<compile_context>
chip_gen: v7x
topology: tpu7x:2x2x1
jax: 0.10.0
libtpu: 0.0.40
codegen_flags: <defaults>
</compile_context>

<pallas_src>
import math

import numpy as np
import jax
import jax.numpy as jnp
from jax.experimental import pallas as pl
from jax.experimental.pallas import tpu as pltpu


# --------------------------------------------------------------------------- #
# Fused ModularLSTM forward kernel (one TB-row batch tile per grid program).
# --------------------------------------------------------------------------- #
def _modular_lstm_kernel(x_ref, we1_ref, be1_ref, we2_ref, be2_ref,
                         wi_ref, wh_ref, wsi_ref, wsh_ref,
                         exp_ref, redh_ref, redc_ref,
                         wd1_ref, bd1_ref, wd2_ref, bd2_ref,
                         out_ref, score_ref, hseq_ref, sseq_ref):
    T, TB, D = x_ref.shape
    Hp = wh_ref.shape[0]           # padded per-module hidden width
    N, NHp = exp_ref.shape         # modules, padded per-gate width (= N*Hp)
    O = out_ref.shape[2]

    # ---- encoder + hoisted projections for ALL (t, b) rows at once --------- #
    x = x_ref[...].reshape(T * TB, D)                 # time-major rows: t*TB+b
    e = jnp.maximum(
        jnp.dot(x, we1_ref[...], preferred_element_type=jnp.float32)
        + be1_ref[...], 0.0)
    enc = (jnp.dot(e, we2_ref[...], preferred_element_type=jnp.float32)
           + be2_ref[...])
    # fused gate-major i2h (GroupLSTMCell has no bias):      (T*TB, 4*NHp)
    ih_all = jnp.dot(enc, wi_ref[...], preferred_element_type=jnp.float32)
    # ih half of the scorer, hoisted off the serial path:    (T*TB, N)
    lg_ih_all = jnp.dot(jnp.maximum(ih_all, 0.0), wsi_ref[...],
                        preferred_element_type=jnp.float32)

    wh = wh_ref[...]               # (Hp, 4*NHp)
    wsh = wsh_ref[...]             # (4*NHp, N)   hh half of the scorer
    exp_m = exp_ref[...]           # (N, NHp)     score -> lane-expanded score
    red_h = redh_ref[...]          # (NHp, Hp)    module-sum, collapsed
    red_c = redc_ref[...]          # (NHp, NHp)   module-sum, re-replicated

    h = jnp.zeros((TB, Hp), jnp.float32)
    c_rep = jnp.zeros((TB, NHp), jnp.float32)       # c replicated over modules

    # ---- serial recurrence (only h/c-dependent work on the critical path) -- #
    for t in range(T):                      # static, fully unrolled (T small)
        r0 = t * TB
        ih_t = ih_all[r0:r0 + TB, :]                                # (TB, 4NHp)
        hh_t = jnp.dot(h, wh, preferred_element_type=jnp.float32)   # (TB, 4NHp)

        # scorer: hoisted ih logits + hh block-diagonal matmul -> softmax_N
        logits = lg_ih_all[r0:r0 + TB, :] + jnp.dot(
            jnp.maximum(hh_t, 0.0), wsh, preferred_element_type=jnp.float32)
        mx = jnp.max(logits, axis=-1, keepdims=True)
        p = jnp.exp(logits - mx)
        score = p * pl.reciprocal(jnp.sum(p, axis=-1, keepdims=True))  # (TB, N)

        # gates: one sigmoid / one tanh over lane-aligned chunks
        pre = ih_t + hh_t
        gates = jax.nn.sigmoid(pre[:, :3 * NHp])
        g_a = jnp.tanh(pre[:, 3 * NHp:])
        i_a = gates[:, :NHp]
        f_a = gates[:, NHp:2 * NHp]
        o_a = gates[:, 2 * NHp:]

        c_all = c_rep * f_a + i_a * g_a                             # (TB, NHp)
        h_all = o_a * jnp.tanh(c_all)

        # score-weighted module mixture via tiny constant matmuls
        score_exp = jnp.dot(score, exp_m, preferred_element_type=jnp.float32)
        c_rep = jnp.dot(c_all * score_exp, red_c,
                        preferred_element_type=jnp.float32)         # (TB, NHp)
        h = jnp.dot(h_all * score_exp, red_h,
                    preferred_element_type=jnp.float32)             # (TB, Hp)

        hseq_ref[pl.ds(r0, TB), :] = h
        sseq_ref[pl.ds(r0, TB), :] = score

    # ---- decoder on the whole sequence (batched, off the serial path) ------ #
    hs = hseq_ref[...]                                              # (T*TB, Hp)
    d = jnp.maximum(
        jnp.dot(hs, wd1_ref[...], preferred_element_type=jnp.float32)
        + bd1_ref[...], 0.0)
    dec = (jnp.dot(d, wd2_ref[...], preferred_element_type=jnp.float32)
           + bd2_ref[...])

    out_ref[...] = dec.reshape(T, TB, O)
    score_ref[...] = sseq_ref[...].reshape(T, TB, N)


# --------------------------------------------------------------------------- #
# ModularLSTM wrapper (parameter setup + fused kernel call)
# --------------------------------------------------------------------------- #
class ModularLSTMPallas:
    def __init__(self, in_size, out_size, enc_out_size, hidden_size,
                 n_modules, num_ops, setting, key):
        if setting == "mod":
            in_size += n_modules
        self.in_dim = in_size
        self.enc_dim = enc_out_size
        self.out_dim = out_size
        self.num_rules = n_modules
        self.setting = setting

        # hidden-size re-derivation, exactly as in the PyTorch __init__
        hid_new = (4 * n_modules * enc_out_size + 1) ** 2
        hid_new += 4 * (4 * n_modules + 1) * (
            5 * hidden_size * hidden_size + hidden_size * (4 * enc_out_size + 1))
        hid_new = math.sqrt(hid_new) - (4 * n_modules * enc_out_size + 1)
        hid_new /= 2 * (4 * n_modules + 1)
        self.hid_dim = int(hid_new)

        E, H, N = self.enc_dim, self.hid_dim, self.num_rules

        # lane-aligned padding: Hp chosen so N*Hp is a multiple of 128
        step = 128 // math.gcd(N, 128)
        self.hid_pad = Hp = max(8, ((H + step - 1) // step) * step)
        self.nh_pad = NHp = N * Hp

        keys = jax.random.split(key, 12)

        def u(k, shape, bound):
            return jax.random.uniform(k, shape, jnp.float32, -bound, bound)

        b_in = 1.0 / math.sqrt(self.in_dim)
        b_e = 1.0 / math.sqrt(E)
        b_h = 1.0 / math.sqrt(H)

        # encoder: Linear(in, E) -> ReLU -> Linear(E, E)
        self.w_e1 = u(keys[0], (self.in_dim, E), b_in)
        self.b_e1 = u(keys[1], (1, E), b_in)
        self.w_e2 = u(keys[2], (E, E), b_e)
        self.b_e2 = u(keys[3], (1, E), b_e)

        # GroupLSTMCell (bias=False), canonical per-module layout (as PyTorch):
        #   wi (N, E, 4H), wh (N, H, 4H), scorer ws (N, 8H)
        self.wi = u(keys[4], (N, E, 4 * H), b_e)
        self.wh = u(keys[5], (N, H, 4 * H), b_h)
        self.ws = u(keys[6], (N, 8 * H), math.sqrt(1.0 / (8 * H)))

        # decoder: Linear(H, H) -> ReLU -> Linear(H, out)
        self.w_d1 = u(keys[7], (H, H), b_h)
        self.b_d1 = u(keys[8], (1, H), b_h)
        self.w_d2 = u(keys[9], (H, self.out_dim), b_h)
        self.b_d2 = u(keys[10], (1, self.out_dim), b_h)

        # ---- fused, gate-major, lane-padded kernel weights ------------------ #
        # column layout: col = gate*N*Hp + module*Hp + j   (gate order i,f,o,g)
        wi_np = np.asarray(self.wi).reshape(N, E, 4, H)
        wi_pad = np.zeros((N, E, 4, Hp), np.float32)
        wi_pad[..., :H] = wi_np
        self.wi_f = jnp.asarray(wi_pad.transpose(1, 2, 0, 3).reshape(E, 4 * NHp))

        wh_np = np.asarray(self.wh).reshape(N, H, 4, H)
        wh_pad = np.zeros((N, Hp, 4, Hp), np.float32)
        wh_pad[:, :H, :, :H] = wh_np
        self.wh_f = jnp.asarray(wh_pad.transpose(1, 2, 0, 3).reshape(Hp, 4 * NHp))

        ws_np = np.asarray(self.ws)
        wsi = np.zeros((4 * NHp, N), np.float32)    # block-diag scorer (ih part)
        wsh = np.zeros((4 * NHp, N), np.float32)    # block-diag scorer (hh part)
        for k in range(N):
            for g in range(4):
                rows = slice(g * NHp + k * Hp, g * NHp + k * Hp + H)
                wsi[rows, k] = ws_np[k, g * H:(g + 1) * H]
                wsh[rows, k] = ws_np[k, 4 * H + g * H:4 * H + (g + 1) * H]
        self.ws_i = jnp.asarray(wsi)
        self.ws_h = jnp.asarray(wsh)

        # constants for the vectorized score-weighted module mixture
        expand = np.zeros((N, NHp), np.float32)
        for k in range(N):
            expand[k, k * Hp:(k + 1) * Hp] = 1.0
        self.expand = jnp.asarray(expand)                  # (N, NHp)
        eye = np.eye(Hp, dtype=np.float32)
        self.reduce_h = jnp.asarray(np.tile(eye, (N, 1)))  # (NHp, Hp)
        self.reduce_c = jnp.asarray(np.tile(eye, (N, N)))  # (NHp, NHp)

        # decoder first layer padded on its input (Hp) side (zero rows for pads)
        wd1_pad = np.zeros((Hp, H), np.float32)
        wd1_pad[:H, :] = np.asarray(self.w_d1)
        self.w_d1_p = jnp.asarray(wd1_pad)

    # forward with the fused Pallas kernel
    def forward(self, x, op):
        # x: (B, T, in_dim); op: (B, T, N) (unused for the default setting)
        B, T, D = x.shape
        O, N = self.out_dim, self.num_rules
        Hp = self.hid_pad

        # batch tile: rows go in the sublane / MXU-M dimension.  One program
        # holds up to 8 rows; for B > 8 the "parallel" grid splits across the
        # two v7x TensorCores (single program for small B, as on v5e/v6e).
        TB = min(B, 8)
        G = -(-B // TB)
        Bp = G * TB
        xp = x if Bp == B else jnp.pad(x, ((0, Bp - B), (0, 0), (0, 0)))
        xt = jnp.transpose(xp, (1, 0, 2))                # (T, Bp, D) time-major

        weights = (self.w_e1, self.b_e1, self.w_e2, self.b_e2,
                   self.wi_f, self.wh_f, self.ws_i, self.ws_h,
                   self.expand, self.reduce_h, self.reduce_c,
                   self.w_d1_p, self.b_d1, self.w_d2, self.b_d2)

        def _full(arr):
            nd = arr.ndim
            return pl.BlockSpec(arr.shape, lambda g, _nd=nd: (0,) * _nd)

        out_t, sc_t = pl.pallas_call(
            _modular_lstm_kernel,
            out_shape=(jax.ShapeDtypeStruct((T, Bp, O), jnp.float32),
                       jax.ShapeDtypeStruct((T, Bp, N), jnp.float32)),
            grid=(G,),
            in_specs=[pl.BlockSpec((T, TB, D), lambda g: (0, g, 0))]
                     + [_full(w) for w in weights],
            out_specs=(pl.BlockSpec((T, TB, O), lambda g: (0, g, 0)),
                       pl.BlockSpec((T, TB, N), lambda g: (0, g, 0))),
            scratch_shapes=[pltpu.VMEM((T * TB, Hp), jnp.float32),
                            pltpu.VMEM((T * TB, N), jnp.float32)],
            compiler_params=pltpu.CompilerParams(
                dimension_semantics=("parallel",)),
        )(xt, *weights)

        out = jnp.transpose(out_t, (1, 0, 2))[:B]        # (B, T, O)
        scores = jnp.transpose(sc_t, (1, 0, 2))[:B]      # (B, T, N)
        return out, scores[..., None]                    # (B,T,O), (B,T,N,1)

    # pure-JAX reference mirroring the PyTorch math (canonical weights)
    def reference(self, x, op):
        B, T, D = x.shape
        H, N = self.hid_dim, self.num_rules
        enc = jnp.maximum(x @ self.w_e1 + self.b_e1, 0.0) @ self.w_e2 + self.b_e2
        h = jnp.zeros((B, H), jnp.float32)
        c = jnp.zeros((B, H), jnp.float32)
        outs, scs = [], []
        for t in range(T):
            xt = enc[:, t, :]
            ih = jnp.einsum("be,neh->bnh", xt, self.wi)          # (B, N, 4H)
            hh = jnp.einsum("bh,nhk->bnk", h, self.wh)
            cat = jnp.maximum(jnp.concatenate([ih, hh], -1), 0.0)
            logits = jnp.einsum("bnd,nd->bn", cat, self.ws)
            score = jax.nn.softmax(logits, axis=1)
            preact = ih + hh
            gates = jax.nn.sigmoid(preact[..., :3 * H])
            g = jnp.tanh(preact[..., 3 * H:])
            i_t, f_t, o_t = gates[..., :H], gates[..., H:2 * H], gates[..., 2 * H:]
            c_t = c[:, None, :] * f_t + i_t * g
            h_t = o_t * jnp.tanh(c_t)
            s3 = score[..., None]
            h = jnp.sum(h_t * s3, axis=1)
            c = jnp.sum(c_t * s3, axis=1)
            outs.append(h)
            scs.append(score)
        out = jnp.stack(outs)                                   # (T, B, H)
        dec = jnp.maximum(out @ self.w_d1 + self.b_d1, 0.0) @ self.w_d2 + self.b_d2
        return dec.transpose(1, 0, 2), jnp.stack(scs).transpose(1, 0, 2)[..., None]


if __name__ == "__main__":
    B, T = 2, 8
    in_size, out_size, enc_out, hidden, n_mod = 8, 8, 16, 32, 4
    setting = "vanilla"   # default branch (not 'mod' / 'mod_dich')

    key = jax.random.PRNGKey(0)
    k_params, k_x, k_op = jax.random.split(key, 3)

    model = ModularLSTMPallas(in_size, out_size, enc_out, hidden,
                              n_mod, n_mod, setting, k_params)

    x = jax.random.normal(k_x, (B, T, in_size), jnp.float32)
    op = jax.random.normal(k_op, (B, T, n_mod), jnp.float32)

    out, scores = model.forward(x, op)
    out, scores = jax.block_until_ready((out, scores))

    ref_out, ref_scores = model.reference(x, op)
    assert out.shape == (B, T, out_size) and scores.shape == (B, T, n_mod, 1)
    assert np.allclose(np.asarray(out), np.asarray(ref_out), atol=1e-3, rtol=1e-3)
    assert np.allclose(np.asarray(scores), np.asarray(ref_scores), atol=1e-3, rtol=1e-3)

    print("KERNEL_OK")
</pallas_src>

<mosaic_0001>
module attributes {stable_mosaic.version = 11 : i64} {
  func.func @_modular_lstm_kernel(%arg0: i32, %arg1: memref<8x2x8xf32, #tpu.memory_space<vmem>>, %arg2: memref<8x16xf32, #tpu.memory_space<vmem>>, %arg3: memref<1x16xf32, #tpu.memory_space<vmem>>, %arg4: memref<16x16xf32, #tpu.memory_space<vmem>>, %arg5: memref<1x16xf32, #tpu.memory_space<vmem>>, %arg6: memref<16x512xf32, #tpu.memory_space<vmem>>, %arg7: memref<32x512xf32, #tpu.memory_space<vmem>>, %arg8: memref<512x4xf32, #tpu.memory_space<vmem>>, %arg9: memref<512x4xf32, #tpu.memory_space<vmem>>, %arg10: memref<4x128xf32, #tpu.memory_space<vmem>>, %arg11: memref<128x32xf32, #tpu.memory_space<vmem>>, %arg12: memref<128x128xf32, #tpu.memory_space<vmem>>, %arg13: memref<32x14xf32, #tpu.memory_space<vmem>>, %arg14: memref<1x14xf32, #tpu.memory_space<vmem>>, %arg15: memref<14x8xf32, #tpu.memory_space<vmem>>, %arg16: memref<1x8xf32, #tpu.memory_space<vmem>>, %arg17: memref<8x2x8xf32, #tpu.memory_space<vmem>>, %arg18: memref<8x2x4xf32, #tpu.memory_space<vmem>>, %arg19: memref<16x32xf32, #tpu.memory_space<vmem>>, %arg20: memref<16x4xf32, #tpu.memory_space<vmem>>) attributes {dimension_semantics = [#tpu.dimension_semantics<parallel>], iteration_bounds = array<i64: 1>, scalar_prefetch = 0 : i64, scratch_operands = 2 : i64, tpu.core_type = #tpu.core_type<tc>, window_params = [{transform_indices = @transform_0, window_bounds = array<i64: 8, 2, 8>}, {pipeline_mode = #tpu.pipeline_mode<synchronous>, transform_indices = @transform_1, window_bounds = array<i64: 8, 16>}, {pipeline_mode = #tpu.pipeline_mode<synchronous>, transform_indices = @transform_2, window_bounds = array<i64: 1, 16>}, {pipeline_mode = #tpu.pipeline_mode<synchronous>, transform_indices = @transform_3, window_bounds = array<i64: 16, 16>}, {pipeline_mode = #tpu.pipeline_mode<synchronous>, transform_indices = @transform_4, window_bounds = array<i64: 1, 16>}, {pipeline_mode = #tpu.pipeline_mode<synchronous>, transform_indices = @transform_5, window_bounds = array<i64: 16, 512>}, {pipeline_mode = #tpu.pipeline_mode<synchronous>, transform_indices = @transform_6, window_bounds = array<i64: 32, 512>}, {pipeline_mode = #tpu.pipeline_mode<synchronous>, transform_indices = @transform_7, window_bounds = array<i64: 512, 4>}, {pipeline_mode = #tpu.pipeline_mode<synchronous>, transform_indices = @transform_8, window_bounds = array<i64: 512, 4>}, {pipeline_mode = #tpu.pipeline_mode<synchronous>, transform_indices = @transform_9, window_bounds = array<i64: 4, 128>}, {pipeline_mode = #tpu.pipeline_mode<synchronous>, transform_indices = @transform_10, window_bounds = array<i64: 128, 32>}, {pipeline_mode = #tpu.pipeline_mode<synchronous>, transform_indices = @transform_11, window_bounds = array<i64: 128, 128>}, {pipeline_mode = #tpu.pipeline_mode<synchronous>, transform_indices = @transform_12, window_bounds = array<i64: 32, 14>}, {pipeline_mode = #tpu.pipeline_mode<synchronous>, transform_indices = @transform_13, window_bounds = array<i64: 1, 14>}, {pipeline_mode = #tpu.pipeline_mode<synchronous>, transform_indices = @transform_14, window_bounds = array<i64: 14, 8>}, {pipeline_mode = #tpu.pipeline_mode<synchronous>, transform_indices = @transform_15, window_bounds = array<i64: 1, 8>}, {transform_indices = @transform_16, window_bounds = array<i64: 8, 2, 8>}, {transform_indices = @transform_17, window_bounds = array<i64: 8, 2, 4>}]} {
    %c0 = arith.constant 0 : index
    %c0_0 = arith.constant 0 : index
    %c0_1 = arith.constant 0 : index
    %0 = vector.load %arg1[%c0, %c0_0, %c0_1] : memref<8x2x8xf32, #tpu.memory_space<vmem>>, vector<8x2x8xf32>
    %1 = vector.shape_cast %0 : vector<8x2x8xf32> to vector<16x8xf32>
    %c0_2 = arith.constant 0 : index
    %c0_3 = arith.constant 0 : index
    %2 = vector.load %arg2[%c0_2, %c0_3] : memref<8x16xf32, #tpu.memory_space<vmem>>, vector<8x16xf32>
    %cst = arith.constant dense<0.000000e+00> : vector<16x16xf32>
    %3 = tpu.matmul %1, %2, %cst {dimension_numbers = #tpu.dot_dimension_numbers<[1], [0], [0], [1], [0, 0, 1, 1], [], []>} : vector<16x8xf32>, vector<8x16xf32>, vector<16x16xf32> -> vector<16x16xf32>
    %c0_4 = arith.constant 0 : index
    %c0_5 = arith.constant 0 : index
    %4 = vector.load %arg3[%c0_4, %c0_5] : memref<1x16xf32, #tpu.memory_space<vmem>>, vector<1x16xf32>
    %5 = vector.broadcast %4 : vector<1x16xf32> to vector<16x16xf32>
    %6 = arith.addf %3, %5 : vector<16x16xf32>
    %cst_6 = arith.constant 0.000000e+00 : f32
    %7 = vector.broadcast %cst_6 : f32 to vector<16x16xf32>
    %8 = arith.maximumf %6, %7 : vector<16x16xf32>
    %c0_7 = arith.constant 0 : index
    %c0_8 = arith.constant 0 : index
    %9 = vector.load %arg4[%c0_7, %c0_8] : memref<16x16xf32, #tpu.memory_space<vmem>>, vector<16x16xf32>
    %cst_9 = arith.constant dense<0.000000e+00> : vector<16x16xf32>
    %10 = tpu.matmul %8, %9, %cst_9 {dimension_numbers = #tpu.dot_dimension_numbers<[1], [0], [0], [1], [0, 0, 1, 1], [], []>} : vector<16x16xf32>, vector<16x16xf32>, vector<16x16xf32> -> vector<16x16xf32>
    %c0_10 = arith.constant 0 : index
    %c0_11 = arith.constant 0 : index
    %11 = vector.load %arg5[%c0_10, %c0_11] : memref<1x16xf32, #tpu.memory_space<vmem>>, vector<1x16xf32>
    %12 = vector.broadcast %11 : vector<1x16xf32> to vector<16x16xf32>
    %13 = arith.addf %10, %12 : vector<16x16xf32>
    %c0_12 = arith.constant 0 : index
    %c0_13 = arith.constant 0 : index
    %14 = vector.load %arg6[%c0_12, %c0_13] : memref<16x512xf32, #tpu.memory_space<vmem>>, vector<16x512xf32>
    %cst_14 = arith.constant dense<0.000000e+00> : vector<16x512xf32>
    %15 = tpu.matmul %13, %14, %cst_14 {dimension_numbers = #tpu.dot_dimension_numbers<[1], [0], [0], [1], [0, 0, 1, 1], [], []>} : vector<16x16xf32>, vector<16x512xf32>, vector<16x512xf32> -> vector<16x512xf32>
    %cst_15 = arith.constant 0.000000e+00 : f32
    %16 = vector.broadcast %cst_15 : f32 to vector<16x512xf32>
    %17 = arith.maximumf %15, %16 : vector<16x512xf32>
    %c0_16 = arith.constant 0 : index
    %c0_17 = arith.constant 0 : index
    %18 = vector.load %arg8[%c0_16, %c0_17] : memref<512x4xf32, #tpu.memory_space<vmem>>, vector<512x4xf32>
    %cst_18 = arith.constant dense<0.000000e+00> : vector<16x4xf32>
    %19 = tpu.matmul %17, %18, %cst_18 {dimension_numbers = #tpu.dot_dimension_numbers<[1], [0], [0], [1], [0, 0, 1, 1], [], []>} : vector<16x512xf32>, vector<512x4xf32>, vector<16x4xf32> -> vector<16x4xf32>
    %c0_19 = arith.constant 0 : index
    %c0_20 = arith.constant 0 : index
    %20 = vector.load %arg7[%c0_19, %c0_20] : memref<32x512xf32, #tpu.memory_space<vmem>>, vector<32x512xf32>
    %c0_21 = arith.constant 0 : index
    %c0_22 = arith.constant 0 : index
    %21 = vector.load %arg9[%c0_21, %c0_22] : memref<512x4xf32, #tpu.memory_space<vmem>>, vector<512x4xf32>
    %c0_23 = arith.constant 0 : index
    %c0_24 = arith.constant 0 : index
    %22 = vector.load %arg10[%c0_23, %c0_24] : memref<4x128xf32, #tpu.memory_space<vmem>>, vector<4x128xf32>
    %c0_25 = arith.constant 0 : index
    %c0_26 = arith.constant 0 : index
    %23 = vector.load %arg11[%c0_25, %c0_26] : memref<128x32xf32, #tpu.memory_space<vmem>>, vector<128x32xf32>
    %c0_27 = arith.constant 0 : index
    %c0_28 = arith.constant 0 : index
    %24 = vector.load %arg12[%c0_27, %c0_28] : memref<128x128xf32, #tpu.memory_space<vmem>>, vector<128x128xf32>
    %cst_29 = arith.constant 0.000000e+00 : f32
    %25 = vector.broadcast %cst_29 : f32 to vector<2x32xf32>
    %cst_30 = arith.constant 0.000000e+00 : f32
    %26 = vector.broadcast %cst_30 : f32 to vector<2x128xf32>
    %27 = vector.extract_strided_slice %15 {offsets = [0, 0], sizes = [2, 512], strides = [1, 1]} : vector<16x512xf32> to vector<2x512xf32>
    %cst_31 = arith.constant dense<0.000000e+00> : vector<2x512xf32>
    %28 = tpu.matmul %25, %20, %cst_31 {dimension_numbers = #tpu.dot_dimension_numbers<[1], [0], [0], [1], [0, 0, 1, 1], [], []>} : vector<2x32xf32>, vector<32x512xf32>, vector<2x512xf32> -> vector<2x512xf32>
    %29 = vector.extract_strided_slice %19 {offsets = [0, 0], sizes = [2, 4], strides = [1, 1]} : vector<16x4xf32> to vector<2x4xf32>
    %cst_32 = arith.constant 0.000000e+00 : f32
    %30 = vector.broadcast %cst_32 : f32 to vector<2x512xf32>
    %31 = arith.maximumf %28, %30 : vector<2x512xf32>
    %cst_33 = arith.constant dense<0.000000e+00> : vector<2x4xf32>
    %32 = tpu.matmul %31, %21, %cst_33 {dimension_numbers = #tpu.dot_dimension_numbers<[1], [0], [0], [1], [0, 0, 1, 1], [], []>} : vector<2x512xf32>, vector<512x4xf32>, vector<2x4xf32> -> vector<2x4xf32>
    %33 = arith.addf %29, %32 : vector<2x4xf32>
    %cst_34 = arith.constant dense<0xFF800000> : vector<2xf32>
    %34 = vector.multi_reduction <maximumf>, %33, %cst_34 [1] : vector<2x4xf32> to vector<2xf32>
    %35 = vector.shape_cast %34 : vector<2xf32> to vector<2x1xf32>
    %36 = vector.broadcast %35 : vector<2x1xf32> to vector<2x4xf32>
    %37 = arith.subf %33, %36 : vector<2x4xf32>
    %38 = math.exp %37 : vector<2x4xf32>
    %cst_35 = arith.constant dense<0.000000e+00> : vector<2xf32>
    %39 = vector.multi_reduction <add>, %38, %cst_35 [1] : vector<2x4xf32> to vector<2xf32>
    %40 = vector.shape_cast %39 : vector<2xf32> to vector<2x1xf32>
    %41 = tpu.reciprocal %40 : vector<2x1xf32> -> vector<2x1xf32>
    %42 = vector.broadcast %41 : vector<2x1xf32> to vector<2x4xf32>
    %43 = arith.mulf %38, %42 : vector<2x4xf32>
    %44 = arith.addf %27, %28 : vector<2x512xf32>
    %45 = vector.extract_strided_slice %44 {offsets = [0, 0], sizes = [2, 384], strides = [1, 1]} : vector<2x512xf32> to vector<2x384xf32>
    %46 = arith.negf %45 : vector<2x384xf32>
    %47 = math.exp %46 : vector<2x384xf32>
    %cst_36 = arith.constant 1.000000e+00 : f32
    %48 = vector.broadcast %cst_36 : f32 to vector<2x384xf32>
    %49 = arith.addf %48, %47 : vector<2x384xf32>
    %50 = arith.divf %48, %49 : vector<2x384xf32>
    %51 = vector.extract_strided_slice %44 {offsets = [0, 384], sizes = [2, 128], strides = [1, 1]} : vector<2x512xf32> to vector<2x128xf32>
    %52 = math.tanh %51 : vector<2x128xf32>
    %53 = vector.extract_strided_slice %50 {offsets = [0, 0], sizes = [2, 128], strides = [1, 1]} : vector<2x384xf32> to vector<2x128xf32>
    %54 = vector.extract_strided_slice %50 {offsets = [0, 128], sizes = [2, 128], strides = [1, 1]} : vector<2x384xf32> to vector<2x128xf32>
    %55 = vector.extract_strided_slice %50 {offsets = [0, 256], sizes = [2, 128], strides = [1, 1]} : vector<2x384xf32> to vector<2x128xf32>
    %56 = arith.mulf %26, %54 : vector<2x128xf32>
    %57 = arith.mulf %53, %52 : vector<2x128xf32>
    %58 = arith.addf %56, %57 : vector<2x128xf32>
    %59 = math.tanh %58 : vector<2x128xf32>
    %60 = arith.mulf %55, %59 : vector<2x128xf32>
    %cst_37 = arith.constant dense<0.000000e+00> : vector<2x128xf32>
    %61 = tpu.matmul %43, %22, %cst_37 {dimension_numbers = #tpu.dot_dimension_numbers<[1], [0], [0], [1], [0, 0, 1, 1], [], []>} : vector<2x4xf32>, vector<4x128xf32>, vector<2x128xf32> -> vector<2x128xf32>
    %62 = arith.mulf %58, %61 : vector<2x128xf32>
    %cst_38 = arith.constant dense<0.000000e+00> : vector<2x128xf32>
    %63 = tpu.matmul %62, %24, %cst_38 {dimension_numbers = #tpu.dot_dimension_numbers<[1], [0], [0], [1], [0, 0, 1, 1], [], []>} : vector<2x128xf32>, vector<128x128xf32>, vector<2x128xf32> -> vector<2x128xf32>
    %64 = arith.mulf %60, %61 : vector<2x128xf32>
    %cst_39 = arith.constant dense<0.000000e+00> : vector<2x32xf32>
    %65 = tpu.matmul %64, %23, %cst_39 {dimension_numbers = #tpu.dot_dimension_numbers<[1], [0], [0], [1], [0, 0, 1, 1], [], []>} : vector<2x128xf32>, vector<128x32xf32>, vector<2x32xf32> -> vector<2x32xf32>
    %c0_40 = arith.constant 0 : index
    %c0_41 = arith.constant 0 : index
    %66 = vector.load %arg19[%c0_40, %c0_41] : memref<16x32xf32, #tpu.memory_space<vmem>>, vector<2x32xf32>
    tpu.vector_store %arg19[%c0_40, %c0_41], %65 {strides = array<i32>} : memref<16x32xf32, #tpu.memory_space<vmem>>, vector<2x32xf32>,
    %c0_42 = arith.constant 0 : index
    %c0_43 = arith.constant 0 : index
    %67 = vector.load %arg20[%c0_42, %c0_43] : memref<16x4xf32, #tpu.memory_space<vmem>>, vector<2x4xf32>
    tpu.vector_store %arg20[%c0_42, %c0_43], %43 {strides = array<i32>} : memref<16x4xf32, #tpu.memory_space<vmem>>, vector<2x4xf32>,
    %68 = vector.extract_strided_slice %15 {offsets = [2, 0], sizes = [2, 512], strides = [1, 1]} : vector<16x512xf32> to vector<2x512xf32>
    %cst_44 = arith.constant dense<0.000000e+00> : vector<2x512xf32>
    %69 = tpu.matmul %65, %20, %cst_44 {dimension_numbers = #tpu.dot_dimension_numbers<[1], [0], [0], [1], [0, 0, 1, 1], [], []>} : vector<2x32xf32>, vector<32x512xf32>, vector<2x512xf32> -> vector<2x512xf32>
    %70 = vector.extract_strided_slice %19 {offsets = [2, 0], sizes = [2, 4], strides = [1, 1]} : vector<16x4xf32> to vector<2x4xf32>
    %cst_45 = arith.constant 0.000000e+00 : f32
    %71 = vector.broadcast %cst_45 : f32 to vector<2x512xf32>
    %72 = arith.maximumf %69, %71 : vector<2x512xf32>
    %cst_46 = arith.constant dense<0.000000e+00> : vector<2x4xf32>
    %73 = tpu.matmul %72, %21, %cst_46 {dimension_numbers = #tpu.dot_dimension_numbers<[1], [0], [0], [1], [0, 0, 1, 1], [], []>} : vector<2x512xf32>, vector<512x4xf32>, vector<2x4xf32> -> vector<2x4xf32>
    %74 = arith.addf %70, %73 : vector<2x4xf32>
    %cst_47 = arith.constant dense<0xFF800000> : vector<2xf32>
    %75 = vector.multi_reduction <maximumf>, %74, %cst_47 [1] : vector<2x4xf32> to vector<2xf32>
    %76 = vector.shape_cast %75 : vector<2xf32> to vector<2x1xf32>
    %77 = vector.broadcast %76 : vector<2x1xf32> to vector<2x4xf32>
    %78 = arith.subf %74, %77 : vector<2x4xf32>
    %79 = math.exp %78 : vector<2x4xf32>
    %cst_48 = arith.constant dense<0.000000e+00> : vector<2xf32>
    %80 = vector.multi_reduction <add>, %79, %cst_48 [1] : vector<2x4xf32> to vector<2xf32>
    %81 = vector.shape_cast %80 : vector<2xf32> to vector<2x1xf32>
    %82 = tpu.reciprocal %81 : vector<2x1xf32> -> vector<2x1xf32>
    %83 = vector.broadcast %82 : vector<2x1xf32> to vector<2x4xf32>
    %84 = arith.mulf %79, %83 : vector<2x4xf32>
    %85 = arith.addf %68, %69 : vector<2x512xf32>
    %86 = vector.extract_strided_slice %85 {offsets = [0, 0], sizes = [2, 384], strides = [1, 1]} : vector<2x512xf32> to vector<2x384xf32>
    %87 = arith.negf %86 : vector<2x384xf32>
    %88 = math.exp %87 : vector<2x384xf32>
    %cst_49 = arith.constant 1.000000e+00 : f32
    %89 = vector.broadcast %cst_49 : f32 to vector<2x384xf32>
    %90 = arith.addf %89, %88 : vector<2x384xf32>
    %91 = arith.divf %89, %90 : vector<2x384xf32>
    %92 = vector.extract_strided_slice %85 {offsets = [0, 384], sizes = [2, 128], strides = [1, 1]} : vector<2x512xf32> to vector<2x128xf32>
    %93 = math.tanh %92 : vector<2x128xf32>
    %94 = vector.extract_strided_slice %91 {offsets = [0, 0], sizes = [2, 128], strides = [1, 1]} : vector<2x384xf32> to vector<2x128xf32>
    %95 = vector.extract_strided_slice %91 {offsets = [0, 128], sizes = [2, 128], strides = [1, 1]} : vector<2x384xf32> to vector<2x128xf32>
    %96 = vector.extract_strided_slice %91 {offsets = [0, 256], sizes = [2, 128], strides = [1, 1]} : vector<2x384xf32> to vector<2x128xf32>
    %97 = arith.mulf %63, %95 : vector<2x128xf32>
    %98 = arith.mulf %94, %93 : vector<2x128xf32>
    %99 = arith.addf %97, %98 : vector<2x128xf32>
    %100 = math.tanh %99 : vector<2x128xf32>
    %101 = arith.mulf %96, %100 : vector<2x128xf32>
    %cst_50 = arith.constant dense<0.000000e+00> : vector<2x128xf32>
    %102 = tpu.matmul %84, %22, %cst_50 {dimension_numbers = #tpu.dot_dimension_numbers<[1], [0], [0], [1], [0, 0, 1, 1], [], []>} : vector<2x4xf32>, vector<4x128xf32>, vector<2x128xf32> -> vector<2x128xf32>
    %103 = arith.mulf %99, %102 : vector<2x128xf32>
    %cst_51 = arith.constant dense<0.000000e+00> : vector<2x128xf32>
    %104 = tpu.matmul %103, %24, %cst_51 {dimension_numbers = #tpu.dot_dimension_numbers<[1], [0], [0], [1], [0, 0, 1, 1], [], []>} : vector<2x128xf32>, vector<128x128xf32>, vector<2x128xf32> -> vector<2x128xf32>
    %105 = arith.mulf %101, %102 : vector<2x128xf32>
    %cst_52 = arith.constant dense<0.000000e+00> : vector<2x32xf32>
    %106 = tpu.matmul %105, %23, %cst_52 {dimension_numbers = #tpu.dot_dimension_numbers<[1], [0], [0], [1], [0, 0, 1, 1], [], []>} : vector<2x128xf32>, vector<128x32xf32>, vector<2x32xf32> -> vector<2x32xf32>
    %c2 = arith.constant 2 : index
    %c0_53 = arith.constant 0 : index
    %107 = vector.load %arg19[%c2, %c0_53] : memref<16x32xf32, #tpu.memory_space<vmem>>, vector<2x32xf32>
    tpu.vector_store %arg19[%c2, %c0_53], %106 {strides = array<i32>} : memref<16x32xf32, #tpu.memory_space<vmem>>, vector<2x32xf32>,
    %c2_54 = arith.constant 2 : index
    %c0_55 = arith.constant 0 : index
    %108 = vector.load %arg20[%c2_54, %c0_55] : memref<16x4xf32, #tpu.memory_space<vmem>>, vector<2x4xf32>
    tpu.vector_store %arg20[%c2_54, %c0_55], %84 {strides = array<i32>} : memref<16x4xf32, #tpu.memory_space<vmem>>, vector<2x4xf32>,
    %109 = vector.extract_strided_slice %15 {offsets = [4, 0], sizes = [2, 512], strides = [1, 1]} : vector<16x512xf32> to vector<2x512xf32>
    %cst_56 = arith.constant dense<0.000000e+00> : vector<2x512xf32>
    %110 = tpu.matmul %106, %20, %cst_56 {dimension_numbers = #tpu.dot_dimension_numbers<[1], [0], [0], [1], [0, 0, 1, 1], [], []>} : vector<2x32xf32>, vector<32x512xf32>, vector<2x512xf32> -> vector<2x512xf32>
    %111 = vector.extract_strided_slice %19 {offsets = [4, 0], sizes = [2, 4], strides = [1, 1]} : vector<16x4xf32> to vector<2x4xf32>
    %cst_57 = arith.constant 0.000000e+00 : f32
    %112 = vector.broadcast %cst_57 : f32 to vector<2x512xf32>
    %113 = arith.maximumf %110, %112 : vector<2x512xf32>
    %cst_58 = arith.constant dense<0.000000e+00> : vector<2x4xf32>
    %114 = tpu.matmul %113, %21, %cst_58 {dimension_numbers = #tpu.dot_dimension_numbers<[1], [0], [0], [1], [0, 0, 1, 1], [], []>} : vector<2x512xf32>, vector<512x4xf32>, vector<2x4xf32> -> vector<2x4xf32>
    %115 = arith.addf %111, %114 : vector<2x4xf32>
    %cst_59 = arith.constant dense<0xFF800000> : vector<2xf32>
    %116 = vector.multi_reduction <maximumf>, %115, %cst_59 [1] : vector<2x4xf32> to vector<2xf32>
    %117 = vector.shape_cast %116 : vector<2xf32> to vector<2x1xf32>
    %118 = vector.broadcast %117 : vector<2x1xf32> to vector<2x4xf32>
    %119 = arith.subf %115, %118 : vector<2x4xf32>
    %120 = math.exp %119 : vector<2x4xf32>
    %cst_60 = arith.constant dense<0.000000e+00> : vector<2xf32>
    %121 = vector.multi_reduction <add>, %120, %cst_60 [1] : vector<2x4xf32> to vector<2xf32>
    %122 = vector.shape_cast %121 : vector<2xf32> to vector<2x1xf32>
    %123 = tpu.reciprocal %122 : vector<2x1xf32> -> vector<2x1xf32>
    %124 = vector.broadcast %123 : vector<2x1xf32> to vector<2x4xf32>
    %125 = arith.mulf %120, %124 : vector<2x4xf32>
    %126 = arith.addf %109, %110 : vector<2x512xf32>
    %127 = vector.extract_strided_slice %126 {offsets = [0, 0], sizes = [2, 384], strides = [1, 1]} : vector<2x512xf32> to vector<2x384xf32>
    %128 = arith.negf %127 : vector<2x384xf32>
    %129 = math.exp %128 : vector<2x384xf32>
    %cst_61 = arith.constant 1.000000e+00 : f32
    %130 = vector.broadcast %cst_61 : f32 to vector<2x384xf32>
    %131 = arith.addf %130, %129 : vector<2x384xf32>
    %132 = arith.divf %130, %131 : vector<2x384xf32>
    %133 = vector.extract_strided_slice %126 {offsets = [0, 384], sizes = [2, 128], strides = [1, 1]} : vector<2x512xf32> to vector<2x128xf32>
    %134 = math.tanh %133 : vector<2x128xf32>
    %135 = vector.extract_strided_slice %132 {offsets = [0, 0], sizes = [2, 128], strides = [1, 1]} : vector<2x384xf32> to vector<2x128xf32>
    %136 = vector.extract_strided_slice %132 {offsets = [0, 128], sizes = [2, 128], strides = [1, 1]} : vector<2x384xf32> to vector<2x128xf32>
    %137 = vector.extract_strided_slice %132 {offsets = [0, 256], sizes = [2, 128], strides = [1, 1]} : vector<2x384xf32> to vector<2x128xf32>
    %138 = arith.mulf %104, %136 : vector<2x128xf32>
    %139 = arith.mulf %135, %134 : vector<2x128xf32>
    %140 = arith.addf %138, %139 : vector<2x128xf32>
    %141 = math.tanh %140 : vector<2x128xf32>
    %142 = arith.mulf %137, %141 : vector<2x128xf32>
    %cst_62 = arith.constant dense<0.000000e+00> : vector<2x128xf32>
    %143 = tpu.matmul %125, %22, %cst_62 {dimension_numbers = #tpu.dot_dimension_numbers<[1], [0], [0], [1], [0, 0, 1, 1], [], []>} : vector<2x4xf32>, vector<4x128xf32>, vector<2x128xf32> -> vector<2x128xf32>
    %144 = arith.mulf %140, %143 : vector<2x128xf32>
    %cst_63 = arith.constant dense<0.000000e+00> : vector<2x128xf32>
    %145 = tpu.matmul %144, %24, %cst_63 {dimension_numbers = #tpu.dot_dimension_numbers<[1], [0], [0], [1], [0, 0, 1, 1], [], []>} : vector<2x128xf32>, vector<128x128xf32>, vector<2x128xf32> -> vector<2x128xf32>
    %146 = arith.mulf %142, %143 : vector<2x128xf32>
    %cst_64 = arith.constant dense<0.000000e+00> : vector<2x32xf32>
    %147 = tpu.matmul %146, %23, %cst_64 {dimension_numbers = #tpu.dot_dimension_numbers<[1], [0], [0], [1], [0, 0, 1, 1], [], []>} : vector<2x128xf32>, vector<128x32xf32>, vector<2x32xf32> -> vector<2x32xf32>
    %c4 = arith.constant 4 : index
    %c0_65 = arith.constant 0 : index
    %148 = vector.load %arg19[%c4, %c0_65] : memref<16x32xf32, #tpu.memory_space<vmem>>, vector<2x32xf32>
    tpu.vector_store %arg19[%c4, %c0_65], %147 {strides = array<i32>} : memref<16x32xf32, #tpu.memory_space<vmem>>, vector<2x32xf32>,
    %c4_66 = arith.constant 4 : index
    %c0_67 = arith.constant 0 : index
    %149 = vector.load %arg20[%c4_66, %c0_67] : memref<16x4xf32, #tpu.memory_space<vmem>>, vector<2x4xf32>
    tpu.vector_store %arg20[%c4_66, %c0_67], %125 {strides = array<i32>} : memref<16x4xf32, #tpu.memory_space<vmem>>, vector<2x4xf32>,
    %150 = vector.extract_strided_slice %15 {offsets = [6, 0], sizes = [2, 512], strides = [1, 1]} : vector<16x512xf32> to vector<2x512xf32>
    %cst_68 = arith.constant dense<0.000000e+00> : vector<2x512xf32>
    %151 = tpu.matmul %147, %20, %cst_68 {dimension_numbers = #tpu.dot_dimension_numbers<[1], [0], [0], [1], [0, 0, 1, 1], [], []>} : vector<2x32xf32>, vector<32x512xf32>, vector<2x512xf32> -> vector<2x512xf32>
    %152 = vector.extract_strided_slice %19 {offsets = [6, 0], sizes = [2, 4], strides = [1, 1]} : vector<16x4xf32> to vector<2x4xf32>
    %cst_69 = arith.constant 0.000000e+00 : f32
    %153 = vector.broadcast %cst_69 : f32 to vector<2x512xf32>
    %154 = arith.maximumf %151, %153 : vector<2x512xf32>
    %cst_70 = arith.constant dense<0.000000e+00> : vector<2x4xf32>
    %155 = tpu.matmul %154, %21, %cst_70 {dimension_numbers = #tpu.dot_dimension_numbers<[1], [0], [0], [1], [0, 0, 1, 1], [], []>} : vector<2x512xf32>, vector<512x4xf32>, vector<2x4xf32> -> vector<2x4xf32>
    %156 = arith.addf %152, %155 : vector<2x4xf32>
    %cst_71 = arith.constant dense<0xFF800000> : vector<2xf32>
    %157 = vector.multi_reduction <maximumf>, %156, %cst_71 [1] : vector<2x4xf32> to vector<2xf32>
    %158 = vector.shape_cast %157 : vector<2xf32> to vector<2x1xf32>
    %159 = vector.broadcast %158 : vector<2x1xf32> to vector<2x4xf32>
    %160 = arith.subf %156, %159 : vector<2x4xf32>
    %161 = math.exp %160 : vector<2x4xf32>
    %cst_72 = arith.constant dense<0.000000e+00> : vector<2xf32>
    %162 = vector.multi_reduction <add>, %161, %cst_72 [1] : vector<2x4xf32> to vector<2xf32>
    %163 = vector.shape_cast %162 : vector<2xf32> to vector<2x1xf32>
    %164 = tpu.reciprocal %163 : vector<2x1xf32> -> vector<2x1xf32>
    %165 = vector.broadcast %164 : vector<2x1xf32> to vector<2x4xf32>
    %166 = arith.mulf %161, %165 : vector<2x4xf32>
    %167 = arith.addf %150, %151 : vector<2x512xf32>
    %168 = vector.extract_strided_slice %167 {offsets = [0, 0], sizes = [2, 384], strides = [1, 1]} : vector<2x512xf32> to vector<2x384xf32>
    %169 = arith.negf %168 : vector<2x384xf32>
    %170 = math.exp %169 : vector<2x384xf32>
    %cst_73 = arith.constant 1.000000e+00 : f32
    %171 = vector.broadcast %cst_73 : f32 to vector<2x384xf32>
    %172 = arith.addf %171, %170 : vector<2x384xf32>
    %173 = arith.divf %171, %172 : vector<2x384xf32>
    %174 = vector.extract_strided_slice %167 {offsets = [0, 384], sizes = [2, 128], strides = [1, 1]} : vector<2x512xf32> to vector<2x128xf32>
    %175 = math.tanh %174 : vector<2x128xf32>
    %176 = vector.extract_strided_slice %173 {offsets = [0, 0], sizes = [2, 128], strides = [1, 1]} : vector<2x384xf32> to vector<2x128xf32>
    %177 = vector.extract_strided_slice %173 {offsets = [0, 128], sizes = [2, 128], strides = [1, 1]} : vector<2x384xf32> to vector<2x128xf32>
    %178 = vector.extract_strided_slice %173 {offsets = [0, 256], sizes = [2, 128], strides = [1, 1]} : vector<2x384xf32> to vector<2x128xf32>
    %179 = arith.mulf %145, %177 : vector<2x128xf32>
    %180 = arith.mulf %176, %175 : vector<2x128xf32>
    %181 = arith.addf %179, %180 : vector<2x128xf32>
    %182 = math.tanh %181 : vector<2x128xf32>
    %183 = arith.mulf %178, %182 : vector<2x128xf32>
    %cst_74 = arith.constant dense<0.000000e+00> : vector<2x128xf32>
    %184 = tpu.matmul %166, %22, %cst_74 {dimension_numbers = #tpu.dot_dimension_numbers<[1], [0], [0], [1], [0, 0, 1, 1], [], []>} : vector<2x4xf32>, vector<4x128xf32>, vector<2x128xf32> -> vector<2x128xf32>
    %185 = arith.mulf %181, %184 : vector<2x128xf32>
    %cst_75 = arith.constant dense<0.000000e+00> : vector<2x128xf32>
    %186 = tpu.matmul %185, %24, %cst_75 {dimension_numbers = #tpu.dot_dimension_numbers<[1], [0], [0], [1], [0, 0, 1, 1], [], []>} : vector<2x128xf32>, vector<128x128xf32>, vector<2x128xf32> -> vector<2x128xf32>
    %187 = arith.mulf %183, %184 : vector<2x128xf32>
    %cst_76 = arith.constant dense<0.000000e+00> : vector<2x32xf32>
    %188 = tpu.matmul %187, %23, %cst_76 {dimension_numbers = #tpu.dot_dimension_numbers<[1], [0], [0], [1], [0, 0, 1, 1], [], []>} : vector<2x128xf32>, vector<128x32xf32>, vector<2x32xf32> -> vector<2x32xf32>
    %c6 = arith.constant 6 : index
    %c0_77 = arith.constant 0 : index
    %189 = vector.load %arg19[%c6, %c0_77] : memref<16x32xf32, #tpu.memory_space<vmem>>, vector<2x32xf32>
    tpu.vector_store %arg19[%c6, %c0_77], %188 {strides = array<i32>} : memref<16x32xf32, #tpu.memory_space<vmem>>, vector<2x32xf32>,
    %c6_78 = arith.constant 6 : index
    %c0_79 = arith.constant 0 : index
    %190 = vector.load %arg20[%c6_78, %c0_79] : memref<16x4xf32, #tpu.memory_space<vmem>>, vector<2x4xf32>
    tpu.vector_store %arg20[%c6_78, %c0_79], %166 {strides = array<i32>} : memref<16x4xf32, #tpu.memory_space<vmem>>, vector<2x4xf32>,
    %191 = vector.extract_strided_slice %15 {offsets = [8, 0], sizes = [2, 512], strides = [1, 1]} : vector<16x512xf32> to vector<2x512xf32>
    %cst_80 = arith.constant dense<0.000000e+00> : vector<2x512xf32>
    %192 = tpu.matmul %188, %20, %cst_80 {dimension_numbers = #tpu.dot_dimension_numbers<[1], [0], [0], [1], [0, 0, 1, 1], [], []>} : vector<2x32xf32>, vector<32x512xf32>, vector<2x512xf32> -> vector<2x512xf32>
    %193 = vector.extract_strided_slice %19 {offsets = [8, 0], sizes = [2, 4], strides = [1, 1]} : vector<16x4xf32> to vector<2x4xf32>
    %cst_81 = arith.constant 0.000000e+00 : f32
    %194 = vector.broadcast %cst_81 : f32 to vector<2x512xf32>
    %195 = arith.maximumf %192, %194 : vector<2x512xf32>
    %cst_82 = arith.constant dense<0.000000e+00> : vector<2x4xf32>
    %196 = tpu.matmul %195, %21, %cst_82 {dimension_numbers = #tpu.dot_dimension_numbers<[1], [0], [0], [1], [0, 0, 1, 1], [], []>} : vector<2x512xf32>, vector<512x4xf32>, vector<2x4xf32> -> vector<2x4xf32>
    %197 = arith.addf %193, %196 : vector<2x4xf32>
    %cst_83 = arith.constant dense<0xFF800000> : vector<2xf32>
    %198 = vector.multi_reduction <maximumf>, %197, %cst_83 [1] : vector<2x4xf32> to vector<2xf32>
    %199 = vector.shape_cast %198 : vector<2xf32> to vector<2x1xf32>
    %200 = vector.broadcast %199 : vector<2x1xf32> to vector<2x4xf32>
    %201 = arith.subf %197, %200 : vector<2x4xf32>
    %202 = math.exp %201 : vector<2x4xf32>
    %cst_84 = arith.constant dense<0.000000e+00> : vector<2xf32>
    %203 = vector.multi_reduction <add>, %202, %cst_84 [1] : vector<2x4xf32> to vector<2xf32>
    %204 = vector.shape_cast %203 : vector<2xf32> to vector<2x1xf32>
    %205 = tpu.reciprocal %204 : vector<2x1xf32> -> vector<2x1xf32>
    %206 = vector.broadcast %205 : vector<2x1xf32> to vector<2x4xf32>
    %207 = arith.mulf %202, %206 : vector<2x4xf32>
    %208 = arith.addf %191, %192 : vector<2x512xf32>
    %209 = vector.extract_strided_slice %208 {offsets = [0, 0], sizes = [2, 384], strides = [1, 1]} : vector<2x512xf32> to vector<2x384xf32>
    %210 = arith.negf %209 : vector<2x384xf32>
    %211 = math.exp %210 : vector<2x384xf32>
    %cst_85 = arith.constant 1.000000e+00 : f32
    %212 = vector.broadcast %cst_85 : f32 to vector<2x384xf32>
    %213 = arith.addf %212, %211 : vector<2x384xf32>
    %214 = arith.divf %212, %213 : vector<2x384xf32>
    %215 = vector.extract_strided_slice %208 {offsets = [0, 384], sizes = [2, 128], strides = [1, 1]} : vector<2x512xf32> to vector<2x128xf32>
    %216 = math.tanh %215 : vector<2x128xf32>
    %217 = vector.extract_strided_slice %214 {offsets = [0, 0], sizes = [2, 128], strides = [1, 1]} : vector<2x384xf32> to vector<2x128xf32>
    %218 = vector.extract_strided_slice %214 {offsets = [0, 128], sizes = [2, 128], strides = [1, 1]} : vector<2x384xf32> to vector<2x128xf32>
    %219 = vector.extract_strided_slice %214 {offsets = [0, 256], sizes = [2, 128], strides = [1, 1]} : vector<2x384xf32> to vector<2x128xf32>
    %220 = arith.mulf %186, %218 : vector<2x128xf32>
    %221 = arith.mulf %217, %216 : vector<2x128xf32>
    %222 = arith.addf %220, %221 : vector<2x128xf32>
    %223 = math.tanh %222 : vector<2x128xf32>
    %224 = arith.mulf %219, %223 : vector<2x128xf32>
    %cst_86 = arith.constant dense<0.000000e+00> : vector<2x128xf32>
    %225 = tpu.matmul %207, %22, %cst_86 {dimension_numbers = #tpu.dot_dimension_numbers<[1], [0], [0], [1], [0, 0, 1, 1], [], []>} : vector<2x4xf32>, vector<4x128xf32>, vector<2x128xf32> -> vector<2x128xf32>
    %226 = arith.mulf %222, %225 : vector<2x128xf32>
    %cst_87 = arith.constant dense<0.000000e+00> : vector<2x128xf32>
    %227 = tpu.matmul %226, %24, %cst_87 {dimension_numbers = #tpu.dot_dimension_numbers<[1], [0], [0], [1], [0, 0, 1, 1], [], []>} : vector<2x128xf32>, vector<128x128xf32>, vector<2x128xf32> -> vector<2x128xf32>
    %228 = arith.mulf %224, %225 : vector<2x128xf32>
    %cst_88 = arith.constant dense<0.000000e+00> : vector<2x32xf32>
    %229 = tpu.matmul %228, %23, %cst_88 {dimension_numbers = #tpu.dot_dimension_numbers<[1], [0], [0], [1], [0, 0, 1, 1], [], []>} : vector<2x128xf32>, vector<128x32xf32>, vector<2x32xf32> -> vector<2x32xf32>
    %c8 = arith.constant 8 : index
    %c0_89 = arith.constant 0 : index
    %230 = vector.load %arg19[%c8, %c0_89] : memref<16x32xf32, #tpu.memory_space<vmem>>, vector<2x32xf32>
    tpu.vector_store %arg19[%c8, %c0_89], %229 {strides = array<i32>} : memref<16x32xf32, #tpu.memory_space<vmem>>, vector<2x32xf32>,
    %c8_90 = arith.constant 8 : index
    %c0_91 = arith.constant 0 : index
    %231 = vector.load %arg20[%c8_90, %c0_91] : memref<16x4xf32, #tpu.memory_space<vmem>>, vector<2x4xf32>
    tpu.vector_store %arg20[%c8_90, %c0_91], %207 {strides = array<i32>} : memref<16x4xf32, #tpu.memory_space<vmem>>, vector<2x4xf32>,
    %232 = vector.extract_strided_slice %15 {offsets = [10, 0], sizes = [2, 512], strides = [1, 1]} : vector<16x512xf32> to vector<2x512xf32>
    %cst_92 = arith.constant dense<0.000000e+00> : vector<2x512xf32>
    %233 = tpu.matmul %229, %20, %cst_92 {dimension_numbers = #tpu.dot_dimension_numbers<[1], [0], [0], [1], [0, 0, 1, 1], [], []>} : vector<2x32xf32>, vector<32x512xf32>, vector<2x512xf32> -> vector<2x512xf32>
    %234 = vector.extract_strided_slice %19 {offsets = [10, 0], sizes = [2, 4], strides = [1, 1]} : vector<16x4xf32> to vector<2x4xf32>
    %cst_93 = arith.constant 0.000000e+00 : f32
    %235 = vector.broadcast %cst_93 : f32 to vector<2x512xf32>
    %236 = arith.maximumf %233, %235 : vector<2x512xf32>
    %cst_94 = arith.constant dense<0.000000e+00> : vector<2x4xf32>
    %237 = tpu.matmul %236, %21, %cst_94 {dimension_numbers = #tpu.dot_dimension_numbers<[1], [0], [0], [1], [0, 0, 1, 1], [], []>} : vector<2x512xf32>, vector<512x4xf32>, vector<2x4xf32> -> vector<2x4xf32>
    %238 = arith.addf %234, %237 : vector<2x4xf32>
    %cst_95 = arith.constant dense<0xFF800000> : vector<2xf32>
    %239 = vector.multi_reduction <maximumf>, %238, %cst_95 [1] : vector<2x4xf32> to vector<2xf32>
    %240 = vector.shape_cast %239 : vector<2xf32> to vector<2x1xf32>
    %241 = vector.broadcast %240 : vector<2x1xf32> to vector<2x4xf32>
    %242 = arith.subf %238, %241 : vector<2x4xf32>
    %243 = math.exp %242 : vector<2x4xf32>
    %cst_96 = arith.constant dense<0.000000e+00> : vector<2xf32>
    %244 = vector.multi_reduction <add>, %243, %cst_96 [1] : vector<2x4xf32> to vector<2xf32>
    %245 = vector.shape_cast %244 : vector<2xf32> to vector<2x1xf32>
    %246 = tpu.reciprocal %245 : vector<2x1xf32> -> vector<2x1xf32>
    %247 = vector.broadcast %246 : vector<2x1xf32> to vector<2x4xf32>
    %248 = arith.mulf %243, %247 : vector<2x4xf32>
    %249 = arith.addf %232, %233 : vector<2x512xf32>
    %250 = vector.extract_strided_slice %249 {offsets = [0, 0], sizes = [2, 384], strides = [1, 1]} : vector<2x512xf32> to vector<2x384xf32>
    %251 = arith.negf %250 : vector<2x384xf32>
    %252 = math.exp %251 : vector<2x384xf32>
    %cst_97 = arith.constant 1.000000e+00 : f32
    %253 = vector.broadcast %cst_97 : f32 to vector<2x384xf32>
    %254 = arith.addf %253, %252 : vector<2x384xf32>
    %255 = arith.divf %253, %254 : vector<2x384xf32>
    %256 = vector.extract_strided_slice %249 {offsets = [0, 384], sizes = [2, 128], strides = [1, 1]} : vector<2x512xf32> to vector<2x128xf32>
    %257 = math.tanh %256 : vector<2x128xf32>
    %258 = vector.extract_strided_slice %255 {offsets = [0, 0], sizes = [2, 128], strides = [1, 1]} : vector<2x384xf32> to vector<2x128xf32>
    %259 = vector.extract_strided_slice %255 {offsets = [0, 128], sizes = [2, 128], strides = [1, 1]} : vector<2x384xf32> to vector<2x128xf32>
    %260 = vector.extract_strided_slice %255 {offsets = [0, 256], sizes = [2, 128], strides = [1, 1]} : vector<2x384xf32> to vector<2x128xf32>
    %261 = arith.mulf %227, %259 : vector<2x128xf32>
    %262 = arith.mulf %258, %257 : vector<2x128xf32>
    %263 = arith.addf %261, %262 : vector<2x128xf32>
    %264 = math.tanh %263 : vector<2x128xf32>
    %265 = arith.mulf %260, %264 : vector<2x128xf32>
    %cst_98 = arith.constant dense<0.000000e+00> : vector<2x128xf32>
    %266 = tpu.matmul %248, %22, %cst_98 {dimension_numbers = #tpu.dot_dimension_numbers<[1], [0], [0], [1], [0, 0, 1, 1], [], []>} : vector<2x4xf32>, vector<4x128xf32>, vector<2x128xf32> -> vector<2x128xf32>
    %267 = arith.mulf %263, %266 : vector<2x128xf32>
    %cst_99 = arith.constant dense<0.000000e+00> : vector<2x128xf32>
    %268 = tpu.matmul %267, %24, %cst_99 {dimension_numbers = #tpu.dot_dimension_numbers<[1], [0], [0], [1], [0, 0, 1, 1], [], []>} : vector<2x128xf32>, vector<128x128xf32>, vector<2x128xf32> -> vector<2x128xf32>
    %269 = arith.mulf %265, %266 : vector<2x128xf32>
    %cst_100 = arith.constant dense<0.000000e+00> : vector<2x32xf32>
    %270 = tpu.matmul %269, %23, %cst_100 {dimension_numbers = #tpu.dot_dimension_numbers<[1], [0], [0], [1], [0, 0, 1, 1], [], []>} : vector<2x128xf32>, vector<128x32xf32>, vector<2x32xf32> -> vector<2x32xf32>
    %c10 = arith.constant 10 : index
    %c0_101 = arith.constant 0 : index
    %271 = vector.load %arg19[%c10, %c0_101] : memref<16x32xf32, #tpu.memory_space<vmem>>, vector<2x32xf32>
    tpu.vector_store %arg19[%c10, %c0_101], %270 {strides = array<i32>} : memref<16x32xf32, #tpu.memory_space<vmem>>, vector<2x32xf32>,
    %c10_102 = arith.constant 10 : index
    %c0_103 = arith.constant 0 : index
    %272 = vector.load %arg20[%c10_102, %c0_103] : memref<16x4xf32, #tpu.memory_space<vmem>>, vector<2x4xf32>
    tpu.vector_store %arg20[%c10_102, %c0_103], %248 {strides = array<i32>} : memref<16x4xf32, #tpu.memory_space<vmem>>, vector<2x4xf32>,
    %273 = vector.extract_strided_slice %15 {offsets = [12, 0], sizes = [2, 512], strides = [1, 1]} : vector<16x512xf32> to vector<2x512xf32>
    %cst_104 = arith.constant dense<0.000000e+00> : vector<2x512xf32>
    %274 = tpu.matmul %270, %20, %cst_104 {dimension_numbers = #tpu.dot_dimension_numbers<[1], [0], [0], [1], [0, 0, 1, 1], [], []>} : vector<2x32xf32>, vector<32x512xf32>, vector<2x512xf32> -> vector<2x512xf32>
    %275 = vector.extract_strided_slice %19 {offsets = [12, 0], sizes = [2, 4], strides = [1, 1]} : vector<16x4xf32> to vector<2x4xf32>
    %cst_105 = arith.constant 0.000000e+00 : f32
    %276 = vector.broadcast %cst_105 : f32 to vector<2x512xf32>
    %277 = arith.maximumf %274, %276 : vector<2x512xf32>
    %cst_106 = arith.constant dense<0.000000e+00> : vector<2x4xf32>
    %278 = tpu.matmul %277, %21, %cst_106 {dimension_numbers = #tpu.dot_dimension_numbers<[1], [0], [0], [1], [0, 0, 1, 1], [], []>} : vector<2x512xf32>, vector<512x4xf32>, vector<2x4xf32> -> vector<2x4xf32>
    %279 = arith.addf %275, %278 : vector<2x4xf32>
    %cst_107 = arith.constant dense<0xFF800000> : vector<2xf32>
    %280 = vector.multi_reduction <maximumf>, %279, %cst_107 [1] : vector<2x4xf32> to vector<2xf32>
    %281 = vector.shape_cast %280 : vector<2xf32> to vector<2x1xf32>
    %282 = vector.broadcast %281 : vector<2x1xf32> to vector<2x4xf32>
    %283 = arith.subf %279, %282 : vector<2x4xf32>
    %284 = math.exp %283 : vector<2x4xf32>
    %cst_108 = arith.constant dense<0.000000e+00> : vector<2xf32>
    %285 = vector.multi_reduction <add>, %284, %cst_108 [1] : vector<2x4xf32> to vector<2xf32>
    %286 = vector.shape_cast %285 : vector<2xf32> to vector<2x1xf32>
    %287 = tpu.reciprocal %286 : vector<2x1xf32> -> vector<2x1xf32>
    %288 = vector.broadcast %287 : vector<2x1xf32> to vector<2x4xf32>
    %289 = arith.mulf %284, %288 : vector<2x4xf32>
    %290 = arith.addf %273, %274 : vector<2x512xf32>
    %291 = vector.extract_strided_slice %290 {offsets = [0, 0], sizes = [2, 384], strides = [1, 1]} : vector<2x512xf32> to vector<2x384xf32>
    %292 = arith.negf %291 : vector<2x384xf32>
    %293 = math.exp %292 : vector<2x384xf32>
    %cst_109 = arith.constant 1.000000e+00 : f32
    %294 = vector.broadcast %cst_109 : f32 to vector<2x384xf32>
    %295 = arith.addf %294, %293 : vector<2x384xf32>
    %296 = arith.divf %294, %295 : vector<2x384xf32>
    %297 = vector.extract_strided_slice %290 {offsets = [0, 384], sizes = [2, 128], strides = [1, 1]} : vector<2x512xf32> to vector<2x128xf32>
    %298 = math.tanh %297 : vector<2x128xf32>
    %299 = vector.extract_strided_slice %296 {offsets = [0, 0], sizes = [2, 128], strides = [1, 1]} : vector<2x384xf32> to vector<2x128xf32>
    %300 = vector.extract_strided_slice %296 {offsets = [0, 128], sizes = [2, 128], strides = [1, 1]} : vector<2x384xf32> to vector<2x128xf32>
    %301 = vector.extract_strided_slice %296 {offsets = [0, 256], sizes = [2, 128], strides = [1, 1]} : vector<2x384xf32> to vector<2x128xf32>
    %302 = arith.mulf %268, %300 : vector<2x128xf32>
    %303 = arith.mulf %299, %298 : vector<2x128xf32>
    %304 = arith.addf %302, %303 : vector<2x128xf32>
    %305 = math.tanh %304 : vector<2x128xf32>
    %306 = arith.mulf %301, %305 : vector<2x128xf32>
    %cst_110 = arith.constant dense<0.000000e+00> : vector<2x128xf32>
    %307 = tpu.matmul %289, %22, %cst_110 {dimension_numbers = #tpu.dot_dimension_numbers<[1], [0], [0], [1], [0, 0, 1, 1], [], []>} : vector<2x4xf32>, vector<4x128xf32>, vector<2x128xf32> -> vector<2x128xf32>
    %308 = arith.mulf %304, %307 : vector<2x128xf32>
    %cst_111 = arith.constant dense<0.000000e+00> : vector<2x128xf32>
    %309 = tpu.matmul %308, %24, %cst_111 {dimension_numbers = #tpu.dot_dimension_numbers<[1], [0], [0], [1], [0, 0, 1, 1], [], []>} : vector<2x128xf32>, vector<128x128xf32>, vector<2x128xf32> -> vector<2x128xf32>
    %310 = arith.mulf %306, %307 : vector<2x128xf32>
    %cst_112 = arith.constant dense<0.000000e+00> : vector<2x32xf32>
    %311 = tpu.matmul %310, %23, %cst_112 {dimension_numbers = #tpu.dot_dimension_numbers<[1], [0], [0], [1], [0, 0, 1, 1], [], []>} : vector<2x128xf32>, vector<128x32xf32>, vector<2x32xf32> -> vector<2x32xf32>
    %c12 = arith.constant 12 : index
    %c0_113 = arith.constant 0 : index
    %312 = vector.load %arg19[%c12, %c0_113] : memref<16x32xf32, #tpu.memory_space<vmem>>, vector<2x32xf32>
    tpu.vector_store %arg19[%c12, %c0_113], %311 {strides = array<i32>} : memref<16x32xf32, #tpu.memory_space<vmem>>, vector<2x32xf32>,
    %c12_114 = arith.constant 12 : index
    %c0_115 = arith.constant 0 : index
    %313 = vector.load %arg20[%c12_114, %c0_115] : memref<16x4xf32, #tpu.memory_space<vmem>>, vector<2x4xf32>
    tpu.vector_store %arg20[%c12_114, %c0_115], %289 {strides = array<i32>} : memref<16x4xf32, #tpu.memory_space<vmem>>, vector<2x4xf32>,
    %314 = vector.extract_strided_slice %15 {offsets = [14, 0], sizes = [2, 512], strides = [1, 1]} : vector<16x512xf32> to vector<2x512xf32>
    %cst_116 = arith.constant dense<0.000000e+00> : vector<2x512xf32>
    %315 = tpu.matmul %311, %20, %cst_116 {dimension_numbers = #tpu.dot_dimension_numbers<[1], [0], [0], [1], [0, 0, 1, 1], [], []>} : vector<2x32xf32>, vector<32x512xf32>, vector<2x512xf32> -> vector<2x512xf32>
    %316 = vector.extract_strided_slice %19 {offsets = [14, 0], sizes = [2, 4], strides = [1, 1]} : vector<16x4xf32> to vector<2x4xf32>
    %cst_117 = arith.constant 0.000000e+00 : f32
    %317 = vector.broadcast %cst_117 : f32 to vector<2x512xf32>
    %318 = arith.maximumf %315, %317 : vector<2x512xf32>
    %cst_118 = arith.constant dense<0.000000e+00> : vector<2x4xf32>
    %319 = tpu.matmul %318, %21, %cst_118 {dimension_numbers = #tpu.dot_dimension_numbers<[1], [0], [0], [1], [0, 0, 1, 1], [], []>} : vector<2x512xf32>, vector<512x4xf32>, vector<2x4xf32> -> vector<2x4xf32>
    %320 = arith.addf %316, %319 : vector<2x4xf32>
    %cst_119 = arith.constant dense<0xFF800000> : vector<2xf32>
    %321 = vector.multi_reduction <maximumf>, %320, %cst_119 [1] : vector<2x4xf32> to vector<2xf32>
    %322 = vector.shape_cast %321 : vector<2xf32> to vector<2x1xf32>
    %323 = vector.broadcast %322 : vector<2x1xf32> to vector<2x4xf32>
    %324 = arith.subf %320, %323 : vector<2x4xf32>
    %325 = math.exp %324 : vector<2x4xf32>
    %cst_120 = arith.constant dense<0.000000e+00> : vector<2xf32>
    %326 = vector.multi_reduction <add>, %325, %cst_120 [1] : vector<2x4xf32> to vector<2xf32>
    %327 = vector.shape_cast %326 : vector<2xf32> to vector<2x1xf32>
    %328 = tpu.reciprocal %327 : vector<2x1xf32> -> vector<2x1xf32>
    %329 = vector.broadcast %328 : vector<2x1xf32> to vector<2x4xf32>
    %330 = arith.mulf %325, %329 : vector<2x4xf32>
    %331 = arith.addf %314, %315 : vector<2x512xf32>
    %332 = vector.extract_strided_slice %331 {offsets = [0, 0], sizes = [2, 384], strides = [1, 1]} : vector<2x512xf32> to vector<2x384xf32>
    %333 = arith.negf %332 : vector<2x384xf32>
    %334 = math.exp %333 : vector<2x384xf32>
    %cst_121 = arith.constant 1.000000e+00 : f32
    %335 = vector.broadcast %cst_121 : f32 to vector<2x384xf32>
    %336 = arith.addf %335, %334 : vector<2x384xf32>
    %337 = arith.divf %335, %336 : vector<2x384xf32>
    %338 = vector.extract_strided_slice %331 {offsets = [0, 384], sizes = [2, 128], strides = [1, 1]} : vector<2x512xf32> to vector<2x128xf32>
    %339 = math.tanh %338 : vector<2x128xf32>
    %340 = vector.extract_strided_slice %337 {offsets = [0, 0], sizes = [2, 128], strides = [1, 1]} : vector<2x384xf32> to vector<2x128xf32>
    %341 = vector.extract_strided_slice %337 {offsets = [0, 128], sizes = [2, 128], strides = [1, 1]} : vector<2x384xf32> to vector<2x128xf32>
    %342 = vector.extract_strided_slice %337 {offsets = [0, 256], sizes = [2, 128], strides = [1, 1]} : vector<2x384xf32> to vector<2x128xf32>
    %343 = arith.mulf %309, %341 : vector<2x128xf32>
    %344 = arith.mulf %340, %339 : vector<2x128xf32>
    %345 = arith.addf %343, %344 : vector<2x128xf32>
    %346 = math.tanh %345 : vector<2x128xf32>
    %347 = arith.mulf %342, %346 : vector<2x128xf32>
    %cst_122 = arith.constant dense<0.000000e+00> : vector<2x128xf32>
    %348 = tpu.matmul %330, %22, %cst_122 {dimension_numbers = #tpu.dot_dimension_numbers<[1], [0], [0], [1], [0, 0, 1, 1], [], []>} : vector<2x4xf32>, vector<4x128xf32>, vector<2x128xf32> -> vector<2x128xf32>
    %349 = arith.mulf %347, %348 : vector<2x128xf32>
    %cst_123 = arith.constant dense<0.000000e+00> : vector<2x32xf32>
    %350 = tpu.matmul %349, %23, %cst_123 {dimension_numbers = #tpu.dot_dimension_numbers<[1], [0], [0], [1], [0, 0, 1, 1], [], []>} : vector<2x128xf32>, vector<128x32xf32>, vector<2x32xf32> -> vector<2x32xf32>
    %c14 = arith.constant 14 : index
    %c0_124 = arith.constant 0 : index
    %351 = vector.load %arg19[%c14, %c0_124] : memref<16x32xf32, #tpu.memory_space<vmem>>, vector<2x32xf32>
    tpu.vector_store %arg19[%c14, %c0_124], %350 {strides = array<i32>} : memref<16x32xf32, #tpu.memory_space<vmem>>, vector<2x32xf32>,
    %c14_125 = arith.constant 14 : index
    %c0_126 = arith.constant 0 : index
    %352 = vector.load %arg20[%c14_125, %c0_126] : memref<16x4xf32, #tpu.memory_space<vmem>>, vector<2x4xf32>
    tpu.vector_store %arg20[%c14_125, %c0_126], %330 {strides = array<i32>} : memref<16x4xf32, #tpu.memory_space<vmem>>, vector<2x4xf32>,
    %c0_127 = arith.constant 0 : index
    %c0_128 = arith.constant 0 : index
    %353 = vector.load %arg19[%c0_127, %c0_128] : memref<16x32xf32, #tpu.memory_space<vmem>>, vector<16x32xf32>
    %c0_129 = arith.constant 0 : index
    %c0_130 = arith.constant 0 : index
    %354 = vector.load %arg13[%c0_129, %c0_130] : memref<32x14xf32, #tpu.memory_space<vmem>>, vector<32x14xf32>
    %cst_131 = arith.constant dense<0.000000e+00> : vector<16x14xf32>
    %355 = tpu.matmul %353, %354, %cst_131 {dimension_numbers = #tpu.dot_dimension_numbers<[1], [0], [0], [1], [0, 0, 1, 1], [], []>} : vector<16x32xf32>, vector<32x14xf32>, vector<16x14xf32> -> vector<16x14xf32>
    %c0_132 = arith.constant 0 : index
    %c0_133 = arith.constant 0 : index
    %356 = vector.load %arg14[%c0_132, %c0_133] : memref<1x14xf32, #tpu.memory_space<vmem>>, vector<1x14xf32>
    %357 = vector.broadcast %356 : vector<1x14xf32> to vector<16x14xf32>
    %358 = arith.addf %355, %357 : vector<16x14xf32>
    %cst_134 = arith.constant 0.000000e+00 : f32
    %359 = vector.broadcast %cst_134 : f32 to vector<16x14xf32>
    %360 = arith.maximumf %358, %359 : vector<16x14xf32>
    %c0_135 = arith.constant 0 : index
    %c0_136 = arith.constant 0 : index
    %361 = vector.load %arg15[%c0_135, %c0_136] : memref<14x8xf32, #tpu.memory_space<vmem>>, vector<14x8xf32>
    %cst_137 = arith.constant dense<0.000000e+00> : vector<16x8xf32>
    %362 = tpu.matmul %360, %361, %cst_137 {dimension_numbers = #tpu.dot_dimension_numbers<[1], [0], [0], [1], [0, 0, 1, 1], [], []>} : vector<16x14xf32>, vector<14x8xf32>, vector<16x8xf32> -> vector<16x8xf32>
    %c0_138 = arith.constant 0 : index
    %c0_139 = arith.constant 0 : index
    %363 = vector.load %arg16[%c0_138, %c0_139] : memref<1x8xf32, #tpu.memory_space<vmem>>, vector<1x8xf32>
    %364 = vector.broadcast %363 : vector<1x8xf32> to vector<16x8xf32>
    %365 = arith.addf %362, %364 : vector<16x8xf32>
    %366 = vector.shape_cast %365 : vector<16x8xf32> to vector<8x2x8xf32>
    %c0_140 = arith.constant 0 : index
    %c0_141 = arith.constant 0 : index
    %c0_142 = arith.constant 0 : index
    %367 = vector.load %arg17[%c0_140, %c0_141, %c0_142] : memref<8x2x8xf32, #tpu.memory_space<vmem>>, vector<8x2x8xf32>
    tpu.vector_store %arg17[%c0_140, %c0_141, %c0_142], %366 {strides = array<i32>} : memref<8x2x8xf32, #tpu.memory_space<vmem>>, vector<8x2x8xf32>,
    %c0_143 = arith.constant 0 : index
    %c0_144 = arith.constant 0 : index
    %368 = vector.load %arg20[%c0_143, %c0_144] : memref<16x4xf32, #tpu.memory_space<vmem>>, vector<16x4xf32>
    %369 = vector.shape_cast %368 : vector<16x4xf32> to vector<8x2x4xf32>
    %c0_145 = arith.constant 0 : index
    %c0_146 = arith.constant 0 : index
    %c0_147 = arith.constant 0 : index
    %370 = vector.load %arg18[%c0_145, %c0_146, %c0_147] : memref<8x2x4xf32, #tpu.memory_space<vmem>>, vector<8x2x4xf32>
    tpu.vector_store %arg18[%c0_145, %c0_146, %c0_147], %369 {strides = array<i32>} : memref<8x2x4xf32, #tpu.memory_space<vmem>>, vector<8x2x4xf32>,
    return
  }
  func.func @transform_0(%arg0: i32) -> (i32, i32, i32) {
    %c0_i32 = arith.constant 0 : i32
    %c0_i32_0 = arith.constant 0 : i32
    %c0_i32_1 = arith.constant 0 : i32
    return %c0_i32, %arg0, %c0_i32_0 : i32, i32, i32
  }
  func.func @transform_1(%arg0: i32) -> (i32, i32) {
    %c0_i32 = arith.constant 0 : i32
    %c0_i32_0 = arith.constant 0 : i32
    %c0_i32_1 = arith.constant 0 : i32
    return %c0_i32, %c0_i32_0 : i32, i32
  }
  func.func @transform_2(%arg0: i32) -> (i32, i32) {
    %c0_i32 = arith.constant 0 : i32
    %c0_i32_0 = arith.constant 0 : i32
    %c0_i32_1 = arith.constant 0 : i32
    return %c0_i32, %c0_i32_0 : i32, i32
  }
  func.func @transform_3(%arg0: i32) -> (i32, i32) {
    %c0_i32 = arith.constant 0 : i32
    %c0_i32_0 = arith.constant 0 : i32
    %c0_i32_1 = arith.constant 0 : i32
    return %c0_i32, %c0_i32_0 : i32, i32
  }
  func.func @transform_4(%arg0: i32) -> (i32, i32) {
    %c0_i32 = arith.constant 0 : i32
    %c0_i32_0 = arith.constant 0 : i32
    %c0_i32_1 = arith.constant 0 : i32
    return %c0_i32, %c0_i32_0 : i32, i32
  }
  func.func @transform_5(%arg0: i32) -> (i32, i32) {
    %c0_i32 = arith.constant 0 : i32
    %c0_i32_0 = arith.constant 0 : i32
    %c0_i32_1 = arith.constant 0 : i32
    return %c0_i32, %c0_i32_0 : i32, i32
  }
  func.func @transform_6(%arg0: i32) -> (i32, i32) {
    %c0_i32 = arith.constant 0 : i32
    %c0_i32_0 = arith.constant 0 : i32
    %c0_i32_1 = arith.constant 0 : i32
    return %c0_i32, %c0_i32_0 : i32, i32
  }
  func.func @transform_7(%arg0: i32) -> (i32, i32) {
    %c0_i32 = arith.constant 0 : i32
    %c0_i32_0 = arith.constant 0 : i32
    %c0_i32_1 = arith.constant 0 : i32
    return %c0_i32, %c0_i32_0 : i32, i32
  }
  func.func @transform_8(%arg0: i32) -> (i32, i32) {
    %c0_i32 = arith.constant 0 : i32
    %c0_i32_0 = arith.constant 0 : i32
    %c0_i32_1 = arith.constant 0 : i32
    return %c0_i32, %c0_i32_0 : i32, i32
  }
  func.func @transform_9(%arg0: i32) -> (i32, i32) {
    %c0_i32 = arith.constant 0 : i32
    %c0_i32_0 = arith.constant 0 : i32
    %c0_i32_1 = arith.constant 0 : i32
    return %c0_i32, %c0_i32_0 : i32, i32
  }
  func.func @transform_10(%arg0: i32) -> (i32, i32) {
    %c0_i32 = arith.constant 0 : i32
    %c0_i32_0 = arith.constant 0 : i32
    %c0_i32_1 = arith.constant 0 : i32
    return %c0_i32, %c0_i32_0 : i32, i32
  }
  func.func @transform_11(%arg0: i32) -> (i32, i32) {
    %c0_i32 = arith.constant 0 : i32
    %c0_i32_0 = arith.constant 0 : i32
    %c0_i32_1 = arith.constant 0 : i32
    return %c0_i32, %c0_i32_0 : i32, i32
  }
  func.func @transform_12(%arg0: i32) -> (i32, i32) {
    %c0_i32 = arith.constant 0 : i32
    %c0_i32_0 = arith.constant 0 : i32
    %c0_i32_1 = arith.constant 0 : i32
    return %c0_i32, %c0_i32_0 : i32, i32
  }
  func.func @transform_13(%arg0: i32) -> (i32, i32) {
    %c0_i32 = arith.constant 0 : i32
    %c0_i32_0 = arith.constant 0 : i32
    %c0_i32_1 = arith.constant 0 : i32
    return %c0_i32, %c0_i32_0 : i32, i32
  }
  func.func @transform_14(%arg0: i32) -> (i32, i32) {
    %c0_i32 = arith.constant 0 : i32
    %c0_i32_0 = arith.constant 0 : i32
    %c0_i32_1 = arith.constant 0 : i32
    return %c0_i32, %c0_i32_0 : i32, i32
  }
  func.func @transform_15(%arg0: i32) -> (i32, i32) {
    %c0_i32 = arith.constant 0 : i32
    %c0_i32_0 = arith.constant 0 : i32
    %c0_i32_1 = arith.constant 0 : i32
    return %c0_i32, %c0_i32_0 : i32, i32
  }
  func.func @transform_16(%arg0: i32) -> (i32, i32, i32) {
    %c0_i32 = arith.constant 0 : i32
    %c0_i32_0 = arith.constant 0 : i32
    %c0_i32_1 = arith.constant 0 : i32
    return %c0_i32, %arg0, %c0_i32_0 : i32, i32, i32
  }
  func.func @transform_17(%arg0: i32) -> (i32, i32, i32) {
    %c0_i32 = arith.constant 0 : i32
    %c0_i32_0 = arith.constant 0 : i32
    %c0_i32_1 = arith.constant 0 : i32
    return %c0_i32, %arg0, %c0_i32_0 : i32, i32, i32
  }
}

</mosaic_0001>

<llo_original>
// kernel: tpu_custom_call.1
$region0: #{tpu_custom_call.1}
  #allocation0 [shape = 'u32[]', space=smem, size = 0x4, offset = 0x4, fixed_abs, tag = 'smem constant byte address 0x4 - core index']
  #allocation1 [shape = 'u32[144,128]{1,0:T(1,128)}', space=vmem, size = 0x12000, scoped, tag = 'internal scratch']
  #allocation2 [shape = 'f32[16,32]{1,0:T(8,128)}', space=vmem, size = 0x2000, scoped, tag = 'scratch operand']
  #allocation3 [shape = 'f32[16,4]{1,0:T(8,128)}', space=vmem, size = 0x2000, scoped, tag = 'scratch operand']
  %s0 = inlined_call_operand.vmem [shape: f32[8,2,8], index: 0, kind: input, shape index: {}]
  %s1 = inlined_call_operand.vmem [shape: f32[8,16], index: 1, kind: input, shape index: {}]
  %s2 = inlined_call_operand.vmem [shape: f32[1,16], index: 2, kind: input, shape index: {}]
  %s3 = inlined_call_operand.vmem [shape: f32[16,16], index: 3, kind: input, shape index: {}]
  %s4 = inlined_call_operand.vmem [shape: f32[1,16], index: 4, kind: input, shape index: {}]
  %s5 = inlined_call_operand.vmem [shape: f32[16,512], index: 5, kind: input, shape index: {}]
  %s6 = inlined_call_operand.vmem [shape: f32[32,512], index: 6, kind: input, shape index: {}]
  %s7 = inlined_call_operand.vmem [shape: f32[512,4], index: 7, kind: input, shape index: {}]
  %s8 = inlined_call_operand.vmem [shape: f32[512,4], index: 8, kind: input, shape index: {}]
  %s9 = inlined_call_operand.vmem [shape: f32[4,128], index: 9, kind: input, shape index: {}]
  %s10 = inlined_call_operand.vmem [shape: f32[128,32], index: 10, kind: input, shape index: {}]
  %s11 = inlined_call_operand.vmem [shape: f32[128,128], index: 11, kind: input, shape index: {}]
  %s12 = inlined_call_operand.vmem [shape: f32[32,14], index: 12, kind: input, shape index: {}]
  %s13 = inlined_call_operand.vmem [shape: f32[1,14], index: 13, kind: input, shape index: {}]
  %s14 = inlined_call_operand.vmem [shape: f32[14,8], index: 14, kind: input, shape index: {}]
  %s15 = inlined_call_operand.vmem [shape: f32[1,8], index: 15, kind: input, shape index: {}]
  %s16 = inlined_call_operand.hbm [shape: f32[8,2,8], index: 16, kind: output, shape index: {0}]
  %s17 = inlined_call_operand.vmem [shape: f32[8,2,4], index: 17, kind: output, shape index: {1}]
  %18 = xla_tuple %s16, %s17
  %s19 = sld [smem:[#allocation0]]
  $region82: #{tpu_custom_call.1} parent=0
    _
  %s21 = ssub.s32 1, %s19
  %s22 = scalar_select 0, %s21, %s19
  $region1: #{tpu_custom_call.1} parent=0
    #allocation4 [shape = 'u8[8192]{0}', space=vmem, size = 0x2000, scoped, tag = 'output window, operand 0, single buffered']
    #allocation5 [shape = 's32[1]{0}', space=sflag, size = 0x4, scoped, tag = 'scoped memory for tpu_custom_call.1']
    %23 = vsyncpa [#allocation5], 0
    // Predicated region
    $region2: #{tpu_custom_call.1} parent=1 // pred_check
      _
    $region3: #{tpu_custom_call.1} parent=1 // pred_check_branch
      %25 = sbr.rel (0) target = $region5
    $region4: #{tpu_custom_call.1} parent=1 // pred_region
      _
    $region5: #{tpu_custom_call.1} parent=1 // pred_fallthru
      _
    // Predicated region
    $region6: #{tpu_custom_call.1} parent=1 // pred_check
      _
    $region7: #{tpu_custom_call.1} parent=1 // pred_check_branch
      %27 = sbr.rel (0) target = $region9
    $region8: #{tpu_custom_call.1} parent=1 // pred_region
      _
    $region9: #{tpu_custom_call.1} parent=1 // pred_fallthru
      _
    // Predicated region
    $region10: #{tpu_custom_call.1} parent=1 // pred_check
      _
    $region11: #{tpu_custom_call.1} parent=1 // pred_check_branch
      %29 = sbr.rel (0) target = $region13
    $region12: #{tpu_custom_call.1} parent=1 // pred_region
      _
    $region13: #{tpu_custom_call.1} parent=1 // pred_fallthru
      _
    // Predicated region
    $region14: #{tpu_custom_call.1} parent=1 // pred_check
      _
    $region15: #{tpu_custom_call.1} parent=1 // pred_check_branch
      %31 = sbr.rel (0) target = $region17
    $region16: #{tpu_custom_call.1} parent=1 // pred_region
      _
    $region17: #{tpu_custom_call.1} parent=1 // pred_fallthru
      _
    // Predicated region
    $region18: #{tpu_custom_call.1} parent=1 // pred_check
      _
    $region19: #{tpu_custom_call.1} parent=1 // pred_check_branch
      %33 = sbr.rel (0) target = $region21
    $region20: #{tpu_custom_call.1} parent=1 // pred_region
      _
    $region21: #{tpu_custom_call.1} parent=1 // pred_fallthru
      _
    // Predicated region
    $region22: #{tpu_custom_call.1} parent=1 // pred_check
      _
    $region23: #{tpu_custom_call.1} parent=1 // pred_check_branch
      %35 = sbr.rel (0) target = $region25
    $region24: #{tpu_custom_call.1} parent=1 // pred_region
      _
    $region25: #{tpu_custom_call.1} parent=1 // pred_fallthru
      _
    // Predicated region
    $region26: #{tpu_custom_call.1} parent=1 // pred_check
      _
    $region27: #{tpu_custom_call.1} parent=1 // pred_check_branch
      %37 = sbr.rel (0) target = $region29
    $region28: #{tpu_custom_call.1} parent=1 // pred_region
      _
    $region29: #{tpu_custom_call.1} parent=1 // pred_fallthru
      _
    // Predicated region
    $region30: #{tpu_custom_call.1} parent=1 // pred_check
      _
    $region31: #{tpu_custom_call.1} parent=1 // pred_check_branch
      %39 = sbr.rel (0) target = $region33
    $region32: #{tpu_custom_call.1} parent=1 // pred_region
      _
    $region33: #{tpu_custom_call.1} parent=1 // pred_fallthru
      _
    // Predicated region
    $region34: #{tpu_custom_call.1} parent=1 // pred_check
      _
    $region35: #{tpu_custom_call.1} parent=1 // pred_check_branch
      %41 = sbr.rel (0) target = $region37
    $region36: #{tpu_custom_call.1} parent=1 // pred_region
      _
    $region37: #{tpu_custom_call.1} parent=1 // pred_fallthru
      _
    // Predicated region
    $region38: #{tpu_custom_call.1} parent=1 // pred_check
      _
    $region39: #{tpu_custom_call.1} parent=1 // pred_check_branch
      %43 = sbr.rel (0) target = $region41
    $region40: #{tpu_custom_call.1} parent=1 // pred_region
      _
    $region41: #{tpu_custom_call.1} parent=1 // pred_fallthru
      _
    // Predicated region
    $region42: #{tpu_custom_call.1} parent=1 // pred_check
      _
    $region43: #{tpu_custom_call.1} parent=1 // pred_check_branch
      %45 = sbr.rel (0) target = $region45
    $region44: #{tpu_custom_call.1} parent=1 // pred_region
      _
    $region45: #{tpu_custom_call.1} parent=1 // pred_fallthru
      _
    // Predicated region
    $region46: #{tpu_custom_call.1} parent=1 // pred_check
      _
    $region47: #{tpu_custom_call.1} parent=1 // pred_check_branch
      %47 = sbr.rel (0) target = $region49
    $region48: #{tpu_custom_call.1} parent=1 // pred_region
      _
    $region49: #{tpu_custom_call.1} parent=1 // pred_fallthru
      _
    // Predicated region
    $region50: #{tpu_custom_call.1} parent=1 // pred_check
      _
    $region51: #{tpu_custom_call.1} parent=1 // pred_check_branch
      %49 = sbr.rel (0) target = $region53
    $region52: #{tpu_custom_call.1} parent=1 // pred_region
      _
    $region53: #{tpu_custom_call.1} parent=1 // pred_fallthru
      _
    // Predicated region
    $region54: #{tpu_custom_call.1} parent=1 // pred_check
      _
    $region55: #{tpu_custom_call.1} parent=1 // pred_check_branch
      %51 = sbr.rel (0) target = $region57
    $region56: #{tpu_custom_call.1} parent=1 // pred_region
      _
    $region57: #{tpu_custom_call.1} parent=1 // pred_fallthru
      _
    // Predicated region
    $region58: #{tpu_custom_call.1} parent=1 // pred_check
      _
    $region59: #{tpu_custom_call.1} parent=1 // pred_check_branch
      %53 = sbr.rel (0) target = $region61
    $region60: #{tpu_custom_call.1} parent=1 // pred_region
      _
    $region61: #{tpu_custom_call.1} parent=1 // pred_fallthru
      _
    // Predicated region
    $region62: #{tpu_custom_call.1} parent=1 // pred_check
      _
    $region63: #{tpu_custom_call.1} parent=1 // pred_check_branch
      %55 = sbr.rel (0) target = $region65
    $region64: #{tpu_custom_call.1} parent=1 // pred_region
      _
    $region65: #{tpu_custom_call.1} parent=1 // pred_fallthru
      _
    %v56 = vld [vmem:[%s0] sm:$0x3]
    %v57 = vld [vmem:[%s0 + $0x2] sm:$0x3]
    %v58 = vld [vmem:[%s0 + $0x4] sm:$0x3]
    %v59 = vld [vmem:[%s0 + $0x6] sm:$0x3]
    %v60 = vld [vmem:[%s0 + $0x8] sm:$0x3]
    %v61 = vld [vmem:[%s0 + $0xa] sm:$0x3]
    %v62 = vld [vmem:[%s0 + $0xc] sm:$0x3]
    %v63 = vld [vmem:[%s0 + $0xe] sm:$0x3]
    %v64 = vld [vmem:[%s1] sm:$0xff]
    %v65 = vld [vmem:[%s2] sm:$0x1]
    %v67 = vlaneseq
    %v68 = vshrl.u32 %v67, 7
    %v69 = vsub.s32 0, %v68
    %v70 = vrot.slane %v65, %v69
    %v80 = vcombine.low %v56, %v57
    %v81 = vcombine.low %v58, %v59
    %v83 = vunpack.c.l.s4 1983009808
    %v84 = vunpack.c.0.s8 %v83
    %v85 = vlaneseq
    %v86 = vshrl.u32 %v85, 7
    %v87 = vsub.s32 %v84, %v86
    %v88 = vrot.slane %v80, %v87
    %v90 = vunpack.c.l.s4 1983009808
    %v91 = vunpack.c.0.s8 %v90
    %v92 = vlaneseq
    %v93 = vshrl.u32 %v92, 7
    %v94 = vsub.s32 %v91, %v93
    %v95 = vrot.slane %v81, %v94
    %v96 = vcombine.low %v88, %v95
    %v97 = vcombine.low %v60, %v61
    %v98 = vcombine.low %v62, %v63
    %v100 = vunpack.c.l.s4 1983009808
    %v101 = vunpack.c.0.s8 %v100
    %v102 = vlaneseq
    %v103 = vshrl.u32 %v102, 7
    %v104 = vsub.s32 %v101, %v103
    %v105 = vrot.slane %v97, %v104
    %v107 = vunpack.c.l.s4 1983009808
    %v108 = vunpack.c.0.s8 %v107
    %v109 = vlaneseq
    %v110 = vshrl.u32 %v109, 7
    %v111 = vsub.s32 %v108, %v110
    %v112 = vrot.slane %v98, %v111
    %v113 = vcombine.low %v105, %v112
    %vm114 = vcmask 64512
    %v115 = vsel %vm114, %v96, 0
    %v117 = vsel %vm114, %v113, 0
    %119 = vmatprep.subr.mxu0 0.0
    %120 = vmatpush1.msra.mxu0 %v64
    %121 = vmatprep.subr.mxu0 0.0
    %122 = vmatpush1.msra.mxu0 0.0
    %123 = vmatprep.subr.mxu0 0.0
    %124 = vmatpush1.msra.mxu0 0.0
    %125 = vmatprep.subr.mxu0 0.0
    %126 = vmatpush1.msra.mxu0 0.0
    %127 = vmatprep.subr.mxu0 0.0
    %128 = vmatpush1.msra.mxu0 0.0
    %129 = vmatprep.subr.mxu0 0.0
    %130 = vmatpush1.msra.mxu0 0.0
    %131 = vmatprep.subr.mxu0 0.0
    %132 = vmatpush1.msra.mxu0 0.0
    %133 = vmatprep.subr.mxu0 0.0
    %134 = vmatpush1.msra.mxu0 0.0
    %135 = vmatprep.subr.mxu0 0.0
    %136 = vmatpush1.msra.mxu0 0.0
    %137 = vmatprep.subr.mxu0 0.0
    %138 = vmatpush1.msra.mxu0 0.0
    %139 = vmatprep.subr.mxu0 0.0
    %140 = vmatpush1.msra.mxu0 0.0
    %141 = vmatprep.subr.mxu0 0.0
    %142 = vmatpush1.msra.mxu0 0.0
    %143 = vmatprep.subr.mxu0 0.0
    %144 = vmatpush1.msra.mxu0 0.0
    %145 = vmatprep.subr.mxu0 0.0
    %146 = vmatpush1.msra.mxu0 0.0
    %147 = vmatprep.subr.mxu0 0.0
    %148 = vmatpush1.msra.mxu0 0.0
    %149 = vmatprep.subr.mxu0 0.0
    %150 = vmatpush1.msra.mxu0 0.0
    %151 = vmatprep.subr.mxu0 0.0
    %152 = vmatpush1.msra.mxu0 0.0
    %153 = vmatprep.subr.mxu0 0.0
    %154 = vmatpush1.msra.mxu0 0.0
    %155 = vmatprep.subr.mxu0 0.0
    %156 = vmatpush1.msra.mxu0 0.0
    %157 = vmatprep.subr.mxu0 0.0
    %158 = vmatpush1.msra.mxu0 0.0
    %159 = vmatprep.subr.mxu0 0.0
    %160 = vmatpush1.msra.mxu0 0.0
    %161 = vmatprep.subr.mxu0 0.0
    %162 = vmatpush1.msra.mxu0 0.0
    %163 = vmatprep.subr.mxu0 0.0
    %164 = vmatpush1.msra.mxu0 0.0
    %165 = vmatprep.subr.mxu0 0.0
    %166 = vmatpush1.msra.mxu0 0.0
    %167 = vmatprep.subr.mxu0 0.0
    %168 = vmatpush1.msra.mxu0 0.0
    %169 = vmatprep.subr.mxu0 0.0
    %170 = vmatpush1.msra.mxu0 0.0
    %171 = vmatprep.subr.mxu0 0.0
    %172 = vmatpush1.msra.mxu0 0.0
    %173 = vmatprep.subr.mxu0 0.0
    %174 = vmatpush1.msra.mxu0 0.0
    %175 = vmatprep.subr.mxu0 0.0
    %176 = vmatpush1.msra.mxu0 0.0
    %177 = vmatprep.subr.mxu0 0.0
    %178 = vmatpush1.msra.mxu0 0.0
    %179 = vmatprep.subr.mxu0 0.0
    %180 = vmatpush1.msra.mxu0 0.0
    %181 = vmatprep.subr.mxu0 0.0
    %182 = vmatpush1.msra.mxu0 0.0
    %183 = vmatprep.mubr.f32.mxu0 0.0
    %184 = vmatmul.mubr.f32.gmra.mrb[0].mxu0 %v115
    %v185 = vpop.f32.mrb[0].mxu0
    %v186 = vadd.f32 %v70, %v185
    %v187 = vpop.f32.mrb[0].mxu0
    %188 = vmatprep.mubr.f32.mxu0 0.0
    %189 = vmatmul.mubr.f32.gmra.mrb[0].mxu0 %v117
    %v190 = vpop.f32.mrb[0].mxu0
    %v191 = vadd.f32 %v70, %v190
    %v192 = vpop.f32.mrb[0].mxu0
    %193 = vdwg.mxu0
    %v194 = vmax.f32 %v186, 0.0
    %v195 = vmax.f32 %v191, 0.0
    %v196 = vld [vmem:[%s3] sm:$0xff]
    %v197 = vld [vmem:[%s3 + $0x8] sm:$0xff]
    %v198 = vld [vmem:[%s4] sm:$0x1]
    %v200 = vlaneseq
    %v201 = vshrl.u32 %v200, 7
    %v202 = vsub.s32 0, %v201
    %v203 = vrot.slane %v198, %v202
    %vm205 = vcmask 130048
    %v207 = vsel %vm205, %v194, 0
    %v210 = vsel %vm205, %v195, 0
    %212 = vmatprep.subr.mxu0 0.0
    %213 = vmatpush1.msra.mxu0 %v196
    %214 = vmatprep.subr.mxu0 0.0
    %215 = vmatpush1.msra.mxu0 %v197
    %216 = vmatprep.subr.mxu0 0.0
    %217 = vmatpush1.msra.mxu0 0.0
    %218 = vmatprep.subr.mxu0 0.0
    %219 = vmatpush1.msra.mxu0 0.0
    %220 = vmatprep.subr.mxu0 0.0
    %221 = vmatpush1.msra.mxu0 0.0
    %222 = vmatprep.subr.mxu0 0.0
    %223 = vmatpush1.msra.mxu0 0.0
    %224 = vmatprep.subr.mxu0 0.0
    %225 = vmatpush1.msra.mxu0 0.0
    %226 = vmatprep.subr.mxu0 0.0
    %227 = vmatpush1.msra.mxu0 0.0
    %228 = vmatprep.subr.mxu0 0.0
    %229 = vmatpush1.msra.mxu0 0.0
    %230 = vmatprep.subr.mxu0 0.0
    %231 = vmatpush1.msra.mxu0 0.0
    %232 = vmatprep.subr.mxu0 0.0
    %233 = vmatpush1.msra.mxu0 0.0
    %234 = vmatprep.subr.mxu0 0.0
    %235 = vmatpush1.msra.mxu0 0.0
    %236 = vmatprep.subr.mxu0 0.0
    %237 = vmatpush1.msra.mxu0 0.0
    %238 = vmatprep.subr.mxu0 0.0
    %239 = vmatpush1.msra.mxu0 0.0
    %240 = vmatprep.subr.mxu0 0.0
    %241 = vmatpush1.msra.mxu0 0.0
    %242 = vmatprep.subr.mxu0 0.0
    %243 = vmatpush1.msra.mxu0 0.0
    %244 = vmatprep.subr.mxu0 0.0
    %245 = vmatpush1.msra.mxu0 0.0
    %246 = vmatprep.subr.mxu0 0.0
    %247 = vmatpush1.msra.mxu0 0.0
    %248 = vmatprep.subr.mxu0 0.0
    %249 = vmatpush1.msra.mxu0 0.0
    %250 = vmatprep.subr.mxu0 0.0
    %251 = vmatpush1.msra.mxu0 0.0
    %252 = vmatprep.subr.mxu0 0.0
    %253 = vmatpush1.msra.mxu0 0.0
    %254 = vmatprep.subr.mxu0 0.0
    %255 = vmatpush1.msra.mxu0 0.0
    %256 = vmatprep.subr.mxu0 0.0
    %257 = vmatpush1.msra.mxu0 0.0
    %258 = vmatprep.subr.mxu0 0.0
    %259 = vmatpush1.msra.mxu0 0.0
    %260 = vmatprep.subr.mxu0 0.0
    %261 = vmatpush1.msra.mxu0 0.0
    %262 = vmatprep.subr.mxu0 0.0
    %263 = vmatpush1.msra.mxu0 0.0
    %264 = vmatprep.subr.mxu0 0.0
    %265 = vmatpush1.msra.mxu0 0.0
    %266 = vmatprep.subr.mxu0 0.0
    %267 = vmatpush1.msra.mxu0 0.0
    %268 = vmatprep.subr.mxu0 0.0
    %269 = vmatpush1.msra.mxu0 0.0
    %270 = vmatprep.subr.mxu0 0.0
    %271 = vmatpush1.msra.mxu0 0.0
    %272 = vmatprep.subr.mxu0 0.0
    %273 = vmatpush1.msra.mxu0 0.0
    %274 = vmatprep.subr.mxu0 0.0
    %275 = vmatpush1.msra.mxu0 0.0
    %276 = vmatprep.mubr.f32.mxu0 0.0
    %277 = vmatmul.mubr.f32.gmra.mrb[0].mxu0 %v207
    %v278 = vpop.f32.mrb[0].mxu0
    %v279 = vadd.f32 %v203, %v278
    %v280 = vpop.f32.mrb[0].mxu0
    %281 = vmatprep.mubr.f32.mxu0 0.0
    %282 = vmatmul.mubr.f32.gmra.mrb[0].mxu0 %v210
    %v283 = vpop.f32.mrb[0].mxu0
    %v284 = vadd.f32 %v203, %v283
    %v285 = vpop.f32.mrb[0].mxu0
    %286 = vdwg.mxu0
    %v287 = vld [vmem:[%s5] sm:$0xff]
    %v288 = vld [vmem:[%s5 + $0x8] sm:$0xff]
    %v289 = vld [vmem:[%s5 + $0x10] sm:$0xff]
    %v290 = vld [vmem:[%s5 + $0x18] sm:$0xff]
    %v291 = vld [vmem:[%s5 + $0x20] sm:$0xff]
    %v292 = vld [vmem:[%s5 + $0x28] sm:$0xff]
    %v293 = vld [vmem:[%s5 + $0x30] sm:$0xff]
    %v294 = vld [vmem:[%s5 + $0x38] sm:$0xff]
    %v296 = vsel %vm205, %v279, 0
    %v299 = vsel %vm205, %v284, 0
    %301 = vmatprep.subr.mxu0 %v288
    %302 = vmatpush1.msra.mxu0 %v287
    %303 = vmatprep.subr.mxu0 %v292
    %304 = vmatpush1.msra.mxu0 %v291
    %305 = vmatprep.subr.mxu0 0.0
    %306 = vmatpush1.msra.mxu0 0.0
    %307 = vmatprep.subr.mxu0 0.0
    %308 = vmatpush1.msra.mxu0 0.0
    %309 = vmatprep.subr.mxu0 0.0
    %310 = vmatpush1.msra.mxu0 0.0
    %311 = vmatprep.subr.mxu0 0.0
    %312 = vmatpush1.msra.mxu0 0.0
    %313 = vmatprep.subr.mxu0 0.0
    %314 = vmatpush1.msra.mxu0 0.0
    %315 = vmatprep.subr.mxu0 0.0
    %316 = vmatpush1.msra.mxu0 0.0
    %317 = vmatprep.subr.mxu0 0.0
    %318 = vmatpush1.msra.mxu0 0.0
    %319 = vmatprep.subr.mxu0 0.0
    %320 = vmatpush1.msra.mxu0 0.0
    %321 = vmatprep.subr.mxu0 0.0
    %322 = vmatpush1.msra.mxu0 0.0
    %323 = vmatprep.subr.mxu0 0.0
    %324 = vmatpush1.msra.mxu0 0.0
    %325 = vmatprep.subr.mxu0 0.0
    %326 = vmatpush1.msra.mxu0 0.0
    %327 = vmatprep.subr.mxu0 0.0
    %328 = vmatpush1.msra.mxu0 0.0
    %329 = vmatprep.subr.mxu0 0.0
    %330 = vmatpush1.msra.mxu0 0.0
    %331 = vmatprep.subr.mxu0 0.0
    %332 = vmatpush1.msra.mxu0 0.0
    %333 = vmatprep.subr.mxu0 0.0
    %334 = vmatpush1.msra.mxu0 0.0
    %335 = vmatprep.subr.mxu0 0.0
    %336 = vmatpush1.msra.mxu0 0.0
    %337 = vmatprep.subr.mxu0 0.0
    %338 = vmatpush1.msra.mxu0 0.0
    %339 = vmatprep.subr.mxu0 0.0
    %340 = vmatpush1.msra.mxu0 0.0
    %341 = vmatprep.subr.mxu0 0.0
    %342 = vmatpush1.msra.mxu0 0.0
    %343 = vmatprep.subr.mxu0 0.0
    %344 = vmatpush1.msra.mxu0 0.0
    %345 = vmatprep.subr.mxu0 0.0
    %346 = vmatpush1.msra.mxu0 0.0
    %347 = vmatprep.subr.mxu0 0.0
    %348 = vmatpush1.msra.mxu0 0.0
    %349 = vmatprep.subr.mxu0 0.0
    %350 = vmatpush1.msra.mxu0 0.0
    %351 = vmatprep.subr.mxu0 0.0
    %352 = vmatpush1.msra.mxu0 0.0
    %353 = vmatprep.subr.mxu0 0.0
    %354 = vmatpush1.msra.mxu0 0.0
    %355 = vmatprep.subr.mxu0 0.0
    %356 = vmatpush1.msra.mxu0 0.0
    %357 = vmatprep.subr.mxu0 0.0
    %358 = vmatpush1.msra.mxu0 0.0
    %359 = vmatprep.subr.mxu0 0.0
    %360 = vmatpush1.msra.mxu0 0.0
    %361 = vmatprep.subr.mxu0 0.0
    %362 = vmatpush1.msra.mxu0 0.0
    %363 = vmatprep.subr.mxu0 0.0
    %364 = vmatpush1.msra.mxu0 0.0
    %365 = vmatprep.mubr.f32.mxu0 0.0
    %366 = vmatmul.mubr.f32.gmra.mrb[0].mxu0 %v296
    %v367 = vpop.f32.mrb[0].mxu0
    %v368 = vadd.f32 0.0, %v367
    %v369 = vpop.f32.mrb[0].mxu0
    %v370 = vadd.f32 0.0, %v369
    %371 = vmatprep.mubr.f32.mxu0 0.0
    %372 = vmatmul.mubr.f32.gmra.mrb[0].mxu0 %v299
    %v373 = vpop.f32.mrb[0].mxu0
    %v374 = vadd.f32 0.0, %v373
    %v375 = vpop.f32.mrb[0].mxu0
    %v376 = vadd.f32 0.0, %v375
    %377 = vdwg.mxu0
    %378 = vmatprep.subr.mxu0 %v290
    %379 = vmatpush1.msra.mxu0 %v289
    %380 = vmatprep.subr.mxu0 %v294
    %381 = vmatpush1.msra.mxu0 %v293
    %382 = vmatprep.subr.mxu0 0.0
    %383 = vmatpush1.msra.mxu0 0.0
    %384 = vmatprep.subr.mxu0 0.0
    %385 = vmatpush1.msra.mxu0 0.0
    %386 = vmatprep.subr.mxu0 0.0
    %387 = vmatpush1.msra.mxu0 0.0
    %388 = vmatprep.subr.mxu0 0.0
    %389 = vmatpush1.msra.mxu0 0.0
    %390 = vmatprep.subr.mxu0 0.0
    %391 = vmatpush1.msra.mxu0 0.0
    %392 = vmatprep.subr.mxu0 0.0
    %393 = vmatpush1.msra.mxu0 0.0
    %394 = vmatprep.subr.mxu0 0.0
    %395 = vmatpush1.msra.mxu0 0.0
    %396 = vmatprep.subr.mxu0 0.0
    %397 = vmatpush1.msra.mxu0 0.0
    %398 = vmatprep.subr.mxu0 0.0
    %399 = vmatpush1.msra.mxu0 0.0
    %400 = vmatprep.subr.mxu0 0.0
    %401 = vmatpush1.msra.mxu0 0.0
    %402 = vmatprep.subr.mxu0 0.0
    %403 = vmatpush1.msra.mxu0 0.0
    %404 = vmatprep.subr.mxu0 0.0
    %405 = vmatpush1.msra.mxu0 0.0
    %406 = vmatprep.subr.mxu0 0.0
    %407 = vmatpush1.msra.mxu0 0.0
    %408 = vmatprep.subr.mxu0 0.0
    %409 = vmatpush1.msra.mxu0 0.0
    %410 = vmatprep.subr.mxu0 0.0
    %411 = vmatpush1.msra.mxu0 0.0
    %412 = vmatprep.subr.mxu0 0.0
    %413 = vmatpush1.msra.mxu0 0.0
    %414 = vmatprep.subr.mxu0 0.0
    %415 = vmatpush1.msra.mxu0 0.0
    %416 = vmatprep.subr.mxu0 0.0
    %417 = vmatpush1.msra.mxu0 0.0
    %418 = vmatprep.subr.mxu0 0.0
    %419 = vmatpush1.msra.mxu0 0.0
    %420 = vmatprep.subr.mxu0 0.0
    %421 = vmatpush1.msra.mxu0 0.0
    %422 = vmatprep.subr.mxu0 0.0
    %423 = vmatpush1.msra.mxu0 0.0
    %424 = vmatprep.subr.mxu0 0.0
    %425 = vmatpush1.msra.mxu0 0.0
    %426 = vmatprep.subr.mxu0 0.0
    %427 = vmatpush1.msra.mxu0 0.0
    %428 = vmatprep.subr.mxu0 0.0
    %429 = vmatpush1.msra.mxu0 0.0
    %430 = vmatprep.subr.mxu0 0.0
    %431 = vmatpush1.msra.mxu0 0.0
    %432 = vmatprep.subr.mxu0 0.0
    %433 = vmatpush1.msra.mxu0 0.0
    %434 = vmatprep.subr.mxu0 0.0
    %435 = vmatpush1.msra.mxu0 0.0
    %436 = vmatprep.subr.mxu0 0.0
    %437 = vmatpush1.msra.mxu0 0.0
    %438 = vmatprep.subr.mxu0 0.0
    %439 = vmatpush1.msra.mxu0 0.0
    %440 = vmatprep.subr.mxu0 0.0
    %441 = vmatpush1.msra.mxu0 0.0
    %442 = vmatprep.mubr.f32.mxu0 0.0
    %443 = vmatmul.mubr.f32.gmra.mrb[0].mxu0 %v296
    %v444 = vpop.f32.mrb[0].mxu0
    %v445 = vadd.f32 0.0, %v444
    %v446 = vpop.f32.mrb[0].mxu0
    %v447 = vadd.f32 0.0, %v446
    %448 = vmatprep.mubr.f32.mxu0 0.0
    %449 = vmatmul.mubr.f32.gmra.mrb[0].mxu0 %v299
    %v450 = vpop.f32.mrb[0].mxu0
    %v451 = vadd.f32 0.0, %v450
    %v452 = vpop.f32.mrb[0].mxu0
    %v453 = vadd.f32 0.0, %v452
    %454 = vdwg.mxu0
    %v455 = vmax.f32 %v368, 0.0
    %v456 = vmax.f32 %v370, 0.0
    %v457 = vmax.f32 %v445, 0.0
    %v458 = vmax.f32 %v447, 0.0
    %v459 = vmax.f32 %v374, 0.0
    %v460 = vmax.f32 %v376, 0.0
    %v461 = vmax.f32 %v451, 0.0
    %v462 = vmax.f32 %v453, 0.0
    %v463 = vld [vmem:[%s7] sm:$0xff]
    %v464 = vld [vmem:[%s7 + $0x8] sm:$0xff]
    %v465 = vld [vmem:[%s7 + $0x10] sm:$0xff]
    %v466 = vld [vmem:[%s7 + $0x18] sm:$0xff]
    %v467 = vld [vmem:[%s7 + $0x20] sm:$0xff]
    %v468 = vld [vmem:[%s7 + $0x28] sm:$0xff]
    %v469 = vld [vmem:[%s7 + $0x30] sm:$0xff]
    %v470 = vld [vmem:[%s7 + $0x38] sm:$0xff]
    %v471 = vld [vmem:[%s7 + $0x40] sm:$0xff]
    %v472 = vld [vmem:[%s7 + $0x48] sm:$0xff]
    %v473 = vld [vmem:[%s7 + $0x50] sm:$0xff]
    %v474 = vld [vmem:[%s7 + $0x58] sm:$0xff]
    %v475 = vld [vmem:[%s7 + $0x60] sm:$0xff]
    %v476 = vld [vmem:[%s7 + $0x68] sm:$0xff]
    %v477 = vld [vmem:[%s7 + $0x70] sm:$0xff]
    %v478 = vld [vmem:[%s7 + $0x78] sm:$0xff]
    %v479 = vld [vmem:[%s7 + $0x80] sm:$0xff]
    %v480 = vld [vmem:[%s7 + $0x88] sm:$0xff]
    %v481 = vld [vmem:[%s7 + $0x90] sm:$0xff]
    %v482 = vld [vmem:[%s7 + $0x98] sm:$0xff]
    %v483 = vld [vmem:[%s7 + $0xa0] sm:$0xff]
    %v484 = vld [vmem:[%s7 + $0xa8] sm:$0xff]
    %v485 = vld [vmem:[%s7 + $0xb0] sm:$0xff]
    %v486 = vld [vmem:[%s7 + $0xb8] sm:$0xff]
    %v487 = vld [vmem:[%s7 + $0xc0] sm:$0xff]
    %v488 = vld [vmem:[%s7 + $0xc8] sm:$0xff]
    %v489 = vld [vmem:[%s7 + $0xd0] sm:$0xff]
    %v490 = vld [vmem:[%s7 + $0xd8] sm:$0xff]
    %v491 = vld [vmem:[%s7 + $0xe0] sm:$0xff]
    %v492 = vld [vmem:[%s7 + $0xe8] sm:$0xff]
    %v493 = vld [vmem:[%s7 + $0xf0] sm:$0xff]
    %v494 = vld [vmem:[%s7 + $0xf8] sm:$0xff]
    %v495 = vld [vmem:[%s7 + $0x100] sm:$0xff]
    %v496 = vld [vmem:[%s7 + $0x108] sm:$0xff]
    %v497 = vld [vmem:[%s7 + $0x110] sm:$0xff]
    %v498 = vld [vmem:[%s7 + $0x118] sm:$0xff]
    %v499 = vld [vmem:[%s7 + $0x120] sm:$0xff]
    %v500 = vld [vmem:[%s7 + $0x128] sm:$0xff]
    %v501 = vld [vmem:[%s7 + $0x130] sm:$0xff]
    %v502 = vld [vmem:[%s7 + $0x138] sm:$0xff]
    %v503 = vld [vmem:[%s7 + $0x140] sm:$0xff]
    %v504 = vld [vmem:[%s7 + $0x148] sm:$0xff]
    %v505 = vld [vmem:[%s7 + $0x150] sm:$0xff]
    %v506 = vld [vmem:[%s7 + $0x158] sm:$0xff]
    %v507 = vld [vmem:[%s7 + $0x160] sm:$0xff]
    %v508 = vld [vmem:[%s7 + $0x168] sm:$0xff]
    %v509 = vld [vmem:[%s7 + $0x170] sm:$0xff]
    %v510 = vld [vmem:[%s7 + $0x178] sm:$0xff]
    %v511 = vld [vmem:[%s7 + $0x180] sm:$0xff]
    %v512 = vld [vmem:[%s7 + $0x188] sm:$0xff]
    %v513 = vld [vmem:[%s7 + $0x190] sm:$0xff]
    %v514 = vld [vmem:[%s7 + $0x198] sm:$0xff]
    %v515 = vld [vmem:[%s7 + $0x1a0] sm:$0xff]
    %v516 = vld [vmem:[%s7 + $0x1a8] sm:$0xff]
    %v517 = vld [vmem:[%s7 + $0x1b0] sm:$0xff]
    %v518 = vld [vmem:[%s7 + $0x1b8] sm:$0xff]
    %v519 = vld [vmem:[%s7 + $0x1c0] sm:$0xff]
    %v520 = vld [vmem:[%s7 + $0x1c8] sm:$0xff]
    %v521 = vld [vmem:[%s7 + $0x1d0] sm:$0xff]
    %v522 = vld [vmem:[%s7 + $0x1d8] sm:$0xff]
    %v523 = vld [vmem:[%s7 + $0x1e0] sm:$0xff]
    %v524 = vld [vmem:[%s7 + $0x1e8] sm:$0xff]
    %v525 = vld [vmem:[%s7 + $0x1f0] sm:$0xff]
    %v526 = vld [vmem:[%s7 + $0x1f8] sm:$0xff]
    %527 = vmatprep.subr.mxu0 0.0
    %528 = vmatpush1.msra.mxu0 %v463
    %529 = vmatprep.subr.mxu0 0.0
    %530 = vmatpush1.msra.mxu0 %v464
    %531 = vmatprep.subr.mxu0 0.0
    %532 = vmatpush1.msra.mxu0 %v465
    %533 = vmatprep.subr.mxu0 0.0
    %534 = vmatpush1.msra.mxu0 %v466
    %535 = vmatprep.subr.mxu0 0.0
    %536 = vmatpush1.msra.mxu0 %v467
    %537 = vmatprep.subr.mxu0 0.0
    %538 = vmatpush1.msra.mxu0 %v468
    %539 = vmatprep.subr.mxu0 0.0
    %540 = vmatpush1.msra.mxu0 %v469
    %541 = vmatprep.subr.mxu0 0.0
    %542 = vmatpush1.msra.mxu0 %v470
    %543 = vmatprep.subr.mxu0 0.0
    %544 = vmatpush1.msra.mxu0 %v471
    %545 = vmatprep.subr.mxu0 0.0
    %546 = vmatpush1.msra.mxu0 %v472
    %547 = vmatprep.subr.mxu0 0.0
    %548 = vmatpush1.msra.mxu0 %v473
    %549 = vmatprep.subr.mxu0 0.0
    %550 = vmatpush1.msra.mxu0 %v474
    %551 = vmatprep.subr.mxu0 0.0
    %552 = vmatpush1.msra.mxu0 %v475
    %553 = vmatprep.subr.mxu0 0.0
    %554 = vmatpush1.msra.mxu0 %v476
    %555 = vmatprep.subr.mxu0 0.0
    %556 = vmatpush1.msra.mxu0 %v477
    %557 = vmatprep.subr.mxu0 0.0
    %558 = vmatpush1.msra.mxu0 %v478
    %559 = vmatprep.subr.mxu0 0.0
    %560 = vmatpush1.msra.mxu0 %v479
    %561 = vmatprep.subr.mxu0 0.0
    %562 = vmatpush1.msra.mxu0 %v480
    %563 = vmatprep.subr.mxu0 0.0
    %564 = vmatpush1.msra.mxu0 %v481
    %565 = vmatprep.subr.mxu0 0.0
    %566 = vmatpush1.msra.mxu0 %v482
    %567 = vmatprep.subr.mxu0 0.0
    %568 = vmatpush1.msra.mxu0 %v483
    %569 = vmatprep.subr.mxu0 0.0
    %570 = vmatpush1.msra.mxu0 %v484
    %571 = vmatprep.subr.mxu0 0.0
    %572 = vmatpush1.msra.mxu0 %v485
    %573 = vmatprep.subr.mxu0 0.0
    %574 = vmatpush1.msra.mxu0 %v486
    %575 = vmatprep.subr.mxu0 0.0
    %576 = vmatpush1.msra.mxu0 %v487
    %577 = vmatprep.subr.mxu0 0.0
    %578 = vmatpush1.msra.mxu0 %v488
    %579 = vmatprep.subr.mxu0 0.0
    %580 = vmatpush1.msra.mxu0 %v489
    %581 = vmatprep.subr.mxu0 0.0
    %582 = vmatpush1.msra.mxu0 %v490
    %583 = vmatprep.subr.mxu0 0.0
    %584 = vmatpush1.msra.mxu0 %v491
    %585 = vmatprep.subr.mxu0 0.0
    %586 = vmatpush1.msra.mxu0 %v492
    %587 = vmatprep.subr.mxu0 0.0
    %588 = vmatpush1.msra.mxu0 %v493
    %589 = vmatprep.subr.mxu0 0.0
    %590 = vmatpush1.msra.mxu0 %v494
    %591 = vmatprep.mubr.f32.mxu0 %v456
    %592 = vmatmul.mubr.f32.gmra.mrb[0].mxu0 %v455
    %v593 = vpop.f32.mrb[0].mxu0
    %v594 = vadd.f32 0.0, %v593
    %v595 = vpop.f32.mrb[0].mxu0
    %596 = vmatprep.mubr.f32.mxu0 %v460
    %597 = vmatmul.mubr.f32.gmra.mrb[0].mxu0 %v459
    %v598 = vpop.f32.mrb[0].mxu0
    %v599 = vadd.f32 0.0, %v598
    %v600 = vpop.f32.mrb[0].mxu0
    %601 = vdwg.mxu0
    %602 = vmatprep.subr.mxu0 0.0
    %603 = vmatpush1.msra.mxu0 %v495
    %604 = vmatprep.subr.mxu0 0.0
    %605 = vmatpush1.msra.mxu0 %v496
    %606 = vmatprep.subr.mxu0 0.0
    %607 = vmatpush1.msra.mxu0 %v497
    %608 = vmatprep.subr.mxu0 0.0
    %609 = vmatpush1.msra.mxu0 %v498
    %610 = vmatprep.subr.mxu0 0.0
    %611 = vmatpush1.msra.mxu0 %v499
    %612 = vmatprep.subr.mxu0 0.0
    %613 = vmatpush1.msra.mxu0 %v500
    %614 = vmatprep.subr.mxu0 0.0
    %615 = vmatpush1.msra.mxu0 %v501
    %616 = vmatprep.subr.mxu0 0.0
    %617 = vmatpush1.msra.mxu0 %v502
    %618 = vmatprep.subr.mxu0 0.0
    %619 = vmatpush1.msra.mxu0 %v503
    %620 = vmatprep.subr.mxu0 0.0
    %621 = vmatpush1.msra.mxu0 %v504
    %622 = vmatprep.subr.mxu0 0.0
    %623 = vmatpush1.msra.mxu0 %v505
    %624 = vmatprep.subr.mxu0 0.0
    %625 = vmatpush1.msra.mxu0 %v506
    %626 = vmatprep.subr.mxu0 0.0
    %627 = vmatpush1.msra.mxu0 %v507
    %628 = vmatprep.subr.mxu0 0.0
    %629 = vmatpush1.msra.mxu0 %v508
    %630 = vmatprep.subr.mxu0 0.0
    %631 = vmatpush1.msra.mxu0 %v509
    %632 = vmatprep.subr.mxu0 0.0
    %633 = vmatpush1.msra.mxu0 %v510
    %634 = vmatprep.subr.mxu0 0.0
    %635 = vmatpush1.msra.mxu0 %v511
    %636 = vmatprep.subr.mxu0 0.0
    %637 = vmatpush1.msra.mxu0 %v512
    %638 = vmatprep.subr.mxu0 0.0
    %639 = vmatpush1.msra.mxu0 %v513
    %640 = vmatprep.subr.mxu0 0.0
    %641 = vmatpush1.msra.mxu0 %v514
    %642 = vmatprep.subr.mxu0 0.0
    %643 = vmatpush1.msra.mxu0 %v515
    %644 = vmatprep.subr.mxu0 0.0
    %645 = vmatpush1.msra.mxu0 %v516
    %646 = vmatprep.subr.mxu0 0.0
    %647 = vmatpush1.msra.mxu0 %v517
    %648 = vmatprep.subr.mxu0 0.0
    %649 = vmatpush1.msra.mxu0 %v518
    %650 = vmatprep.subr.mxu0 0.0
    %651 = vmatpush1.msra.mxu0 %v519
    %652 = vmatprep.subr.mxu0 0.0
    %653 = vmatpush1.msra.mxu0 %v520
    %654 = vmatprep.subr.mxu0 0.0
    %655 = vmatpush1.msra.mxu0 %v521
    %656 = vmatprep.subr.mxu0 0.0
    %657 = vmatpush1.msra.mxu0 %v522
    %658 = vmatprep.subr.mxu0 0.0
    %659 = vmatpush1.msra.mxu0 %v523
    %660 = vmatprep.subr.mxu0 0.0
    %661 = vmatpush1.msra.mxu0 %v524
    %662 = vmatprep.subr.mxu0 0.0
    %663 = vmatpush1.msra.mxu0 %v525
    %664 = vmatprep.subr.mxu0 0.0
    %665 = vmatpush1.msra.mxu0 %v526
    %666 = vmatprep.mubr.f32.mxu0 %v458
    %667 = vmatmul.mubr.f32.gmra.mrb[0].mxu0 %v457
    %v668 = vpop.f32.mrb[0].mxu0
    %v669 = vadd.f32 %v594, %v668
    %v670 = vpop.f32.mrb[0].mxu0
    %671 = vmatprep.mubr.f32.mxu0 %v462
    %672 = vmatmul.mubr.f32.gmra.mrb[0].mxu0 %v461
    %v673 = vpop.f32.mrb[0].mxu0
    %v674 = vadd.f32 %v599, %v673
    %v675 = vpop.f32.mrb[0].mxu0
    %676 = vdwg.mxu0
    %v677 = vld [vmem:[%s6] sm:$0xff]
    %v678 = vld [vmem:[%s6 + $0x8] sm:$0xff]
    %v679 = vld [vmem:[%s6 + $0x10] sm:$0xff]
    %v680 = vld [vmem:[%s6 + $0x18] sm:$0xff]
    %v681 = vld [vmem:[%s6 + $0x20] sm:$0xff]
    %v682 = vld [vmem:[%s6 + $0x28] sm:$0xff]
    %v683 = vld [vmem:[%s6 + $0x30] sm:$0xff]
    %v684 = vld [vmem:[%s6 + $0x38] sm:$0xff]
    %v685 = vld [vmem:[%s6 + $0x40] sm:$0xff]
    %v686 = vld [vmem:[%s6 + $0x48] sm:$0xff]
    %v687 = vld [vmem:[%s6 + $0x50] sm:$0xff]
    %v688 = vld [vmem:[%s6 + $0x58] sm:$0xff]
    %v689 = vld [vmem:[%s6 + $0x60] sm:$0xff]
    %v690 = vld [vmem:[%s6 + $0x68] sm:$0xff]
    %v691 = vld [vmem:[%s6 + $0x70] sm:$0xff]
    %v692 = vld [vmem:[%s6 + $0x78] sm:$0xff]
    %v693 = vld [vmem:[%s8] sm:$0xff]
    %v694 = vld [vmem:[%s8 + $0x8] sm:$0xff]
    %v695 = vld [vmem:[%s8 + $0x10] sm:$0xff]
    %v696 = vld [vmem:[%s8 + $0x18] sm:$0xff]
    %v697 = vld [vmem:[%s8 + $0x20] sm:$0xff]
    %v698 = vld [vmem:[%s8 + $0x28] sm:$0xff]
    %v699 = vld [vmem:[%s8 + $0x30] sm:$0xff]
    %v700 = vld [vmem:[%s8 + $0x38] sm:$0xff]
    %v701 = vld [vmem:[%s8 + $0x40] sm:$0xff]
    %v702 = vld [vmem:[%s8 + $0x48] sm:$0xff]
    %v703 = vld [vmem:[%s8 + $0x50] sm:$0xff]
    %v704 = vld [vmem:[%s8 + $0x58] sm:$0xff]
    %v705 = vld [vmem:[%s8 + $0x60] sm:$0xff]
    %v706 = vld [vmem:[%s8 + $0x68] sm:$0xff]
    %v707 = vld [vmem:[%s8 + $0x70] sm:$0xff]
    %v708 = vld [vmem:[%s8 + $0x78] sm:$0xff]
    %v709 = vld [vmem:[%s8 + $0x80] sm:$0xff]
    %v710 = vld [vmem:[%s8 + $0x88] sm:$0xff]
    %v711 = vld [vmem:[%s8 + $0x90] sm:$0xff]
    %v712 = vld [vmem:[%s8 + $0x98] sm:$0xff]
    %v713 = vld [vmem:[%s8 + $0xa0] sm:$0xff]
    %v714 = vld [vmem:[%s8 + $0xa8] sm:$0xff]
    %v715 = vld [vmem:[%s8 + $0xb0] sm:$0xff]
    %v716 = vld [vmem:[%s8 + $0xb8] sm:$0xff]
    %v717 = vld [vmem:[%s8 + $0xc0] sm:$0xff]
    %v718 = vld [vmem:[%s8 + $0xc8] sm:$0xff]
    %v719 = vld [vmem:[%s8 + $0xd0] sm:$0xff]
    %v720 = vld [vmem:[%s8 + $0xd8] sm:$0xff]
    %v721 = vld [vmem:[%s8 + $0xe0] sm:$0xff]
    %v722 = vld [vmem:[%s8 + $0xe8] sm:$0xff]
    %v723 = vld [vmem:[%s8 + $0xf0] sm:$0xff]
    %v724 = vld [vmem:[%s8 + $0xf8] sm:$0xff]
    %v725 = vld [vmem:[%s8 + $0x100] sm:$0xff]
    %v726 = vld [vmem:[%s8 + $0x108] sm:$0xff]
    %v727 = vld [vmem:[%s8 + $0x110] sm:$0xff]
    %v728 = vld [vmem:[%s8 + $0x118] sm:$0xff]
    %v729 = vld [vmem:[%s8 + $0x120] sm:$0xff]
    %v730 = vld [vmem:[%s8 + $0x128] sm:$0xff]
    %v731 = vld [vmem:[%s8 + $0x130] sm:$0xff]
    %v732 = vld [vmem:[%s8 + $0x138] sm:$0xff]
    %v733 = vld [vmem:[%s8 + $0x140] sm:$0xff]
    %v734 = vld [vmem:[%s8 + $0x148] sm:$0xff]
    %v735 = vld [vmem:[%s8 + $0x150] sm:$0xff]
    %v736 = vld [vmem:[%s8 + $0x158] sm:$0xff]
    %v737 = vld [vmem:[%s8 + $0x160] sm:$0xff]
    %v738 = vld [vmem:[%s8 + $0x168] sm:$0xff]
    %v739 = vld [vmem:[%s8 + $0x170] sm:$0xff]
    %v740 = vld [vmem:[%s8 + $0x178] sm:$0xff]
    %v741 = vld [vmem:[%s8 + $0x180] sm:$0xff]
    %v742 = vld [vmem:[%s8 + $0x188] sm:$0xff]
    %v743 = vld [vmem:[%s8 + $0x190] sm:$0xff]
    %v744 = vld [vmem:[%s8 + $0x198] sm:$0xff]
    %v745 = vld [vmem:[%s8 + $0x1a0] sm:$0xff]
    %v746 = vld [vmem:[%s8 + $0x1a8] sm:$0xff]
    %v747 = vld [vmem:[%s8 + $0x1b0] sm:$0xff]
    %v748 = vld [vmem:[%s8 + $0x1b8] sm:$0xff]
    %v749 = vld [vmem:[%s8 + $0x1c0] sm:$0xff]
    %v750 = vld [vmem:[%s8 + $0x1c8] sm:$0xff]
    %v751 = vld [vmem:[%s8 + $0x1d0] sm:$0xff]
    %v752 = vld [vmem:[%s8 + $0x1d8] sm:$0xff]
    %v753 = vld [vmem:[%s8 + $0x1e0] sm:$0xff]
    %v754 = vld [vmem:[%s8 + $0x1e8] sm:$0xff]
    %v755 = vld [vmem:[%s8 + $0x1f0] sm:$0xff]
    %v756 = vld [vmem:[%s8 + $0x1f8] sm:$0xff]
    %v757 = vld [vmem:[%s9] sm:$0xf]
    %v758 = vld [vmem:[%s10] sm:$0xff]
    %v759 = vld [vmem:[%s10 + $0x8] sm:$0xff]
    %v760 = vld [vmem:[%s10 + $0x10] sm:$0xff]
    %v761 = vld [vmem:[%s10 + $0x18] sm:$0xff]
    %v762 = vld [vmem:[%s10 + $0x20] sm:$0xff]
    %v763 = vld [vmem:[%s10 + $0x28] sm:$0xff]
    %v764 = vld [vmem:[%s10 + $0x30] sm:$0xff]
    %v765 = vld [vmem:[%s10 + $0x38] sm:$0xff]
    %v766 = vld [vmem:[%s10 + $0x40] sm:$0xff]
    %v767 = vld [vmem:[%s10 + $0x48] sm:$0xff]
    %v768 = vld [vmem:[%s10 + $0x50] sm:$0xff]
    %v769 = vld [vmem:[%s10 + $0x58] sm:$0xff]
    %v770 = vld [vmem:[%s10 + $0x60] sm:$0xff]
    %v771 = vld [vmem:[%s10 + $0x68] sm:$0xff]
    %v772 = vld [vmem:[%s10 + $0x70] sm:$0xff]
    %v773 = vld [vmem:[%s10 + $0x78] sm:$0xff]
    %v774 = vld [vmem:[%s11] sm:$0xff]
    %v775 = vld [vmem:[%s11 + $0x8] sm:$0xff]
    %v776 = vld [vmem:[%s11 + $0x10] sm:$0xff]
    %v777 = vld [vmem:[%s11 + $0x18] sm:$0xff]
    %v778 = vld [vmem:[%s11 + $0x20] sm:$0xff]
    %v779 = vld [vmem:[%s11 + $0x28] sm:$0xff]
    %v780 = vld [vmem:[%s11 + $0x30] sm:$0xff]
    %v781 = vld [vmem:[%s11 + $0x38] sm:$0xff]
    %v782 = vld [vmem:[%s11 + $0x40] sm:$0xff]
    %v783 = vld [vmem:[%s11 + $0x48] sm:$0xff]
    %v784 = vld [vmem:[%s11 + $0x50] sm:$0xff]
    %v785 = vld [vmem:[%s11 + $0x58] sm:$0xff]
    %v786 = vld [vmem:[%s11 + $0x60] sm:$0xff]
    %v787 = vld [vmem:[%s11 + $0x68] sm:$0xff]
    %v788 = vld [vmem:[%s11 + $0x70] sm:$0xff]
    %v789 = vld [vmem:[%s11 + $0x78] sm:$0xff]
    %vm790 = vcmask 261120
    %v792 = vsel %vm790, 0.0, 0
    %794 = vmatprep.subr.mxu0 %v678
    %795 = vmatpush1.msra.mxu0 %v677
    %796 = vmatprep.subr.mxu0 %v682
    %797 = vmatpush1.msra.mxu0 %v681
    %798 = vmatprep.subr.mxu0 %v686
    %799 = vmatpush1.msra.mxu0 %v685
    %800 = vmatprep.subr.mxu0 %v690
    %801 = vmatpush1.msra.mxu0 %v689
    %802 = vmatprep.subr.mxu0 0.0
    %803 = vmatpush1.msra.mxu0 0.0
    %804 = vmatprep.subr.mxu0 0.0
    %805 = vmatpush1.msra.mxu0 0.0
    %806 = vmatprep.subr.mxu0 0.0
    %807 = vmatpush1.msra.mxu0 0.0
    %808 = vmatprep.subr.mxu0 0.0
    %809 = vmatpush1.msra.mxu0 0.0
    %810 = vmatprep.subr.mxu0 0.0
    %811 = vmatpush1.msra.mxu0 0.0
    %812 = vmatprep.subr.mxu0 0.0
    %813 = vmatpush1.msra.mxu0 0.0
    %814 = vmatprep.subr.mxu0 0.0
    %815 = vmatpush1.msra.mxu0 0.0
    %816 = vmatprep.subr.mxu0 0.0
    %817 = vmatpush1.msra.mxu0 0.0
    %818 = vmatprep.subr.mxu0 0.0
    %819 = vmatpush1.msra.mxu0 0.0
    %820 = vmatprep.subr.mxu0 0.0
    %821 = vmatpush1.msra.mxu0 0.0
    %822 = vmatprep.subr.mxu0 0.0
    %823 = vmatpush1.msra.mxu0 0.0
    %824 = vmatprep.subr.mxu0 0.0
    %825 = vmatpush1.msra.mxu0 0.0
    %826 = vmatprep.subr.mxu0 0.0
    %827 = vmatpush1.msra.mxu0 0.0
    %828 = vmatprep.subr.mxu0 0.0
    %829 = vmatpush1.msra.mxu0 0.0
    %830 = vmatprep.subr.mxu0 0.0
    %831 = vmatpush1.msra.mxu0 0.0
    %832 = vmatprep.subr.mxu0 0.0
    %833 = vmatpush1.msra.mxu0 0.0
    %834 = vmatprep.subr.mxu0 0.0
    %835 = vmatpush1.msra.mxu0 0.0
    %836 = vmatprep.subr.mxu0 0.0
    %837 = vmatpush1.msra.mxu0 0.0
    %838 = vmatprep.subr.mxu0 0.0
    %839 = vmatpush1.msra.mxu0 0.0
    %840 = vmatprep.subr.mxu0 0.0
    %841 = vmatpush1.msra.mxu0 0.0
    %842 = vmatprep.subr.mxu0 0.0
    %843 = vmatpush1.msra.mxu0 0.0
    %844 = vmatprep.subr.mxu0 0.0
    %845 = vmatpush1.msra.mxu0 0.0
    %846 = vmatprep.subr.mxu0 0.0
    %847 = vmatpush1.msra.mxu0 0.0
    %848 = vmatprep.subr.mxu0 0.0
    %849 = vmatpush1.msra.mxu0 0.0
    %850 = vmatprep.subr.mxu0 0.0
    %851 = vmatpush1.msra.mxu0 0.0
    %852 = vmatprep.subr.mxu0 0.0
    %853 = vmatpush1.msra.mxu0 0.0
    %854 = vmatprep.subr.mxu0 0.0
    %855 = vmatpush1.msra.mxu0 0.0
    %856 = vmatprep.subr.mxu0 0.0
    %857 = vmatpush1.msra.mxu0 0.0
    %858 = vmatprep.mubr.f32.mxu0 0.0
    %859 = vmatmul.mubr.f32.gmra.mrb[0].mxu0 %v792
    %v860 = vpop.f32.mrb[0].mxu0
    %v861 = vadd.f32 0.0, %v860
    %v862 = vpop.f32.mrb[0].mxu0
    %v863 = vadd.f32 0.0, %v862
    %864 = vdwg.mxu0
    %865 = vmatprep.subr.mxu0 %v680
    %866 = vmatpush1.msra.mxu0 %v679
    %867 = vmatprep.subr.mxu0 %v684
    %868 = vmatpush1.msra.mxu0 %v683
    %869 = vmatprep.subr.mxu0 %v688
    %870 = vmatpush1.msra.mxu0 %v687
    %871 = vmatprep.subr.mxu0 %v692
    %872 = vmatpush1.msra.mxu0 %v691
    %873 = vmatprep.subr.mxu0 0.0
    %874 = vmatpush1.msra.mxu0 0.0
    %875 = vmatprep.subr.mxu0 0.0
    %876 = vmatpush1.msra.mxu0 0.0
    %877 = vmatprep.subr.mxu0 0.0
    %878 = vmatpush1.msra.mxu0 0.0
    %879 = vmatprep.subr.mxu0 0.0
    %880 = vmatpush1.msra.mxu0 0.0
    %881 = vmatprep.subr.mxu0 0.0
    %882 = vmatpush1.msra.mxu0 0.0
    %883 = vmatprep.subr.mxu0 0.0
    %884 = vmatpush1.msra.mxu0 0.0
    %885 = vmatprep.subr.mxu0 0.0
    %886 = vmatpush1.msra.mxu0 0.0
    %887 = vmatprep.subr.mxu0 0.0
    %888 = vmatpush1.msra.mxu0 0.0
    %889 = vmatprep.subr.mxu0 0.0
    %890 = vmatpush1.msra.mxu0 0.0
    %891 = vmatprep.subr.mxu0 0.0
    %892 = vmatpush1.msra.mxu0 0.0
    %893 = vmatprep.subr.mxu0 0.0
    %894 = vmatpush1.msra.mxu0 0.0
    %895 = vmatprep.subr.mxu0 0.0
    %896 = vmatpush1.msra.mxu0 0.0
    %897 = vmatprep.subr.mxu0 0.0
    %898 = vmatpush1.msra.mxu0 0.0
    %899 = vmatprep.subr.mxu0 0.0
    %900 = vmatpush1.msra.mxu0 0.0
    %901 = vmatprep.subr.mxu0 0.0
    %902 = vmatpush1.msra.mxu0 0.0
    %903 = vmatprep.subr.mxu0 0.0
    %904 = vmatpush1.msra.mxu0 0.0
    %905 = vmatprep.subr.mxu0 0.0
    %906 = vmatpush1.msra.mxu0 0.0
    %907 = vmatprep.subr.mxu0 0.0
    %908 = vmatpush1.msra.mxu0 0.0
    %909 = vmatprep.subr.mxu0 0.0
    %910 = vmatpush1.msra.mxu0 0.0
    %911 = vmatprep.subr.mxu0 0.0
    %912 = vmatpush1.msra.mxu0 0.0
    %913 = vmatprep.subr.mxu0 0.0
    %914 = vmatpush1.msra.mxu0 0.0
    %915 = vmatprep.subr.mxu0 0.0
    %916 = vmatpush1.msra.mxu0 0.0
    %917 = vmatprep.subr.mxu0 0.0
    %918 = vmatpush1.msra.mxu0 0.0
    %919 = vmatprep.subr.mxu0 0.0
    %920 = vmatpush1.msra.mxu0 0.0
    %921 = vmatprep.subr.mxu0 0.0
    %922 = vmatpush1.msra.mxu0 0.0
    %923 = vmatprep.subr.mxu0 0.0
    %924 = vmatpush1.msra.mxu0 0.0
    %925 = vmatprep.subr.mxu0 0.0
    %926 = vmatpush1.msra.mxu0 0.0
    %927 = vmatprep.subr.mxu0 0.0
    %928 = vmatpush1.msra.mxu0 0.0
    %929 = vmatprep.mubr.f32.mxu0 0.0
    %930 = vmatmul.mubr.f32.gmra.mrb[0].mxu0 %v792
    %v931 = vpop.f32.mrb[0].mxu0
    %v932 = vadd.f32 0.0, %v931
    %v933 = vpop.f32.mrb[0].mxu0
    %v934 = vadd.f32 0.0, %v933
    %935 = vdwg.mxu0
    %v936 = vmax.f32 %v861, 0.0
    %v937 = vmax.f32 %v863, 0.0
    %v938 = vmax.f32 %v932, 0.0
    %v939 = vmax.f32 %v934, 0.0
    %940 = vmatprep.subr.mxu0 0.0
    %941 = vmatpush1.msra.mxu0 %v693
    %942 = vmatprep.subr.mxu0 0.0
    %943 = vmatpush1.msra.mxu0 %v694
    %944 = vmatprep.subr.mxu0 0.0
    %945 = vmatpush1.msra.mxu0 %v695
    %946 = vmatprep.subr.mxu0 0.0
    %947 = vmatpush1.msra.mxu0 %v696
    %948 = vmatprep.subr.mxu0 0.0
    %949 = vmatpush1.msra.mxu0 %v697
    %950 = vmatprep.subr.mxu0 0.0
    %951 = vmatpush1.msra.mxu0 %v698
    %952 = vmatprep.subr.mxu0 0.0
    %953 = vmatpush1.msra.mxu0 %v699
    %954 = vmatprep.subr.mxu0 0.0
    %955 = vmatpush1.msra.mxu0 %v700
    %956 = vmatprep.subr.mxu0 0.0
    %957 = vmatpush1.msra.mxu0 %v701
    %958 = vmatprep.subr.mxu0 0.0
    %959 = vmatpush1.msra.mxu0 %v702
    %960 = vmatprep.subr.mxu0 0.0
    %961 = vmatpush1.msra.mxu0 %v703
    %962 = vmatprep.subr.mxu0 0.0
    %963 = vmatpush1.msra.mxu0 %v704
    %964 = vmatprep.subr.mxu0 0.0
    %965 = vmatpush1.msra.mxu0 %v705
    %966 = vmatprep.subr.mxu0 0.0
    %967 = vmatpush1.msra.mxu0 %v706
    %968 = vmatprep.subr.mxu0 0.0
    %969 = vmatpush1.msra.mxu0 %v707
    %970 = vmatprep.subr.mxu0 0.0
    %971 = vmatpush1.msra.mxu0 %v708
    %972 = vmatprep.subr.mxu0 0.0
    %973 = vmatpush1.msra.mxu0 %v709
    %974 = vmatprep.subr.mxu0 0.0
    %975 = vmatpush1.msra.mxu0 %v710
    %976 = vmatprep.subr.mxu0 0.0
    %977 = vmatpush1.msra.mxu0 %v711
    %978 = vmatprep.subr.mxu0 0.0
    %979 = vmatpush1.msra.mxu0 %v712
    %980 = vmatprep.subr.mxu0 0.0
    %981 = vmatpush1.msra.mxu0 %v713
    %982 = vmatprep.subr.mxu0 0.0
    %983 = vmatpush1.msra.mxu0 %v714
    %984 = vmatprep.subr.mxu0 0.0
    %985 = vmatpush1.msra.mxu0 %v715
    %986 = vmatprep.subr.mxu0 0.0
    %987 = vmatpush1.msra.mxu0 %v716
    %988 = vmatprep.subr.mxu0 0.0
    %989 = vmatpush1.msra.mxu0 %v717
    %990 = vmatprep.subr.mxu0 0.0
    %991 = vmatpush1.msra.mxu0 %v718
    %992 = vmatprep.subr.mxu0 0.0
    %993 = vmatpush1.msra.mxu0 %v719
    %994 = vmatprep.subr.mxu0 0.0
    %995 = vmatpush1.msra.mxu0 %v720
    %996 = vmatprep.subr.mxu0 0.0
    %997 = vmatpush1.msra.mxu0 %v721
    %998 = vmatprep.subr.mxu0 0.0
    %999 = vmatpush1.msra.mxu0 %v722
    %1000 = vmatprep.subr.mxu0 0.0
    %1001 = vmatpush1.msra.mxu0 %v723
    %1002 = vmatprep.subr.mxu0 0.0
    %1003 = vmatpush1.msra.mxu0 %v724
    %1004 = vmatprep.mubr.f32.mxu0 %v937
    %1005 = vmatmul.mubr.f32.gmra.mrb[0].mxu0 %v936
    %v1006 = vpop.f32.mrb[0].mxu0
    %v1007 = vadd.f32 0.0, %v1006
    %v1008 = vpop.f32.mrb[0].mxu0
    %1009 = vdwg.mxu0
    %1010 = vmatprep.subr.mxu0 0.0
    %1011 = vmatpush1.msra.mxu0 %v725
    %1012 = vmatprep.subr.mxu0 0.0
    %1013 = vmatpush1.msra.mxu0 %v726
    %1014 = vmatprep.subr.mxu0 0.0
    %1015 = vmatpush1.msra.mxu0 %v727
    %1016 = vmatprep.subr.mxu0 0.0
    %1017 = vmatpush1.msra.mxu0 %v728
    %1018 = vmatprep.subr.mxu0 0.0
    %1019 = vmatpush1.msra.mxu0 %v729
    %1020 = vmatprep.subr.mxu0 0.0
    %1021 = vmatpush1.msra.mxu0 %v730
    %1022 = vmatprep.subr.mxu0 0.0
    %1023 = vmatpush1.msra.mxu0 %v731
    %1024 = vmatprep.subr.mxu0 0.0
    %1025 = vmatpush1.msra.mxu0 %v732
    %1026 = vmatprep.subr.mxu0 0.0
    %1027 = vmatpush1.msra.mxu0 %v733
    %1028 = vmatprep.subr.mxu0 0.0
    %1029 = vmatpush1.msra.mxu0 %v734
    %1030 = vmatprep.subr.mxu0 0.0
    %1031 = vmatpush1.msra.mxu0 %v735
    %1032 = vmatprep.subr.mxu0 0.0
    %1033 = vmatpush1.msra.mxu0 %v736
    %1034 = vmatprep.subr.mxu0 0.0
    %1035 = vmatpush1.msra.mxu0 %v737
    %1036 = vmatprep.subr.mxu0 0.0
    %1037 = vmatpush1.msra.mxu0 %v738
    %1038 = vmatprep.subr.mxu0 0.0
    %1039 = vmatpush1.msra.mxu0 %v739
    %1040 = vmatprep.subr.mxu0 0.0
    %1041 = vmatpush1.msra.mxu0 %v740
    %1042 = vmatprep.subr.mxu0 0.0
    %1043 = vmatpush1.msra.mxu0 %v741
    %1044 = vmatprep.subr.mxu0 0.0
    %1045 = vmatpush1.msra.mxu0 %v742
    %1046 = vmatprep.subr.mxu0 0.0
    %1047 = vmatpush1.msra.mxu0 %v743
    %1048 = vmatprep.subr.mxu0 0.0
    %1049 = vmatpush1.msra.mxu0 %v744
    %1050 = vmatprep.subr.mxu0 0.0
    %1051 = vmatpush1.msra.mxu0 %v745
    %1052 = vmatprep.subr.mxu0 0.0
    %1053 = vmatpush1.msra.mxu0 %v746
    %1054 = vmatprep.subr.mxu0 0.0
    %1055 = vmatpush1.msra.mxu0 %v747
    %1056 = vmatprep.subr.mxu0 0.0
    %1057 = vmatpush1.msra.mxu0 %v748
    %1058 = vmatprep.subr.mxu0 0.0
    %1059 = vmatpush1.msra.mxu0 %v749
    %1060 = vmatprep.subr.mxu0 0.0
    %1061 = vmatpush1.msra.mxu0 %v750
    %1062 = vmatprep.subr.mxu0 0.0
    %1063 = vmatpush1.msra.mxu0 %v751
    %1064 = vmatprep.subr.mxu0 0.0
    %1065 = vmatpush1.msra.mxu0 %v752
    %1066 = vmatprep.subr.mxu0 0.0
    %1067 = vmatpush1.msra.mxu0 %v753
    %1068 = vmatprep.subr.mxu0 0.0
    %1069 = vmatpush1.msra.mxu0 %v754
    %1070 = vmatprep.subr.mxu0 0.0
    %1071 = vmatpush1.msra.mxu0 %v755
    %1072 = vmatprep.subr.mxu0 0.0
    %1073 = vmatpush1.msra.mxu0 %v756
    %1074 = vmatprep.mubr.f32.mxu0 %v939
    %1075 = vmatmul.mubr.f32.gmra.mrb[0].mxu0 %v938
    %v1076 = vpop.f32.mrb[0].mxu0
    %v1077 = vadd.f32 %v1007, %v1076
    %v1078 = vpop.f32.mrb[0].mxu0
    %1079 = vdwg.mxu0
    %v1080 = vadd.f32 %v669, %v1077
    %vm1081 = vcmask 25600
    %v1082 = vsel %vm1081, %v1080, -inf
    %1083 = vmax.xlane.f32.xlu0 %v1082
    %v1084 = vpop.xlane.xlu0 %1083
    %v1085 = vsub.f32 %v1080, %v1084
    %v1086 = vmul.f32 %v1085, 1.442695
    %v1087 = vpow.pop %v1086
    %v1088 = vsel %vm1081, %v1087, 0.0
    %1089 = vadd.xlane.f32.xlu0 %v1088
    %v1090 = vpop.xlane.xlu0 %1089
    %v1091 = vrcp.pop %v1090
    %v1092 = vmul.f32 %v1087, %v1091
    %v1093 = vadd.f32 %v368, %v861
    %v1094 = vadd.f32 %v370, %v863
    %v1095 = vadd.f32 %v445, %v932
    %v1096 = vadd.f32 %v447, %v934
    %v1097 = vxor.u32 %v1093, 2147483648
    %v1098 = vxor.u32 %v1094, 2147483648
    %v1099 = vxor.u32 %v1095, 2147483648
    %v1100 = vmul.f32 %v1097, 1.442695
    %v1101 = vpow.pop %v1100
    %v1102 = vmul.f32 %v1098, 1.442695
    %v1103 = vpow.pop %v1102
    %v1104 = vmul.f32 %v1099, 1.442695
    %v1105 = vpow.pop %v1104
    %v1106 = vadd.f32 %v1101, 1.0
    %v1107 = vadd.f32 %v1103, 1.0
    %v1108 = vadd.f32 %v1105, 1.0
    %v1109 = vrcp.pop %v1106
    %v1110 = vmul.f32 1.0, %v1109
    %v1111 = vrcp.pop %v1107
    %v1112 = vmul.f32 1.0, %v1111
    %v1113 = vrcp.pop %v1108
    %v1114 = vmul.f32 1.0, %v1113
    %v1115 = vtanh.pop %v1096
    %v1116 = vmul.f32 %v1112, 0.0
    %v1117 = vmul.f32 %v1110, %v1115
    %v1118 = vadd.f32 %v1116, %v1117
    %v1119 = vtanh.pop %v1118
    %v1120 = vmul.f32 %v1114, %v1119
    %vm1121 = vcmask 31744
    %v1123 = vsel %vm1121, %v1092, 0
    %vm1125 = vcmask 1043456
    %v1127 = vsel %vm1125, %v757, 0
    %1129 = vmatprep.subr.mxu0 0.0
    %1130 = vmatpush1.msra.mxu0 %v1127
    %1131 = vmatprep.subr.mxu0 0.0
    %1132 = vmatpush1.msra.mxu0 0.0
    %1133 = vmatprep.subr.mxu0 0.0
    %1134 = vmatpush1.msra.mxu0 0.0
    %1135 = vmatprep.subr.mxu0 0.0
    %1136 = vmatpush1.msra.mxu0 0.0
    %1137 = vmatprep.subr.mxu0 0.0
    %1138 = vmatpush1.msra.mxu0 0.0
    %1139 = vmatprep.subr.mxu0 0.0
    %1140 = vmatpush1.msra.mxu0 0.0
    %1141 = vmatprep.subr.mxu0 0.0
    %1142 = vmatpush1.msra.mxu0 0.0
    %1143 = vmatprep.subr.mxu0 0.0
    %1144 = vmatpush1.msra.mxu0 0.0
    %1145 = vmatprep.subr.mxu0 0.0
    %1146 = vmatpush1.msra.mxu0 0.0
    %1147 = vmatprep.subr.mxu0 0.0
    %1148 = vmatpush1.msra.mxu0 0.0
    %1149 = vmatprep.subr.mxu0 0.0
    %1150 = vmatpush1.msra.mxu0 0.0
    %1151 = vmatprep.subr.mxu0 0.0
    %1152 = vmatpush1.msra.mxu0 0.0
    %1153 = vmatprep.subr.mxu0 0.0
    %1154 = vmatpush1.msra.mxu0 0.0
    %1155 = vmatprep.subr.mxu0 0.0
    %1156 = vmatpush1.msra.mxu0 0.0
    %1157 = vmatprep.subr.mxu0 0.0
    %1158 = vmatpush1.msra.mxu0 0.0
    %1159 = vmatprep.subr.mxu0 0.0
    %1160 = vmatpush1.msra.mxu0 0.0
    %1161 = vmatprep.subr.mxu0 0.0
    %1162 = vmatpush1.msra.mxu0 0.0
    %1163 = vmatprep.subr.mxu0 0.0
    %1164 = vmatpush1.msra.mxu0 0.0
    %1165 = vmatprep.subr.mxu0 0.0
    %1166 = vmatpush1.msra.mxu0 0.0
    %1167 = vmatprep.subr.mxu0 0.0
    %1168 = vmatpush1.msra.mxu0 0.0
    %1169 = vmatprep.subr.mxu0 0.0
    %1170 = vmatpush1.msra.mxu0 0.0
    %1171 = vmatprep.subr.mxu0 0.0
    %1172 = vmatpush1.msra.mxu0 0.0
    %1173 = vmatprep.subr.mxu0 0.0
    %1174 = vmatpush1.msra.mxu0 0.0
    %1175 = vmatprep.subr.mxu0 0.0
    %1176 = vmatpush1.msra.mxu0 0.0
    %1177 = vmatprep.subr.mxu0 0.0
    %1178 = vmatpush1.msra.mxu0 0.0
    %1179 = vmatprep.subr.mxu0 0.0
    %1180 = vmatpush1.msra.mxu0 0.0
    %1181 = vmatprep.subr.mxu0 0.0
    %1182 = vmatpush1.msra.mxu0 0.0
    %1183 = vmatprep.subr.mxu0 0.0
    %1184 = vmatpush1.msra.mxu0 0.0
    %1185 = vmatprep.subr.mxu0 0.0
    %1186 = vmatpush1.msra.mxu0 0.0
    %1187 = vmatprep.subr.mxu0 0.0
    %1188 = vmatpush1.msra.mxu0 0.0
    %1189 = vmatprep.subr.mxu0 0.0
    %1190 = vmatpush1.msra.mxu0 0.0
    %1191 = vmatprep.subr.mxu0 0.0
    %1192 = vmatpush1.msra.mxu0 0.0
    %1193 = vmatprep.mubr.f32.mxu0 0.0
    %1194 = vmatmul.mubr.f32.gmra.mrb[0].mxu0 %v1123
    %v1195 = vpop.f32.mrb[0].mxu0
    %v1196 = vadd.f32 0.0, %v1195
    %v1197 = vpop.f32.mrb[0].mxu0
    %1198 = vdwg.mxu0
    %v1199 = vmul.f32 %v1118, %v1196
    %1200 = vmatprep.subr.mxu0 0.0
    %1201 = vmatpush1.msra.mxu0 %v774
    %1202 = vmatprep.subr.mxu0 0.0
    %1203 = vmatpush1.msra.mxu0 %v775
    %1204 = vmatprep.subr.mxu0 0.0
    %1205 = vmatpush1.msra.mxu0 %v776
    %1206 = vmatprep.subr.mxu0 0.0
    %1207 = vmatpush1.msra.mxu0 %v777
    %1208 = vmatprep.subr.mxu0 0.0
    %1209 = vmatpush1.msra.mxu0 %v778
    %1210 = vmatprep.subr.mxu0 0.0
    %1211 = vmatpush1.msra.mxu0 %v779
    %1212 = vmatprep.subr.mxu0 0.0
    %1213 = vmatpush1.msra.mxu0 %v780
    %1214 = vmatprep.subr.mxu0 0.0
    %1215 = vmatpush1.msra.mxu0 %v781
    %1216 = vmatprep.subr.mxu0 0.0
    %1217 = vmatpush1.msra.mxu0 %v782
    %1218 = vmatprep.subr.mxu0 0.0
    %1219 = vmatpush1.msra.mxu0 %v783
    %1220 = vmatprep.subr.mxu0 0.0
    %1221 = vmatpush1.msra.mxu0 %v784
    %1222 = vmatprep.subr.mxu0 0.0
    %1223 = vmatpush1.msra.mxu0 %v785
    %1224 = vmatprep.subr.mxu0 0.0
    %1225 = vmatpush1.msra.mxu0 %v786
    %1226 = vmatprep.subr.mxu0 0.0
    %1227 = vmatpush1.msra.mxu0 %v787
    %1228 = vmatprep.subr.mxu0 0.0
    %1229 = vmatpush1.msra.mxu0 %v788
    %1230 = vmatprep.subr.mxu0 0.0
    %1231 = vmatpush1.msra.mxu0 %v789
    %1232 = vmatprep.subr.mxu0 0.0
    %1233 = vmatpush1.msra.mxu0 0.0
    %1234 = vmatprep.subr.mxu0 0.0
    %1235 = vmatpush1.msra.mxu0 0.0
    %1236 = vmatprep.subr.mxu0 0.0
    %1237 = vmatpush1.msra.mxu0 0.0
    %1238 = vmatprep.subr.mxu0 0.0
    %1239 = vmatpush1.msra.mxu0 0.0
    %1240 = vmatprep.subr.mxu0 0.0
    %1241 = vmatpush1.msra.mxu0 0.0
    %1242 = vmatprep.subr.mxu0 0.0
    %1243 = vmatpush1.msra.mxu0 0.0
    %1244 = vmatprep.subr.mxu0 0.0
    %1245 = vmatpush1.msra.mxu0 0.0
    %1246 = vmatprep.subr.mxu0 0.0
    %1247 = vmatpush1.msra.mxu0 0.0
    %1248 = vmatprep.subr.mxu0 0.0
    %1249 = vmatpush1.msra.mxu0 0.0
    %1250 = vmatprep.subr.mxu0 0.0
    %1251 = vmatpush1.msra.mxu0 0.0
    %1252 = vmatprep.subr.mxu0 0.0
    %1253 = vmatpush1.msra.mxu0 0.0
    %1254 = vmatprep.subr.mxu0 0.0
    %1255 = vmatpush1.msra.mxu0 0.0
    %1256 = vmatprep.subr.mxu0 0.0
    %1257 = vmatpush1.msra.mxu0 0.0
    %1258 = vmatprep.subr.mxu0 0.0
    %1259 = vmatpush1.msra.mxu0 0.0
    %1260 = vmatprep.subr.mxu0 0.0
    %1261 = vmatpush1.msra.mxu0 0.0
    %1262 = vmatprep.subr.mxu0 0.0
    %1263 = vmatpush1.msra.mxu0 0.0
    %1264 = vmatprep.mubr.f32.mxu0 0.0
    %1265 = vmatmul.mubr.f32.gmra.mrb[0].mxu0 %v1199
    %v1266 = vpop.f32.mrb[0].mxu0
    %v1267 = vadd.f32 0.0, %v1266
    %v1268 = vpop.f32.mrb[0].mxu0
    %1269 = vdwg.mxu0
    %v1270 = vmul.f32 %v1120, %v1196
    %1271 = vmatprep.subr.mxu0 0.0
    %1272 = vmatpush1.msra.mxu0 %v758
    %1273 = vmatprep.subr.mxu0 0.0
    %1274 = vmatpush1.msra.mxu0 %v759
    %1275 = vmatprep.subr.mxu0 0.0
    %1276 = vmatpush1.msra.mxu0 %v760
    %1277 = vmatprep.subr.mxu0 0.0
    %1278 = vmatpush1.msra.mxu0 %v761
    %1279 = vmatprep.subr.mxu0 0.0
    %1280 = vmatpush1.msra.mxu0 %v762
    %1281 = vmatprep.subr.mxu0 0.0
    %1282 = vmatpush1.msra.mxu0 %v763
    %1283 = vmatprep.subr.mxu0 0.0
    %1284 = vmatpush1.msra.mxu0 %v764
    %1285 = vmatprep.subr.mxu0 0.0
    %1286 = vmatpush1.msra.mxu0 %v765
    %1287 = vmatprep.subr.mxu0 0.0
    %1288 = vmatpush1.msra.mxu0 %v766
    %1289 = vmatprep.subr.mxu0 0.0
    %1290 = vmatpush1.msra.mxu0 %v767
    %1291 = vmatprep.subr.mxu0 0.0
    %1292 = vmatpush1.msra.mxu0 %v768
    %1293 = vmatprep.subr.mxu0 0.0
    %1294 = vmatpush1.msra.mxu0 %v769
    %1295 = vmatprep.subr.mxu0 0.0
    %1296 = vmatpush1.msra.mxu0 %v770
    %1297 = vmatprep.subr.mxu0 0.0
    %1298 = vmatpush1.msra.mxu0 %v771
    %1299 = vmatprep.subr.mxu0 0.0
    %1300 = vmatpush1.msra.mxu0 %v772
    %1301 = vmatprep.subr.mxu0 0.0
    %1302 = vmatpush1.msra.mxu0 %v773
    %1303 = vmatprep.subr.mxu0 0.0
    %1304 = vmatpush1.msra.mxu0 0.0
    %1305 = vmatprep.subr.mxu0 0.0
    %1306 = vmatpush1.msra.mxu0 0.0
    %1307 = vmatprep.subr.mxu0 0.0
    %1308 = vmatpush1.msra.mxu0 0.0
    %1309 = vmatprep.subr.mxu0 0.0
    %1310 = vmatpush1.msra.mxu0 0.0
    %1311 = vmatprep.subr.mxu0 0.0
    %1312 = vmatpush1.msra.mxu0 0.0
    %1313 = vmatprep.subr.mxu0 0.0
    %1314 = vmatpush1.msra.mxu0 0.0
    %1315 = vmatprep.subr.mxu0 0.0
    %1316 = vmatpush1.msra.mxu0 0.0
    %1317 = vmatprep.subr.mxu0 0.0
    %1318 = vmatpush1.msra.mxu0 0.0
    %1319 = vmatprep.subr.mxu0 0.0
    %1320 = vmatpush1.msra.mxu0 0.0
    %1321 = vmatprep.subr.mxu0 0.0
    %1322 = vmatpush1.msra.mxu0 0.0
    %1323 = vmatprep.subr.mxu0 0.0
    %1324 = vmatpush1.msra.mxu0 0.0
    %1325 = vmatprep.subr.mxu0 0.0
    %1326 = vmatpush1.msra.mxu0 0.0
    %1327 = vmatprep.subr.mxu0 0.0
    %1328 = vmatpush1.msra.mxu0 0.0
    %1329 = vmatprep.subr.mxu0 0.0
    %1330 = vmatpush1.msra.mxu0 0.0
    %1331 = vmatprep.subr.mxu0 0.0
    %1332 = vmatpush1.msra.mxu0 0.0
    %1333 = vmatprep.subr.mxu0 0.0
    %1334 = vmatpush1.msra.mxu0 0.0
    %1335 = vmatprep.mubr.f32.mxu0 0.0
    %1336 = vmatmul.mubr.f32.gmra.mrb[0].mxu0 %v1270
    %v1337 = vpop.f32.mrb[0].mxu0
    %v1338 = vadd.f32 0.0, %v1337
    %v1339 = vpop.f32.mrb[0].mxu0
    %1340 = vdwg.mxu0
    %vm1341 = vcmask 254976
    %1342 = vst.msk [vmem:[#allocation2] sm:$0x3] %vm1341, %v1338
    %1343 = vst.msk [vmem:[#allocation3] sm:$0x3] %vm1081, %v1092
    %v1345 = vsel %vm790, %v1338, 0
    %1347 = vmatprep.subr.mxu0 %v678
    %1348 = vmatpush1.msra.mxu0 %v677
    %1349 = vmatprep.subr.mxu0 %v682
    %1350 = vmatpush1.msra.mxu0 %v681
    %1351 = vmatprep.subr.mxu0 %v686
    %1352 = vmatpush1.msra.mxu0 %v685
    %1353 = vmatprep.subr.mxu0 %v690
    %1354 = vmatpush1.msra.mxu0 %v689
    %1355 = vmatprep.subr.mxu0 0.0
    %1356 = vmatpush1.msra.mxu0 0.0
    %1357 = vmatprep.subr.mxu0 0.0
    %1358 = vmatpush1.msra.mxu0 0.0
    %1359 = vmatprep.subr.mxu0 0.0
    %1360 = vmatpush1.msra.mxu0 0.0
    %1361 = vmatprep.subr.mxu0 0.0
    %1362 = vmatpush1.msra.mxu0 0.0
    %1363 = vmatprep.subr.mxu0 0.0
    %1364 = vmatpush1.msra.mxu0 0.0
    %1365 = vmatprep.subr.mxu0 0.0
    %1366 = vmatpush1.msra.mxu0 0.0
    %1367 = vmatprep.subr.mxu0 0.0
    %1368 = vmatpush1.msra.mxu0 0.0
    %1369 = vmatprep.subr.mxu0 0.0
    %1370 = vmatpush1.msra.mxu0 0.0
    %1371 = vmatprep.subr.mxu0 0.0
    %1372 = vmatpush1.msra.mxu0 0.0
    %1373 = vmatprep.subr.mxu0 0.0
    %1374 = vmatpush1.msra.mxu0 0.0
    %1375 = vmatprep.subr.mxu0 0.0
    %1376 = vmatpush1.msra.mxu0 0.0
    %1377 = vmatprep.subr.mxu0 0.0
    %1378 = vmatpush1.msra.mxu0 0.0
    %1379 = vmatprep.subr.mxu0 0.0
    %1380 = vmatpush1.msra.mxu0 0.0
    %1381 = vmatprep.subr.mxu0 0.0
    %1382 = vmatpush1.msra.mxu0 0.0
    %1383 = vmatprep.subr.mxu0 0.0
    %1384 = vmatpush1.msra.mxu0 0.0
    %1385 = vmatprep.subr.mxu0 0.0
    %1386 = vmatpush1.msra.mxu0 0.0
    %1387 = vmatprep.subr.mxu0 0.0
    %1388 = vmatpush1.msra.mxu0 0.0
    %1389 = vmatprep.subr.mxu0 0.0
    %1390 = vmatpush1.msra.mxu0 0.0
    %1391 = vmatprep.subr.mxu0 0.0
    %1392 = vmatpush1.msra.mxu0 0.0
    %1393 = vmatprep.subr.mxu0 0.0
    %1394 = vmatpush1.msra.mxu0 0.0
    %1395 = vmatprep.subr.mxu0 0.0
    %1396 = vmatpush1.msra.mxu0 0.0
    %1397 = vmatprep.subr.mxu0 0.0
    %1398 = vmatpush1.msra.mxu0 0.0
    %1399 = vmatprep.subr.mxu0 0.0
    %1400 = vmatpush1.msra.mxu0 0.0
    %1401 = vmatprep.subr.mxu0 0.0
    %1402 = vmatpush1.msra.mxu0 0.0
    %1403 = vmatprep.subr.mxu0 0.0
    %1404 = vmatpush1.msra.mxu0 0.0
    %1405 = vmatprep.subr.mxu0 0.0
    %1406 = vmatpush1.msra.mxu0 0.0
    %1407 = vmatprep.subr.mxu0 0.0
    %1408 = vmatpush1.msra.mxu0 0.0
    %1409 = vmatprep.subr.mxu0 0.0
    %1410 = vmatpush1.msra.mxu0 0.0
    %1411 = vmatprep.mubr.f32.mxu0 0.0
    %1412 = vmatmul.mubr.f32.gmra.mrb[0].mxu0 %v1345
    %v1413 = vpop.f32.mrb[0].mxu0
    %v1414 = vadd.f32 0.0, %v1413
    %v1415 = vpop.f32.mrb[0].mxu0
    %v1416 = vadd.f32 0.0, %v1415
    %1417 = vdwg.mxu0
    %1418 = vmatprep.subr.mxu0 %v680
    %1419 = vmatpush1.msra.mxu0 %v679
    %1420 = vmatprep.subr.mxu0 %v684
    %1421 = vmatpush1.msra.mxu0 %v683
    %1422 = vmatprep.subr.mxu0 %v688
    %1423 = vmatpush1.msra.mxu0 %v687
    %1424 = vmatprep.subr.mxu0 %v692
    %1425 = vmatpush1.msra.mxu0 %v691
    %1426 = vmatprep.subr.mxu0 0.0
    %1427 = vmatpush1.msra.mxu0 0.0
    %1428 = vmatprep.subr.mxu0 0.0
    %1429 = vmatpush1.msra.mxu0 0.0
    %1430 = vmatprep.subr.mxu0 0.0
    %1431 = vmatpush1.msra.mxu0 0.0
    %1432 = vmatprep.subr.mxu0 0.0
    %1433 = vmatpush1.msra.mxu0 0.0
    %1434 = vmatprep.subr.mxu0 0.0
    %1435 = vmatpush1.msra.mxu0 0.0
    %1436 = vmatprep.subr.mxu0 0.0
    %1437 = vmatpush1.msra.mxu0 0.0
    %1438 = vmatprep.subr.mxu0 0.0
    %1439 = vmatpush1.msra.mxu0 0.0
    %1440 = vmatprep.subr.mxu0 0.0
    %1441 = vmatpush1.msra.mxu0 0.0
    %1442 = vmatprep.subr.mxu0 0.0
    %1443 = vmatpush1.msra.mxu0 0.0
    %1444 = vmatprep.subr.mxu0 0.0
    %1445 = vmatpush1.msra.mxu0 0.0
    %1446 = vmatprep.subr.mxu0 0.0
    %1447 = vmatpush1.msra.mxu0 0.0
    %1448 = vmatprep.subr.mxu0 0.0
    %1449 = vmatpush1.msra.mxu0 0.0
    %1450 = vmatprep.subr.mxu0 0.0
    %1451 = vmatpush1.msra.mxu0 0.0
    %1452 = vmatprep.subr.mxu0 0.0
    %1453 = vmatpush1.msra.mxu0 0.0
    %1454 = vmatprep.subr.mxu0 0.0
    %1455 = vmatpush1.msra.mxu0 0.0
    %1456 = vmatprep.subr.mxu0 0.0
    %1457 = vmatpush1.msra.mxu0 0.0
    %1458 = vmatprep.subr.mxu0 0.0
    %1459 = vmatpush1.msra.mxu0 0.0
    %1460 = vmatprep.subr.mxu0 0.0
    %1461 = vmatpush1.msra.mxu0 0.0
    %1462 = vmatprep.subr.mxu0 0.0
    %1463 = vmatpush1.msra.mxu0 0.0
    %1464 = vmatprep.subr.mxu0 0.0
    %1465 = vmatpush1.msra.mxu0 0.0
    %1466 = vmatprep.subr.mxu0 0.0
    %1467 = vmatpush1.msra.mxu0 0.0
    %1468 = vmatprep.subr.mxu0 0.0
    %1469 = vmatpush1.msra.mxu0 0.0
    %1470 = vmatprep.subr.mxu0 0.0
    %1471 = vmatpush1.msra.mxu0 0.0
    %1472 = vmatprep.subr.mxu0 0.0
    %1473 = vmatpush1.msra.mxu0 0.0
    %1474 = vmatprep.subr.mxu0 0.0
    %1475 = vmatpush1.msra.mxu0 0.0
    %1476 = vmatprep.subr.mxu0 0.0
    %1477 = vmatpush1.msra.mxu0 0.0
    %1478 = vmatprep.subr.mxu0 0.0
    %1479 = vmatpush1.msra.mxu0 0.0
    %1480 = vmatprep.subr.mxu0 0.0
    %1481 = vmatpush1.msra.mxu0 0.0
    %1482 = vmatprep.mubr.f32.mxu0 0.0
    %1483 = vmatmul.mubr.f32.gmra.mrb[0].mxu0 %v1345
    %v1484 = vpop.f32.mrb[0].mxu0
    %v1485 = vadd.f32 0.0, %v1484
    %v1486 = vpop.f32.mrb[0].mxu0
    %v1487 = vadd.f32 0.0, %v1486
    %1488 = vdwg.mxu0
    %v1489 = vmax.f32 %v1414, 0.0
    %v1490 = vmax.f32 %v1416, 0.0
    %v1491 = vmax.f32 %v1485, 0.0
    %v1492 = vmax.f32 %v1487, 0.0
    %1493 = vmatprep.subr.mxu0 0.0
    %1494 = vmatpush1.msra.mxu0 %v693
    %1495 = vmatprep.subr.mxu0 0.0
    %1496 = vmatpush1.msra.mxu0 %v694
    %1497 = vmatprep.subr.mxu0 0.0
    %1498 = vmatpush1.msra.mxu0 %v695
    %1499 = vmatprep.subr.mxu0 0.0
    %1500 = vmatpush1.msra.mxu0 %v696
    %1501 = vmatprep.subr.mxu0 0.0
    %1502 = vmatpush1.msra.mxu0 %v697
    %1503 = vmatprep.subr.mxu0 0.0
    %1504 = vmatpush1.msra.mxu0 %v698
    %1505 = vmatprep.subr.mxu0 0.0
    %1506 = vmatpush1.msra.mxu0 %v699
    %1507 = vmatprep.subr.mxu0 0.0
    %1508 = vmatpush1.msra.mxu0 %v700
    %1509 = vmatprep.subr.mxu0 0.0
    %1510 = vmatpush1.msra.mxu0 %v701
    %1511 = vmatprep.subr.mxu0 0.0
    %1512 = vmatpush1.msra.mxu0 %v702
    %1513 = vmatprep.subr.mxu0 0.0
    %1514 = vmatpush1.msra.mxu0 %v703
    %1515 = vmatprep.subr.mxu0 0.0
    %1516 = vmatpush1.msra.mxu0 %v704
    %1517 = vmatprep.subr.mxu0 0.0
    %1518 = vmatpush1.msra.mxu0 %v705
    %1519 = vmatprep.subr.mxu0 0.0
    %1520 = vmatpush1.msra.mxu0 %v706
    %1521 = vmatprep.subr.mxu0 0.0
    %1522 = vmatpush1.msra.mxu0 %v707
    %1523 = vmatprep.subr.mxu0 0.0
    %1524 = vmatpush1.msra.mxu0 %v708
    %1525 = vmatprep.subr.mxu0 0.0
    %1526 = vmatpush1.msra.mxu0 %v709
    %1527 = vmatprep.subr.mxu0 0.0
    %1528 = vmatpush1.msra.mxu0 %v710
    %1529 = vmatprep.subr.mxu0 0.0
    %1530 = vmatpush1.msra.mxu0 %v711
    %1531 = vmatprep.subr.mxu0 0.0
    %1532 = vmatpush1.msra.mxu0 %v712
    %1533 = vmatprep.subr.mxu0 0.0
    %1534 = vmatpush1.msra.mxu0 %v713
    %1535 = vmatprep.subr.mxu0 0.0
    %1536 = vmatpush1.msra.mxu0 %v714
    %1537 = vmatprep.subr.mxu0 0.0
    %1538 = vmatpush1.msra.mxu0 %v715
    %1539 = vmatprep.subr.mxu0 0.0
    %1540 = vmatpush1.msra.mxu0 %v716
    %1541 = vmatprep.subr.mxu0 0.0
    %1542 = vmatpush1.msra.mxu0 %v717
    %1543 = vmatprep.subr.mxu0 0.0
    %1544 = vmatpush1.msra.mxu0 %v718
    %1545 = vmatprep.subr.mxu0 0.0
    %1546 = vmatpush1.msra.mxu0 %v719
    %1547 = vmatprep.subr.mxu0 0.0
    %1548 = vmatpush1.msra.mxu0 %v720
    %1549 = vmatprep.subr.mxu0 0.0
    %1550 = vmatpush1.msra.mxu0 %v721
    %1551 = vmatprep.subr.mxu0 0.0
    %1552 = vmatpush1.msra.mxu0 %v722
    %1553 = vmatprep.subr.mxu0 0.0
    %1554 = vmatpush1.msra.mxu0 %v723
    %1555 = vmatprep.subr.mxu0 0.0
    %1556 = vmatpush1.msra.mxu0 %v724
    %1557 = vmatprep.mubr.f32.mxu0 %v1490
    %1558 = vmatmul.mubr.f32.gmra.mrb[0].mxu0 %v1489
    %v1559 = vpop.f32.mrb[0].mxu0
    %v1560 = vadd.f32 0.0, %v1559
    %v1561 = vpop.f32.mrb[0].mxu0
    %1562 = vdwg.mxu0
    %1563 = vmatprep.subr.mxu0 0.0
    %1564 = vmatpush1.msra.mxu0 %v725
    %1565 = vmatprep.subr.mxu0 0.0
    %1566 = vmatpush1.msra.mxu0 %v726
    %1567 = vmatprep.subr.mxu0 0.0
    %1568 = vmatpush1.msra.mxu0 %v727
    %1569 = vmatprep.subr.mxu0 0.0
    %1570 = vmatpush1.msra.mxu0 %v728
    %1571 = vmatprep.subr.mxu0 0.0
    %1572 = vmatpush1.msra.mxu0 %v729
    %1573 = vmatprep.subr.mxu0 0.0
    %1574 = vmatpush1.msra.mxu0 %v730
    %1575 = vmatprep.subr.mxu0 0.0
    %1576 = vmatpush1.msra.mxu0 %v731
    %1577 = vmatprep.subr.mxu0 0.0
    %1578 = vmatpush1.msra.mxu0 %v732
    %1579 = vmatprep.subr.mxu0 0.0
    %1580 = vmatpush1.msra.mxu0 %v733
    %1581 = vmatprep.subr.mxu0 0.0
    %1582 = vmatpush1.msra.mxu0 %v734
    %1583 = vmatprep.subr.mxu0 0.0
    %1584 = vmatpush1.msra.mxu0 %v735
    %1585 = vmatprep.subr.mxu0 0.0
    %1586 = vmatpush1.msra.mxu0 %v736
    %1587 = vmatprep.subr.mxu0 0.0
    %1588 = vmatpush1.msra.mxu0 %v737
    %1589 = vmatprep.subr.mxu0 0.0
    %1590 = vmatpush1.msra.mxu0 %v738
    %1591 = vmatprep.subr.mxu0 0.0
    %1592 = vmatpush1.msra.mxu0 %v739
    %1593 = vmatprep.subr.mxu0 0.0
    %1594 = vmatpush1.msra.mxu0 %v740
    %1595 = vmatprep.subr.mxu0 0.0
    %1596 = vmatpush1.msra.mxu0 %v741
    %1597 = vmatprep.subr.mxu0 0.0
    %1598 = vmatpush1.msra.mxu0 %v742
    %1599 = vmatprep.subr.mxu0 0.0
    %1600 = vmatpush1.msra.mxu0 %v743
    %1601 = vmatprep.subr.mxu0 0.0
    %1602 = vmatpush1.msra.mxu0 %v744
    %1603 = vmatprep.subr.mxu0 0.0
    %1604 = vmatpush1.msra.mxu0 %v745
    %1605 = vmatprep.subr.mxu0 0.0
    %1606 = vmatpush1.msra.mxu0 %v746
    %1607 = vmatprep.subr.mxu0 0.0
    %1608 = vmatpush1.msra.mxu0 %v747
    %1609 = vmatprep.subr.mxu0 0.0
    %1610 = vmatpush1.msra.mxu0 %v748
    %1611 = vmatprep.subr.mxu0 0.0
    %1612 = vmatpush1.msra.mxu0 %v749
    %1613 = vmatprep.subr.mxu0 0.0
    %1614 = vmatpush1.msra.mxu0 %v750
    %1615 = vmatprep.subr.mxu0 0.0
    %1616 = vmatpush1.msra.mxu0 %v751
    %1617 = vmatprep.subr.mxu0 0.0
    %1618 = vmatpush1.msra.mxu0 %v752
    %1619 = vmatprep.subr.mxu0 0.0
    %1620 = vmatpush1.msra.mxu0 %v753
    %1621 = vmatprep.subr.mxu0 0.0
    %1622 = vmatpush1.msra.mxu0 %v754
    %1623 = vmatprep.subr.mxu0 0.0
    %1624 = vmatpush1.msra.mxu0 %v755
    %1625 = vmatprep.subr.mxu0 0.0
    %1626 = vmatpush1.msra.mxu0 %v756
    %1627 = vmatprep.mubr.f32.mxu0 %v1492
    %1628 = vmatmul.mubr.f32.gmra.mrb[0].mxu0 %v1491
    %v1629 = vpop.f32.mrb[0].mxu0
    %v1630 = vadd.f32 %v1560, %v1629
    %v1631 = vpop.f32.mrb[0].mxu0
    %1632 = vdwg.mxu0
    %v1634 = vrot.slane %v1630, 6
    %v1636 = vadd.f32 %v669, %v1634
    %vm1637 = vcmask 27650
    %v1638 = vsel %vm1637, %v1636, -inf
    %1639 = vmax.xlane.f32.xlu0 %v1638
    %v1640 = vpop.xlane.xlu0 %1639
    %v1641 = vsub.f32 %v1636, %v1640
    %v1642 = vmul.f32 %v1641, 1.442695
    %v1643 = vpow.pop %v1642
    %v1644 = vsel %vm1637, %v1643, 0.0
    %1645 = vadd.xlane.f32.xlu0 %v1644
    %v1646 = vpop.xlane.xlu0 %1645
    %v1647 = vrcp.pop %v1646
    %v1648 = vmul.f32 %v1643, %v1647
    %v1653 = vrot.slane %v1414, 6
    %v1654 = vrot.slane %v1416, 6
    %v1655 = vrot.slane %v1485, 6
    %v1656 = vrot.slane %v1487, 6
    %v1661 = vadd.f32 %v368, %v1653
    %v1662 = vadd.f32 %v370, %v1654
    %v1663 = vadd.f32 %v445, %v1655
    %v1664 = vadd.f32 %v447, %v1656
    %v1665 = vxor.u32 %v1661, 2147483648
    %v1666 = vxor.u32 %v1662, 2147483648
    %v1667 = vxor.u32 %v1663, 2147483648
    %v1668 = vmul.f32 %v1665, 1.442695
    %v1669 = vpow.pop %v1668
    %v1670 = vmul.f32 %v1666, 1.442695
    %v1671 = vpow.pop %v1670
    %v1672 = vmul.f32 %v1667, 1.442695
    %v1673 = vpow.pop %v1672
    %v1674 = vadd.f32 %v1669, 1.0
    %v1675 = vadd.f32 %v1671, 1.0
    %v1676 = vadd.f32 %v1673, 1.0
    %v1677 = vrcp.pop %v1674
    %v1678 = vmul.f32 1.0, %v1677
    %v1679 = vrcp.pop %v1675
    %v1680 = vmul.f32 1.0, %v1679
    %v1681 = vrcp.pop %v1676
    %v1682 = vmul.f32 1.0, %v1681
    %v1683 = vtanh.pop %v1664
    %v1685 = vrot.slane %v1680, 2
    %v1687 = vmul.f32 %v1267, %v1685
    %v1688 = vmul.f32 %v1678, %v1683
    %v1690 = vrot.slane %v1688, 2
    %v1692 = vadd.f32 %v1687, %v1690
    %v1693 = vtanh.pop %v1692
    %v1695 = vrot.slane %v1693, 6
    %v1697 = vmul.f32 %v1682, %v1695
    %v1699 = vrot.slane %v1648, 2
    %v1700 = vsel %vm1121, %v1699, 0
    %1702 = vmatprep.subr.mxu0 0.0
    %1703 = vmatpush1.msra.mxu0 %v1127
    %1704 = vmatprep.subr.mxu0 0.0
    %1705 = vmatpush1.msra.mxu0 0.0
    %1706 = vmatprep.subr.mxu0 0.0
    %1707 = vmatpush1.msra.mxu0 0.0
    %1708 = vmatprep.subr.mxu0 0.0
    %1709 = vmatpush1.msra.mxu0 0.0
    %1710 = vmatprep.subr.mxu0 0.0
    %1711 = vmatpush1.msra.mxu0 0.0
    %1712 = vmatprep.subr.mxu0 0.0
    %1713 = vmatpush1.msra.mxu0 0.0
    %1714 = vmatprep.subr.mxu0 0.0
    %1715 = vmatpush1.msra.mxu0 0.0
    %1716 = vmatprep.subr.mxu0 0.0
    %1717 = vmatpush1.msra.mxu0 0.0
    %1718 = vmatprep.subr.mxu0 0.0
    %1719 = vmatpush1.msra.mxu0 0.0
    %1720 = vmatprep.subr.mxu0 0.0
    %1721 = vmatpush1.msra.mxu0 0.0
    %1722 = vmatprep.subr.mxu0 0.0
    %1723 = vmatpush1.msra.mxu0 0.0
    %1724 = vmatprep.subr.mxu0 0.0
    %1725 = vmatpush1.msra.mxu0 0.0
    %1726 = vmatprep.subr.mxu0 0.0
    %1727 = vmatpush1.msra.mxu0 0.0
    %1728 = vmatprep.subr.mxu0 0.0
    %1729 = vmatpush1.msra.mxu0 0.0
    %1730 = vmatprep.subr.mxu0 0.0
    %1731 = vmatpush1.msra.mxu0 0.0
    %1732 = vmatprep.subr.mxu0 0.0
    %1733 = vmatpush1.msra.mxu0 0.0
    %1734 = vmatprep.subr.mxu0 0.0
    %1735 = vmatpush1.msra.mxu0 0.0
    %1736 = vmatprep.subr.mxu0 0.0
    %1737 = vmatpush1.msra.mxu0 0.0
    %1738 = vmatprep.subr.mxu0 0.0
    %1739 = vmatpush1.msra.mxu0 0.0
    %1740 = vmatprep.subr.mxu0 0.0
    %1741 = vmatpush1.msra.mxu0 0.0
    %1742 = vmatprep.subr.mxu0 0.0
    %1743 = vmatpush1.msra.mxu0 0.0
    %1744 = vmatprep.subr.mxu0 0.0
    %1745 = vmatpush1.msra.mxu0 0.0
    %1746 = vmatprep.subr.mxu0 0.0
    %1747 = vmatpush1.msra.mxu0 0.0
    %1748 = vmatprep.subr.mxu0 0.0
    %1749 = vmatpush1.msra.mxu0 0.0
    %1750 = vmatprep.subr.mxu0 0.0
    %1751 = vmatpush1.msra.mxu0 0.0
    %1752 = vmatprep.subr.mxu0 0.0
    %1753 = vmatpush1.msra.mxu0 0.0
    %1754 = vmatprep.subr.mxu0 0.0
    %1755 = vmatpush1.msra.mxu0 0.0
    %1756 = vmatprep.subr.mxu0 0.0
    %1757 = vmatpush1.msra.mxu0 0.0
    %1758 = vmatprep.subr.mxu0 0.0
    %1759 = vmatpush1.msra.mxu0 0.0
    %1760 = vmatprep.subr.mxu0 0.0
    %1761 = vmatpush1.msra.mxu0 0.0
    %1762 = vmatprep.subr.mxu0 0.0
    %1763 = vmatpush1.msra.mxu0 0.0
    %1764 = vmatprep.subr.mxu0 0.0
    %1765 = vmatpush1.msra.mxu0 0.0
    %1766 = vmatprep.mubr.f32.mxu0 0.0
    %1767 = vmatmul.mubr.f32.gmra.mrb[0].mxu0 %v1700
    %v1768 = vpop.f32.mrb[0].mxu0
    %v1769 = vadd.f32 0.0, %v1768
    %v1770 = vpop.f32.mrb[0].mxu0
    %1771 = vdwg.mxu0
    %v1772 = vmul.f32 %v1692, %v1769
    %1773 = vmatprep.subr.mxu0 0.0
    %1774 = vmatpush1.msra.mxu0 %v774
    %1775 = vmatprep.subr.mxu0 0.0
    %1776 = vmatpush1.msra.mxu0 %v775
    %1777 = vmatprep.subr.mxu0 0.0
    %1778 = vmatpush1.msra.mxu0 %v776
    %1779 = vmatprep.subr.mxu0 0.0
    %1780 = vmatpush1.msra.mxu0 %v777
    %1781 = vmatprep.subr.mxu0 0.0
    %1782 = vmatpush1.msra.mxu0 %v778
    %1783 = vmatprep.subr.mxu0 0.0
    %1784 = vmatpush1.msra.mxu0 %v779
    %1785 = vmatprep.subr.mxu0 0.0
    %1786 = vmatpush1.msra.mxu0 %v780
    %1787 = vmatprep.subr.mxu0 0.0
    %1788 = vmatpush1.msra.mxu0 %v781
    %1789 = vmatprep.subr.mxu0 0.0
    %1790 = vmatpush1.msra.mxu0 %v782
    %1791 = vmatprep.subr.mxu0 0.0
    %1792 = vmatpush1.msra.mxu0 %v783
    %1793 = vmatprep.subr.mxu0 0.0
    %1794 = vmatpush1.msra.mxu0 %v784
    %1795 = vmatprep.subr.mxu0 0.0
    %1796 = vmatpush1.msra.mxu0 %v785
    %1797 = vmatprep.subr.mxu0 0.0
    %1798 = vmatpush1.msra.mxu0 %v786
    %1799 = vmatprep.subr.mxu0 0.0
    %1800 = vmatpush1.msra.mxu0 %v787
    %1801 = vmatprep.subr.mxu0 0.0
    %1802 = vmatpush1.msra.mxu0 %v788
    %1803 = vmatprep.subr.mxu0 0.0
    %1804 = vmatpush1.msra.mxu0 %v789
    %1805 = vmatprep.subr.mxu0 0.0
    %1806 = vmatpush1.msra.mxu0 0.0
    %1807 = vmatprep.subr.mxu0 0.0
    %1808 = vmatpush1.msra.mxu0 0.0
    %1809 = vmatprep.subr.mxu0 0.0
    %1810 = vmatpush1.msra.mxu0 0.0
    %1811 = vmatprep.subr.mxu0 0.0
    %1812 = vmatpush1.msra.mxu0 0.0
    %1813 = vmatprep.subr.mxu0 0.0
    %1814 = vmatpush1.msra.mxu0 0.0
    %1815 = vmatprep.subr.mxu0 0.0
    %1816 = vmatpush1.msra.mxu0 0.0
    %1817 = vmatprep.subr.mxu0 0.0
    %1818 = vmatpush1.msra.mxu0 0.0
    %1819 = vmatprep.subr.mxu0 0.0
    %1820 = vmatpush1.msra.mxu0 0.0
    %1821 = vmatprep.subr.mxu0 0.0
    %1822 = vmatpush1.msra.mxu0 0.0
    %1823 = vmatprep.subr.mxu0 0.0
    %1824 = vmatpush1.msra.mxu0 0.0
    %1825 = vmatprep.subr.mxu0 0.0
    %1826 = vmatpush1.msra.mxu0 0.0
    %1827 = vmatprep.subr.mxu0 0.0
    %1828 = vmatpush1.msra.mxu0 0.0
    %1829 = vmatprep.subr.mxu0 0.0
    %1830 = vmatpush1.msra.mxu0 0.0
    %1831 = vmatprep.subr.mxu0 0.0
    %1832 = vmatpush1.msra.mxu0 0.0
    %1833 = vmatprep.subr.mxu0 0.0
    %1834 = vmatpush1.msra.mxu0 0.0
    %1835 = vmatprep.subr.mxu0 0.0
    %1836 = vmatpush1.msra.mxu0 0.0
    %1837 = vmatprep.mubr.f32.mxu0 0.0
    %1838 = vmatmul.mubr.f32.gmra.mrb[0].mxu0 %v1772
    %v1839 = vpop.f32.mrb[0].mxu0
    %v1840 = vadd.f32 0.0, %v1839
    %v1841 = vpop.f32.mrb[0].mxu0
    %1842 = vdwg.mxu0
    %v1844 = vrot.slane %v1769, 6
    %v1846 = vmul.f32 %v1697, %v1844
    %v1848 = vrot.slane %v1846, 2
    %1850 = vmatprep.subr.mxu0 0.0
    %1851 = vmatpush1.msra.mxu0 %v758
    %1852 = vmatprep.subr.mxu0 0.0
    %1853 = vmatpush1.msra.mxu0 %v759
    %1854 = vmatprep.subr.mxu0 0.0
    %1855 = vmatpush1.msra.mxu0 %v760
    %1856 = vmatprep.subr.mxu0 0.0
    %1857 = vmatpush1.msra.mxu0 %v761
    %1858 = vmatprep.subr.mxu0 0.0
    %1859 = vmatpush1.msra.mxu0 %v762
    %1860 = vmatprep.subr.mxu0 0.0
    %1861 = vmatpush1.msra.mxu0 %v763
    %1862 = vmatprep.subr.mxu0 0.0
    %1863 = vmatpush1.msra.mxu0 %v764
    %1864 = vmatprep.subr.mxu0 0.0
    %1865 = vmatpush1.msra.mxu0 %v765
    %1866 = vmatprep.subr.mxu0 0.0
    %1867 = vmatpush1.msra.mxu0 %v766
    %1868 = vmatprep.subr.mxu0 0.0
    %1869 = vmatpush1.msra.mxu0 %v767
    %1870 = vmatprep.subr.mxu0 0.0
    %1871 = vmatpush1.msra.mxu0 %v768
    %1872 = vmatprep.subr.mxu0 0.0
    %1873 = vmatpush1.msra.mxu0 %v769
    %1874 = vmatprep.subr.mxu0 0.0
    %1875 = vmatpush1.msra.mxu0 %v770
    %1876 = vmatprep.subr.mxu0 0.0
    %1877 = vmatpush1.msra.mxu0 %v771
    %1878 = vmatprep.subr.mxu0 0.0
    %1879 = vmatpush1.msra.mxu0 %v772
    %1880 = vmatprep.subr.mxu0 0.0
    %1881 = vmatpush1.msra.mxu0 %v773
    %1882 = vmatprep.subr.mxu0 0.0
    %1883 = vmatpush1.msra.mxu0 0.0
    %1884 = vmatprep.subr.mxu0 0.0
    %1885 = vmatpush1.msra.mxu0 0.0
    %1886 = vmatprep.subr.mxu0 0.0
    %1887 = vmatpush1.msra.mxu0 0.0
    %1888 = vmatprep.subr.mxu0 0.0
    %1889 = vmatpush1.msra.mxu0 0.0
    %1890 = vmatprep.subr.mxu0 0.0
    %1891 = vmatpush1.msra.mxu0 0.0
    %1892 = vmatprep.subr.mxu0 0.0
    %1893 = vmatpush1.msra.mxu0 0.0
    %1894 = vmatprep.subr.mxu0 0.0
    %1895 = vmatpush1.msra.mxu0 0.0
    %1896 = vmatprep.subr.mxu0 0.0
    %1897 = vmatpush1.msra.mxu0 0.0
    %1898 = vmatprep.subr.mxu0 0.0
    %1899 = vmatpush1.msra.mxu0 0.0
    %1900 = vmatprep.subr.mxu0 0.0
    %1901 = vmatpush1.msra.mxu0 0.0
    %1902 = vmatprep.subr.mxu0 0.0
    %1903 = vmatpush1.msra.mxu0 0.0
    %1904 = vmatprep.subr.mxu0 0.0
    %1905 = vmatpush1.msra.mxu0 0.0
    %1906 = vmatprep.subr.mxu0 0.0
    %1907 = vmatpush1.msra.mxu0 0.0
    %1908 = vmatprep.subr.mxu0 0.0
    %1909 = vmatpush1.msra.mxu0 0.0
    %1910 = vmatprep.subr.mxu0 0.0
    %1911 = vmatpush1.msra.mxu0 0.0
    %1912 = vmatprep.subr.mxu0 0.0
    %1913 = vmatpush1.msra.mxu0 0.0
    %1914 = vmatprep.mubr.f32.mxu0 0.0
    %1915 = vmatmul.mubr.f32.gmra.mrb[0].mxu0 %v1848
    %v1916 = vpop.f32.mrb[0].mxu0
    %v1917 = vadd.f32 0.0, %v1916
    %v1918 = vpop.f32.mrb[0].mxu0
    %1919 = vdwg.mxu0
    %1920 = vst.msk [vmem:[#allocation2 + $0x2] sm:$0x3] %vm1341, %v1917
    %1921 = vst.msk [vmem:[#allocation3] sm:$0xc] %vm1637, %v1648
    %v1923 = vsel %vm790, %v1917, 0
    %1925 = vmatprep.subr.mxu0 %v678
    %1926 = vmatpush1.msra.mxu0 %v677
    %1927 = vmatprep.subr.mxu0 %v682
    %1928 = vmatpush1.msra.mxu0 %v681
    %1929 = vmatprep.subr.mxu0 %v686
    %1930 = vmatpush1.msra.mxu0 %v685
    %1931 = vmatprep.subr.mxu0 %v690
    %1932 = vmatpush1.msra.mxu0 %v689
    %1933 = vmatprep.subr.mxu0 0.0
    %1934 = vmatpush1.msra.mxu0 0.0
    %1935 = vmatprep.subr.mxu0 0.0
    %1936 = vmatpush1.msra.mxu0 0.0
    %1937 = vmatprep.subr.mxu0 0.0
    %1938 = vmatpush1.msra.mxu0 0.0
    %1939 = vmatprep.subr.mxu0 0.0
    %1940 = vmatpush1.msra.mxu0 0.0
    %1941 = vmatprep.subr.mxu0 0.0
    %1942 = vmatpush1.msra.mxu0 0.0
    %1943 = vmatprep.subr.mxu0 0.0
    %1944 = vmatpush1.msra.mxu0 0.0
    %1945 = vmatprep.subr.mxu0 0.0
    %1946 = vmatpush1.msra.mxu0 0.0
    %1947 = vmatprep.subr.mxu0 0.0
    %1948 = vmatpush1.msra.mxu0 0.0
    %1949 = vmatprep.subr.mxu0 0.0
    %1950 = vmatpush1.msra.mxu0 0.0
    %1951 = vmatprep.subr.mxu0 0.0
    %1952 = vmatpush1.msra.mxu0 0.0
    %1953 = vmatprep.subr.mxu0 0.0
    %1954 = vmatpush1.msra.mxu0 0.0
    %1955 = vmatprep.subr.mxu0 0.0
    %1956 = vmatpush1.msra.mxu0 0.0
    %1957 = vmatprep.subr.mxu0 0.0
    %1958 = vmatpush1.msra.mxu0 0.0
    %1959 = vmatprep.subr.mxu0 0.0
    %1960 = vmatpush1.msra.mxu0 0.0
    %1961 = vmatprep.subr.mxu0 0.0
    %1962 = vmatpush1.msra.mxu0 0.0
    %1963 = vmatprep.subr.mxu0 0.0
    %1964 = vmatpush1.msra.mxu0 0.0
    %1965 = vmatprep.subr.mxu0 0.0
    %1966 = vmatpush1.msra.mxu0 0.0
    %1967 = vmatprep.subr.mxu0 0.0
    %1968 = vmatpush1.msra.mxu0 0.0
    %1969 = vmatprep.subr.mxu0 0.0
    %1970 = vmatpush1.msra.mxu0 0.0
    %1971 = vmatprep.subr.mxu0 0.0
    %1972 = vmatpush1.msra.mxu0 0.0
    %1973 = vmatprep.subr.mxu0 0.0
    %1974 = vmatpush1.msra.mxu0 0.0
    %1975 = vmatprep.subr.mxu0 0.0
    %1976 = vmatpush1.msra.mxu0 0.0
    %1977 = vmatprep.subr.mxu0 0.0
    %1978 = vmatpush1.msra.mxu0 0.0
    %1979 = vmatprep.subr.mxu0 0.0
    %1980 = vmatpush1.msra.mxu0 0.0
    %1981 = vmatprep.subr.mxu0 0.0
    %1982 = vmatpush1.msra.mxu0 0.0
    %1983 = vmatprep.subr.mxu0 0.0
    %1984 = vmatpush1.msra.mxu0 0.0
    %1985 = vmatprep.subr.mxu0 0.0
    %1986 = vmatpush1.msra.mxu0 0.0
    %1987 = vmatprep.subr.mxu0 0.0
    %1988 = vmatpush1.msra.mxu0 0.0
    %1989 = vmatprep.mubr.f32.mxu0 0.0
    %1990 = vmatmul.mubr.f32.gmra.mrb[0].mxu0 %v1923
    %v1991 = vpop.f32.mrb[0].mxu0
    %v1992 = vadd.f32 0.0, %v1991
    %v1993 = vpop.f32.mrb[0].mxu0
    %v1994 = vadd.f32 0.0, %v1993
    %1995 = vdwg.mxu0
    %1996 = vmatprep.subr.mxu0 %v680
    %1997 = vmatpush1.msra.mxu0 %v679
    %1998 = vmatprep.subr.mxu0 %v684
    %1999 = vmatpush1.msra.mxu0 %v683
    %2000 = vmatprep.subr.mxu0 %v688
    %2001 = vmatpush1.msra.mxu0 %v687
    %2002 = vmatprep.subr.mxu0 %v692
    %2003 = vmatpush1.msra.mxu0 %v691
    %2004 = vmatprep.subr.mxu0 0.0
    %2005 = vmatpush1.msra.mxu0 0.0
    %2006 = vmatprep.subr.mxu0 0.0
    %2007 = vmatpush1.msra.mxu0 0.0
    %2008 = vmatprep.subr.mxu0 0.0
    %2009 = vmatpush1.msra.mxu0 0.0
    %2010 = vmatprep.subr.mxu0 0.0
    %2011 = vmatpush1.msra.mxu0 0.0
    %2012 = vmatprep.subr.mxu0 0.0
    %2013 = vmatpush1.msra.mxu0 0.0
    %2014 = vmatprep.subr.mxu0 0.0
    %2015 = vmatpush1.msra.mxu0 0.0
    %2016 = vmatprep.subr.mxu0 0.0
    %2017 = vmatpush1.msra.mxu0 0.0
    %2018 = vmatprep.subr.mxu0 0.0
    %2019 = vmatpush1.msra.mxu0 0.0
    %2020 = vmatprep.subr.mxu0 0.0
    %2021 = vmatpush1.msra.mxu0 0.0
    %2022 = vmatprep.subr.mxu0 0.0
    %2023 = vmatpush1.msra.mxu0 0.0
    %2024 = vmatprep.subr.mxu0 0.0
    %2025 = vmatpush1.msra.mxu0 0.0
    %2026 = vmatprep.subr.mxu0 0.0
    %2027 = vmatpush1.msra.mxu0 0.0
    %2028 = vmatprep.subr.mxu0 0.0
    %2029 = vmatpush1.msra.mxu0 0.0
    %2030 = vmatprep.subr.mxu0 0.0
    %2031 = vmatpush1.msra.mxu0 0.0
    %2032 = vmatprep.subr.mxu0 0.0
    %2033 = vmatpush1.msra.mxu0 0.0
    %2034 = vmatprep.subr.mxu0 0.0
    %2035 = vmatpush1.msra.mxu0 0.0
    %2036 = vmatprep.subr.mxu0 0.0
    %2037 = vmatpush1.msra.mxu0 0.0
    %2038 = vmatprep.subr.mxu0 0.0
    %2039 = vmatpush1.msra.mxu0 0.0
    %2040 = vmatprep.subr.mxu0 0.0
    %2041 = vmatpush1.msra.mxu0 0.0
    %2042 = vmatprep.subr.mxu0 0.0
    %2043 = vmatpush1.msra.mxu0 0.0
    %2044 = vmatprep.subr.mxu0 0.0
    %2045 = vmatpush1.msra.mxu0 0.0
    %2046 = vmatprep.subr.mxu0 0.0
    %2047 = vmatpush1.msra.mxu0 0.0
    %2048 = vmatprep.subr.mxu0 0.0
    %2049 = vmatpush1.msra.mxu0 0.0
    %2050 = vmatprep.subr.mxu0 0.0
    %2051 = vmatpush1.msra.mxu0 0.0
    %2052 = vmatprep.subr.mxu0 0.0
    %2053 = vmatpush1.msra.mxu0 0.0
    %2054 = vmatprep.subr.mxu0 0.0
    %2055 = vmatpush1.msra.mxu0 0.0
    %2056 = vmatprep.subr.mxu0 0.0
    %2057 = vmatpush1.msra.mxu0 0.0
    %2058 = vmatprep.subr.mxu0 0.0
    %2059 = vmatpush1.msra.mxu0 0.0
    %2060 = vmatprep.mubr.f32.mxu0 0.0
    %2061 = vmatmul.mubr.f32.gmra.mrb[0].mxu0 %v1923
    %v2062 = vpop.f32.mrb[0].mxu0
    %v2063 = vadd.f32 0.0, %v2062
    %v2064 = vpop.f32.mrb[0].mxu0
    %v2065 = vadd.f32 0.0, %v2064
    %2066 = vdwg.mxu0
    %v2067 = vmax.f32 %v1992, 0.0
    %v2068 = vmax.f32 %v1994, 0.0
    %v2069 = vmax.f32 %v2063, 0.0
    %v2070 = vmax.f32 %v2065, 0.0
    %2071 = vmatprep.subr.mxu0 0.0
    %2072 = vmatpush1.msra.mxu0 %v693
    %2073 = vmatprep.subr.mxu0 0.0
    %2074 = vmatpush1.msra.mxu0 %v694
    %2075 = vmatprep.subr.mxu0 0.0
    %2076 = vmatpush1.msra.mxu0 %v695
    %2077 = vmatprep.subr.mxu0 0.0
    %2078 = vmatpush1.msra.mxu0 %v696
    %2079 = vmatprep.subr.mxu0 0.0
    %2080 = vmatpush1.msra.mxu0 %v697
    %2081 = vmatprep.subr.mxu0 0.0
    %2082 = vmatpush1.msra.mxu0 %v698
    %2083 = vmatprep.subr.mxu0 0.0
    %2084 = vmatpush1.msra.mxu0 %v699
    %2085 = vmatprep.subr.mxu0 0.0
    %2086 = vmatpush1.msra.mxu0 %v700
    %2087 = vmatprep.subr.mxu0 0.0
    %2088 = vmatpush1.msra.mxu0 %v701
    %2089 = vmatprep.subr.mxu0 0.0
    %2090 = vmatpush1.msra.mxu0 %v702
    %2091 = vmatprep.subr.mxu0 0.0
    %2092 = vmatpush1.msra.mxu0 %v703
    %2093 = vmatprep.subr.mxu0 0.0
    %2094 = vmatpush1.msra.mxu0 %v704
    %2095 = vmatprep.subr.mxu0 0.0
    %2096 = vmatpush1.msra.mxu0 %v705
    %2097 = vmatprep.subr.mxu0 0.0
    %2098 = vmatpush1.msra.mxu0 %v706
    %2099 = vmatprep.subr.mxu0 0.0
    %2100 = vmatpush1.msra.mxu0 %v707
    %2101 = vmatprep.subr.mxu0 0.0
    %2102 = vmatpush1.msra.mxu0 %v708
    %2103 = vmatprep.subr.mxu0 0.0
    %2104 = vmatpush1.msra.mxu0 %v709
    %2105 = vmatprep.subr.mxu0 0.0
    %2106 = vmatpush1.msra.mxu0 %v710
    %2107 = vmatprep.subr.mxu0 0.0
    %2108 = vmatpush1.msra.mxu0 %v711
    %2109 = vmatprep.subr.mxu0 0.0
    %2110 = vmatpush1.msra.mxu0 %v712
    %2111 = vmatprep.subr.mxu0 0.0
    %2112 = vmatpush1.msra.mxu0 %v713
    %2113 = vmatprep.subr.mxu0 0.0
    %2114 = vmatpush1.msra.mxu0 %v714
    %2115 = vmatprep.subr.mxu0 0.0
    %2116 = vmatpush1.msra.mxu0 %v715
    %2117 = vmatprep.subr.mxu0 0.0
    %2118 = vmatpush1.msra.mxu0 %v716
    %2119 = vmatprep.subr.mxu0 0.0
    %2120 = vmatpush1.msra.mxu0 %v717
    %2121 = vmatprep.subr.mxu0 0.0
    %2122 = vmatpush1.msra.mxu0 %v718
    %2123 = vmatprep.subr.mxu0 0.0
    %2124 = vmatpush1.msra.mxu0 %v719
    %2125 = vmatprep.subr.mxu0 0.0
    %2126 = vmatpush1.msra.mxu0 %v720
    %2127 = vmatprep.subr.mxu0 0.0
    %2128 = vmatpush1.msra.mxu0 %v721
    %2129 = vmatprep.subr.mxu0 0.0
    %2130 = vmatpush1.msra.mxu0 %v722
    %2131 = vmatprep.subr.mxu0 0.0
    %2132 = vmatpush1.msra.mxu0 %v723
    %2133 = vmatprep.subr.mxu0 0.0
    %2134 = vmatpush1.msra.mxu0 %v724
    %2135 = vmatprep.mubr.f32.mxu0 %v2068
    %2136 = vmatmul.mubr.f32.gmra.mrb[0].mxu0 %v2067
    %v2137 = vpop.f32.mrb[0].mxu0
    %v2138 = vadd.f32 0.0, %v2137
    %v2139 = vpop.f32.mrb[0].mxu0
    %2140 = vdwg.mxu0
    %2141 = vmatprep.subr.mxu0 0.0
    %2142 = vmatpush1.msra.mxu0 %v725
    %2143 = vmatprep.subr.mxu0 0.0
    %2144 = vmatpush1.msra.mxu0 %v726
    %2145 = vmatprep.subr.mxu0 0.0
    %2146 = vmatpush1.msra.mxu0 %v727
    %2147 = vmatprep.subr.mxu0 0.0
    %2148 = vmatpush1.msra.mxu0 %v728
    %2149 = vmatprep.subr.mxu0 0.0
    %2150 = vmatpush1.msra.mxu0 %v729
    %2151 = vmatprep.subr.mxu0 0.0
    %2152 = vmatpush1.msra.mxu0 %v730
    %2153 = vmatprep.subr.mxu0 0.0
    %2154 = vmatpush1.msra.mxu0 %v731
    %2155 = vmatprep.subr.mxu0 0.0
    %2156 = vmatpush1.msra.mxu0 %v732
    %2157 = vmatprep.subr.mxu0 0.0
    %2158 = vmatpush1.msra.mxu0 %v733
    %2159 = vmatprep.subr.mxu0 0.0
    %2160 = vmatpush1.msra.mxu0 %v734
    %2161 = vmatprep.subr.mxu0 0.0
    %2162 = vmatpush1.msra.mxu0 %v735
    %2163 = vmatprep.subr.mxu0 0.0
    %2164 = vmatpush1.msra.mxu0 %v736
    %2165 = vmatprep.subr.mxu0 0.0
    %2166 = vmatpush1.msra.mxu0 %v737
    %2167 = vmatprep.subr.mxu0 0.0
    %2168 = vmatpush1.msra.mxu0 %v738
    %2169 = vmatprep.subr.mxu0 0.0
    %2170 = vmatpush1.msra.mxu0 %v739
    %2171 = vmatprep.subr.mxu0 0.0
    %2172 = vmatpush1.msra.mxu0 %v740
    %2173 = vmatprep.subr.mxu0 0.0
    %2174 = vmatpush1.msra.mxu0 %v741
    %2175 = vmatprep.subr.mxu0 0.0
    %2176 = vmatpush1.msra.mxu0 %v742
    %2177 = vmatprep.subr.mxu0 0.0
    %2178 = vmatpush1.msra.mxu0 %v743
    %2179 = vmatprep.subr.mxu0 0.0
    %2180 = vmatpush1.msra.mxu0 %v744
    %2181 = vmatprep.subr.mxu0 0.0
    %2182 = vmatpush1.msra.mxu0 %v745
    %2183 = vmatprep.subr.mxu0 0.0
    %2184 = vmatpush1.msra.mxu0 %v746
    %2185 = vmatprep.subr.mxu0 0.0
    %2186 = vmatpush1.msra.mxu0 %v747
    %2187 = vmatprep.subr.mxu0 0.0
    %2188 = vmatpush1.msra.mxu0 %v748
    %2189 = vmatprep.subr.mxu0 0.0
    %2190 = vmatpush1.msra.mxu0 %v749
    %2191 = vmatprep.subr.mxu0 0.0
    %2192 = vmatpush1.msra.mxu0 %v750
    %2193 = vmatprep.subr.mxu0 0.0
    %2194 = vmatpush1.msra.mxu0 %v751
    %2195 = vmatprep.subr.mxu0 0.0
    %2196 = vmatpush1.msra.mxu0 %v752
    %2197 = vmatprep.subr.mxu0 0.0
    %2198 = vmatpush1.msra.mxu0 %v753
    %2199 = vmatprep.subr.mxu0 0.0
    %2200 = vmatpush1.msra.mxu0 %v754
    %2201 = vmatprep.subr.mxu0 0.0
    %2202 = vmatpush1.msra.mxu0 %v755
    %2203 = vmatprep.subr.mxu0 0.0
    %2204 = vmatpush1.msra.mxu0 %v756
    %2205 = vmatprep.mubr.f32.mxu0 %v2070
    %2206 = vmatmul.mubr.f32.gmra.mrb[0].mxu0 %v2069
    %v2207 = vpop.f32.mrb[0].mxu0
    %v2208 = vadd.f32 %v2138, %v2207
    %v2209 = vpop.f32.mrb[0].mxu0
    %2210 = vdwg.mxu0
    %v2212 = vrot.slane %v2208, 4
    %v2214 = vadd.f32 %v669, %v2212
    %vm2215 = vcmask 29700
    %v2216 = vsel %vm2215, %v2214, -inf
    %2217 = vmax.xlane.f32.xlu0 %v2216
    %v2218 = vpop.xlane.xlu0 %2217
    %v2219 = vsub.f32 %v2214, %v2218
    %v2220 = vmul.f32 %v2219, 1.442695
    %v2221 = vpow.pop %v2220
    %v2222 = vsel %vm2215, %v2221, 0.0
    %2223 = vadd.xlane.f32.xlu0 %v2222
    %v2224 = vpop.xlane.xlu0 %2223
    %v2225 = vrcp.pop %v2224
    %v2226 = vmul.f32 %v2221, %v2225
    %v2231 = vrot.slane %v1992, 4
    %v2232 = vrot.slane %v1994, 4
    %v2233 = vrot.slane %v2063, 4
    %v2234 = vrot.slane %v2065, 4
    %v2239 = vadd.f32 %v368, %v2231
    %v2240 = vadd.f32 %v370, %v2232
    %v2241 = vadd.f32 %v445, %v2233
    %v2242 = vadd.f32 %v447, %v2234
    %v2243 = vxor.u32 %v2239, 2147483648
    %v2244 = vxor.u32 %v2240, 2147483648
    %v2245 = vxor.u32 %v2241, 2147483648
    %v2246 = vmul.f32 %v2243, 1.442695
    %v2247 = vpow.pop %v2246
    %v2248 = vmul.f32 %v2244, 1.442695
    %v2249 = vpow.pop %v2248
    %v2250 = vmul.f32 %v2245, 1.442695
    %v2251 = vpow.pop %v2250
    %v2252 = vadd.f32 %v2247, 1.0
    %v2253 = vadd.f32 %v2249, 1.0
    %v2254 = vadd.f32 %v2251, 1.0
    %v2255 = vrcp.pop %v2252
    %v2256 = vmul.f32 1.0, %v2255
    %v2257 = vrcp.pop %v2253
    %v2258 = vmul.f32 1.0, %v2257
    %v2259 = vrcp.pop %v2254
    %v2260 = vmul.f32 1.0, %v2259
    %v2261 = vtanh.pop %v2242
    %v2263 = vrot.slane %v2258, 4
    %v2265 = vmul.f32 %v1840, %v2263
    %v2266 = vmul.f32 %v2256, %v2261
    %v2268 = vrot.slane %v2266, 4
    %v2270 = vadd.f32 %v2265, %v2268
    %v2271 = vtanh.pop %v2270
    %v2273 = vrot.slane %v2271, 4
    %v2275 = vmul.f32 %v2260, %v2273
    %v2277 = vrot.slane %v2226, 4
    %v2278 = vsel %vm1121, %v2277, 0
    %2280 = vmatprep.subr.mxu0 0.0
    %2281 = vmatpush1.msra.mxu0 %v1127
    %2282 = vmatprep.subr.mxu0 0.0
    %2283 = vmatpush1.msra.mxu0 0.0
    %2284 = vmatprep.subr.mxu0 0.0
    %2285 = vmatpush1.msra.mxu0 0.0
    %2286 = vmatprep.subr.mxu0 0.0
    %2287 = vmatpush1.msra.mxu0 0.0
    %2288 = vmatprep.subr.mxu0 0.0
    %2289 = vmatpush1.msra.mxu0 0.0
    %2290 = vmatprep.subr.mxu0 0.0
    %2291 = vmatpush1.msra.mxu0 0.0
    %2292 = vmatprep.subr.mxu0 0.0
    %2293 = vmatpush1.msra.mxu0 0.0
    %2294 = vmatprep.subr.mxu0 0.0
    %2295 = vmatpush1.msra.mxu0 0.0
    %2296 = vmatprep.subr.mxu0 0.0
    %2297 = vmatpush1.msra.mxu0 0.0
    %2298 = vmatprep.subr.mxu0 0.0
    %2299 = vmatpush1.msra.mxu0 0.0
    %2300 = vmatprep.subr.mxu0 0.0
    %2301 = vmatpush1.msra.mxu0 0.0
    %2302 = vmatprep.subr.mxu0 0.0
    %2303 = vmatpush1.msra.mxu0 0.0
    %2304 = vmatprep.subr.mxu0 0.0
    %2305 = vmatpush1.msra.mxu0 0.0
    %2306 = vmatprep.subr.mxu0 0.0
    %2307 = vmatpush1.msra.mxu0 0.0
    %2308 = vmatprep.subr.mxu0 0.0
    %2309 = vmatpush1.msra.mxu0 0.0
    %2310 = vmatprep.subr.mxu0 0.0
    %2311 = vmatpush1.msra.mxu0 0.0
    %2312 = vmatprep.subr.mxu0 0.0
    %2313 = vmatpush1.msra.mxu0 0.0
    %2314 = vmatprep.subr.mxu0 0.0
    %2315 = vmatpush1.msra.mxu0 0.0
    %2316 = vmatprep.subr.mxu0 0.0
    %2317 = vmatpush1.msra.mxu0 0.0
    %2318 = vmatprep.subr.mxu0 0.0
    %2319 = vmatpush1.msra.mxu0 0.0
    %2320 = vmatprep.subr.mxu0 0.0
    %2321 = vmatpush1.msra.mxu0 0.0
    %2322 = vmatprep.subr.mxu0 0.0
    %2323 = vmatpush1.msra.mxu0 0.0
    %2324 = vmatprep.subr.mxu0 0.0
    %2325 = vmatpush1.msra.mxu0 0.0
    %2326 = vmatprep.subr.mxu0 0.0
    %2327 = vmatpush1.msra.mxu0 0.0
    %2328 = vmatprep.subr.mxu0 0.0
    %2329 = vmatpush1.msra.mxu0 0.0
    %2330 = vmatprep.subr.mxu0 0.0
    %2331 = vmatpush1.msra.mxu0 0.0
    %2332 = vmatprep.subr.mxu0 0.0
    %2333 = vmatpush1.msra.mxu0 0.0
    %2334 = vmatprep.subr.mxu0 0.0
    %2335 = vmatpush1.msra.mxu0 0.0
    %2336 = vmatprep.subr.mxu0 0.0
    %2337 = vmatpush1.msra.mxu0 0.0
    %2338 = vmatprep.subr.mxu0 0.0
    %2339 = vmatpush1.msra.mxu0 0.0
    %2340 = vmatprep.subr.mxu0 0.0
    %2341 = vmatpush1.msra.mxu0 0.0
    %2342 = vmatprep.subr.mxu0 0.0
    %2343 = vmatpush1.msra.mxu0 0.0
    %2344 = vmatprep.mubr.f32.mxu0 0.0
    %2345 = vmatmul.mubr.f32.gmra.mrb[0].mxu0 %v2278
    %v2346 = vpop.f32.mrb[0].mxu0
    %v2347 = vadd.f32 0.0, %v2346
    %v2348 = vpop.f32.mrb[0].mxu0
    %2349 = vdwg.mxu0
    %v2350 = vmul.f32 %v2270, %v2347
    %2351 = vmatprep.subr.mxu0 0.0
    %2352 = vmatpush1.msra.mxu0 %v774
    %2353 = vmatprep.subr.mxu0 0.0
    %2354 = vmatpush1.msra.mxu0 %v775
    %2355 = vmatprep.subr.mxu0 0.0
    %2356 = vmatpush1.msra.mxu0 %v776
    %2357 = vmatprep.subr.mxu0 0.0
    %2358 = vmatpush1.msra.mxu0 %v777
    %2359 = vmatprep.subr.mxu0 0.0
    %2360 = vmatpush1.msra.mxu0 %v778
    %2361 = vmatprep.subr.mxu0 0.0
    %2362 = vmatpush1.msra.mxu0 %v779
    %2363 = vmatprep.subr.mxu0 0.0
    %2364 = vmatpush1.msra.mxu0 %v780
    %2365 = vmatprep.subr.mxu0 0.0
    %2366 = vmatpush1.msra.mxu0 %v781
    %2367 = vmatprep.subr.mxu0 0.0
    %2368 = vmatpush1.msra.mxu0 %v782
    %2369 = vmatprep.subr.mxu0 0.0
    %2370 = vmatpush1.msra.mxu0 %v783
    %2371 = vmatprep.subr.mxu0 0.0
    %2372 = vmatpush1.msra.mxu0 %v784
    %2373 = vmatprep.subr.mxu0 0.0
    %2374 = vmatpush1.msra.mxu0 %v785
    %2375 = vmatprep.subr.mxu0 0.0
    %2376 = vmatpush1.msra.mxu0 %v786
    %2377 = vmatprep.subr.mxu0 0.0
    %2378 = vmatpush1.msra.mxu0 %v787
    %2379 = vmatprep.subr.mxu0 0.0
    %2380 = vmatpush1.msra.mxu0 %v788
    %2381 = vmatprep.subr.mxu0 0.0
    %2382 = vmatpush1.msra.mxu0 %v789
    %2383 = vmatprep.subr.mxu0 0.0
    %2384 = vmatpush1.msra.mxu0 0.0
    %2385 = vmatprep.subr.mxu0 0.0
    %2386 = vmatpush1.msra.mxu0 0.0
    %2387 = vmatprep.subr.mxu0 0.0
    %2388 = vmatpush1.msra.mxu0 0.0
    %2389 = vmatprep.subr.mxu0 0.0
    %2390 = vmatpush1.msra.mxu0 0.0
    %2391 = vmatprep.subr.mxu0 0.0
    %2392 = vmatpush1.msra.mxu0 0.0
    %2393 = vmatprep.subr.mxu0 0.0
    %2394 = vmatpush1.msra.mxu0 0.0
    %2395 = vmatprep.subr.mxu0 0.0
    %2396 = vmatpush1.msra.mxu0 0.0
    %2397 = vmatprep.subr.mxu0 0.0
    %2398 = vmatpush1.msra.mxu0 0.0
    %2399 = vmatprep.subr.mxu0 0.0
    %2400 = vmatpush1.msra.mxu0 0.0
    %2401 = vmatprep.subr.mxu0 0.0
    %2402 = vmatpush1.msra.mxu0 0.0
    %2403 = vmatprep.subr.mxu0 0.0
    %2404 = vmatpush1.msra.mxu0 0.0
    %2405 = vmatprep.subr.mxu0 0.0
    %2406 = vmatpush1.msra.mxu0 0.0
    %2407 = vmatprep.subr.mxu0 0.0
    %2408 = vmatpush1.msra.mxu0 0.0
    %2409 = vmatprep.subr.mxu0 0.0
    %2410 = vmatpush1.msra.mxu0 0.0
    %2411 = vmatprep.subr.mxu0 0.0
    %2412 = vmatpush1.msra.mxu0 0.0
    %2413 = vmatprep.subr.mxu0 0.0
    %2414 = vmatpush1.msra.mxu0 0.0
    %2415 = vmatprep.mubr.f32.mxu0 0.0
    %2416 = vmatmul.mubr.f32.gmra.mrb[0].mxu0 %v2350
    %v2417 = vpop.f32.mrb[0].mxu0
    %v2418 = vadd.f32 0.0, %v2417
    %v2419 = vpop.f32.mrb[0].mxu0
    %2420 = vdwg.mxu0
    %v2422 = vrot.slane %v2347, 4
    %v2424 = vmul.f32 %v2275, %v2422
    %v2426 = vrot.slane %v2424, 4
    %2428 = vmatprep.subr.mxu0 0.0
    %2429 = vmatpush1.msra.mxu0 %v758
    %2430 = vmatprep.subr.mxu0 0.0
    %2431 = vmatpush1.msra.mxu0 %v759
    %2432 = vmatprep.subr.mxu0 0.0
    %2433 = vmatpush1.msra.mxu0 %v760
    %2434 = vmatprep.subr.mxu0 0.0
    %2435 = vmatpush1.msra.mxu0 %v761
    %2436 = vmatprep.subr.mxu0 0.0
    %2437 = vmatpush1.msra.mxu0 %v762
    %2438 = vmatprep.subr.mxu0 0.0
    %2439 = vmatpush1.msra.mxu0 %v763
    %2440 = vmatprep.subr.mxu0 0.0
    %2441 = vmatpush1.msra.mxu0 %v764
    %2442 = vmatprep.subr.mxu0 0.0
    %2443 = vmatpush1.msra.mxu0 %v765
    %2444 = vmatprep.subr.mxu0 0.0
    %2445 = vmatpush1.msra.mxu0 %v766
    %2446 = vmatprep.subr.mxu0 0.0
    %2447 = vmatpush1.msra.mxu0 %v767
    %2448 = vmatprep.subr.mxu0 0.0
    %2449 = vmatpush1.msra.mxu0 %v768
    %2450 = vmatprep.subr.mxu0 0.0
    %2451 = vmatpush1.msra.mxu0 %v769
    %2452 = vmatprep.subr.mxu0 0.0
    %2453 = vmatpush1.msra.mxu0 %v770
    %2454 = vmatprep.subr.mxu0 0.0
    %2455 = vmatpush1.msra.mxu0 %v771
    %2456 = vmatprep.subr.mxu0 0.0
    %2457 = vmatpush1.msra.mxu0 %v772
    %2458 = vmatprep.subr.mxu0 0.0
    %2459 = vmatpush1.msra.mxu0 %v773
    %2460 = vmatprep.subr.mxu0 0.0
    %2461 = vmatpush1.msra.mxu0 0.0
    %2462 = vmatprep.subr.mxu0 0.0
    %2463 = vmatpush1.msra.mxu0 0.0
    %2464 = vmatprep.subr.mxu0 0.0
    %2465 = vmatpush1.msra.mxu0 0.0
    %2466 = vmatprep.subr.mxu0 0.0
    %2467 = vmatpush1.msra.mxu0 0.0
    %2468 = vmatprep.subr.mxu0 0.0
    %2469 = vmatpush1.msra.mxu0 0.0
    %2470 = vmatprep.subr.mxu0 0.0
    %2471 = vmatpush1.msra.mxu0 0.0
    %2472 = vmatprep.subr.mxu0 0.0
    %2473 = vmatpush1.msra.mxu0 0.0
    %2474 = vmatprep.subr.mxu0 0.0
    %2475 = vmatpush1.msra.mxu0 0.0
    %2476 = vmatprep.subr.mxu0 0.0
    %2477 = vmatpush1.msra.mxu0 0.0
    %2478 = vmatprep.subr.mxu0 0.0
    %2479 = vmatpush1.msra.mxu0 0.0
    %2480 = vmatprep.subr.mxu0 0.0
    %2481 = vmatpush1.msra.mxu0 0.0
    %2482 = vmatprep.subr.mxu0 0.0
    %2483 = vmatpush1.msra.mxu0 0.0
    %2484 = vmatprep.subr.mxu0 0.0
    %2485 = vmatpush1.msra.mxu0 0.0
    %2486 = vmatprep.subr.mxu0 0.0
    %2487 = vmatpush1.msra.mxu0 0.0
    %2488 = vmatprep.subr.mxu0 0.0
    %2489 = vmatpush1.msra.mxu0 0.0
    %2490 = vmatprep.subr.mxu0 0.0
    %2491 = vmatpush1.msra.mxu0 0.0
    %2492 = vmatprep.mubr.f32.mxu0 0.0
    %2493 = vmatmul.mubr.f32.gmra.mrb[0].mxu0 %v2426
    %v2494 = vpop.f32.mrb[0].mxu0
    %v2495 = vadd.f32 0.0, %v2494
    %v2496 = vpop.f32.mrb[0].mxu0
    %2497 = vdwg.mxu0
    %2498 = vst.msk [vmem:[#allocation2 + $0x4] sm:$0x3] %vm1341, %v2495
    %2499 = vst.msk [vmem:[#allocation3] sm:$0x30] %vm2215, %v2226
    %v2501 = vsel %vm790, %v2495, 0
    %2503 = vmatprep.subr.mxu0 %v678
    %2504 = vmatpush1.msra.mxu0 %v677
    %2505 = vmatprep.subr.mxu0 %v682
    %2506 = vmatpush1.msra.mxu0 %v681
    %2507 = vmatprep.subr.mxu0 %v686
    %2508 = vmatpush1.msra.mxu0 %v685
    %2509 = vmatprep.subr.mxu0 %v690
    %2510 = vmatpush1.msra.mxu0 %v689
    %2511 = vmatprep.subr.mxu0 0.0
    %2512 = vmatpush1.msra.mxu0 0.0
    %2513 = vmatprep.subr.mxu0 0.0
    %2514 = vmatpush1.msra.mxu0 0.0
    %2515 = vmatprep.subr.mxu0 0.0
    %2516 = vmatpush1.msra.mxu0 0.0
    %2517 = vmatprep.subr.mxu0 0.0
    %2518 = vmatpush1.msra.mxu0 0.0
    %2519 = vmatprep.subr.mxu0 0.0
    %2520 = vmatpush1.msra.mxu0 0.0
    %2521 = vmatprep.subr.mxu0 0.0
    %2522 = vmatpush1.msra.mxu0 0.0
    %2523 = vmatprep.subr.mxu0 0.0
    %2524 = vmatpush1.msra.mxu0 0.0
    %2525 = vmatprep.subr.mxu0 0.0
    %2526 = vmatpush1.msra.mxu0 0.0
    %2527 = vmatprep.subr.mxu0 0.0
    %2528 = vmatpush1.msra.mxu0 0.0
    %2529 = vmatprep.subr.mxu0 0.0
    %2530 = vmatpush1.msra.mxu0 0.0
    %2531 = vmatprep.subr.mxu0 0.0
    %2532 = vmatpush1.msra.mxu0 0.0
    %2533 = vmatprep.subr.mxu0 0.0
    %2534 = vmatpush1.msra.mxu0 0.0
    %2535 = vmatprep.subr.mxu0 0.0
    %2536 = vmatpush1.msra.mxu0 0.0
    %2537 = vmatprep.subr.mxu0 0.0
    %2538 = vmatpush1.msra.mxu0 0.0
    %2539 = vmatprep.subr.mxu0 0.0
    %2540 = vmatpush1.msra.mxu0 0.0
    %2541 = vmatprep.subr.mxu0 0.0
    %2542 = vmatpush1.msra.mxu0 0.0
    %2543 = vmatprep.subr.mxu0 0.0
    %2544 = vmatpush1.msra.mxu0 0.0
    %2545 = vmatprep.subr.mxu0 0.0
    %2546 = vmatpush1.msra.mxu0 0.0
    %2547 = vmatprep.subr.mxu0 0.0
    %2548 = vmatpush1.msra.mxu0 0.0
    %2549 = vmatprep.subr.mxu0 0.0
    %2550 = vmatpush1.msra.mxu0 0.0
    %2551 = vmatprep.subr.mxu0 0.0
    %2552 = vmatpush1.msra.mxu0 0.0
    %2553 = vmatprep.subr.mxu0 0.0
    %2554 = vmatpush1.msra.mxu0 0.0
    %2555 = vmatprep.subr.mxu0 0.0
    %2556 = vmatpush1.msra.mxu0 0.0
    %2557 = vmatprep.subr.mxu0 0.0
    %2558 = vmatpush1.msra.mxu0 0.0
    %2559 = vmatprep.subr.mxu0 0.0
    %2560 = vmatpush1.msra.mxu0 0.0
    %2561 = vmatprep.subr.mxu0 0.0
    %2562 = vmatpush1.msra.mxu0 0.0
    %2563 = vmatprep.subr.mxu0 0.0
    %2564 = vmatpush1.msra.mxu0 0.0
    %2565 = vmatprep.subr.mxu0 0.0
    %2566 = vmatpush1.msra.mxu0 0.0
    %2567 = vmatprep.mubr.f32.mxu0 0.0
    %2568 = vmatmul.mubr.f32.gmra.mrb[0].mxu0 %v2501
    %v2569 = vpop.f32.mrb[0].mxu0
    %v2570 = vadd.f32 0.0, %v2569
    %v2571 = vpop.f32.mrb[0].mxu0
    %v2572 = vadd.f32 0.0, %v2571
    %2573 = vdwg.mxu0
    %2574 = vmatprep.subr.mxu0 %v680
    %2575 = vmatpush1.msra.mxu0 %v679
    %2576 = vmatprep.subr.mxu0 %v684
    %2577 = vmatpush1.msra.mxu0 %v683
    %2578 = vmatprep.subr.mxu0 %v688
    %2579 = vmatpush1.msra.mxu0 %v687
    %2580 = vmatprep.subr.mxu0 %v692
    %2581 = vmatpush1.msra.mxu0 %v691
    %2582 = vmatprep.subr.mxu0 0.0
    %2583 = vmatpush1.msra.mxu0 0.0
    %2584 = vmatprep.subr.mxu0 0.0
    %2585 = vmatpush1.msra.mxu0 0.0
    %2586 = vmatprep.subr.mxu0 0.0
    %2587 = vmatpush1.msra.mxu0 0.0
    %2588 = vmatprep.subr.mxu0 0.0
    %2589 = vmatpush1.msra.mxu0 0.0
    %2590 = vmatprep.subr.mxu0 0.0
    %2591 = vmatpush1.msra.mxu0 0.0
    %2592 = vmatprep.subr.mxu0 0.0
    %2593 = vmatpush1.msra.mxu0 0.0
    %2594 = vmatprep.subr.mxu0 0.0
    %2595 = vmatpush1.msra.mxu0 0.0
    %2596 = vmatprep.subr.mxu0 0.0
    %2597 = vmatpush1.msra.mxu0 0.0
    %2598 = vmatprep.subr.mxu0 0.0
    %2599 = vmatpush1.msra.mxu0 0.0
    %2600 = vmatprep.subr.mxu0 0.0
    %2601 = vmatpush1.msra.mxu0 0.0
    %2602 = vmatprep.subr.mxu0 0.0
    %2603 = vmatpush1.msra.mxu0 0.0
    %2604 = vmatprep.subr.mxu0 0.0
    %2605 = vmatpush1.msra.mxu0 0.0
    %2606 = vmatprep.subr.mxu0 0.0
    %2607 = vmatpush1.msra.mxu0 0.0
    %2608 = vmatprep.subr.mxu0 0.0
    %2609 = vmatpush1.msra.mxu0 0.0
    %2610 = vmatprep.subr.mxu0 0.0
    %2611 = vmatpush1.msra.mxu0 0.0
    %2612 = vmatprep.subr.mxu0 0.0
    %2613 = vmatpush1.msra.mxu0 0.0
    %2614 = vmatprep.subr.mxu0 0.0
    %2615 = vmatpush1.msra.mxu0 0.0
    %2616 = vmatprep.subr.mxu0 0.0
    %2617 = vmatpush1.msra.mxu0 0.0
    %2618 = vmatprep.subr.mxu0 0.0
    %2619 = vmatpush1.msra.mxu0 0.0
    %2620 = vmatprep.subr.mxu0 0.0
    %2621 = vmatpush1.msra.mxu0 0.0
    %2622 = vmatprep.subr.mxu0 0.0
    %2623 = vmatpush1.msra.mxu0 0.0
    %2624 = vmatprep.subr.mxu0 0.0
    %2625 = vmatpush1.msra.mxu0 0.0
    %2626 = vmatprep.subr.mxu0 0.0
    %2627 = vmatpush1.msra.mxu0 0.0
    %2628 = vmatprep.subr.mxu0 0.0
    %2629 = vmatpush1.msra.mxu0 0.0
    %2630 = vmatprep.subr.mxu0 0.0
    %2631 = vmatpush1.msra.mxu0 0.0
    %2632 = vmatprep.subr.mxu0 0.0
    %2633 = vmatpush1.msra.mxu0 0.0
    %2634 = vmatprep.subr.mxu0 0.0
    %2635 = vmatpush1.msra.mxu0 0.0
    %2636 = vmatprep.subr.mxu0 0.0
    %2637 = vmatpush1.msra.mxu0 0.0
    %2638 = vmatprep.mubr.f32.mxu0 0.0
    %2639 = vmatmul.mubr.f32.gmra.mrb[0].mxu0 %v2501
    %v2640 = vpop.f32.mrb[0].mxu0
    %v2641 = vadd.f32 0.0, %v2640
    %v2642 = vpop.f32.mrb[0].mxu0
    %v2643 = vadd.f32 0.0, %v2642
    %2644 = vdwg.mxu0
    %v2645 = vmax.f32 %v2570, 0.0
    %v2646 = vmax.f32 %v2572, 0.0
    %v2647 = vmax.f32 %v2641, 0.0
    %v2648 = vmax.f32 %v2643, 0.0
    %2649 = vmatprep.subr.mxu0 0.0
    %2650 = vmatpush1.msra.mxu0 %v693
    %2651 = vmatprep.subr.mxu0 0.0
    %2652 = vmatpush1.msra.mxu0 %v694
    %2653 = vmatprep.subr.mxu0 0.0
    %2654 = vmatpush1.msra.mxu0 %v695
    %2655 = vmatprep.subr.mxu0 0.0
    %2656 = vmatpush1.msra.mxu0 %v696
    %2657 = vmatprep.subr.mxu0 0.0
    %2658 = vmatpush1.msra.mxu0 %v697
    %2659 = vmatprep.subr.mxu0 0.0
    %2660 = vmatpush1.msra.mxu0 %v698
    %2661 = vmatprep.subr.mxu0 0.0
    %2662 = vmatpush1.msra.mxu0 %v699
    %2663 = vmatprep.subr.mxu0 0.0
    %2664 = vmatpush1.msra.mxu0 %v700
    %2665 = vmatprep.subr.mxu0 0.0
    %2666 = vmatpush1.msra.mxu0 %v701
    %2667 = vmatprep.subr.mxu0 0.0
    %2668 = vmatpush1.msra.mxu0 %v702
    %2669 = vmatprep.subr.mxu0 0.0
    %2670 = vmatpush1.msra.mxu0 %v703
    %2671 = vmatprep.subr.mxu0 0.0
    %2672 = vmatpush1.msra.mxu0 %v704
    %2673 = vmatprep.subr.mxu0 0.0
    %2674 = vmatpush1.msra.mxu0 %v705
    %2675 = vmatprep.subr.mxu0 0.0
    %2676 = vmatpush1.msra.mxu0 %v706
    %2677 = vmatprep.subr.mxu0 0.0
    %2678 = vmatpush1.msra.mxu0 %v707
    %2679 = vmatprep.subr.mxu0 0.0
    %2680 = vmatpush1.msra.mxu0 %v708
    %2681 = vmatprep.subr.mxu0 0.0
    %2682 = vmatpush1.msra.mxu0 %v709
    %2683 = vmatprep.subr.mxu0 0.0
    %2684 = vmatpush1.msra.mxu0 %v710
    %2685 = vmatprep.subr.mxu0 0.0
    %2686 = vmatpush1.msra.mxu0 %v711
    %2687 = vmatprep.subr.mxu0 0.0
    %2688 = vmatpush1.msra.mxu0 %v712
    %2689 = vmatprep.subr.mxu0 0.0
    %2690 = vmatpush1.msra.mxu0 %v713
    %2691 = vmatprep.subr.mxu0 0.0
    %2692 = vmatpush1.msra.mxu0 %v714
    %2693 = vmatprep.subr.mxu0 0.0
    %2694 = vmatpush1.msra.mxu0 %v715
    %2695 = vmatprep.subr.mxu0 0.0
    %2696 = vmatpush1.msra.mxu0 %v716
    %2697 = vmatprep.subr.mxu0 0.0
    %2698 = vmatpush1.msra.mxu0 %v717
    %2699 = vmatprep.subr.mxu0 0.0
    %2700 = vmatpush1.msra.mxu0 %v718
    %2701 = vmatprep.subr.mxu0 0.0
    %2702 = vmatpush1.msra.mxu0 %v719
    %2703 = vmatprep.subr.mxu0 0.0
    %2704 = vmatpush1.msra.mxu0 %v720
    %2705 = vmatprep.subr.mxu0 0.0
    %2706 = vmatpush1.msra.mxu0 %v721
    %2707 = vmatprep.subr.mxu0 0.0
    %2708 = vmatpush1.msra.mxu0 %v722
    %2709 = vmatprep.subr.mxu0 0.0
    %2710 = vmatpush1.msra.mxu0 %v723
    %2711 = vmatprep.subr.mxu0 0.0
    %2712 = vmatpush1.msra.mxu0 %v724
    %2713 = vmatprep.mubr.f32.mxu0 %v2646
    %2714 = vmatmul.mubr.f32.gmra.mrb[0].mxu0 %v2645
    %v2715 = vpop.f32.mrb[0].mxu0
    %v2716 = vadd.f32 0.0, %v2715
    %v2717 = vpop.f32.mrb[0].mxu0
    %2718 = vdwg.mxu0
    %2719 = vmatprep.subr.mxu0 0.0
    %2720 = vmatpush1.msra.mxu0 %v725
    %2721 = vmatprep.subr.mxu0 0.0
    %2722 = vmatpush1.msra.mxu0 %v726
    %2723 = vmatprep.subr.mxu0 0.0
    %2724 = vmatpush1.msra.mxu0 %v727
    %2725 = vmatprep.subr.mxu0 0.0
    %2726 = vmatpush1.msra.mxu0 %v728
    %2727 = vmatprep.subr.mxu0 0.0
    %2728 = vmatpush1.msra.mxu0 %v729
    %2729 = vmatprep.subr.mxu0 0.0
    %2730 = vmatpush1.msra.mxu0 %v730
    %2731 = vmatprep.subr.mxu0 0.0
    %2732 = vmatpush1.msra.mxu0 %v731
    %2733 = vmatprep.subr.mxu0 0.0
    %2734 = vmatpush1.msra.mxu0 %v732
    %2735 = vmatprep.subr.mxu0 0.0
    %2736 = vmatpush1.msra.mxu0 %v733
    %2737 = vmatprep.subr.mxu0 0.0
    %2738 = vmatpush1.msra.mxu0 %v734
    %2739 = vmatprep.subr.mxu0 0.0
    %2740 = vmatpush1.msra.mxu0 %v735
    %2741 = vmatprep.subr.mxu0 0.0
    %2742 = vmatpush1.msra.mxu0 %v736
    %2743 = vmatprep.subr.mxu0 0.0
    %2744 = vmatpush1.msra.mxu0 %v737
    %2745 = vmatprep.subr.mxu0 0.0
    %2746 = vmatpush1.msra.mxu0 %v738
    %2747 = vmatprep.subr.mxu0 0.0
    %2748 = vmatpush1.msra.mxu0 %v739
    %2749 = vmatprep.subr.mxu0 0.0
    %2750 = vmatpush1.msra.mxu0 %v740
    %2751 = vmatprep.subr.mxu0 0.0
    %2752 = vmatpush1.msra.mxu0 %v741
    %2753 = vmatprep.subr.mxu0 0.0
    %2754 = vmatpush1.msra.mxu0 %v742
    %2755 = vmatprep.subr.mxu0 0.0
    %2756 = vmatpush1.msra.mxu0 %v743
    %2757 = vmatprep.subr.mxu0 0.0
    %2758 = vmatpush1.msra.mxu0 %v744
    %2759 = vmatprep.subr.mxu0 0.0
    %2760 = vmatpush1.msra.mxu0 %v745
    %2761 = vmatprep.subr.mxu0 0.0
    %2762 = vmatpush1.msra.mxu0 %v746
    %2763 = vmatprep.subr.mxu0 0.0
    %2764 = vmatpush1.msra.mxu0 %v747
    %2765 = vmatprep.subr.mxu0 0.0
    %2766 = vmatpush1.msra.mxu0 %v748
    %2767 = vmatprep.subr.mxu0 0.0
    %2768 = vmatpush1.msra.mxu0 %v749
    %2769 = vmatprep.subr.mxu0 0.0
    %2770 = vmatpush1.msra.mxu0 %v750
    %2771 = vmatprep.subr.mxu0 0.0
    %2772 = vmatpush1.msra.mxu0 %v751
    %2773 = vmatprep.subr.mxu0 0.0
    %2774 = vmatpush1.msra.mxu0 %v752
    %2775 = vmatprep.subr.mxu0 0.0
    %2776 = vmatpush1.msra.mxu0 %v753
    %2777 = vmatprep.subr.mxu0 0.0
    %2778 = vmatpush1.msra.mxu0 %v754
    %2779 = vmatprep.subr.mxu0 0.0
    %2780 = vmatpush1.msra.mxu0 %v755
    %2781 = vmatprep.subr.mxu0 0.0
    %2782 = vmatpush1.msra.mxu0 %v756
    %2783 = vmatprep.mubr.f32.mxu0 %v2648
    %2784 = vmatmul.mubr.f32.gmra.mrb[0].mxu0 %v2647
    %v2785 = vpop.f32.mrb[0].mxu0
    %v2786 = vadd.f32 %v2716, %v2785
    %v2787 = vpop.f32.mrb[0].mxu0
    %2788 = vdwg.mxu0
    %v2790 = vrot.slane %v2786, 2
    %v2792 = vadd.f32 %v669, %v2790
    %vm2793 = vcmask 31750
    %v2794 = vsel %vm2793, %v2792, -inf
    %2795 = vmax.xlane.f32.xlu0 %v2794
    %v2796 = vpop.xlane.xlu0 %2795
    %v2797 = vsub.f32 %v2792, %v2796
    %v2798 = vmul.f32 %v2797, 1.442695
    %v2799 = vpow.pop %v2798
    %v2800 = vsel %vm2793, %v2799, 0.0
    %2801 = vadd.xlane.f32.xlu0 %v2800
    %v2802 = vpop.xlane.xlu0 %2801
    %v2803 = vrcp.pop %v2802
    %v2804 = vmul.f32 %v2799, %v2803
    %v2809 = vrot.slane %v2570, 2
    %v2810 = vrot.slane %v2572, 2
    %v2811 = vrot.slane %v2641, 2
    %v2812 = vrot.slane %v2643, 2
    %v2817 = vadd.f32 %v368, %v2809
    %v2818 = vadd.f32 %v370, %v2810
    %v2819 = vadd.f32 %v445, %v2811
    %v2820 = vadd.f32 %v447, %v2812
    %v2821 = vxor.u32 %v2817, 2147483648
    %v2822 = vxor.u32 %v2818, 2147483648
    %v2823 = vxor.u32 %v2819, 2147483648
    %v2824 = vmul.f32 %v2821, 1.442695
    %v2825 = vpow.pop %v2824
    %v2826 = vmul.f32 %v2822, 1.442695
    %v2827 = vpow.pop %v2826
    %v2828 = vmul.f32 %v2823, 1.442695
    %v2829 = vpow.pop %v2828
    %v2830 = vadd.f32 %v2825, 1.0
    %v2831 = vadd.f32 %v2827, 1.0
    %v2832 = vadd.f32 %v2829, 1.0
    %v2833 = vrcp.pop %v2830
    %v2834 = vmul.f32 1.0, %v2833
    %v2835 = vrcp.pop %v2831
    %v2836 = vmul.f32 1.0, %v2835
    %v2837 = vrcp.pop %v2832
    %v2838 = vmul.f32 1.0, %v2837
    %v2839 = vtanh.pop %v2820
    %v2841 = vrot.slane %v2836, 6
    %v2843 = vmul.f32 %v2418, %v2841
    %v2844 = vmul.f32 %v2834, %v2839
    %v2846 = vrot.slane %v2844, 6
    %v2848 = vadd.f32 %v2843, %v2846
    %v2849 = vtanh.pop %v2848
    %v2851 = vrot.slane %v2849, 2
    %v2853 = vmul.f32 %v2838, %v2851
    %v2855 = vrot.slane %v2804, 6
    %v2856 = vsel %vm1121, %v2855, 0
    %2858 = vmatprep.subr.mxu0 0.0
    %2859 = vmatpush1.msra.mxu0 %v1127
    %2860 = vmatprep.subr.mxu0 0.0
    %2861 = vmatpush1.msra.mxu0 0.0
    %2862 = vmatprep.subr.mxu0 0.0
    %2863 = vmatpush1.msra.mxu0 0.0
    %2864 = vmatprep.subr.mxu0 0.0
    %2865 = vmatpush1.msra.mxu0 0.0
    %2866 = vmatprep.subr.mxu0 0.0
    %2867 = vmatpush1.msra.mxu0 0.0
    %2868 = vmatprep.subr.mxu0 0.0
    %2869 = vmatpush1.msra.mxu0 0.0
    %2870 = vmatprep.subr.mxu0 0.0
    %2871 = vmatpush1.msra.mxu0 0.0
    %2872 = vmatprep.subr.mxu0 0.0
    %2873 = vmatpush1.msra.mxu0 0.0
    %2874 = vmatprep.subr.mxu0 0.0
    %2875 = vmatpush1.msra.mxu0 0.0
    %2876 = vmatprep.subr.mxu0 0.0
    %2877 = vmatpush1.msra.mxu0 0.0
    %2878 = vmatprep.subr.mxu0 0.0
    %2879 = vmatpush1.msra.mxu0 0.0
    %2880 = vmatprep.subr.mxu0 0.0
    %2881 = vmatpush1.msra.mxu0 0.0
    %2882 = vmatprep.subr.mxu0 0.0
    %2883 = vmatpush1.msra.mxu0 0.0
    %2884 = vmatprep.subr.mxu0 0.0
    %2885 = vmatpush1.msra.mxu0 0.0
    %2886 = vmatprep.subr.mxu0 0.0
    %2887 = vmatpush1.msra.mxu0 0.0
    %2888 = vmatprep.subr.mxu0 0.0
    %2889 = vmatpush1.msra.mxu0 0.0
    %2890 = vmatprep.subr.mxu0 0.0
    %2891 = vmatpush1.msra.mxu0 0.0
    %2892 = vmatprep.subr.mxu0 0.0
    %2893 = vmatpush1.msra.mxu0 0.0
    %2894 = vmatprep.subr.mxu0 0.0
    %2895 = vmatpush1.msra.mxu0 0.0
    %2896 = vmatprep.subr.mxu0 0.0
    %2897 = vmatpush1.msra.mxu0 0.0
    %2898 = vmatprep.subr.mxu0 0.0
    %2899 = vmatpush1.msra.mxu0 0.0
    %2900 = vmatprep.subr.mxu0 0.0
    %2901 = vmatpush1.msra.mxu0 0.0
    %2902 = vmatprep.subr.mxu0 0.0
    %2903 = vmatpush1.msra.mxu0 0.0
    %2904 = vmatprep.subr.mxu0 0.0
    %2905 = vmatpush1.msra.mxu0 0.0
    %2906 = vmatprep.subr.mxu0 0.0
    %2907 = vmatpush1.msra.mxu0 0.0
    %2908 = vmatprep.subr.mxu0 0.0
    %2909 = vmatpush1.msra.mxu0 0.0
    %2910 = vmatprep.subr.mxu0 0.0
    %2911 = vmatpush1.msra.mxu0 0.0
    %2912 = vmatprep.subr.mxu0 0.0
    %2913 = vmatpush1.msra.mxu0 0.0
    %2914 = vmatprep.subr.mxu0 0.0
    %2915 = vmatpush1.msra.mxu0 0.0
    %2916 = vmatprep.subr.mxu0 0.0
    %2917 = vmatpush1.msra.mxu0 0.0
    %2918 = vmatprep.subr.mxu0 0.0
    %2919 = vmatpush1.msra.mxu0 0.0
    %2920 = vmatprep.subr.mxu0 0.0
    %2921 = vmatpush1.msra.mxu0 0.0
    %2922 = vmatprep.mubr.f32.mxu0 0.0
    %2923 = vmatmul.mubr.f32.gmra.mrb[0].mxu0 %v2856
    %v2924 = vpop.f32.mrb[0].mxu0
    %v2925 = vadd.f32 0.0, %v2924
    %v2926 = vpop.f32.mrb[0].mxu0
    %2927 = vdwg.mxu0
    %v2928 = vmul.f32 %v2848, %v2925
    %2929 = vmatprep.subr.mxu0 0.0
    %2930 = vmatpush1.msra.mxu0 %v774
    %2931 = vmatprep.subr.mxu0 0.0
    %2932 = vmatpush1.msra.mxu0 %v775
    %2933 = vmatprep.subr.mxu0 0.0
    %2934 = vmatpush1.msra.mxu0 %v776
    %2935 = vmatprep.subr.mxu0 0.0
    %2936 = vmatpush1.msra.mxu0 %v777
    %2937 = vmatprep.subr.mxu0 0.0
    %2938 = vmatpush1.msra.mxu0 %v778
    %2939 = vmatprep.subr.mxu0 0.0
    %2940 = vmatpush1.msra.mxu0 %v779
    %2941 = vmatprep.subr.mxu0 0.0
    %2942 = vmatpush1.msra.mxu0 %v780
    %2943 = vmatprep.subr.mxu0 0.0
    %2944 = vmatpush1.msra.mxu0 %v781
    %2945 = vmatprep.subr.mxu0 0.0
    %2946 = vmatpush1.msra.mxu0 %v782
    %2947 = vmatprep.subr.mxu0 0.0
    %2948 = vmatpush1.msra.mxu0 %v783
    %2949 = vmatprep.subr.mxu0 0.0
    %2950 = vmatpush1.msra.mxu0 %v784
    %2951 = vmatprep.subr.mxu0 0.0
    %2952 = vmatpush1.msra.mxu0 %v785
    %2953 = vmatprep.subr.mxu0 0.0
    %2954 = vmatpush1.msra.mxu0 %v786
    %2955 = vmatprep.subr.mxu0 0.0
    %2956 = vmatpush1.msra.mxu0 %v787
    %2957 = vmatprep.subr.mxu0 0.0
    %2958 = vmatpush1.msra.mxu0 %v788
    %2959 = vmatprep.subr.mxu0 0.0
    %2960 = vmatpush1.msra.mxu0 %v789
    %2961 = vmatprep.subr.mxu0 0.0
    %2962 = vmatpush1.msra.mxu0 0.0
    %2963 = vmatprep.subr.mxu0 0.0
    %2964 = vmatpush1.msra.mxu0 0.0
    %2965 = vmatprep.subr.mxu0 0.0
    %2966 = vmatpush1.msra.mxu0 0.0
    %2967 = vmatprep.subr.mxu0 0.0
    %2968 = vmatpush1.msra.mxu0 0.0
    %2969 = vmatprep.subr.mxu0 0.0
    %2970 = vmatpush1.msra.mxu0 0.0
    %2971 = vmatprep.subr.mxu0 0.0
    %2972 = vmatpush1.msra.mxu0 0.0
    %2973 = vmatprep.subr.mxu0 0.0
    %2974 = vmatpush1.msra.mxu0 0.0
    %2975 = vmatprep.subr.mxu0 0.0
    %2976 = vmatpush1.msra.mxu0 0.0
    %2977 = vmatprep.subr.mxu0 0.0
    %2978 = vmatpush1.msra.mxu0 0.0
    %2979 = vmatprep.subr.mxu0 0.0
    %2980 = vmatpush1.msra.mxu0 0.0
    %2981 = vmatprep.subr.mxu0 0.0
    %2982 = vmatpush1.msra.mxu0 0.0
    %2983 = vmatprep.subr.mxu0 0.0
    %2984 = vmatpush1.msra.mxu0 0.0
    %2985 = vmatprep.subr.mxu0 0.0
    %2986 = vmatpush1.msra.mxu0 0.0
    %2987 = vmatprep.subr.mxu0 0.0
    %2988 = vmatpush1.msra.mxu0 0.0
    %2989 = vmatprep.subr.mxu0 0.0
    %2990 = vmatpush1.msra.mxu0 0.0
    %2991 = vmatprep.subr.mxu0 0.0
    %2992 = vmatpush1.msra.mxu0 0.0
    %2993 = vmatprep.mubr.f32.mxu0 0.0
    %2994 = vmatmul.mubr.f32.gmra.mrb[0].mxu0 %v2928
    %v2995 = vpop.f32.mrb[0].mxu0
    %v2996 = vadd.f32 0.0, %v2995
    %v2997 = vpop.f32.mrb[0].mxu0
    %2998 = vdwg.mxu0
    %v3000 = vrot.slane %v2925, 2
    %v3002 = vmul.f32 %v2853, %v3000
    %v3004 = vrot.slane %v3002, 6
    %3006 = vmatprep.subr.mxu0 0.0
    %3007 = vmatpush1.msra.mxu0 %v758
    %3008 = vmatprep.subr.mxu0 0.0
    %3009 = vmatpush1.msra.mxu0 %v759
    %3010 = vmatprep.subr.mxu0 0.0
    %3011 = vmatpush1.msra.mxu0 %v760
    %3012 = vmatprep.subr.mxu0 0.0
    %3013 = vmatpush1.msra.mxu0 %v761
    %3014 = vmatprep.subr.mxu0 0.0
    %3015 = vmatpush1.msra.mxu0 %v762
    %3016 = vmatprep.subr.mxu0 0.0
    %3017 = vmatpush1.msra.mxu0 %v763
    %3018 = vmatprep.subr.mxu0 0.0
    %3019 = vmatpush1.msra.mxu0 %v764
    %3020 = vmatprep.subr.mxu0 0.0
    %3021 = vmatpush1.msra.mxu0 %v765
    %3022 = vmatprep.subr.mxu0 0.0
    %3023 = vmatpush1.msra.mxu0 %v766
    %3024 = vmatprep.subr.mxu0 0.0
    %3025 = vmatpush1.msra.mxu0 %v767
    %3026 = vmatprep.subr.mxu0 0.0
    %3027 = vmatpush1.msra.mxu0 %v768
    %3028 = vmatprep.subr.mxu0 0.0
    %3029 = vmatpush1.msra.mxu0 %v769
    %3030 = vmatprep.subr.mxu0 0.0
    %3031 = vmatpush1.msra.mxu0 %v770
    %3032 = vmatprep.subr.mxu0 0.0
    %3033 = vmatpush1.msra.mxu0 %v771
    %3034 = vmatprep.subr.mxu0 0.0
    %3035 = vmatpush1.msra.mxu0 %v772
    %3036 = vmatprep.subr.mxu0 0.0
    %3037 = vmatpush1.msra.mxu0 %v773
    %3038 = vmatprep.subr.mxu0 0.0
    %3039 = vmatpush1.msra.mxu0 0.0
    %3040 = vmatprep.subr.mxu0 0.0
    %3041 = vmatpush1.msra.mxu0 0.0
    %3042 = vmatprep.subr.mxu0 0.0
    %3043 = vmatpush1.msra.mxu0 0.0
    %3044 = vmatprep.subr.mxu0 0.0
    %3045 = vmatpush1.msra.mxu0 0.0
    %3046 = vmatprep.subr.mxu0 0.0
    %3047 = vmatpush1.msra.mxu0 0.0
    %3048 = vmatprep.subr.mxu0 0.0
    %3049 = vmatpush1.msra.mxu0 0.0
    %3050 = vmatprep.subr.mxu0 0.0
    %3051 = vmatpush1.msra.mxu0 0.0
    %3052 = vmatprep.subr.mxu0 0.0
    %3053 = vmatpush1.msra.mxu0 0.0
    %3054 = vmatprep.subr.mxu0 0.0
    %3055 = vmatpush1.msra.mxu0 0.0
    %3056 = vmatprep.subr.mxu0 0.0
    %3057 = vmatpush1.msra.mxu0 0.0
    %3058 = vmatprep.subr.mxu0 0.0
    %3059 = vmatpush1.msra.mxu0 0.0
    %3060 = vmatprep.subr.mxu0 0.0
    %3061 = vmatpush1.msra.mxu0 0.0
    %3062 = vmatprep.subr.mxu0 0.0
    %3063 = vmatpush1.msra.mxu0 0.0
    %3064 = vmatprep.subr.mxu0 0.0
    %3065 = vmatpush1.msra.mxu0 0.0
    %3066 = vmatprep.subr.mxu0 0.0
    %3067 = vmatpush1.msra.mxu0 0.0
    %3068 = vmatprep.subr.mxu0 0.0
    %3069 = vmatpush1.msra.mxu0 0.0
    %3070 = vmatprep.mubr.f32.mxu0 0.0
    %3071 = vmatmul.mubr.f32.gmra.mrb[0].mxu0 %v3004
    %v3072 = vpop.f32.mrb[0].mxu0
    %v3073 = vadd.f32 0.0, %v3072
    %v3074 = vpop.f32.mrb[0].mxu0
    %3075 = vdwg.mxu0
    %3076 = vst.msk [vmem:[#allocation2 + $0x6] sm:$0x3] %vm1341, %v3073
    %3077 = vst.msk [vmem:[#allocation3] sm:$0xc0] %vm2793, %v2804
    %v3079 = vsel %vm790, %v3073, 0
    %3081 = vmatprep.subr.mxu0 %v678
    %3082 = vmatpush1.msra.mxu0 %v677
    %3083 = vmatprep.subr.mxu0 %v682
    %3084 = vmatpush1.msra.mxu0 %v681
    %3085 = vmatprep.subr.mxu0 %v686
    %3086 = vmatpush1.msra.mxu0 %v685
    %3087 = vmatprep.subr.mxu0 %v690
    %3088 = vmatpush1.msra.mxu0 %v689
    %3089 = vmatprep.subr.mxu0 0.0
    %3090 = vmatpush1.msra.mxu0 0.0
    %3091 = vmatprep.subr.mxu0 0.0
    %3092 = vmatpush1.msra.mxu0 0.0
    %3093 = vmatprep.subr.mxu0 0.0
    %3094 = vmatpush1.msra.mxu0 0.0
    %3095 = vmatprep.subr.mxu0 0.0
    %3096 = vmatpush1.msra.mxu0 0.0
    %3097 = vmatprep.subr.mxu0 0.0
    %3098 = vmatpush1.msra.mxu0 0.0
    %3099 = vmatprep.subr.mxu0 0.0
    %3100 = vmatpush1.msra.mxu0 0.0
    %3101 = vmatprep.subr.mxu0 0.0
    %3102 = vmatpush1.msra.mxu0 0.0
    %3103 = vmatprep.subr.mxu0 0.0
    %3104 = vmatpush1.msra.mxu0 0.0
    %3105 = vmatprep.subr.mxu0 0.0
    %3106 = vmatpush1.msra.mxu0 0.0
    %3107 = vmatprep.subr.mxu0 0.0
    %3108 = vmatpush1.msra.mxu0 0.0
    %3109 = vmatprep.subr.mxu0 0.0
    %3110 = vmatpush1.msra.mxu0 0.0
    %3111 = vmatprep.subr.mxu0 0.0
    %3112 = vmatpush1.msra.mxu0 0.0
    %3113 = vmatprep.subr.mxu0 0.0
    %3114 = vmatpush1.msra.mxu0 0.0
    %3115 = vmatprep.subr.mxu0 0.0
    %3116 = vmatpush1.msra.mxu0 0.0
    %3117 = vmatprep.subr.mxu0 0.0
    %3118 = vmatpush1.msra.mxu0 0.0
    %3119 = vmatprep.subr.mxu0 0.0
    %3120 = vmatpush1.msra.mxu0 0.0
    %3121 = vmatprep.subr.mxu0 0.0
    %3122 = vmatpush1.msra.mxu0 0.0
    %3123 = vmatprep.subr.mxu0 0.0
    %3124 = vmatpush1.msra.mxu0 0.0
    %3125 = vmatprep.subr.mxu0 0.0
    %3126 = vmatpush1.msra.mxu0 0.0
    %3127 = vmatprep.subr.mxu0 0.0
    %3128 = vmatpush1.msra.mxu0 0.0
    %3129 = vmatprep.subr.mxu0 0.0
    %3130 = vmatpush1.msra.mxu0 0.0
    %3131 = vmatprep.subr.mxu0 0.0
    %3132 = vmatpush1.msra.mxu0 0.0
    %3133 = vmatprep.subr.mxu0 0.0
    %3134 = vmatpush1.msra.mxu0 0.0
    %3135 = vmatprep.subr.mxu0 0.0
    %3136 = vmatpush1.msra.mxu0 0.0
    %3137 = vmatprep.subr.mxu0 0.0
    %3138 = vmatpush1.msra.mxu0 0.0
    %3139 = vmatprep.subr.mxu0 0.0
    %3140 = vmatpush1.msra.mxu0 0.0
    %3141 = vmatprep.subr.mxu0 0.0
    %3142 = vmatpush1.msra.mxu0 0.0
    %3143 = vmatprep.subr.mxu0 0.0
    %3144 = vmatpush1.msra.mxu0 0.0
    %3145 = vmatprep.mubr.f32.mxu0 0.0
    %3146 = vmatmul.mubr.f32.gmra.mrb[0].mxu0 %v3079
    %v3147 = vpop.f32.mrb[0].mxu0
    %v3148 = vadd.f32 0.0, %v3147
    %v3149 = vpop.f32.mrb[0].mxu0
    %v3150 = vadd.f32 0.0, %v3149
    %3151 = vdwg.mxu0
    %3152 = vmatprep.subr.mxu0 %v680
    %3153 = vmatpush1.msra.mxu0 %v679
    %3154 = vmatprep.subr.mxu0 %v684
    %3155 = vmatpush1.msra.mxu0 %v683
    %3156 = vmatprep.subr.mxu0 %v688
    %3157 = vmatpush1.msra.mxu0 %v687
    %3158 = vmatprep.subr.mxu0 %v692
    %3159 = vmatpush1.msra.mxu0 %v691
    %3160 = vmatprep.subr.mxu0 0.0
    %3161 = vmatpush1.msra.mxu0 0.0
    %3162 = vmatprep.subr.mxu0 0.0
    %3163 = vmatpush1.msra.mxu0 0.0
    %3164 = vmatprep.subr.mxu0 0.0
    %3165 = vmatpush1.msra.mxu0 0.0
    %3166 = vmatprep.subr.mxu0 0.0
    %3167 = vmatpush1.msra.mxu0 0.0
    %3168 = vmatprep.subr.mxu0 0.0
    %3169 = vmatpush1.msra.mxu0 0.0
    %3170 = vmatprep.subr.mxu0 0.0
    %3171 = vmatpush1.msra.mxu0 0.0
    %3172 = vmatprep.subr.mxu0 0.0
    %3173 = vmatpush1.msra.mxu0 0.0
    %3174 = vmatprep.subr.mxu0 0.0
    %3175 = vmatpush1.msra.mxu0 0.0
    %3176 = vmatprep.subr.mxu0 0.0
    %3177 = vmatpush1.msra.mxu0 0.0
    %3178 = vmatprep.subr.mxu0 0.0
    %3179 = vmatpush1.msra.mxu0 0.0
    %3180 = vmatprep.subr.mxu0 0.0
    %3181 = vmatpush1.msra.mxu0 0.0
    %3182 = vmatprep.subr.mxu0 0.0
    %3183 = vmatpush1.msra.mxu0 0.0
    %3184 = vmatprep.subr.mxu0 0.0
    %3185 = vmatpush1.msra.mxu0 0.0
    %3186 = vmatprep.subr.mxu0 0.0
    %3187 = vmatpush1.msra.mxu0 0.0
    %3188 = vmatprep.subr.mxu0 0.0
    %3189 = vmatpush1.msra.mxu0 0.0
    %3190 = vmatprep.subr.mxu0 0.0
    %3191 = vmatpush1.msra.mxu0 0.0
    %3192 = vmatprep.subr.mxu0 0.0
    %3193 = vmatpush1.msra.mxu0 0.0
    %3194 = vmatprep.subr.mxu0 0.0
    %3195 = vmatpush1.msra.mxu0 0.0
    %3196 = vmatprep.subr.mxu0 0.0
    %3197 = vmatpush1.msra.mxu0 0.0
    %3198 = vmatprep.subr.mxu0 0.0
    %3199 = vmatpush1.msra.mxu0 0.0
    %3200 = vmatprep.subr.mxu0 0.0
    %3201 = vmatpush1.msra.mxu0 0.0
    %3202 = vmatprep.subr.mxu0 0.0
    %3203 = vmatpush1.msra.mxu0 0.0
    %3204 = vmatprep.subr.mxu0 0.0
    %3205 = vmatpush1.msra.mxu0 0.0
    %3206 = vmatprep.subr.mxu0 0.0
    %3207 = vmatpush1.msra.mxu0 0.0
    %3208 = vmatprep.subr.mxu0 0.0
    %3209 = vmatpush1.msra.mxu0 0.0
    %3210 = vmatprep.subr.mxu0 0.0
    %3211 = vmatpush1.msra.mxu0 0.0
    %3212 = vmatprep.subr.mxu0 0.0
    %3213 = vmatpush1.msra.mxu0 0.0
    %3214 = vmatprep.subr.mxu0 0.0
    %3215 = vmatpush1.msra.mxu0 0.0
    %3216 = vmatprep.mubr.f32.mxu0 0.0
    %3217 = vmatmul.mubr.f32.gmra.mrb[0].mxu0 %v3079
    %v3218 = vpop.f32.mrb[0].mxu0
    %v3219 = vadd.f32 0.0, %v3218
    %v3220 = vpop.f32.mrb[0].mxu0
    %v3221 = vadd.f32 0.0, %v3220
    %3222 = vdwg.mxu0
    %v3223 = vmax.f32 %v3148, 0.0
    %v3224 = vmax.f32 %v3150, 0.0
    %v3225 = vmax.f32 %v3219, 0.0
    %v3226 = vmax.f32 %v3221, 0.0
    %3227 = vmatprep.subr.mxu0 0.0
    %3228 = vmatpush1.msra.mxu0 %v693
    %3229 = vmatprep.subr.mxu0 0.0
    %3230 = vmatpush1.msra.mxu0 %v694
    %3231 = vmatprep.subr.mxu0 0.0
    %3232 = vmatpush1.msra.mxu0 %v695
    %3233 = vmatprep.subr.mxu0 0.0
    %3234 = vmatpush1.msra.mxu0 %v696
    %3235 = vmatprep.subr.mxu0 0.0
    %3236 = vmatpush1.msra.mxu0 %v697
    %3237 = vmatprep.subr.mxu0 0.0
    %3238 = vmatpush1.msra.mxu0 %v698
    %3239 = vmatprep.subr.mxu0 0.0
    %3240 = vmatpush1.msra.mxu0 %v699
    %3241 = vmatprep.subr.mxu0 0.0
    %3242 = vmatpush1.msra.mxu0 %v700
    %3243 = vmatprep.subr.mxu0 0.0
    %3244 = vmatpush1.msra.mxu0 %v701
    %3245 = vmatprep.subr.mxu0 0.0
    %3246 = vmatpush1.msra.mxu0 %v702
    %3247 = vmatprep.subr.mxu0 0.0
    %3248 = vmatpush1.msra.mxu0 %v703
    %3249 = vmatprep.subr.mxu0 0.0
    %3250 = vmatpush1.msra.mxu0 %v704
    %3251 = vmatprep.subr.mxu0 0.0
    %3252 = vmatpush1.msra.mxu0 %v705
    %3253 = vmatprep.subr.mxu0 0.0
    %3254 = vmatpush1.msra.mxu0 %v706
    %3255 = vmatprep.subr.mxu0 0.0
    %3256 = vmatpush1.msra.mxu0 %v707
    %3257 = vmatprep.subr.mxu0 0.0
    %3258 = vmatpush1.msra.mxu0 %v708
    %3259 = vmatprep.subr.mxu0 0.0
    %3260 = vmatpush1.msra.mxu0 %v709
    %3261 = vmatprep.subr.mxu0 0.0
    %3262 = vmatpush1.msra.mxu0 %v710
    %3263 = vmatprep.subr.mxu0 0.0
    %3264 = vmatpush1.msra.mxu0 %v711
    %3265 = vmatprep.subr.mxu0 0.0
    %3266 = vmatpush1.msra.mxu0 %v712
    %3267 = vmatprep.subr.mxu0 0.0
    %3268 = vmatpush1.msra.mxu0 %v713
    %3269 = vmatprep.subr.mxu0 0.0
    %3270 = vmatpush1.msra.mxu0 %v714
    %3271 = vmatprep.subr.mxu0 0.0
    %3272 = vmatpush1.msra.mxu0 %v715
    %3273 = vmatprep.subr.mxu0 0.0
    %3274 = vmatpush1.msra.mxu0 %v716
    %3275 = vmatprep.subr.mxu0 0.0
    %3276 = vmatpush1.msra.mxu0 %v717
    %3277 = vmatprep.subr.mxu0 0.0
    %3278 = vmatpush1.msra.mxu0 %v718
    %3279 = vmatprep.subr.mxu0 0.0
    %3280 = vmatpush1.msra.mxu0 %v719
    %3281 = vmatprep.subr.mxu0 0.0
    %3282 = vmatpush1.msra.mxu0 %v720
    %3283 = vmatprep.subr.mxu0 0.0
    %3284 = vmatpush1.msra.mxu0 %v721
    %3285 = vmatprep.subr.mxu0 0.0
    %3286 = vmatpush1.msra.mxu0 %v722
    %3287 = vmatprep.subr.mxu0 0.0
    %3288 = vmatpush1.msra.mxu0 %v723
    %3289 = vmatprep.subr.mxu0 0.0
    %3290 = vmatpush1.msra.mxu0 %v724
    %3291 = vmatprep.mubr.f32.mxu0 %v3224
    %3292 = vmatmul.mubr.f32.gmra.mrb[0].mxu0 %v3223
    %v3293 = vpop.f32.mrb[0].mxu0
    %v3294 = vadd.f32 0.0, %v3293
    %v3295 = vpop.f32.mrb[0].mxu0
    %3296 = vdwg.mxu0
    %3297 = vmatprep.subr.mxu0 0.0
    %3298 = vmatpush1.msra.mxu0 %v725
    %3299 = vmatprep.subr.mxu0 0.0
    %3300 = vmatpush1.msra.mxu0 %v726
    %3301 = vmatprep.subr.mxu0 0.0
    %3302 = vmatpush1.msra.mxu0 %v727
    %3303 = vmatprep.subr.mxu0 0.0
    %3304 = vmatpush1.msra.mxu0 %v728
    %3305 = vmatprep.subr.mxu0 0.0
    %3306 = vmatpush1.msra.mxu0 %v729
    %3307 = vmatprep.subr.mxu0 0.0
    %3308 = vmatpush1.msra.mxu0 %v730
    %3309 = vmatprep.subr.mxu0 0.0
    %3310 = vmatpush1.msra.mxu0 %v731
    %3311 = vmatprep.subr.mxu0 0.0
    %3312 = vmatpush1.msra.mxu0 %v732
    %3313 = vmatprep.subr.mxu0 0.0
    %3314 = vmatpush1.msra.mxu0 %v733
    %3315 = vmatprep.subr.mxu0 0.0
    %3316 = vmatpush1.msra.mxu0 %v734
    %3317 = vmatprep.subr.mxu0 0.0
    %3318 = vmatpush1.msra.mxu0 %v735
    %3319 = vmatprep.subr.mxu0 0.0
    %3320 = vmatpush1.msra.mxu0 %v736
    %3321 = vmatprep.subr.mxu0 0.0
    %3322 = vmatpush1.msra.mxu0 %v737
    %3323 = vmatprep.subr.mxu0 0.0
    %3324 = vmatpush1.msra.mxu0 %v738
    %3325 = vmatprep.subr.mxu0 0.0
    %3326 = vmatpush1.msra.mxu0 %v739
    %3327 = vmatprep.subr.mxu0 0.0
    %3328 = vmatpush1.msra.mxu0 %v740
    %3329 = vmatprep.subr.mxu0 0.0
    %3330 = vmatpush1.msra.mxu0 %v741
    %3331 = vmatprep.subr.mxu0 0.0
    %3332 = vmatpush1.msra.mxu0 %v742
    %3333 = vmatprep.subr.mxu0 0.0
    %3334 = vmatpush1.msra.mxu0 %v743
    %3335 = vmatprep.subr.mxu0 0.0
    %3336 = vmatpush1.msra.mxu0 %v744
    %3337 = vmatprep.subr.mxu0 0.0
    %3338 = vmatpush1.msra.mxu0 %v745
    %3339 = vmatprep.subr.mxu0 0.0
    %3340 = vmatpush1.msra.mxu0 %v746
    %3341 = vmatprep.subr.mxu0 0.0
    %3342 = vmatpush1.msra.mxu0 %v747
    %3343 = vmatprep.subr.mxu0 0.0
    %3344 = vmatpush1.msra.mxu0 %v748
    %3345 = vmatprep.subr.mxu0 0.0
    %3346 = vmatpush1.msra.mxu0 %v749
    %3347 = vmatprep.subr.mxu0 0.0
    %3348 = vmatpush1.msra.mxu0 %v750
    %3349 = vmatprep.subr.mxu0 0.0
    %3350 = vmatpush1.msra.mxu0 %v751
    %3351 = vmatprep.subr.mxu0 0.0
    %3352 = vmatpush1.msra.mxu0 %v752
    %3353 = vmatprep.subr.mxu0 0.0
    %3354 = vmatpush1.msra.mxu0 %v753
    %3355 = vmatprep.subr.mxu0 0.0
    %3356 = vmatpush1.msra.mxu0 %v754
    %3357 = vmatprep.subr.mxu0 0.0
    %3358 = vmatpush1.msra.mxu0 %v755
    %3359 = vmatprep.subr.mxu0 0.0
    %3360 = vmatpush1.msra.mxu0 %v756
    %3361 = vmatprep.mubr.f32.mxu0 %v3226
    %3362 = vmatmul.mubr.f32.gmra.mrb[0].mxu0 %v3225
    %v3363 = vpop.f32.mrb[0].mxu0
    %v3364 = vadd.f32 %v3294, %v3363
    %v3365 = vpop.f32.mrb[0].mxu0
    %3366 = vdwg.mxu0
    %v3367 = vadd.f32 %v674, %v3364
    %v3368 = vsel %vm1081, %v3367, -inf
    %3369 = vmax.xlane.f32.xlu0 %v3368
    %v3370 = vpop.xlane.xlu0 %3369
    %v3371 = vsub.f32 %v3367, %v3370
    %v3372 = vmul.f32 %v3371, 1.442695
    %v3373 = vpow.pop %v3372
    %v3374 = vsel %vm1081, %v3373, 0.0
    %3375 = vadd.xlane.f32.xlu0 %v3374
    %v3376 = vpop.xlane.xlu0 %3375
    %v3377 = vrcp.pop %v3376
    %v3378 = vmul.f32 %v3373, %v3377
    %v3379 = vadd.f32 %v374, %v3148
    %v3380 = vadd.f32 %v376, %v3150
    %v3381 = vadd.f32 %v451, %v3219
    %v3382 = vadd.f32 %v453, %v3221
    %v3383 = vxor.u32 %v3379, 2147483648
    %v3384 = vxor.u32 %v3380, 2147483648
    %v3385 = vxor.u32 %v3381, 2147483648
    %v3386 = vmul.f32 %v3383, 1.442695
    %v3387 = vpow.pop %v3386
    %v3388 = vmul.f32 %v3384, 1.442695
    %v3389 = vpow.pop %v3388
    %v3390 = vmul.f32 %v3385, 1.442695
    %v3391 = vpow.pop %v3390
    %v3392 = vadd.f32 %v3387, 1.0
    %v3393 = vadd.f32 %v3389, 1.0
    %v3394 = vadd.f32 %v3391, 1.0
    %v3395 = vrcp.pop %v3392
    %v3396 = vmul.f32 1.0, %v3395
    %v3397 = vrcp.pop %v3393
    %v3398 = vmul.f32 1.0, %v3397
    %v3399 = vrcp.pop %v3394
    %v3400 = vmul.f32 1.0, %v3399
    %v3401 = vtanh.pop %v3382
    %v3402 = vmul.f32 %v2996, %v3398
    %v3403 = vmul.f32 %v3396, %v3401
    %v3404 = vadd.f32 %v3402, %v3403
    %v3405 = vtanh.pop %v3404
    %v3406 = vmul.f32 %v3400, %v3405
    %v3408 = vsel %vm1121, %v3378, 0
    %3410 = vmatprep.subr.mxu0 0.0
    %3411 = vmatpush1.msra.mxu0 %v1127
    %3412 = vmatprep.subr.mxu0 0.0
    %3413 = vmatpush1.msra.mxu0 0.0
    %3414 = vmatprep.subr.mxu0 0.0
    %3415 = vmatpush1.msra.mxu0 0.0
    %3416 = vmatprep.subr.mxu0 0.0
    %3417 = vmatpush1.msra.mxu0 0.0
    %3418 = vmatprep.subr.mxu0 0.0
    %3419 = vmatpush1.msra.mxu0 0.0
    %3420 = vmatprep.subr.mxu0 0.0
    %3421 = vmatpush1.msra.mxu0 0.0
    %3422 = vmatprep.subr.mxu0 0.0
    %3423 = vmatpush1.msra.mxu0 0.0
    %3424 = vmatprep.subr.mxu0 0.0
    %3425 = vmatpush1.msra.mxu0 0.0
    %3426 = vmatprep.subr.mxu0 0.0
    %3427 = vmatpush1.msra.mxu0 0.0
    %3428 = vmatprep.subr.mxu0 0.0
    %3429 = vmatpush1.msra.mxu0 0.0
    %3430 = vmatprep.subr.mxu0 0.0
    %3431 = vmatpush1.msra.mxu0 0.0
    %3432 = vmatprep.subr.mxu0 0.0
    %3433 = vmatpush1.msra.mxu0 0.0
    %3434 = vmatprep.subr.mxu0 0.0
    %3435 = vmatpush1.msra.mxu0 0.0
    %3436 = vmatprep.subr.mxu0 0.0
    %3437 = vmatpush1.msra.mxu0 0.0
    %3438 = vmatprep.subr.mxu0 0.0
    %3439 = vmatpush1.msra.mxu0 0.0
    %3440 = vmatprep.subr.mxu0 0.0
    %3441 = vmatpush1.msra.mxu0 0.0
    %3442 = vmatprep.subr.mxu0 0.0
    %3443 = vmatpush1.msra.mxu0 0.0
    %3444 = vmatprep.subr.mxu0 0.0
    %3445 = vmatpush1.msra.mxu0 0.0
    %3446 = vmatprep.subr.mxu0 0.0
    %3447 = vmatpush1.msra.mxu0 0.0
    %3448 = vmatprep.subr.mxu0 0.0
    %3449 = vmatpush1.msra.mxu0 0.0
    %3450 = vmatprep.subr.mxu0 0.0
    %3451 = vmatpush1.msra.mxu0 0.0
    %3452 = vmatprep.subr.mxu0 0.0
    %3453 = vmatpush1.msra.mxu0 0.0
    %3454 = vmatprep.subr.mxu0 0.0
    %3455 = vmatpush1.msra.mxu0 0.0
    %3456 = vmatprep.subr.mxu0 0.0
    %3457 = vmatpush1.msra.mxu0 0.0
    %3458 = vmatprep.subr.mxu0 0.0
    %3459 = vmatpush1.msra.mxu0 0.0
    %3460 = vmatprep.subr.mxu0 0.0
    %3461 = vmatpush1.msra.mxu0 0.0
    %3462 = vmatprep.subr.mxu0 0.0
    %3463 = vmatpush1.msra.mxu0 0.0
    %3464 = vmatprep.subr.mxu0 0.0
    %3465 = vmatpush1.msra.mxu0 0.0
    %3466 = vmatprep.subr.mxu0 0.0
    %3467 = vmatpush1.msra.mxu0 0.0
    %3468 = vmatprep.subr.mxu0 0.0
    %3469 = vmatpush1.msra.mxu0 0.0
    %3470 = vmatprep.subr.mxu0 0.0
    %3471 = vmatpush1.msra.mxu0 0.0
    %3472 = vmatprep.subr.mxu0 0.0
    %3473 = vmatpush1.msra.mxu0 0.0
    %3474 = vmatprep.mubr.f32.mxu0 0.0
    %3475 = vmatmul.mubr.f32.gmra.mrb[0].mxu0 %v3408
    %v3476 = vpop.f32.mrb[0].mxu0
    %v3477 = vadd.f32 0.0, %v3476
    %v3478 = vpop.f32.mrb[0].mxu0
    %3479 = vdwg.mxu0
    %v3480 = vmul.f32 %v3404, %v3477
    %3481 = vmatprep.subr.mxu0 0.0
    %3482 = vmatpush1.msra.mxu0 %v774
    %3483 = vmatprep.subr.mxu0 0.0
    %3484 = vmatpush1.msra.mxu0 %v775
    %3485 = vmatprep.subr.mxu0 0.0
    %3486 = vmatpush1.msra.mxu0 %v776
    %3487 = vmatprep.subr.mxu0 0.0
    %3488 = vmatpush1.msra.mxu0 %v777
    %3489 = vmatprep.subr.mxu0 0.0
    %3490 = vmatpush1.msra.mxu0 %v778
    %3491 = vmatprep.subr.mxu0 0.0
    %3492 = vmatpush1.msra.mxu0 %v779
    %3493 = vmatprep.subr.mxu0 0.0
    %3494 = vmatpush1.msra.mxu0 %v780
    %3495 = vmatprep.subr.mxu0 0.0
    %3496 = vmatpush1.msra.mxu0 %v781
    %3497 = vmatprep.subr.mxu0 0.0
    %3498 = vmatpush1.msra.mxu0 %v782
    %3499 = vmatprep.subr.mxu0 0.0
    %3500 = vmatpush1.msra.mxu0 %v783
    %3501 = vmatprep.subr.mxu0 0.0
    %3502 = vmatpush1.msra.mxu0 %v784
    %3503 = vmatprep.subr.mxu0 0.0
    %3504 = vmatpush1.msra.mxu0 %v785
    %3505 = vmatprep.subr.mxu0 0.0
    %3506 = vmatpush1.msra.mxu0 %v786
    %3507 = vmatprep.subr.mxu0 0.0
    %3508 = vmatpush1.msra.mxu0 %v787
    %3509 = vmatprep.subr.mxu0 0.0
    %3510 = vmatpush1.msra.mxu0 %v788
    %3511 = vmatprep.subr.mxu0 0.0
    %3512 = vmatpush1.msra.mxu0 %v789
    %3513 = vmatprep.subr.mxu0 0.0
    %3514 = vmatpush1.msra.mxu0 0.0
    %3515 = vmatprep.subr.mxu0 0.0
    %3516 = vmatpush1.msra.mxu0 0.0
    %3517 = vmatprep.subr.mxu0 0.0
    %3518 = vmatpush1.msra.mxu0 0.0
    %3519 = vmatprep.subr.mxu0 0.0
    %3520 = vmatpush1.msra.mxu0 0.0
    %3521 = vmatprep.subr.mxu0 0.0
    %3522 = vmatpush1.msra.mxu0 0.0
    %3523 = vmatprep.subr.mxu0 0.0
    %3524 = vmatpush1.msra.mxu0 0.0
    %3525 = vmatprep.subr.mxu0 0.0
    %3526 = vmatpush1.msra.mxu0 0.0
    %3527 = vmatprep.subr.mxu0 0.0
    %3528 = vmatpush1.msra.mxu0 0.0
    %3529 = vmatprep.subr.mxu0 0.0
    %3530 = vmatpush1.msra.mxu0 0.0
    %3531 = vmatprep.subr.mxu0 0.0
    %3532 = vmatpush1.msra.mxu0 0.0
    %3533 = vmatprep.subr.mxu0 0.0
    %3534 = vmatpush1.msra.mxu0 0.0
    %3535 = vmatprep.subr.mxu0 0.0
    %3536 = vmatpush1.msra.mxu0 0.0
    %3537 = vmatprep.subr.mxu0 0.0
    %3538 = vmatpush1.msra.mxu0 0.0
    %3539 = vmatprep.subr.mxu0 0.0
    %3540 = vmatpush1.msra.mxu0 0.0
    %3541 = vmatprep.subr.mxu0 0.0
    %3542 = vmatpush1.msra.mxu0 0.0
    %3543 = vmatprep.subr.mxu0 0.0
    %3544 = vmatpush1.msra.mxu0 0.0
    %3545 = vmatprep.mubr.f32.mxu0 0.0
    %3546 = vmatmul.mubr.f32.gmra.mrb[0].mxu0 %v3480
    %v3547 = vpop.f32.mrb[0].mxu0
    %v3548 = vadd.f32 0.0, %v3547
    %v3549 = vpop.f32.mrb[0].mxu0
    %3550 = vdwg.mxu0
    %v3551 = vmul.f32 %v3406, %v3477
    %3552 = vmatprep.subr.mxu0 0.0
    %3553 = vmatpush1.msra.mxu0 %v758
    %3554 = vmatprep.subr.mxu0 0.0
    %3555 = vmatpush1.msra.mxu0 %v759
    %3556 = vmatprep.subr.mxu0 0.0
    %3557 = vmatpush1.msra.mxu0 %v760
    %3558 = vmatprep.subr.mxu0 0.0
    %3559 = vmatpush1.msra.mxu0 %v761
    %3560 = vmatprep.subr.mxu0 0.0
    %3561 = vmatpush1.msra.mxu0 %v762
    %3562 = vmatprep.subr.mxu0 0.0
    %3563 = vmatpush1.msra.mxu0 %v763
    %3564 = vmatprep.subr.mxu0 0.0
    %3565 = vmatpush1.msra.mxu0 %v764
    %3566 = vmatprep.subr.mxu0 0.0
    %3567 = vmatpush1.msra.mxu0 %v765
    %3568 = vmatprep.subr.mxu0 0.0
    %3569 = vmatpush1.msra.mxu0 %v766
    %3570 = vmatprep.subr.mxu0 0.0
    %3571 = vmatpush1.msra.mxu0 %v767
    %3572 = vmatprep.subr.mxu0 0.0
    %3573 = vmatpush1.msra.mxu0 %v768
    %3574 = vmatprep.subr.mxu0 0.0
    %3575 = vmatpush1.msra.mxu0 %v769
    %3576 = vmatprep.subr.mxu0 0.0
    %3577 = vmatpush1.msra.mxu0 %v770
    %3578 = vmatprep.subr.mxu0 0.0
    %3579 = vmatpush1.msra.mxu0 %v771
    %3580 = vmatprep.subr.mxu0 0.0
    %3581 = vmatpush1.msra.mxu0 %v772
    %3582 = vmatprep.subr.mxu0 0.0
    %3583 = vmatpush1.msra.mxu0 %v773
    %3584 = vmatprep.subr.mxu0 0.0
    %3585 = vmatpush1.msra.mxu0 0.0
    %3586 = vmatprep.subr.mxu0 0.0
    %3587 = vmatpush1.msra.mxu0 0.0
    %3588 = vmatprep.subr.mxu0 0.0
    %3589 = vmatpush1.msra.mxu0 0.0
    %3590 = vmatprep.subr.mxu0 0.0
    %3591 = vmatpush1.msra.mxu0 0.0
    %3592 = vmatprep.subr.mxu0 0.0
    %3593 = vmatpush1.msra.mxu0 0.0
    %3594 = vmatprep.subr.mxu0 0.0
    %3595 = vmatpush1.msra.mxu0 0.0
    %3596 = vmatprep.subr.mxu0 0.0
    %3597 = vmatpush1.msra.mxu0 0.0
    %3598 = vmatprep.subr.mxu0 0.0
    %3599 = vmatpush1.msra.mxu0 0.0
    %3600 = vmatprep.subr.mxu0 0.0
    %3601 = vmatpush1.msra.mxu0 0.0
    %3602 = vmatprep.subr.mxu0 0.0
    %3603 = vmatpush1.msra.mxu0 0.0
    %3604 = vmatprep.subr.mxu0 0.0
    %3605 = vmatpush1.msra.mxu0 0.0
    %3606 = vmatprep.subr.mxu0 0.0
    %3607 = vmatpush1.msra.mxu0 0.0
    %3608 = vmatprep.subr.mxu0 0.0
    %3609 = vmatpush1.msra.mxu0 0.0
    %3610 = vmatprep.subr.mxu0 0.0
    %3611 = vmatpush1.msra.mxu0 0.0
    %3612 = vmatprep.subr.mxu0 0.0
    %3613 = vmatpush1.msra.mxu0 0.0
    %3614 = vmatprep.subr.mxu0 0.0
    %3615 = vmatpush1.msra.mxu0 0.0
    %3616 = vmatprep.mubr.f32.mxu0 0.0
    %3617 = vmatmul.mubr.f32.gmra.mrb[0].mxu0 %v3551
    %v3618 = vpop.f32.mrb[0].mxu0
    %v3619 = vadd.f32 0.0, %v3618
    %v3620 = vpop.f32.mrb[0].mxu0
    %3621 = vdwg.mxu0
    %3622 = vst.msk [vmem:[#allocation2 + $0x8] sm:$0x3] %vm1341, %v3619
    %3623 = vst.msk [vmem:[#allocation3 + $0x8] sm:$0x3] %vm1081, %v3378
    %v3625 = vsel %vm790, %v3619, 0
    %3627 = vmatprep.subr.mxu0 %v678
    %3628 = vmatpush1.msra.mxu0 %v677
    %3629 = vmatprep.subr.mxu0 %v682
    %3630 = vmatpush1.msra.mxu0 %v681
    %3631 = vmatprep.subr.mxu0 %v686
    %3632 = vmatpush1.msra.mxu0 %v685
    %3633 = vmatprep.subr.mxu0 %v690
    %3634 = vmatpush1.msra.mxu0 %v689
    %3635 = vmatprep.subr.mxu0 0.0
    %3636 = vmatpush1.msra.mxu0 0.0
    %3637 = vmatprep.subr.mxu0 0.0
    %3638 = vmatpush1.msra.mxu0 0.0
    %3639 = vmatprep.subr.mxu0 0.0
    %3640 = vmatpush1.msra.mxu0 0.0
    %3641 = vmatprep.subr.mxu0 0.0
    %3642 = vmatpush1.msra.mxu0 0.0
    %3643 = vmatprep.subr.mxu0 0.0
    %3644 = vmatpush1.msra.mxu0 0.0
    %3645 = vmatprep.subr.mxu0 0.0
    %3646 = vmatpush1.msra.mxu0 0.0
    %3647 = vmatprep.subr.mxu0 0.0
    %3648 = vmatpush1.msra.mxu0 0.0
    %3649 = vmatprep.subr.mxu0 0.0
    %3650 = vmatpush1.msra.mxu0 0.0
    %3651 = vmatprep.subr.mxu0 0.0
    %3652 = vmatpush1.msra.mxu0 0.0
    %3653 = vmatprep.subr.mxu0 0.0
    %3654 = vmatpush1.msra.mxu0 0.0
    %3655 = vmatprep.subr.mxu0 0.0
    %3656 = vmatpush1.msra.mxu0 0.0
    %3657 = vmatprep.subr.mxu0 0.0
    %3658 = vmatpush1.msra.mxu0 0.0
    %3659 = vmatprep.subr.mxu0 0.0
    %3660 = vmatpush1.msra.mxu0 0.0
    %3661 = vmatprep.subr.mxu0 0.0
    %3662 = vmatpush1.msra.mxu0 0.0
    %3663 = vmatprep.subr.mxu0 0.0
    %3664 = vmatpush1.msra.mxu0 0.0
    %3665 = vmatprep.subr.mxu0 0.0
    %3666 = vmatpush1.msra.mxu0 0.0
    %3667 = vmatprep.subr.mxu0 0.0
    %3668 = vmatpush1.msra.mxu0 0.0
    %3669 = vmatprep.subr.mxu0 0.0
    %3670 = vmatpush1.msra.mxu0 0.0
    %3671 = vmatprep.subr.mxu0 0.0
    %3672 = vmatpush1.msra.mxu0 0.0
    %3673 = vmatprep.subr.mxu0 0.0
    %3674 = vmatpush1.msra.mxu0 0.0
    %3675 = vmatprep.subr.mxu0 0.0
    %3676 = vmatpush1.msra.mxu0 0.0
    %3677 = vmatprep.subr.mxu0 0.0
    %3678 = vmatpush1.msra.mxu0 0.0
    %3679 = vmatprep.subr.mxu0 0.0
    %3680 = vmatpush1.msra.mxu0 0.0
    %3681 = vmatprep.subr.mxu0 0.0
    %3682 = vmatpush1.msra.mxu0 0.0
    %3683 = vmatprep.subr.mxu0 0.0
    %3684 = vmatpush1.msra.mxu0 0.0
    %3685 = vmatprep.subr.mxu0 0.0
    %3686 = vmatpush1.msra.mxu0 0.0
    %3687 = vmatprep.subr.mxu0 0.0
    %3688 = vmatpush1.msra.mxu0 0.0
    %3689 = vmatprep.subr.mxu0 0.0
    %3690 = vmatpush1.msra.mxu0 0.0
    %3691 = vmatprep.mubr.f32.mxu0 0.0
    %3692 = vmatmul.mubr.f32.gmra.mrb[0].mxu0 %v3625
    %v3693 = vpop.f32.mrb[0].mxu0
    %v3694 = vadd.f32 0.0, %v3693
    %v3695 = vpop.f32.mrb[0].mxu0
    %v3696 = vadd.f32 0.0, %v3695
    %3697 = vdwg.mxu0
    %3698 = vmatprep.subr.mxu0 %v680
    %3699 = vmatpush1.msra.mxu0 %v679
    %3700 = vmatprep.subr.mxu0 %v684
    %3701 = vmatpush1.msra.mxu0 %v683
    %3702 = vmatprep.subr.mxu0 %v688
    %3703 = vmatpush1.msra.mxu0 %v687
    %3704 = vmatprep.subr.mxu0 %v692
    %3705 = vmatpush1.msra.mxu0 %v691
    %3706 = vmatprep.subr.mxu0 0.0
    %3707 = vmatpush1.msra.mxu0 0.0
    %3708 = vmatprep.subr.mxu0 0.0
    %3709 = vmatpush1.msra.mxu0 0.0
    %3710 = vmatprep.subr.mxu0 0.0
    %3711 = vmatpush1.msra.mxu0 0.0
    %3712 = vmatprep.subr.mxu0 0.0
    %3713 = vmatpush1.msra.mxu0 0.0
    %3714 = vmatprep.subr.mxu0 0.0
    %3715 = vmatpush1.msra.mxu0 0.0
    %3716 = vmatprep.subr.mxu0 0.0
    %3717 = vmatpush1.msra.mxu0 0.0
    %3718 = vmatprep.subr.mxu0 0.0
    %3719 = vmatpush1.msra.mxu0 0.0
    %3720 = vmatprep.subr.mxu0 0.0
    %3721 = vmatpush1.msra.mxu0 0.0
    %3722 = vmatprep.subr.mxu0 0.0
    %3723 = vmatpush1.msra.mxu0 0.0
    %3724 = vmatprep.subr.mxu0 0.0
    %3725 = vmatpush1.msra.mxu0 0.0
    %3726 = vmatprep.subr.mxu0 0.0
    %3727 = vmatpush1.msra.mxu0 0.0
    %3728 = vmatprep.subr.mxu0 0.0
    %3729 = vmatpush1.msra.mxu0 0.0
    %3730 = vmatprep.subr.mxu0 0.0
    %3731 = vmatpush1.msra.mxu0 0.0
    %3732 = vmatprep.subr.mxu0 0.0
    %3733 = vmatpush1.msra.mxu0 0.0
    %3734 = vmatprep.subr.mxu0 0.0
    %3735 = vmatpush1.msra.mxu0 0.0
    %3736 = vmatprep.subr.mxu0 0.0
    %3737 = vmatpush1.msra.mxu0 0.0
    %3738 = vmatprep.subr.mxu0 0.0
    %3739 = vmatpush1.msra.mxu0 0.0
    %3740 = vmatprep.subr.mxu0 0.0
    %3741 = vmatpush1.msra.mxu0 0.0
    %3742 = vmatprep.subr.mxu0 0.0
    %3743 = vmatpush1.msra.mxu0 0.0
    %3744 = vmatprep.subr.mxu0 0.0
    %3745 = vmatpush1.msra.mxu0 0.0
    %3746 = vmatprep.subr.mxu0 0.0
    %3747 = vmatpush1.msra.mxu0 0.0
    %3748 = vmatprep.subr.mxu0 0.0
    %3749 = vmatpush1.msra.mxu0 0.0
    %3750 = vmatprep.subr.mxu0 0.0
    %3751 = vmatpush1.msra.mxu0 0.0
    %3752 = vmatprep.subr.mxu0 0.0
    %3753 = vmatpush1.msra.mxu0 0.0
    %3754 = vmatprep.subr.mxu0 0.0
    %3755 = vmatpush1.msra.mxu0 0.0
    %3756 = vmatprep.subr.mxu0 0.0
    %3757 = vmatpush1.msra.mxu0 0.0
    %3758 = vmatprep.subr.mxu0 0.0
    %3759 = vmatpush1.msra.mxu0 0.0
    %3760 = vmatprep.subr.mxu0 0.0
    %3761 = vmatpush1.msra.mxu0 0.0
    %3762 = vmatprep.mubr.f32.mxu0 0.0
    %3763 = vmatmul.mubr.f32.gmra.mrb[0].mxu0 %v3625
    %v3764 = vpop.f32.mrb[0].mxu0
    %v3765 = vadd.f32 0.0, %v3764
    %v3766 = vpop.f32.mrb[0].mxu0
    %v3767 = vadd.f32 0.0, %v3766
    %3768 = vdwg.mxu0
    %v3769 = vmax.f32 %v3694, 0.0
    %v3770 = vmax.f32 %v3696, 0.0
    %v3771 = vmax.f32 %v3765, 0.0
    %v3772 = vmax.f32 %v3767, 0.0
    %3773 = vmatprep.subr.mxu0 0.0
    %3774 = vmatpush1.msra.mxu0 %v693
    %3775 = vmatprep.subr.mxu0 0.0
    %3776 = vmatpush1.msra.mxu0 %v694
    %3777 = vmatprep.subr.mxu0 0.0
    %3778 = vmatpush1.msra.mxu0 %v695
    %3779 = vmatprep.subr.mxu0 0.0
    %3780 = vmatpush1.msra.mxu0 %v696
    %3781 = vmatprep.subr.mxu0 0.0
    %3782 = vmatpush1.msra.mxu0 %v697
    %3783 = vmatprep.subr.mxu0 0.0
    %3784 = vmatpush1.msra.mxu0 %v698
    %3785 = vmatprep.subr.mxu0 0.0
    %3786 = vmatpush1.msra.mxu0 %v699
    %3787 = vmatprep.subr.mxu0 0.0
    %3788 = vmatpush1.msra.mxu0 %v700
    %3789 = vmatprep.subr.mxu0 0.0
    %3790 = vmatpush1.msra.mxu0 %v701
    %3791 = vmatprep.subr.mxu0 0.0
    %3792 = vmatpush1.msra.mxu0 %v702
    %3793 = vmatprep.subr.mxu0 0.0
    %3794 = vmatpush1.msra.mxu0 %v703
    %3795 = vmatprep.subr.mxu0 0.0
    %3796 = vmatpush1.msra.mxu0 %v704
    %3797 = vmatprep.subr.mxu0 0.0
    %3798 = vmatpush1.msra.mxu0 %v705
    %3799 = vmatprep.subr.mxu0 0.0
    %3800 = vmatpush1.msra.mxu0 %v706
    %3801 = vmatprep.subr.mxu0 0.0
    %3802 = vmatpush1.msra.mxu0 %v707
    %3803 = vmatprep.subr.mxu0 0.0
    %3804 = vmatpush1.msra.mxu0 %v708
    %3805 = vmatprep.subr.mxu0 0.0
    %3806 = vmatpush1.msra.mxu0 %v709
    %3807 = vmatprep.subr.mxu0 0.0
    %3808 = vmatpush1.msra.mxu0 %v710
    %3809 = vmatprep.subr.mxu0 0.0
    %3810 = vmatpush1.msra.mxu0 %v711
    %3811 = vmatprep.subr.mxu0 0.0
    %3812 = vmatpush1.msra.mxu0 %v712
    %3813 = vmatprep.subr.mxu0 0.0
    %3814 = vmatpush1.msra.mxu0 %v713
    %3815 = vmatprep.subr.mxu0 0.0
    %3816 = vmatpush1.msra.mxu0 %v714
    %3817 = vmatprep.subr.mxu0 0.0
    %3818 = vmatpush1.msra.mxu0 %v715
    %3819 = vmatprep.subr.mxu0 0.0
    %3820 = vmatpush1.msra.mxu0 %v716
    %3821 = vmatprep.subr.mxu0 0.0
    %3822 = vmatpush1.msra.mxu0 %v717
    %3823 = vmatprep.subr.mxu0 0.0
    %3824 = vmatpush1.msra.mxu0 %v718
    %3825 = vmatprep.subr.mxu0 0.0
    %3826 = vmatpush1.msra.mxu0 %v719
    %3827 = vmatprep.subr.mxu0 0.0
    %3828 = vmatpush1.msra.mxu0 %v720
    %3829 = vmatprep.subr.mxu0 0.0
    %3830 = vmatpush1.msra.mxu0 %v721
    %3831 = vmatprep.subr.mxu0 0.0
    %3832 = vmatpush1.msra.mxu0 %v722
    %3833 = vmatprep.subr.mxu0 0.0
    %3834 = vmatpush1.msra.mxu0 %v723
    %3835 = vmatprep.subr.mxu0 0.0
    %3836 = vmatpush1.msra.mxu0 %v724
    %3837 = vmatprep.mubr.f32.mxu0 %v3770
    %3838 = vmatmul.mubr.f32.gmra.mrb[0].mxu0 %v3769
    %v3839 = vpop.f32.mrb[0].mxu0
    %v3840 = vadd.f32 0.0, %v3839
    %v3841 = vpop.f32.mrb[0].mxu0
    %3842 = vdwg.mxu0
    %3843 = vmatprep.subr.mxu0 0.0
    %3844 = vmatpush1.msra.mxu0 %v725
    %3845 = vmatprep.subr.mxu0 0.0
    %3846 = vmatpush1.msra.mxu0 %v726
    %3847 = vmatprep.subr.mxu0 0.0
    %3848 = vmatpush1.msra.mxu0 %v727
    %3849 = vmatprep.subr.mxu0 0.0
    %3850 = vmatpush1.msra.mxu0 %v728
    %3851 = vmatprep.subr.mxu0 0.0
    %3852 = vmatpush1.msra.mxu0 %v729
    %3853 = vmatprep.subr.mxu0 0.0
    %3854 = vmatpush1.msra.mxu0 %v730
    %3855 = vmatprep.subr.mxu0 0.0
    %3856 = vmatpush1.msra.mxu0 %v731
    %3857 = vmatprep.subr.mxu0 0.0
    %3858 = vmatpush1.msra.mxu0 %v732
    %3859 = vmatprep.subr.mxu0 0.0
    %3860 = vmatpush1.msra.mxu0 %v733
    %3861 = vmatprep.subr.mxu0 0.0
    %3862 = vmatpush1.msra.mxu0 %v734
    %3863 = vmatprep.subr.mxu0 0.0
    %3864 = vmatpush1.msra.mxu0 %v735
    %3865 = vmatprep.subr.mxu0 0.0
    %3866 = vmatpush1.msra.mxu0 %v736
    %3867 = vmatprep.subr.mxu0 0.0
    %3868 = vmatpush1.msra.mxu0 %v737
    %3869 = vmatprep.subr.mxu0 0.0
    %3870 = vmatpush1.msra.mxu0 %v738
    %3871 = vmatprep.subr.mxu0 0.0
    %3872 = vmatpush1.msra.mxu0 %v739
    %3873 = vmatprep.subr.mxu0 0.0
    %3874 = vmatpush1.msra.mxu0 %v740
    %3875 = vmatprep.subr.mxu0 0.0
    %3876 = vmatpush1.msra.mxu0 %v741
    %3877 = vmatprep.subr.mxu0 0.0
    %3878 = vmatpush1.msra.mxu0 %v742
    %3879 = vmatprep.subr.mxu0 0.0
    %3880 = vmatpush1.msra.mxu0 %v743
    %3881 = vmatprep.subr.mxu0 0.0
    %3882 = vmatpush1.msra.mxu0 %v744
    %3883 = vmatprep.subr.mxu0 0.0
    %3884 = vmatpush1.msra.mxu0 %v745
    %3885 = vmatprep.subr.mxu0 0.0
    %3886 = vmatpush1.msra.mxu0 %v746
    %3887 = vmatprep.subr.mxu0 0.0
    %3888 = vmatpush1.msra.mxu0 %v747
    %3889 = vmatprep.subr.mxu0 0.0
    %3890 = vmatpush1.msra.mxu0 %v748
    %3891 = vmatprep.subr.mxu0 0.0
    %3892 = vmatpush1.msra.mxu0 %v749
    %3893 = vmatprep.subr.mxu0 0.0
    %3894 = vmatpush1.msra.mxu0 %v750
    %3895 = vmatprep.subr.mxu0 0.0
    %3896 = vmatpush1.msra.mxu0 %v751
    %3897 = vmatprep.subr.mxu0 0.0
    %3898 = vmatpush1.msra.mxu0 %v752
    %3899 = vmatprep.subr.mxu0 0.0
    %3900 = vmatpush1.msra.mxu0 %v753
    %3901 = vmatprep.subr.mxu0 0.0
    %3902 = vmatpush1.msra.mxu0 %v754
    %3903 = vmatprep.subr.mxu0 0.0
    %3904 = vmatpush1.msra.mxu0 %v755
    %3905 = vmatprep.subr.mxu0 0.0
    %3906 = vmatpush1.msra.mxu0 %v756
    %3907 = vmatprep.mubr.f32.mxu0 %v3772
    %3908 = vmatmul.mubr.f32.gmra.mrb[0].mxu0 %v3771
    %v3909 = vpop.f32.mrb[0].mxu0
    %v3910 = vadd.f32 %v3840, %v3909
    %v3911 = vpop.f32.mrb[0].mxu0
    %3912 = vdwg.mxu0
    %v3914 = vrot.slane %v3910, 6
    %v3916 = vadd.f32 %v674, %v3914
    %v3917 = vsel %vm1637, %v3916, -inf
    %3918 = vmax.xlane.f32.xlu0 %v3917
    %v3919 = vpop.xlane.xlu0 %3918
    %v3920 = vsub.f32 %v3916, %v3919
    %v3921 = vmul.f32 %v3920, 1.442695
    %v3922 = vpow.pop %v3921
    %v3923 = vsel %vm1637, %v3922, 0.0
    %3924 = vadd.xlane.f32.xlu0 %v3923
    %v3925 = vpop.xlane.xlu0 %3924
    %v3926 = vrcp.pop %v3925
    %v3927 = vmul.f32 %v3922, %v3926
    %v3932 = vrot.slane %v3694, 6
    %v3933 = vrot.slane %v3696, 6
    %v3934 = vrot.slane %v3765, 6
    %v3935 = vrot.slane %v3767, 6
    %v3940 = vadd.f32 %v374, %v3932
    %v3941 = vadd.f32 %v376, %v3933
    %v3942 = vadd.f32 %v451, %v3934
    %v3943 = vadd.f32 %v453, %v3935
    %v3944 = vxor.u32 %v3940, 2147483648
    %v3945 = vxor.u32 %v3941, 2147483648
    %v3946 = vxor.u32 %v3942, 2147483648
    %v3947 = vmul.f32 %v3944, 1.442695
    %v3948 = vpow.pop %v3947
    %v3949 = vmul.f32 %v3945, 1.442695
    %v3950 = vpow.pop %v3949
    %v3951 = vmul.f32 %v3946, 1.442695
    %v3952 = vpow.pop %v3951
    %v3953 = vadd.f32 %v3948, 1.0
    %v3954 = vadd.f32 %v3950, 1.0
    %v3955 = vadd.f32 %v3952, 1.0
    %v3956 = vrcp.pop %v3953
    %v3957 = vmul.f32 1.0, %v3956
    %v3958 = vrcp.pop %v3954
    %v3959 = vmul.f32 1.0, %v3958
    %v3960 = vrcp.pop %v3955
    %v3961 = vmul.f32 1.0, %v3960
    %v3962 = vtanh.pop %v3943
    %v3964 = vrot.slane %v3959, 2
    %v3966 = vmul.f32 %v3548, %v3964
    %v3967 = vmul.f32 %v3957, %v3962
    %v3969 = vrot.slane %v3967, 2
    %v3971 = vadd.f32 %v3966, %v3969
    %v3972 = vtanh.pop %v3971
    %v3974 = vrot.slane %v3972, 6
    %v3976 = vmul.f32 %v3961, %v3974
    %v3978 = vrot.slane %v3927, 2
    %v3979 = vsel %vm1121, %v3978, 0
    %3981 = vmatprep.subr.mxu0 0.0
    %3982 = vmatpush1.msra.mxu0 %v1127
    %3983 = vmatprep.subr.mxu0 0.0
    %3984 = vmatpush1.msra.mxu0 0.0
    %3985 = vmatprep.subr.mxu0 0.0
    %3986 = vmatpush1.msra.mxu0 0.0
    %3987 = vmatprep.subr.mxu0 0.0
    %3988 = vmatpush1.msra.mxu0 0.0
    %3989 = vmatprep.subr.mxu0 0.0
    %3990 = vmatpush1.msra.mxu0 0.0
    %3991 = vmatprep.subr.mxu0 0.0
    %3992 = vmatpush1.msra.mxu0 0.0
    %3993 = vmatprep.subr.mxu0 0.0
    %3994 = vmatpush1.msra.mxu0 0.0
    %3995 = vmatprep.subr.mxu0 0.0
    %3996 = vmatpush1.msra.mxu0 0.0
    %3997 = vmatprep.subr.mxu0 0.0
    %3998 = vmatpush1.msra.mxu0 0.0
    %3999 = vmatprep.subr.mxu0 0.0
    %4000 = vmatpush1.msra.mxu0 0.0
    %4001 = vmatprep.subr.mxu0 0.0
    %4002 = vmatpush1.msra.mxu0 0.0
    %4003 = vmatprep.subr.mxu0 0.0
    %4004 = vmatpush1.msra.mxu0 0.0
    %4005 = vmatprep.subr.mxu0 0.0
    %4006 = vmatpush1.msra.mxu0 0.0
    %4007 = vmatprep.subr.mxu0 0.0
    %4008 = vmatpush1.msra.mxu0 0.0
    %4009 = vmatprep.subr.mxu0 0.0
    %4010 = vmatpush1.msra.mxu0 0.0
    %4011 = vmatprep.subr.mxu0 0.0
    %4012 = vmatpush1.msra.mxu0 0.0
    %4013 = vmatprep.subr.mxu0 0.0
    %4014 = vmatpush1.msra.mxu0 0.0
    %4015 = vmatprep.subr.mxu0 0.0
    %4016 = vmatpush1.msra.mxu0 0.0
    %4017 = vmatprep.subr.mxu0 0.0
    %4018 = vmatpush1.msra.mxu0 0.0
    %4019 = vmatprep.subr.mxu0 0.0
    %4020 = vmatpush1.msra.mxu0 0.0
    %4021 = vmatprep.subr.mxu0 0.0
    %4022 = vmatpush1.msra.mxu0 0.0
    %4023 = vmatprep.subr.mxu0 0.0
    %4024 = vmatpush1.msra.mxu0 0.0
    %4025 = vmatprep.subr.mxu0 0.0
    %4026 = vmatpush1.msra.mxu0 0.0
    %4027 = vmatprep.subr.mxu0 0.0
    %4028 = vmatpush1.msra.mxu0 0.0
    %4029 = vmatprep.subr.mxu0 0.0
    %4030 = vmatpush1.msra.mxu0 0.0
    %4031 = vmatprep.subr.mxu0 0.0
    %4032 = vmatpush1.msra.mxu0 0.0
    %4033 = vmatprep.subr.mxu0 0.0
    %4034 = vmatpush1.msra.mxu0 0.0
    %4035 = vmatprep.subr.mxu0 0.0
    %4036 = vmatpush1.msra.mxu0 0.0
    %4037 = vmatprep.subr.mxu0 0.0
    %4038 = vmatpush1.msra.mxu0 0.0
    %4039 = vmatprep.subr.mxu0 0.0
    %4040 = vmatpush1.msra.mxu0 0.0
    %4041 = vmatprep.subr.mxu0 0.0
    %4042 = vmatpush1.msra.mxu0 0.0
    %4043 = vmatprep.subr.mxu0 0.0
    %4044 = vmatpush1.msra.mxu0 0.0
    %4045 = vmatprep.mubr.f32.mxu0 0.0
    %4046 = vmatmul.mubr.f32.gmra.mrb[0].mxu0 %v3979
    %v4047 = vpop.f32.mrb[0].mxu0
    %v4048 = vadd.f32 0.0, %v4047
    %v4049 = vpop.f32.mrb[0].mxu0
    %4050 = vdwg.mxu0
    %v4051 = vmul.f32 %v3971, %v4048
    %4052 = vmatprep.subr.mxu0 0.0
    %4053 = vmatpush1.msra.mxu0 %v774
    %4054 = vmatprep.subr.mxu0 0.0
    %4055 = vmatpush1.msra.mxu0 %v775
    %4056 = vmatprep.subr.mxu0 0.0
    %4057 = vmatpush1.msra.mxu0 %v776
    %4058 = vmatprep.subr.mxu0 0.0
    %4059 = vmatpush1.msra.mxu0 %v777
    %4060 = vmatprep.subr.mxu0 0.0
    %4061 = vmatpush1.msra.mxu0 %v778
    %4062 = vmatprep.subr.mxu0 0.0
    %4063 = vmatpush1.msra.mxu0 %v779
    %4064 = vmatprep.subr.mxu0 0.0
    %4065 = vmatpush1.msra.mxu0 %v780
    %4066 = vmatprep.subr.mxu0 0.0
    %4067 = vmatpush1.msra.mxu0 %v781
    %4068 = vmatprep.subr.mxu0 0.0
    %4069 = vmatpush1.msra.mxu0 %v782
    %4070 = vmatprep.subr.mxu0 0.0
    %4071 = vmatpush1.msra.mxu0 %v783
    %4072 = vmatprep.subr.mxu0 0.0
    %4073 = vmatpush1.msra.mxu0 %v784
    %4074 = vmatprep.subr.mxu0 0.0
    %4075 = vmatpush1.msra.mxu0 %v785
    %4076 = vmatprep.subr.mxu0 0.0
    %4077 = vmatpush1.msra.mxu0 %v786
    %4078 = vmatprep.subr.mxu0 0.0
    %4079 = vmatpush1.msra.mxu0 %v787
    %4080 = vmatprep.subr.mxu0 0.0
    %4081 = vmatpush1.msra.mxu0 %v788
    %4082 = vmatprep.subr.mxu0 0.0
    %4083 = vmatpush1.msra.mxu0 %v789
    %4084 = vmatprep.subr.mxu0 0.0
    %4085 = vmatpush1.msra.mxu0 0.0
    %4086 = vmatprep.subr.mxu0 0.0
    %4087 = vmatpush1.msra.mxu0 0.0
    %4088 = vmatprep.subr.mxu0 0.0
    %4089 = vmatpush1.msra.mxu0 0.0
    %4090 = vmatprep.subr.mxu0 0.0
    %4091 = vmatpush1.msra.mxu0 0.0
    %4092 = vmatprep.subr.mxu0 0.0
    %4093 = vmatpush1.msra.mxu0 0.0
    %4094 = vmatprep.subr.mxu0 0.0
    %4095 = vmatpush1.msra.mxu0 0.0
    %4096 = vmatprep.subr.mxu0 0.0
    %4097 = vmatpush1.msra.mxu0 0.0
    %4098 = vmatprep.subr.mxu0 0.0
    %4099 = vmatpush1.msra.mxu0 0.0
    %4100 = vmatprep.subr.mxu0 0.0
    %4101 = vmatpush1.msra.mxu0 0.0
    %4102 = vmatprep.subr.mxu0 0.0
    %4103 = vmatpush1.msra.mxu0 0.0
    %4104 = vmatprep.subr.mxu0 0.0
    %4105 = vmatpush1.msra.mxu0 0.0
    %4106 = vmatprep.subr.mxu0 0.0
    %4107 = vmatpush1.msra.mxu0 0.0
    %4108 = vmatprep.subr.mxu0 0.0
    %4109 = vmatpush1.msra.mxu0 0.0
    %4110 = vmatprep.subr.mxu0 0.0
    %4111 = vmatpush1.msra.mxu0 0.0
    %4112 = vmatprep.subr.mxu0 0.0
    %4113 = vmatpush1.msra.mxu0 0.0
    %4114 = vmatprep.subr.mxu0 0.0
    %4115 = vmatpush1.msra.mxu0 0.0
    %4116 = vmatprep.mubr.f32.mxu0 0.0
    %4117 = vmatmul.mubr.f32.gmra.mrb[0].mxu0 %v4051
    %v4118 = vpop.f32.mrb[0].mxu0
    %v4119 = vadd.f32 0.0, %v4118
    %v4120 = vpop.f32.mrb[0].mxu0
    %4121 = vdwg.mxu0
    %v4123 = vrot.slane %v4048, 6
    %v4125 = vmul.f32 %v3976, %v4123
    %v4127 = vrot.slane %v4125, 2
    %4129 = vmatprep.subr.mxu0 0.0
    %4130 = vmatpush1.msra.mxu0 %v758
    %4131 = vmatprep.subr.mxu0 0.0
    %4132 = vmatpush1.msra.mxu0 %v759
    %4133 = vmatprep.subr.mxu0 0.0
    %4134 = vmatpush1.msra.mxu0 %v760
    %4135 = vmatprep.subr.mxu0 0.0
    %4136 = vmatpush1.msra.mxu0 %v761
    %4137 = vmatprep.subr.mxu0 0.0
    %4138 = vmatpush1.msra.mxu0 %v762
    %4139 = vmatprep.subr.mxu0 0.0
    %4140 = vmatpush1.msra.mxu0 %v763
    %4141 = vmatprep.subr.mxu0 0.0
    %4142 = vmatpush1.msra.mxu0 %v764
    %4143 = vmatprep.subr.mxu0 0.0
    %4144 = vmatpush1.msra.mxu0 %v765
    %4145 = vmatprep.subr.mxu0 0.0
    %4146 = vmatpush1.msra.mxu0 %v766
    %4147 = vmatprep.subr.mxu0 0.0
    %4148 = vmatpush1.msra.mxu0 %v767
    %4149 = vmatprep.subr.mxu0 0.0
    %4150 = vmatpush1.msra.mxu0 %v768
    %4151 = vmatprep.subr.mxu0 0.0
    %4152 = vmatpush1.msra.mxu0 %v769
    %4153 = vmatprep.subr.mxu0 0.0
    %4154 = vmatpush1.msra.mxu0 %v770
    %4155 = vmatprep.subr.mxu0 0.0
    %4156 = vmatpush1.msra.mxu0 %v771
    %4157 = vmatprep.subr.mxu0 0.0
    %4158 = vmatpush1.msra.mxu0 %v772
    %4159 = vmatprep.subr.mxu0 0.0
    %4160 = vmatpush1.msra.mxu0 %v773
    %4161 = vmatprep.subr.mxu0 0.0
    %4162 = vmatpush1.msra.mxu0 0.0
    %4163 = vmatprep.subr.mxu0 0.0
    %4164 = vmatpush1.msra.mxu0 0.0
    %4165 = vmatprep.subr.mxu0 0.0
    %4166 = vmatpush1.msra.mxu0 0.0
    %4167 = vmatprep.subr.mxu0 0.0
    %4168 = vmatpush1.msra.mxu0 0.0
    %4169 = vmatprep.subr.mxu0 0.0
    %4170 = vmatpush1.msra.mxu0 0.0
    %4171 = vmatprep.subr.mxu0 0.0
    %4172 = vmatpush1.msra.mxu0 0.0
    %4173 = vmatprep.subr.mxu0 0.0
    %4174 = vmatpush1.msra.mxu0 0.0
    %4175 = vmatprep.subr.mxu0 0.0
    %4176 = vmatpush1.msra.mxu0 0.0
    %4177 = vmatprep.subr.mxu0 0.0
    %4178 = vmatpush1.msra.mxu0 0.0
    %4179 = vmatprep.subr.mxu0 0.0
    %4180 = vmatpush1.msra.mxu0 0.0
    %4181 = vmatprep.subr.mxu0 0.0
    %4182 = vmatpush1.msra.mxu0 0.0
    %4183 = vmatprep.subr.mxu0 0.0
    %4184 = vmatpush1.msra.mxu0 0.0
    %4185 = vmatprep.subr.mxu0 0.0
    %4186 = vmatpush1.msra.mxu0 0.0
    %4187 = vmatprep.subr.mxu0 0.0
    %4188 = vmatpush1.msra.mxu0 0.0
    %4189 = vmatprep.subr.mxu0 0.0
    %4190 = vmatpush1.msra.mxu0 0.0
    %4191 = vmatprep.subr.mxu0 0.0
    %4192 = vmatpush1.msra.mxu0 0.0
    %4193 = vmatprep.mubr.f32.mxu0 0.0
    %4194 = vmatmul.mubr.f32.gmra.mrb[0].mxu0 %v4127
    %v4195 = vpop.f32.mrb[0].mxu0
    %v4196 = vadd.f32 0.0, %v4195
    %v4197 = vpop.f32.mrb[0].mxu0
    %4198 = vdwg.mxu0
    %4199 = vst.msk [vmem:[#allocation2 + $0xa] sm:$0x3] %vm1341, %v4196
    %4200 = vst.msk [vmem:[#allocation3 + $0x8] sm:$0xc] %vm1637, %v3927
    %v4202 = vsel %vm790, %v4196, 0
    %4204 = vmatprep.subr.mxu0 %v678
    %4205 = vmatpush1.msra.mxu0 %v677
    %4206 = vmatprep.subr.mxu0 %v682
    %4207 = vmatpush1.msra.mxu0 %v681
    %4208 = vmatprep.subr.mxu0 %v686
    %4209 = vmatpush1.msra.mxu0 %v685
    %4210 = vmatprep.subr.mxu0 %v690
    %4211 = vmatpush1.msra.mxu0 %v689
    %4212 = vmatprep.subr.mxu0 0.0
    %4213 = vmatpush1.msra.mxu0 0.0
    %4214 = vmatprep.subr.mxu0 0.0
    %4215 = vmatpush1.msra.mxu0 0.0
    %4216 = vmatprep.subr.mxu0 0.0
    %4217 = vmatpush1.msra.mxu0 0.0
    %4218 = vmatprep.subr.mxu0 0.0
    %4219 = vmatpush1.msra.mxu0 0.0
    %4220 = vmatprep.subr.mxu0 0.0
    %4221 = vmatpush1.msra.mxu0 0.0
    %4222 = vmatprep.subr.mxu0 0.0
    %4223 = vmatpush1.msra.mxu0 0.0
    %4224 = vmatprep.subr.mxu0 0.0
    %4225 = vmatpush1.msra.mxu0 0.0
    %4226 = vmatprep.subr.mxu0 0.0
    %4227 = vmatpush1.msra.mxu0 0.0
    %4228 = vmatprep.subr.mxu0 0.0
    %4229 = vmatpush1.msra.mxu0 0.0
    %4230 = vmatprep.subr.mxu0 0.0
    %4231 = vmatpush1.msra.mxu0 0.0
    %4232 = vmatprep.subr.mxu0 0.0
    %4233 = vmatpush1.msra.mxu0 0.0
    %4234 = vmatprep.subr.mxu0 0.0
    %4235 = vmatpush1.msra.mxu0 0.0
    %4236 = vmatprep.subr.mxu0 0.0
    %4237 = vmatpush1.msra.mxu0 0.0
    %4238 = vmatprep.subr.mxu0 0.0
    %4239 = vmatpush1.msra.mxu0 0.0
    %4240 = vmatprep.subr.mxu0 0.0
    %4241 = vmatpush1.msra.mxu0 0.0
    %4242 = vmatprep.subr.mxu0 0.0
    %4243 = vmatpush1.msra.mxu0 0.0
    %4244 = vmatprep.subr.mxu0 0.0
    %4245 = vmatpush1.msra.mxu0 0.0
    %4246 = vmatprep.subr.mxu0 0.0
    %4247 = vmatpush1.msra.mxu0 0.0
    %4248 = vmatprep.subr.mxu0 0.0
    %4249 = vmatpush1.msra.mxu0 0.0
    %4250 = vmatprep.subr.mxu0 0.0
    %4251 = vmatpush1.msra.mxu0 0.0
    %4252 = vmatprep.subr.mxu0 0.0
    %4253 = vmatpush1.msra.mxu0 0.0
    %4254 = vmatprep.subr.mxu0 0.0
    %4255 = vmatpush1.msra.mxu0 0.0
    %4256 = vmatprep.subr.mxu0 0.0
    %4257 = vmatpush1.msra.mxu0 0.0
    %4258 = vmatprep.subr.mxu0 0.0
    %4259 = vmatpush1.msra.mxu0 0.0
    %4260 = vmatprep.subr.mxu0 0.0
    %4261 = vmatpush1.msra.mxu0 0.0
    %4262 = vmatprep.subr.mxu0 0.0
    %4263 = vmatpush1.msra.mxu0 0.0
    %4264 = vmatprep.subr.mxu0 0.0
    %4265 = vmatpush1.msra.mxu0 0.0
    %4266 = vmatprep.subr.mxu0 0.0
    %4267 = vmatpush1.msra.mxu0 0.0
    %4268 = vmatprep.mubr.f32.mxu0 0.0
    %4269 = vmatmul.mubr.f32.gmra.mrb[0].mxu0 %v4202
    %v4270 = vpop.f32.mrb[0].mxu0
    %v4271 = vadd.f32 0.0, %v4270
    %v4272 = vpop.f32.mrb[0].mxu0
    %v4273 = vadd.f32 0.0, %v4272
    %4274 = vdwg.mxu0
    %4275 = vmatprep.subr.mxu0 %v680
    %4276 = vmatpush1.msra.mxu0 %v679
    %4277 = vmatprep.subr.mxu0 %v684
    %4278 = vmatpush1.msra.mxu0 %v683
    %4279 = vmatprep.subr.mxu0 %v688
    %4280 = vmatpush1.msra.mxu0 %v687
    %4281 = vmatprep.subr.mxu0 %v692
    %4282 = vmatpush1.msra.mxu0 %v691
    %4283 = vmatprep.subr.mxu0 0.0
    %4284 = vmatpush1.msra.mxu0 0.0
    %4285 = vmatprep.subr.mxu0 0.0
    %4286 = vmatpush1.msra.mxu0 0.0
    %4287 = vmatprep.subr.mxu0 0.0
    %4288 = vmatpush1.msra.mxu0 0.0
    %4289 = vmatprep.subr.mxu0 0.0
    %4290 = vmatpush1.msra.mxu0 0.0
    %4291 = vmatprep.subr.mxu0 0.0
    %4292 = vmatpush1.msra.mxu0 0.0
    %4293 = vmatprep.subr.mxu0 0.0
    %4294 = vmatpush1.msra.mxu0 0.0
    %4295 = vmatprep.subr.mxu0 0.0
    %4296 = vmatpush1.msra.mxu0 0.0
    %4297 = vmatprep.subr.mxu0 0.0
    %4298 = vmatpush1.msra.mxu0 0.0
    %4299 = vmatprep.subr.mxu0 0.0
    %4300 = vmatpush1.msra.mxu0 0.0
    %4301 = vmatprep.subr.mxu0 0.0
    %4302 = vmatpush1.msra.mxu0 0.0
    %4303 = vmatprep.subr.mxu0 0.0
    %4304 = vmatpush1.msra.mxu0 0.0
    %4305 = vmatprep.subr.mxu0 0.0
    %4306 = vmatpush1.msra.mxu0 0.0
    %4307 = vmatprep.subr.mxu0 0.0
    %4308 = vmatpush1.msra.mxu0 0.0
    %4309 = vmatprep.subr.mxu0 0.0
    %4310 = vmatpush1.msra.mxu0 0.0
    %4311 = vmatprep.subr.mxu0 0.0
    %4312 = vmatpush1.msra.mxu0 0.0
    %4313 = vmatprep.subr.mxu0 0.0
    %4314 = vmatpush1.msra.mxu0 0.0
    %4315 = vmatprep.subr.mxu0 0.0
    %4316 = vmatpush1.msra.mxu0 0.0
    %4317 = vmatprep.subr.mxu0 0.0
    %4318 = vmatpush1.msra.mxu0 0.0
    %4319 = vmatprep.subr.mxu0 0.0
    %4320 = vmatpush1.msra.mxu0 0.0
    %4321 = vmatprep.subr.mxu0 0.0
    %4322 = vmatpush1.msra.mxu0 0.0
    %4323 = vmatprep.subr.mxu0 0.0
    %4324 = vmatpush1.msra.mxu0 0.0
    %4325 = vmatprep.subr.mxu0 0.0
    %4326 = vmatpush1.msra.mxu0 0.0
    %4327 = vmatprep.subr.mxu0 0.0
    %4328 = vmatpush1.msra.mxu0 0.0
    %4329 = vmatprep.subr.mxu0 0.0
    %4330 = vmatpush1.msra.mxu0 0.0
    %4331 = vmatprep.subr.mxu0 0.0
    %4332 = vmatpush1.msra.mxu0 0.0
    %4333 = vmatprep.subr.mxu0 0.0
    %4334 = vmatpush1.msra.mxu0 0.0
    %4335 = vmatprep.subr.mxu0 0.0
    %4336 = vmatpush1.msra.mxu0 0.0
    %4337 = vmatprep.subr.mxu0 0.0
    %4338 = vmatpush1.msra.mxu0 0.0
    %4339 = vmatprep.mubr.f32.mxu0 0.0
    %4340 = vmatmul.mubr.f32.gmra.mrb[0].mxu0 %v4202
    %v4341 = vpop.f32.mrb[0].mxu0
    %v4342 = vadd.f32 0.0, %v4341
    %v4343 = vpop.f32.mrb[0].mxu0
    %v4344 = vadd.f32 0.0, %v4343
    %4345 = vdwg.mxu0
    %v4346 = vmax.f32 %v4271, 0.0
    %v4347 = vmax.f32 %v4273, 0.0
    %v4348 = vmax.f32 %v4342, 0.0
    %v4349 = vmax.f32 %v4344, 0.0
    %4350 = vmatprep.subr.mxu0 0.0
    %4351 = vmatpush1.msra.mxu0 %v693
    %4352 = vmatprep.subr.mxu0 0.0
    %4353 = vmatpush1.msra.mxu0 %v694
    %4354 = vmatprep.subr.mxu0 0.0
    %4355 = vmatpush1.msra.mxu0 %v695
    %4356 = vmatprep.subr.mxu0 0.0
    %4357 = vmatpush1.msra.mxu0 %v696
    %4358 = vmatprep.subr.mxu0 0.0
    %4359 = vmatpush1.msra.mxu0 %v697
    %4360 = vmatprep.subr.mxu0 0.0
    %4361 = vmatpush1.msra.mxu0 %v698
    %4362 = vmatprep.subr.mxu0 0.0
    %4363 = vmatpush1.msra.mxu0 %v699
    %4364 = vmatprep.subr.mxu0 0.0
    %4365 = vmatpush1.msra.mxu0 %v700
    %4366 = vmatprep.subr.mxu0 0.0
    %4367 = vmatpush1.msra.mxu0 %v701
    %4368 = vmatprep.subr.mxu0 0.0
    %4369 = vmatpush1.msra.mxu0 %v702
    %4370 = vmatprep.subr.mxu0 0.0
    %4371 = vmatpush1.msra.mxu0 %v703
    %4372 = vmatprep.subr.mxu0 0.0
    %4373 = vmatpush1.msra.mxu0 %v704
    %4374 = vmatprep.subr.mxu0 0.0
    %4375 = vmatpush1.msra.mxu0 %v705
    %4376 = vmatprep.subr.mxu0 0.0
    %4377 = vmatpush1.msra.mxu0 %v706
    %4378 = vmatprep.subr.mxu0 0.0
    %4379 = vmatpush1.msra.mxu0 %v707
    %4380 = vmatprep.subr.mxu0 0.0
    %4381 = vmatpush1.msra.mxu0 %v708
    %4382 = vmatprep.subr.mxu0 0.0
    %4383 = vmatpush1.msra.mxu0 %v709
    %4384 = vmatprep.subr.mxu0 0.0
    %4385 = vmatpush1.msra.mxu0 %v710
    %4386 = vmatprep.subr.mxu0 0.0
    %4387 = vmatpush1.msra.mxu0 %v711
    %4388 = vmatprep.subr.mxu0 0.0
    %4389 = vmatpush1.msra.mxu0 %v712
    %4390 = vmatprep.subr.mxu0 0.0
    %4391 = vmatpush1.msra.mxu0 %v713
    %4392 = vmatprep.subr.mxu0 0.0
    %4393 = vmatpush1.msra.mxu0 %v714
    %4394 = vmatprep.subr.mxu0 0.0
    %4395 = vmatpush1.msra.mxu0 %v715
    %4396 = vmatprep.subr.mxu0 0.0
    %4397 = vmatpush1.msra.mxu0 %v716
    %4398 = vmatprep.subr.mxu0 0.0
    %4399 = vmatpush1.msra.mxu0 %v717
    %4400 = vmatprep.subr.mxu0 0.0
    %4401 = vmatpush1.msra.mxu0 %v718
    %4402 = vmatprep.subr.mxu0 0.0
    %4403 = vmatpush1.msra.mxu0 %v719
    %4404 = vmatprep.subr.mxu0 0.0
    %4405 = vmatpush1.msra.mxu0 %v720
    %4406 = vmatprep.subr.mxu0 0.0
    %4407 = vmatpush1.msra.mxu0 %v721
    %4408 = vmatprep.subr.mxu0 0.0
    %4409 = vmatpush1.msra.mxu0 %v722
    %4410 = vmatprep.subr.mxu0 0.0
    %4411 = vmatpush1.msra.mxu0 %v723
    %4412 = vmatprep.subr.mxu0 0.0
    %4413 = vmatpush1.msra.mxu0 %v724
    %4414 = vmatprep.mubr.f32.mxu0 %v4347
    %4415 = vmatmul.mubr.f32.gmra.mrb[0].mxu0 %v4346
    %v4416 = vpop.f32.mrb[0].mxu0
    %v4417 = vadd.f32 0.0, %v4416
    %v4418 = vpop.f32.mrb[0].mxu0
    %4419 = vdwg.mxu0
    %4420 = vmatprep.subr.mxu0 0.0
    %4421 = vmatpush1.msra.mxu0 %v725
    %4422 = vmatprep.subr.mxu0 0.0
    %4423 = vmatpush1.msra.mxu0 %v726
    %4424 = vmatprep.subr.mxu0 0.0
    %4425 = vmatpush1.msra.mxu0 %v727
    %4426 = vmatprep.subr.mxu0 0.0
    %4427 = vmatpush1.msra.mxu0 %v728
    %4428 = vmatprep.subr.mxu0 0.0
    %4429 = vmatpush1.msra.mxu0 %v729
    %4430 = vmatprep.subr.mxu0 0.0
    %4431 = vmatpush1.msra.mxu0 %v730
    %4432 = vmatprep.subr.mxu0 0.0
    %4433 = vmatpush1.msra.mxu0 %v731
    %4434 = vmatprep.subr.mxu0 0.0
    %4435 = vmatpush1.msra.mxu0 %v732
    %4436 = vmatprep.subr.mxu0 0.0
    %4437 = vmatpush1.msra.mxu0 %v733
    %4438 = vmatprep.subr.mxu0 0.0
    %4439 = vmatpush1.msra.mxu0 %v734
    %4440 = vmatprep.subr.mxu0 0.0
    %4441 = vmatpush1.msra.mxu0 %v735
    %4442 = vmatprep.subr.mxu0 0.0
    %4443 = vmatpush1.msra.mxu0 %v736
    %4444 = vmatprep.subr.mxu0 0.0
    %4445 = vmatpush1.msra.mxu0 %v737
    %4446 = vmatprep.subr.mxu0 0.0
    %4447 = vmatpush1.msra.mxu0 %v738
    %4448 = vmatprep.subr.mxu0 0.0
    %4449 = vmatpush1.msra.mxu0 %v739
    %4450 = vmatprep.subr.mxu0 0.0
    %4451 = vmatpush1.msra.mxu0 %v740
    %4452 = vmatprep.subr.mxu0 0.0
    %4453 = vmatpush1.msra.mxu0 %v741
    %4454 = vmatprep.subr.mxu0 0.0
    %4455 = vmatpush1.msra.mxu0 %v742
    %4456 = vmatprep.subr.mxu0 0.0
    %4457 = vmatpush1.msra.mxu0 %v743
    %4458 = vmatprep.subr.mxu0 0.0
    %4459 = vmatpush1.msra.mxu0 %v744
    %4460 = vmatprep.subr.mxu0 0.0
    %4461 = vmatpush1.msra.mxu0 %v745
    %4462 = vmatprep.subr.mxu0 0.0
    %4463 = vmatpush1.msra.mxu0 %v746
    %4464 = vmatprep.subr.mxu0 0.0
    %4465 = vmatpush1.msra.mxu0 %v747
    %4466 = vmatprep.subr.mxu0 0.0
    %4467 = vmatpush1.msra.mxu0 %v748
    %4468 = vmatprep.subr.mxu0 0.0
    %4469 = vmatpush1.msra.mxu0 %v749
    %4470 = vmatprep.subr.mxu0 0.0
    %4471 = vmatpush1.msra.mxu0 %v750
    %4472 = vmatprep.subr.mxu0 0.0
    %4473 = vmatpush1.msra.mxu0 %v751
    %4474 = vmatprep.subr.mxu0 0.0
    %4475 = vmatpush1.msra.mxu0 %v752
    %4476 = vmatprep.subr.mxu0 0.0
    %4477 = vmatpush1.msra.mxu0 %v753
    %4478 = vmatprep.subr.mxu0 0.0
    %4479 = vmatpush1.msra.mxu0 %v754
    %4480 = vmatprep.subr.mxu0 0.0
    %4481 = vmatpush1.msra.mxu0 %v755
    %4482 = vmatprep.subr.mxu0 0.0
    %4483 = vmatpush1.msra.mxu0 %v756
    %4484 = vmatprep.mubr.f32.mxu0 %v4349
    %4485 = vmatmul.mubr.f32.gmra.mrb[0].mxu0 %v4348
    %v4486 = vpop.f32.mrb[0].mxu0
    %v4487 = vadd.f32 %v4417, %v4486
    %v4488 = vpop.f32.mrb[0].mxu0
    %4489 = vdwg.mxu0
    %v4491 = vrot.slane %v4487, 4
    %v4493 = vadd.f32 %v674, %v4491
    %v4494 = vsel %vm2215, %v4493, -inf
    %4495 = vmax.xlane.f32.xlu0 %v4494
    %v4496 = vpop.xlane.xlu0 %4495
    %v4497 = vsub.f32 %v4493, %v4496
    %v4498 = vmul.f32 %v4497, 1.442695
    %v4499 = vpow.pop %v4498
    %v4500 = vsel %vm2215, %v4499, 0.0
    %4501 = vadd.xlane.f32.xlu0 %v4500
    %v4502 = vpop.xlane.xlu0 %4501
    %v4503 = vrcp.pop %v4502
    %v4504 = vmul.f32 %v4499, %v4503
    %v4509 = vrot.slane %v4271, 4
    %v4510 = vrot.slane %v4273, 4
    %v4511 = vrot.slane %v4342, 4
    %v4512 = vrot.slane %v4344, 4
    %v4517 = vadd.f32 %v374, %v4509
    %v4518 = vadd.f32 %v376, %v4510
    %v4519 = vadd.f32 %v451, %v4511
    %v4520 = vadd.f32 %v453, %v4512
    %v4521 = vxor.u32 %v4517, 2147483648
    %v4522 = vxor.u32 %v4518, 2147483648
    %v4523 = vxor.u32 %v4519, 2147483648
    %v4524 = vmul.f32 %v4521, 1.442695
    %v4525 = vpow.pop %v4524
    %v4526 = vmul.f32 %v4522, 1.442695
    %v4527 = vpow.pop %v4526
    %v4528 = vmul.f32 %v4523, 1.442695
    %v4529 = vpow.pop %v4528
    %v4530 = vadd.f32 %v4525, 1.0
    %v4531 = vadd.f32 %v4527, 1.0
    %v4532 = vadd.f32 %v4529, 1.0
    %v4533 = vrcp.pop %v4530
    %v4534 = vmul.f32 1.0, %v4533
    %v4535 = vrcp.pop %v4531
    %v4536 = vmul.f32 1.0, %v4535
    %v4537 = vrcp.pop %v4532
    %v4538 = vmul.f32 1.0, %v4537
    %v4539 = vtanh.pop %v4520
    %v4541 = vrot.slane %v4536, 4
    %v4543 = vmul.f32 %v4119, %v4541
    %v4544 = vmul.f32 %v4534, %v4539
    %v4546 = vrot.slane %v4544, 4
    %v4548 = vadd.f32 %v4543, %v4546
    %v4549 = vtanh.pop %v4548
    %v4551 = vrot.slane %v4549, 4
    %v4553 = vmul.f32 %v4538, %v4551
    %v4555 = vrot.slane %v4504, 4
    %v4556 = vsel %vm1121, %v4555, 0
    %4558 = vmatprep.subr.mxu0 0.0
    %4559 = vmatpush1.msra.mxu0 %v1127
    %4560 = vmatprep.subr.mxu0 0.0
    %4561 = vmatpush1.msra.mxu0 0.0
    %4562 = vmatprep.subr.mxu0 0.0
    %4563 = vmatpush1.msra.mxu0 0.0
    %4564 = vmatprep.subr.mxu0 0.0
    %4565 = vmatpush1.msra.mxu0 0.0
    %4566 = vmatprep.subr.mxu0 0.0
    %4567 = vmatpush1.msra.mxu0 0.0
    %4568 = vmatprep.subr.mxu0 0.0
    %4569 = vmatpush1.msra.mxu0 0.0
    %4570 = vmatprep.subr.mxu0 0.0
    %4571 = vmatpush1.msra.mxu0 0.0
    %4572 = vmatprep.subr.mxu0 0.0
    %4573 = vmatpush1.msra.mxu0 0.0
    %4574 = vmatprep.subr.mxu0 0.0
    %4575 = vmatpush1.msra.mxu0 0.0
    %4576 = vmatprep.subr.mxu0 0.0
    %4577 = vmatpush1.msra.mxu0 0.0
    %4578 = vmatprep.subr.mxu0 0.0
    %4579 = vmatpush1.msra.mxu0 0.0
    %4580 = vmatprep.subr.mxu0 0.0
    %4581 = vmatpush1.msra.mxu0 0.0
    %4582 = vmatprep.subr.mxu0 0.0
    %4583 = vmatpush1.msra.mxu0 0.0
    %4584 = vmatprep.subr.mxu0 0.0
    %4585 = vmatpush1.msra.mxu0 0.0
    %4586 = vmatprep.subr.mxu0 0.0
    %4587 = vmatpush1.msra.mxu0 0.0
    %4588 = vmatprep.subr.mxu0 0.0
    %4589 = vmatpush1.msra.mxu0 0.0
    %4590 = vmatprep.subr.mxu0 0.0
    %4591 = vmatpush1.msra.mxu0 0.0
    %4592 = vmatprep.subr.mxu0 0.0
    %4593 = vmatpush1.msra.mxu0 0.0
    %4594 = vmatprep.subr.mxu0 0.0
    %4595 = vmatpush1.msra.mxu0 0.0
    %4596 = vmatprep.subr.mxu0 0.0
    %4597 = vmatpush1.msra.mxu0 0.0
    %4598 = vmatprep.subr.mxu0 0.0
    %4599 = vmatpush1.msra.mxu0 0.0
    %4600 = vmatprep.subr.mxu0 0.0
    %4601 = vmatpush1.msra.mxu0 0.0
    %4602 = vmatprep.subr.mxu0 0.0
    %4603 = vmatpush1.msra.mxu0 0.0
    %4604 = vmatprep.subr.mxu0 0.0
    %4605 = vmatpush1.msra.mxu0 0.0
    %4606 = vmatprep.subr.mxu0 0.0
    %4607 = vmatpush1.msra.mxu0 0.0
    %4608 = vmatprep.subr.mxu0 0.0
    %4609 = vmatpush1.msra.mxu0 0.0
    %4610 = vmatprep.subr.mxu0 0.0
    %4611 = vmatpush1.msra.mxu0 0.0
    %4612 = vmatprep.subr.mxu0 0.0
    %4613 = vmatpush1.msra.mxu0 0.0
    %4614 = vmatprep.subr.mxu0 0.0
    %4615 = vmatpush1.msra.mxu0 0.0
    %4616 = vmatprep.subr.mxu0 0.0
    %4617 = vmatpush1.msra.mxu0 0.0
    %4618 = vmatprep.subr.mxu0 0.0
    %4619 = vmatpush1.msra.mxu0 0.0
    %4620 = vmatprep.subr.mxu0 0.0
    %4621 = vmatpush1.msra.mxu0 0.0
    %4622 = vmatprep.mubr.f32.mxu0 0.0
    %4623 = vmatmul.mubr.f32.gmra.mrb[0].mxu0 %v4556
    %v4624 = vpop.f32.mrb[0].mxu0
    %v4625 = vadd.f32 0.0, %v4624
    %v4626 = vpop.f32.mrb[0].mxu0
    %4627 = vdwg.mxu0
    %v4628 = vmul.f32 %v4548, %v4625
    %4629 = vmatprep.subr.mxu0 0.0
    %4630 = vmatpush1.msra.mxu0 %v774
    %4631 = vmatprep.subr.mxu0 0.0
    %4632 = vmatpush1.msra.mxu0 %v775
    %4633 = vmatprep.subr.mxu0 0.0
    %4634 = vmatpush1.msra.mxu0 %v776
    %4635 = vmatprep.subr.mxu0 0.0
    %4636 = vmatpush1.msra.mxu0 %v777
    %4637 = vmatprep.subr.mxu0 0.0
    %4638 = vmatpush1.msra.mxu0 %v778
    %4639 = vmatprep.subr.mxu0 0.0
    %4640 = vmatpush1.msra.mxu0 %v779
    %4641 = vmatprep.subr.mxu0 0.0
    %4642 = vmatpush1.msra.mxu0 %v780
    %4643 = vmatprep.subr.mxu0 0.0
    %4644 = vmatpush1.msra.mxu0 %v781
    %4645 = vmatprep.subr.mxu0 0.0
    %4646 = vmatpush1.msra.mxu0 %v782
    %4647 = vmatprep.subr.mxu0 0.0
    %4648 = vmatpush1.msra.mxu0 %v783
    %4649 = vmatprep.subr.mxu0 0.0
    %4650 = vmatpush1.msra.mxu0 %v784
    %4651 = vmatprep.subr.mxu0 0.0
    %4652 = vmatpush1.msra.mxu0 %v785
    %4653 = vmatprep.subr.mxu0 0.0
    %4654 = vmatpush1.msra.mxu0 %v786
    %4655 = vmatprep.subr.mxu0 0.0
    %4656 = vmatpush1.msra.mxu0 %v787
    %4657 = vmatprep.subr.mxu0 0.0
    %4658 = vmatpush1.msra.mxu0 %v788
    %4659 = vmatprep.subr.mxu0 0.0
    %4660 = vmatpush1.msra.mxu0 %v789
    %4661 = vmatprep.subr.mxu0 0.0
    %4662 = vmatpush1.msra.mxu0 0.0
    %4663 = vmatprep.subr.mxu0 0.0
    %4664 = vmatpush1.msra.mxu0 0.0
    %4665 = vmatprep.subr.mxu0 0.0
    %4666 = vmatpush1.msra.mxu0 0.0
    %4667 = vmatprep.subr.mxu0 0.0
    %4668 = vmatpush1.msra.mxu0 0.0
    %4669 = vmatprep.subr.mxu0 0.0
    %4670 = vmatpush1.msra.mxu0 0.0
    %4671 = vmatprep.subr.mxu0 0.0
    %4672 = vmatpush1.msra.mxu0 0.0
    %4673 = vmatprep.subr.mxu0 0.0
    %4674 = vmatpush1.msra.mxu0 0.0
    %4675 = vmatprep.subr.mxu0 0.0
    %4676 = vmatpush1.msra.mxu0 0.0
    %4677 = vmatprep.subr.mxu0 0.0
    %4678 = vmatpush1.msra.mxu0 0.0
    %4679 = vmatprep.subr.mxu0 0.0
    %4680 = vmatpush1.msra.mxu0 0.0
    %4681 = vmatprep.subr.mxu0 0.0
    %4682 = vmatpush1.msra.mxu0 0.0
    %4683 = vmatprep.subr.mxu0 0.0
    %4684 = vmatpush1.msra.mxu0 0.0
    %4685 = vmatprep.subr.mxu0 0.0
    %4686 = vmatpush1.msra.mxu0 0.0
    %4687 = vmatprep.subr.mxu0 0.0
    %4688 = vmatpush1.msra.mxu0 0.0
    %4689 = vmatprep.subr.mxu0 0.0
    %4690 = vmatpush1.msra.mxu0 0.0
    %4691 = vmatprep.subr.mxu0 0.0
    %4692 = vmatpush1.msra.mxu0 0.0
    %4693 = vmatprep.mubr.f32.mxu0 0.0
    %4694 = vmatmul.mubr.f32.gmra.mrb[0].mxu0 %v4628
    %v4695 = vpop.f32.mrb[0].mxu0
    %v4696 = vadd.f32 0.0, %v4695
    %v4697 = vpop.f32.mrb[0].mxu0
    %4698 = vdwg.mxu0
    %v4700 = vrot.slane %v4625, 4
    %v4702 = vmul.f32 %v4553, %v4700
    %v4704 = vrot.slane %v4702, 4
    %4706 = vmatprep.subr.mxu0 0.0
    %4707 = vmatpush1.msra.mxu0 %v758
    %4708 = vmatprep.subr.mxu0 0.0
    %4709 = vmatpush1.msra.mxu0 %v759
    %4710 = vmatprep.subr.mxu0 0.0
    %4711 = vmatpush1.msra.mxu0 %v760
    %4712 = vmatprep.subr.mxu0 0.0
    %4713 = vmatpush1.msra.mxu0 %v761
    %4714 = vmatprep.subr.mxu0 0.0
    %4715 = vmatpush1.msra.mxu0 %v762
    %4716 = vmatprep.subr.mxu0 0.0
    %4717 = vmatpush1.msra.mxu0 %v763
    %4718 = vmatprep.subr.mxu0 0.0
    %4719 = vmatpush1.msra.mxu0 %v764
    %4720 = vmatprep.subr.mxu0 0.0
    %4721 = vmatpush1.msra.mxu0 %v765
    %4722 = vmatprep.subr.mxu0 0.0
    %4723 = vmatpush1.msra.mxu0 %v766
    %4724 = vmatprep.subr.mxu0 0.0
    %4725 = vmatpush1.msra.mxu0 %v767
    %4726 = vmatprep.subr.mxu0 0.0
    %4727 = vmatpush1.msra.mxu0 %v768
    %4728 = vmatprep.subr.mxu0 0.0
    %4729 = vmatpush1.msra.mxu0 %v769
    %4730 = vmatprep.subr.mxu0 0.0
    %4731 = vmatpush1.msra.mxu0 %v770
    %4732 = vmatprep.subr.mxu0 0.0
    %4733 = vmatpush1.msra.mxu0 %v771
    %4734 = vmatprep.subr.mxu0 0.0
    %4735 = vmatpush1.msra.mxu0 %v772
    %4736 = vmatprep.subr.mxu0 0.0
    %4737 = vmatpush1.msra.mxu0 %v773
    %4738 = vmatprep.subr.mxu0 0.0
    %4739 = vmatpush1.msra.mxu0 0.0
    %4740 = vmatprep.subr.mxu0 0.0
    %4741 = vmatpush1.msra.mxu0 0.0
    %4742 = vmatprep.subr.mxu0 0.0
    %4743 = vmatpush1.msra.mxu0 0.0
    %4744 = vmatprep.subr.mxu0 0.0
    %4745 = vmatpush1.msra.mxu0 0.0
    %4746 = vmatprep.subr.mxu0 0.0
    %4747 = vmatpush1.msra.mxu0 0.0
    %4748 = vmatprep.subr.mxu0 0.0
    %4749 = vmatpush1.msra.mxu0 0.0
    %4750 = vmatprep.subr.mxu0 0.0
    %4751 = vmatpush1.msra.mxu0 0.0
    %4752 = vmatprep.subr.mxu0 0.0
    %4753 = vmatpush1.msra.mxu0 0.0
    %4754 = vmatprep.subr.mxu0 0.0
    %4755 = vmatpush1.msra.mxu0 0.0
    %4756 = vmatprep.subr.mxu0 0.0
    %4757 = vmatpush1.msra.mxu0 0.0
    %4758 = vmatprep.subr.mxu0 0.0
    %4759 = vmatpush1.msra.mxu0 0.0
    %4760 = vmatprep.subr.mxu0 0.0
    %4761 = vmatpush1.msra.mxu0 0.0
    %4762 = vmatprep.subr.mxu0 0.0
    %4763 = vmatpush1.msra.mxu0 0.0
    %4764 = vmatprep.subr.mxu0 0.0
    %4765 = vmatpush1.msra.mxu0 0.0
    %4766 = vmatprep.subr.mxu0 0.0
    %4767 = vmatpush1.msra.mxu0 0.0
    %4768 = vmatprep.subr.mxu0 0.0
    %4769 = vmatpush1.msra.mxu0 0.0
    %4770 = vmatprep.mubr.f32.mxu0 0.0
    %4771 = vmatmul.mubr.f32.gmra.mrb[0].mxu0 %v4704
    %v4772 = vpop.f32.mrb[0].mxu0
    %v4773 = vadd.f32 0.0, %v4772
    %v4774 = vpop.f32.mrb[0].mxu0
    %4775 = vdwg.mxu0
    %4776 = vst.msk [vmem:[#allocation2 + $0xc] sm:$0x3] %vm1341, %v4773
    %4777 = vst.msk [vmem:[#allocation3 + $0x8] sm:$0x30] %vm2215, %v4504
    %v4779 = vsel %vm790, %v4773, 0
    %4781 = vmatprep.subr.mxu0 %v678
    %4782 = vmatpush1.msra.mxu0 %v677
    %4783 = vmatprep.subr.mxu0 %v682
    %4784 = vmatpush1.msra.mxu0 %v681
    %4785 = vmatprep.subr.mxu0 %v686
    %4786 = vmatpush1.msra.mxu0 %v685
    %4787 = vmatprep.subr.mxu0 %v690
    %4788 = vmatpush1.msra.mxu0 %v689
    %4789 = vmatprep.subr.mxu0 0.0
    %4790 = vmatpush1.msra.mxu0 0.0
    %4791 = vmatprep.subr.mxu0 0.0
    %4792 = vmatpush1.msra.mxu0 0.0
    %4793 = vmatprep.subr.mxu0 0.0
    %4794 = vmatpush1.msra.mxu0 0.0
    %4795 = vmatprep.subr.mxu0 0.0
    %4796 = vmatpush1.msra.mxu0 0.0
    %4797 = vmatprep.subr.mxu0 0.0
    %4798 = vmatpush1.msra.mxu0 0.0
    %4799 = vmatprep.subr.mxu0 0.0
    %4800 = vmatpush1.msra.mxu0 0.0
    %4801 = vmatprep.subr.mxu0 0.0
    %4802 = vmatpush1.msra.mxu0 0.0
    %4803 = vmatprep.subr.mxu0 0.0
    %4804 = vmatpush1.msra.mxu0 0.0
    %4805 = vmatprep.subr.mxu0 0.0
    %4806 = vmatpush1.msra.mxu0 0.0
    %4807 = vmatprep.subr.mxu0 0.0
    %4808 = vmatpush1.msra.mxu0 0.0
    %4809 = vmatprep.subr.mxu0 0.0
    %4810 = vmatpush1.msra.mxu0 0.0
    %4811 = vmatprep.subr.mxu0 0.0
    %4812 = vmatpush1.msra.mxu0 0.0
    %4813 = vmatprep.subr.mxu0 0.0
    %4814 = vmatpush1.msra.mxu0 0.0
    %4815 = vmatprep.subr.mxu0 0.0
    %4816 = vmatpush1.msra.mxu0 0.0
    %4817 = vmatprep.subr.mxu0 0.0
    %4818 = vmatpush1.msra.mxu0 0.0
    %4819 = vmatprep.subr.mxu0 0.0
    %4820 = vmatpush1.msra.mxu0 0.0
    %4821 = vmatprep.subr.mxu0 0.0
    %4822 = vmatpush1.msra.mxu0 0.0
    %4823 = vmatprep.subr.mxu0 0.0
    %4824 = vmatpush1.msra.mxu0 0.0
    %4825 = vmatprep.subr.mxu0 0.0
    %4826 = vmatpush1.msra.mxu0 0.0
    %4827 = vmatprep.subr.mxu0 0.0
    %4828 = vmatpush1.msra.mxu0 0.0
    %4829 = vmatprep.subr.mxu0 0.0
    %4830 = vmatpush1.msra.mxu0 0.0
    %4831 = vmatprep.subr.mxu0 0.0
    %4832 = vmatpush1.msra.mxu0 0.0
    %4833 = vmatprep.subr.mxu0 0.0
    %4834 = vmatpush1.msra.mxu0 0.0
    %4835 = vmatprep.subr.mxu0 0.0
    %4836 = vmatpush1.msra.mxu0 0.0
    %4837 = vmatprep.subr.mxu0 0.0
    %4838 = vmatpush1.msra.mxu0 0.0
    %4839 = vmatprep.subr.mxu0 0.0
    %4840 = vmatpush1.msra.mxu0 0.0
    %4841 = vmatprep.subr.mxu0 0.0
    %4842 = vmatpush1.msra.mxu0 0.0
    %4843 = vmatprep.subr.mxu0 0.0
    %4844 = vmatpush1.msra.mxu0 0.0
    %4845 = vmatprep.mubr.f32.mxu0 0.0
    %4846 = vmatmul.mubr.f32.gmra.mrb[0].mxu0 %v4779
    %v4847 = vpop.f32.mrb[0].mxu0
    %v4848 = vadd.f32 0.0, %v4847
    %v4849 = vpop.f32.mrb[0].mxu0
    %v4850 = vadd.f32 0.0, %v4849
    %4851 = vdwg.mxu0
    %4852 = vmatprep.subr.mxu0 %v680
    %4853 = vmatpush1.msra.mxu0 %v679
    %4854 = vmatprep.subr.mxu0 %v684
    %4855 = vmatpush1.msra.mxu0 %v683
    %4856 = vmatprep.subr.mxu0 %v688
    %4857 = vmatpush1.msra.mxu0 %v687
    %4858 = vmatprep.subr.mxu0 %v692
    %4859 = vmatpush1.msra.mxu0 %v691
    %4860 = vmatprep.subr.mxu0 0.0
    %4861 = vmatpush1.msra.mxu0 0.0
    %4862 = vmatprep.subr.mxu0 0.0
    %4863 = vmatpush1.msra.mxu0 0.0
    %4864 = vmatprep.subr.mxu0 0.0
    %4865 = vmatpush1.msra.mxu0 0.0
    %4866 = vmatprep.subr.mxu0 0.0
    %4867 = vmatpush1.msra.mxu0 0.0
    %4868 = vmatprep.subr.mxu0 0.0
    %4869 = vmatpush1.msra.mxu0 0.0
    %4870 = vmatprep.subr.mxu0 0.0
    %4871 = vmatpush1.msra.mxu0 0.0
    %4872 = vmatprep.subr.mxu0 0.0
    %4873 = vmatpush1.msra.mxu0 0.0
    %4874 = vmatprep.subr.mxu0 0.0
    %4875 = vmatpush1.msra.mxu0 0.0
    %4876 = vmatprep.subr.mxu0 0.0
    %4877 = vmatpush1.msra.mxu0 0.0
    %4878 = vmatprep.subr.mxu0 0.0
    %4879 = vmatpush1.msra.mxu0 0.0
    %4880 = vmatprep.subr.mxu0 0.0
    %4881 = vmatpush1.msra.mxu0 0.0
    %4882 = vmatprep.subr.mxu0 0.0
    %4883 = vmatpush1.msra.mxu0 0.0
    %4884 = vmatprep.subr.mxu0 0.0
    %4885 = vmatpush1.msra.mxu0 0.0
    %4886 = vmatprep.subr.mxu0 0.0
    %4887 = vmatpush1.msra.mxu0 0.0
    %4888 = vmatprep.subr.mxu0 0.0
    %4889 = vmatpush1.msra.mxu0 0.0
    %4890 = vmatprep.subr.mxu0 0.0
    %4891 = vmatpush1.msra.mxu0 0.0
    %4892 = vmatprep.subr.mxu0 0.0
    %4893 = vmatpush1.msra.mxu0 0.0
    %4894 = vmatprep.subr.mxu0 0.0
    %4895 = vmatpush1.msra.mxu0 0.0
    %4896 = vmatprep.subr.mxu0 0.0
    %4897 = vmatpush1.msra.mxu0 0.0
    %4898 = vmatprep.subr.mxu0 0.0
    %4899 = vmatpush1.msra.mxu0 0.0
    %4900 = vmatprep.subr.mxu0 0.0
    %4901 = vmatpush1.msra.mxu0 0.0
    %4902 = vmatprep.subr.mxu0 0.0
    %4903 = vmatpush1.msra.mxu0 0.0
    %4904 = vmatprep.subr.mxu0 0.0
    %4905 = vmatpush1.msra.mxu0 0.0
    %4906 = vmatprep.subr.mxu0 0.0
    %4907 = vmatpush1.msra.mxu0 0.0
    %4908 = vmatprep.subr.mxu0 0.0
    %4909 = vmatpush1.msra.mxu0 0.0
    %4910 = vmatprep.subr.mxu0 0.0
    %4911 = vmatpush1.msra.mxu0 0.0
    %4912 = vmatprep.subr.mxu0 0.0
    %4913 = vmatpush1.msra.mxu0 0.0
    %4914 = vmatprep.subr.mxu0 0.0
    %4915 = vmatpush1.msra.mxu0 0.0
    %4916 = vmatprep.mubr.f32.mxu0 0.0
    %4917 = vmatmul.mubr.f32.gmra.mrb[0].mxu0 %v4779
    %v4918 = vpop.f32.mrb[0].mxu0
    %v4919 = vadd.f32 0.0, %v4918
    %v4920 = vpop.f32.mrb[0].mxu0
    %v4921 = vadd.f32 0.0, %v4920
    %4922 = vdwg.mxu0
    %v4923 = vmax.f32 %v4848, 0.0
    %v4924 = vmax.f32 %v4850, 0.0
    %v4925 = vmax.f32 %v4919, 0.0
    %v4926 = vmax.f32 %v4921, 0.0
    %4927 = vmatprep.subr.mxu0 0.0
    %4928 = vmatpush1.msra.mxu0 %v693
    %4929 = vmatprep.subr.mxu0 0.0
    %4930 = vmatpush1.msra.mxu0 %v694
    %4931 = vmatprep.subr.mxu0 0.0
    %4932 = vmatpush1.msra.mxu0 %v695
    %4933 = vmatprep.subr.mxu0 0.0
    %4934 = vmatpush1.msra.mxu0 %v696
    %4935 = vmatprep.subr.mxu0 0.0
    %4936 = vmatpush1.msra.mxu0 %v697
    %4937 = vmatprep.subr.mxu0 0.0
    %4938 = vmatpush1.msra.mxu0 %v698
    %4939 = vmatprep.subr.mxu0 0.0
    %4940 = vmatpush1.msra.mxu0 %v699
    %4941 = vmatprep.subr.mxu0 0.0
    %4942 = vmatpush1.msra.mxu0 %v700
    %4943 = vmatprep.subr.mxu0 0.0
    %4944 = vmatpush1.msra.mxu0 %v701
    %4945 = vmatprep.subr.mxu0 0.0
    %4946 = vmatpush1.msra.mxu0 %v702
    %4947 = vmatprep.subr.mxu0 0.0
    %4948 = vmatpush1.msra.mxu0 %v703
    %4949 = vmatprep.subr.mxu0 0.0
    %4950 = vmatpush1.msra.mxu0 %v704
    %4951 = vmatprep.subr.mxu0 0.0
    %4952 = vmatpush1.msra.mxu0 %v705
    %4953 = vmatprep.subr.mxu0 0.0
    %4954 = vmatpush1.msra.mxu0 %v706
    %4955 = vmatprep.subr.mxu0 0.0
    %4956 = vmatpush1.msra.mxu0 %v707
    %4957 = vmatprep.subr.mxu0 0.0
    %4958 = vmatpush1.msra.mxu0 %v708
    %4959 = vmatprep.subr.mxu0 0.0
    %4960 = vmatpush1.msra.mxu0 %v709
    %4961 = vmatprep.subr.mxu0 0.0
    %4962 = vmatpush1.msra.mxu0 %v710
    %4963 = vmatprep.subr.mxu0 0.0
    %4964 = vmatpush1.msra.mxu0 %v711
    %4965 = vmatprep.subr.mxu0 0.0
    %4966 = vmatpush1.msra.mxu0 %v712
    %4967 = vmatprep.subr.mxu0 0.0
    %4968 = vmatpush1.msra.mxu0 %v713
    %4969 = vmatprep.subr.mxu0 0.0
    %4970 = vmatpush1.msra.mxu0 %v714
    %4971 = vmatprep.subr.mxu0 0.0
    %4972 = vmatpush1.msra.mxu0 %v715
    %4973 = vmatprep.subr.mxu0 0.0
    %4974 = vmatpush1.msra.mxu0 %v716
    %4975 = vmatprep.subr.mxu0 0.0
    %4976 = vmatpush1.msra.mxu0 %v717
    %4977 = vmatprep.subr.mxu0 0.0
    %4978 = vmatpush1.msra.mxu0 %v718
    %4979 = vmatprep.subr.mxu0 0.0
    %4980 = vmatpush1.msra.mxu0 %v719
    %4981 = vmatprep.subr.mxu0 0.0
    %4982 = vmatpush1.msra.mxu0 %v720
    %4983 = vmatprep.subr.mxu0 0.0
    %4984 = vmatpush1.msra.mxu0 %v721
    %4985 = vmatprep.subr.mxu0 0.0
    %4986 = vmatpush1.msra.mxu0 %v722
    %4987 = vmatprep.subr.mxu0 0.0
    %4988 = vmatpush1.msra.mxu0 %v723
    %4989 = vmatprep.subr.mxu0 0.0
    %4990 = vmatpush1.msra.mxu0 %v724
    %4991 = vmatprep.mubr.f32.mxu0 %v4924
    %4992 = vmatmul.mubr.f32.gmra.mrb[0].mxu0 %v4923
    %v4993 = vpop.f32.mrb[0].mxu0
    %v4994 = vadd.f32 0.0, %v4993
    %v4995 = vpop.f32.mrb[0].mxu0
    %4996 = vdwg.mxu0
    %4997 = vmatprep.subr.mxu0 0.0
    %4998 = vmatpush1.msra.mxu0 %v725
    %4999 = vmatprep.subr.mxu0 0.0
    %5000 = vmatpush1.msra.mxu0 %v726
    %5001 = vmatprep.subr.mxu0 0.0
    %5002 = vmatpush1.msra.mxu0 %v727
    %5003 = vmatprep.subr.mxu0 0.0
    %5004 = vmatpush1.msra.mxu0 %v728
    %5005 = vmatprep.subr.mxu0 0.0
    %5006 = vmatpush1.msra.mxu0 %v729
    %5007 = vmatprep.subr.mxu0 0.0
    %5008 = vmatpush1.msra.mxu0 %v730
    %5009 = vmatprep.subr.mxu0 0.0
    %5010 = vmatpush1.msra.mxu0 %v731
    %5011 = vmatprep.subr.mxu0 0.0
    %5012 = vmatpush1.msra.mxu0 %v732
    %5013 = vmatprep.subr.mxu0 0.0
    %5014 = vmatpush1.msra.mxu0 %v733
    %5015 = vmatprep.subr.mxu0 0.0
    %5016 = vmatpush1.msra.mxu0 %v734
    %5017 = vmatprep.subr.mxu0 0.0
    %5018 = vmatpush1.msra.mxu0 %v735
    %5019 = vmatprep.subr.mxu0 0.0
    %5020 = vmatpush1.msra.mxu0 %v736
    %5021 = vmatprep.subr.mxu0 0.0
    %5022 = vmatpush1.msra.mxu0 %v737
    %5023 = vmatprep.subr.mxu0 0.0
    %5024 = vmatpush1.msra.mxu0 %v738
    %5025 = vmatprep.subr.mxu0 0.0
    %5026 = vmatpush1.msra.mxu0 %v739
    %5027 = vmatprep.subr.mxu0 0.0
    %5028 = vmatpush1.msra.mxu0 %v740
    %5029 = vmatprep.subr.mxu0 0.0
    %5030 = vmatpush1.msra.mxu0 %v741
    %5031 = vmatprep.subr.mxu0 0.0
    %5032 = vmatpush1.msra.mxu0 %v742
    %5033 = vmatprep.subr.mxu0 0.0
    %5034 = vmatpush1.msra.mxu0 %v743
    %5035 = vmatprep.subr.mxu0 0.0
    %5036 = vmatpush1.msra.mxu0 %v744
    %5037 = vmatprep.subr.mxu0 0.0
    %5038 = vmatpush1.msra.mxu0 %v745
    %5039 = vmatprep.subr.mxu0 0.0
    %5040 = vmatpush1.msra.mxu0 %v746
    %5041 = vmatprep.subr.mxu0 0.0
    %5042 = vmatpush1.msra.mxu0 %v747
    %5043 = vmatprep.subr.mxu0 0.0
    %5044 = vmatpush1.msra.mxu0 %v748
    %5045 = vmatprep.subr.mxu0 0.0
    %5046 = vmatpush1.msra.mxu0 %v749
    %5047 = vmatprep.subr.mxu0 0.0
    %5048 = vmatpush1.msra.mxu0 %v750
    %5049 = vmatprep.subr.mxu0 0.0
    %5050 = vmatpush1.msra.mxu0 %v751
    %5051 = vmatprep.subr.mxu0 0.0
    %5052 = vmatpush1.msra.mxu0 %v752
    %5053 = vmatprep.subr.mxu0 0.0
    %5054 = vmatpush1.msra.mxu0 %v753
    %5055 = vmatprep.subr.mxu0 0.0
    %5056 = vmatpush1.msra.mxu0 %v754
    %5057 = vmatprep.subr.mxu0 0.0
    %5058 = vmatpush1.msra.mxu0 %v755
    %5059 = vmatprep.subr.mxu0 0.0
    %5060 = vmatpush1.msra.mxu0 %v756
    %5061 = vmatprep.mubr.f32.mxu0 %v4926
    %5062 = vmatmul.mubr.f32.gmra.mrb[0].mxu0 %v4925
    %v5063 = vpop.f32.mrb[0].mxu0
    %v5064 = vadd.f32 %v4994, %v5063
    %v5065 = vpop.f32.mrb[0].mxu0
    %5066 = vdwg.mxu0
    %v5068 = vrot.slane %v5064, 2
    %v5070 = vadd.f32 %v674, %v5068
    %v5071 = vsel %vm2793, %v5070, -inf
    %5072 = vmax.xlane.f32.xlu0 %v5071
    %v5073 = vpop.xlane.xlu0 %5072
    %v5074 = vsub.f32 %v5070, %v5073
    %v5075 = vmul.f32 %v5074, 1.442695
    %v5076 = vpow.pop %v5075
    %v5077 = vsel %vm2793, %v5076, 0.0
    %5078 = vadd.xlane.f32.xlu0 %v5077
    %v5079 = vpop.xlane.xlu0 %5078
    %v5080 = vrcp.pop %v5079
    %v5081 = vmul.f32 %v5076, %v5080
    %v5086 = vrot.slane %v4848, 2
    %v5087 = vrot.slane %v4850, 2
    %v5088 = vrot.slane %v4919, 2
    %v5089 = vrot.slane %v4921, 2
    %v5094 = vadd.f32 %v374, %v5086
    %v5095 = vadd.f32 %v376, %v5087
    %v5096 = vadd.f32 %v451, %v5088
    %v5097 = vadd.f32 %v453, %v5089
    %v5098 = vxor.u32 %v5094, 2147483648
    %v5099 = vxor.u32 %v5095, 2147483648
    %v5100 = vxor.u32 %v5096, 2147483648
    %v5101 = vmul.f32 %v5098, 1.442695
    %v5102 = vpow.pop %v5101
    %v5103 = vmul.f32 %v5099, 1.442695
    %v5104 = vpow.pop %v5103
    %v5105 = vmul.f32 %v5100, 1.442695
    %v5106 = vpow.pop %v5105
    %v5107 = vadd.f32 %v5102, 1.0
    %v5108 = vadd.f32 %v5104, 1.0
    %v5109 = vadd.f32 %v5106, 1.0
    %v5110 = vrcp.pop %v5107
    %v5111 = vmul.f32 1.0, %v5110
    %v5112 = vrcp.pop %v5108
    %v5113 = vmul.f32 1.0, %v5112
    %v5114 = vrcp.pop %v5109
    %v5115 = vmul.f32 1.0, %v5114
    %v5116 = vtanh.pop %v5097
    %v5118 = vrot.slane %v5113, 6
    %v5120 = vmul.f32 %v4696, %v5118
    %v5121 = vmul.f32 %v5111, %v5116
    %v5123 = vrot.slane %v5121, 6
    %v5125 = vadd.f32 %v5120, %v5123
    %v5126 = vtanh.pop %v5125
    %v5128 = vrot.slane %v5126, 2
    %v5130 = vmul.f32 %v5115, %v5128
    %v5132 = vrot.slane %v5081, 6
    %v5133 = vsel %vm1121, %v5132, 0
    %5135 = vmatprep.subr.mxu0 0.0
    %5136 = vmatpush1.msra.mxu0 %v1127
    %5137 = vmatprep.subr.mxu0 0.0
    %5138 = vmatpush1.msra.mxu0 0.0
    %5139 = vmatprep.subr.mxu0 0.0
    %5140 = vmatpush1.msra.mxu0 0.0
    %5141 = vmatprep.subr.mxu0 0.0
    %5142 = vmatpush1.msra.mxu0 0.0
    %5143 = vmatprep.subr.mxu0 0.0
    %5144 = vmatpush1.msra.mxu0 0.0
    %5145 = vmatprep.subr.mxu0 0.0
    %5146 = vmatpush1.msra.mxu0 0.0
    %5147 = vmatprep.subr.mxu0 0.0
    %5148 = vmatpush1.msra.mxu0 0.0
    %5149 = vmatprep.subr.mxu0 0.0
    %5150 = vmatpush1.msra.mxu0 0.0
    %5151 = vmatprep.subr.mxu0 0.0
    %5152 = vmatpush1.msra.mxu0 0.0
    %5153 = vmatprep.subr.mxu0 0.0
    %5154 = vmatpush1.msra.mxu0 0.0
    %5155 = vmatprep.subr.mxu0 0.0
    %5156 = vmatpush1.msra.mxu0 0.0
    %5157 = vmatprep.subr.mxu0 0.0
    %5158 = vmatpush1.msra.mxu0 0.0
    %5159 = vmatprep.subr.mxu0 0.0
    %5160 = vmatpush1.msra.mxu0 0.0
    %5161 = vmatprep.subr.mxu0 0.0
    %5162 = vmatpush1.msra.mxu0 0.0
    %5163 = vmatprep.subr.mxu0 0.0
    %5164 = vmatpush1.msra.mxu0 0.0
    %5165 = vmatprep.subr.mxu0 0.0
    %5166 = vmatpush1.msra.mxu0 0.0
    %5167 = vmatprep.subr.mxu0 0.0
    %5168 = vmatpush1.msra.mxu0 0.0
    %5169 = vmatprep.subr.mxu0 0.0
    %5170 = vmatpush1.msra.mxu0 0.0
    %5171 = vmatprep.subr.mxu0 0.0
    %5172 = vmatpush1.msra.mxu0 0.0
    %5173 = vmatprep.subr.mxu0 0.0
    %5174 = vmatpush1.msra.mxu0 0.0
    %5175 = vmatprep.subr.mxu0 0.0
    %5176 = vmatpush1.msra.mxu0 0.0
    %5177 = vmatprep.subr.mxu0 0.0
    %5178 = vmatpush1.msra.mxu0 0.0
    %5179 = vmatprep.subr.mxu0 0.0
    %5180 = vmatpush1.msra.mxu0 0.0
    %5181 = vmatprep.subr.mxu0 0.0
    %5182 = vmatpush1.msra.mxu0 0.0
    %5183 = vmatprep.subr.mxu0 0.0
    %5184 = vmatpush1.msra.mxu0 0.0
    %5185 = vmatprep.subr.mxu0 0.0
    %5186 = vmatpush1.msra.mxu0 0.0
    %5187 = vmatprep.subr.mxu0 0.0
    %5188 = vmatpush1.msra.mxu0 0.0
    %5189 = vmatprep.subr.mxu0 0.0
    %5190 = vmatpush1.msra.mxu0 0.0
    %5191 = vmatprep.subr.mxu0 0.0
    %5192 = vmatpush1.msra.mxu0 0.0
    %5193 = vmatprep.subr.mxu0 0.0
    %5194 = vmatpush1.msra.mxu0 0.0
    %5195 = vmatprep.subr.mxu0 0.0
    %5196 = vmatpush1.msra.mxu0 0.0
    %5197 = vmatprep.subr.mxu0 0.0
    %5198 = vmatpush1.msra.mxu0 0.0
    %5199 = vmatprep.mubr.f32.mxu0 0.0
    %5200 = vmatmul.mubr.f32.gmra.mrb[0].mxu0 %v5133
    %v5201 = vpop.f32.mrb[0].mxu0
    %v5202 = vadd.f32 0.0, %v5201
    %v5203 = vpop.f32.mrb[0].mxu0
    %5204 = vdwg.mxu0
    %v5206 = vrot.slane %v5202, 2
    %v5208 = vmul.f32 %v5130, %v5206
    %v5210 = vrot.slane %v5208, 6
    %5212 = vmatprep.subr.mxu0 0.0
    %5213 = vmatpush1.msra.mxu0 %v758
    %5214 = vmatprep.subr.mxu0 0.0
    %5215 = vmatpush1.msra.mxu0 %v759
    %5216 = vmatprep.subr.mxu0 0.0
    %5217 = vmatpush1.msra.mxu0 %v760
    %5218 = vmatprep.subr.mxu0 0.0
    %5219 = vmatpush1.msra.mxu0 %v761
    %5220 = vmatprep.subr.mxu0 0.0
    %5221 = vmatpush1.msra.mxu0 %v762
    %5222 = vmatprep.subr.mxu0 0.0
    %5223 = vmatpush1.msra.mxu0 %v763
    %5224 = vmatprep.subr.mxu0 0.0
    %5225 = vmatpush1.msra.mxu0 %v764
    %5226 = vmatprep.subr.mxu0 0.0
    %5227 = vmatpush1.msra.mxu0 %v765
    %5228 = vmatprep.subr.mxu0 0.0
    %5229 = vmatpush1.msra.mxu0 %v766
    %5230 = vmatprep.subr.mxu0 0.0
    %5231 = vmatpush1.msra.mxu0 %v767
    %5232 = vmatprep.subr.mxu0 0.0
    %5233 = vmatpush1.msra.mxu0 %v768
    %5234 = vmatprep.subr.mxu0 0.0
    %5235 = vmatpush1.msra.mxu0 %v769
    %5236 = vmatprep.subr.mxu0 0.0
    %5237 = vmatpush1.msra.mxu0 %v770
    %5238 = vmatprep.subr.mxu0 0.0
    %5239 = vmatpush1.msra.mxu0 %v771
    %5240 = vmatprep.subr.mxu0 0.0
    %5241 = vmatpush1.msra.mxu0 %v772
    %5242 = vmatprep.subr.mxu0 0.0
    %5243 = vmatpush1.msra.mxu0 %v773
    %5244 = vmatprep.subr.mxu0 0.0
    %5245 = vmatpush1.msra.mxu0 0.0
    %5246 = vmatprep.subr.mxu0 0.0
    %5247 = vmatpush1.msra.mxu0 0.0
    %5248 = vmatprep.subr.mxu0 0.0
    %5249 = vmatpush1.msra.mxu0 0.0
    %5250 = vmatprep.subr.mxu0 0.0
    %5251 = vmatpush1.msra.mxu0 0.0
    %5252 = vmatprep.subr.mxu0 0.0
    %5253 = vmatpush1.msra.mxu0 0.0
    %5254 = vmatprep.subr.mxu0 0.0
    %5255 = vmatpush1.msra.mxu0 0.0
    %5256 = vmatprep.subr.mxu0 0.0
    %5257 = vmatpush1.msra.mxu0 0.0
    %5258 = vmatprep.subr.mxu0 0.0
    %5259 = vmatpush1.msra.mxu0 0.0
    %5260 = vmatprep.subr.mxu0 0.0
    %5261 = vmatpush1.msra.mxu0 0.0
    %5262 = vmatprep.subr.mxu0 0.0
    %5263 = vmatpush1.msra.mxu0 0.0
    %5264 = vmatprep.subr.mxu0 0.0
    %5265 = vmatpush1.msra.mxu0 0.0
    %5266 = vmatprep.subr.mxu0 0.0
    %5267 = vmatpush1.msra.mxu0 0.0
    %5268 = vmatprep.subr.mxu0 0.0
    %5269 = vmatpush1.msra.mxu0 0.0
    %5270 = vmatprep.subr.mxu0 0.0
    %5271 = vmatpush1.msra.mxu0 0.0
    %5272 = vmatprep.subr.mxu0 0.0
    %5273 = vmatpush1.msra.mxu0 0.0
    %5274 = vmatprep.subr.mxu0 0.0
    %5275 = vmatpush1.msra.mxu0 0.0
    %5276 = vmatprep.mubr.f32.mxu0 0.0
    %5277 = vmatmul.mubr.f32.gmra.mrb[0].mxu0 %v5210
    %v5278 = vpop.f32.mrb[0].mxu0
    %v5279 = vadd.f32 0.0, %v5278
    %v5280 = vpop.f32.mrb[0].mxu0
    %5281 = vdwg.mxu0
    %5282 = vst.msk [vmem:[#allocation2 + $0xe] sm:$0x3] %vm1341, %v5279
    %5283 = vst.msk [vmem:[#allocation3 + $0x8] sm:$0xc0] %vm2793, %v5081
    %v5284 = vld [vmem:[#allocation2] sm:$0xff]
    %v5285 = vld [vmem:[#allocation2 + $0x8] sm:$0xff]
    %v5286 = vld [vmem:[%s12] sm:$0xff]
    %v5287 = vld [vmem:[%s12 + $0x8] sm:$0xff]
    %v5288 = vld [vmem:[%s12 + $0x10] sm:$0xff]
    %v5289 = vld [vmem:[%s12 + $0x18] sm:$0xff]
    %v5290 = vld [vmem:[%s13] sm:$0x1]
    %v5292 = vlaneseq
    %v5293 = vshrl.u32 %v5292, 7
    %v5294 = vsub.s32 0, %v5293
    %v5295 = vrot.slane %v5290, %v5294
    %v5298 = vsel %vm790, %v5284, 0
    %v5301 = vsel %vm790, %v5285, 0
    %5303 = vmatprep.subr.mxu0 0.0
    %5304 = vmatpush1.msra.mxu0 %v5286
    %5305 = vmatprep.subr.mxu0 0.0
    %5306 = vmatpush1.msra.mxu0 %v5287
    %5307 = vmatprep.subr.mxu0 0.0
    %5308 = vmatpush1.msra.mxu0 %v5288
    %5309 = vmatprep.subr.mxu0 0.0
    %5310 = vmatpush1.msra.mxu0 %v5289
    %5311 = vmatprep.subr.mxu0 0.0
    %5312 = vmatpush1.msra.mxu0 0.0
    %5313 = vmatprep.subr.mxu0 0.0
    %5314 = vmatpush1.msra.mxu0 0.0
    %5315 = vmatprep.subr.mxu0 0.0
    %5316 = vmatpush1.msra.mxu0 0.0
    %5317 = vmatprep.subr.mxu0 0.0
    %5318 = vmatpush1.msra.mxu0 0.0
    %5319 = vmatprep.subr.mxu0 0.0
    %5320 = vmatpush1.msra.mxu0 0.0
    %5321 = vmatprep.subr.mxu0 0.0
    %5322 = vmatpush1.msra.mxu0 0.0
    %5323 = vmatprep.subr.mxu0 0.0
    %5324 = vmatpush1.msra.mxu0 0.0
    %5325 = vmatprep.subr.mxu0 0.0
    %5326 = vmatpush1.msra.mxu0 0.0
    %5327 = vmatprep.subr.mxu0 0.0
    %5328 = vmatpush1.msra.mxu0 0.0
    %5329 = vmatprep.subr.mxu0 0.0
    %5330 = vmatpush1.msra.mxu0 0.0
    %5331 = vmatprep.subr.mxu0 0.0
    %5332 = vmatpush1.msra.mxu0 0.0
    %5333 = vmatprep.subr.mxu0 0.0
    %5334 = vmatpush1.msra.mxu0 0.0
    %5335 = vmatprep.subr.mxu0 0.0
    %5336 = vmatpush1.msra.mxu0 0.0
    %5337 = vmatprep.subr.mxu0 0.0
    %5338 = vmatpush1.msra.mxu0 0.0
    %5339 = vmatprep.subr.mxu0 0.0
    %5340 = vmatpush1.msra.mxu0 0.0
    %5341 = vmatprep.subr.mxu0 0.0
    %5342 = vmatpush1.msra.mxu0 0.0
    %5343 = vmatprep.subr.mxu0 0.0
    %5344 = vmatpush1.msra.mxu0 0.0
    %5345 = vmatprep.subr.mxu0 0.0
    %5346 = vmatpush1.msra.mxu0 0.0
    %5347 = vmatprep.subr.mxu0 0.0
    %5348 = vmatpush1.msra.mxu0 0.0
    %5349 = vmatprep.subr.mxu0 0.0
    %5350 = vmatpush1.msra.mxu0 0.0
    %5351 = vmatprep.subr.mxu0 0.0
    %5352 = vmatpush1.msra.mxu0 0.0
    %5353 = vmatprep.subr.mxu0 0.0
    %5354 = vmatpush1.msra.mxu0 0.0
    %5355 = vmatprep.subr.mxu0 0.0
    %5356 = vmatpush1.msra.mxu0 0.0
    %5357 = vmatprep.subr.mxu0 0.0
    %5358 = vmatpush1.msra.mxu0 0.0
    %5359 = vmatprep.subr.mxu0 0.0
    %5360 = vmatpush1.msra.mxu0 0.0
    %5361 = vmatprep.subr.mxu0 0.0
    %5362 = vmatpush1.msra.mxu0 0.0
    %5363 = vmatprep.subr.mxu0 0.0
    %5364 = vmatpush1.msra.mxu0 0.0
    %5365 = vmatprep.subr.mxu0 0.0
    %5366 = vmatpush1.msra.mxu0 0.0
    %5367 = vmatprep.mubr.f32.mxu0 0.0
    %5368 = vmatmul.mubr.f32.gmra.mrb[0].mxu0 %v5298
    %v5369 = vpop.f32.mrb[0].mxu0
    %v5370 = vadd.f32 %v5295, %v5369
    %v5371 = vpop.f32.mrb[0].mxu0
    %5372 = vmatprep.mubr.f32.mxu0 0.0
    %5373 = vmatmul.mubr.f32.gmra.mrb[0].mxu0 %v5301
    %v5374 = vpop.f32.mrb[0].mxu0
    %v5375 = vadd.f32 %v5295, %v5374
    %v5376 = vpop.f32.mrb[0].mxu0
    %5377 = vdwg.mxu0
    %v5378 = vmax.f32 %v5370, 0.0
    %v5379 = vmax.f32 %v5375, 0.0
    %v5380 = vld [vmem:[%s14] sm:$0xff]
    %v5381 = vld [vmem:[%s14 + $0x8] sm:$0x3f]
    %v5382 = vld [vmem:[%s15] sm:$0x1]
    %v5384 = vlaneseq
    %v5385 = vshrl.u32 %v5384, 7
    %v5386 = vsub.s32 0, %v5385
    %v5387 = vrot.slane %v5382, %v5386
    %vm5389 = vcmask 113664
    %v5391 = vsel %vm5389, %v5378, 0
    %v5394 = vsel %vm5389, %v5379, 0
    %vm5396 = vcmask 1045504
    %v5398 = vsel %vm5396, %v5381, 0
    %5400 = vmatprep.subr.mxu0 0.0
    %5401 = vmatpush1.msra.mxu0 %v5380
    %5402 = vmatprep.subr.mxu0 0.0
    %5403 = vmatpush1.msra.mxu0 %v5398
    %5404 = vmatprep.subr.mxu0 0.0
    %5405 = vmatpush1.msra.mxu0 0.0
    %5406 = vmatprep.subr.mxu0 0.0
    %5407 = vmatpush1.msra.mxu0 0.0
    %5408 = vmatprep.subr.mxu0 0.0
    %5409 = vmatpush1.msra.mxu0 0.0
    %5410 = vmatprep.subr.mxu0 0.0
    %5411 = vmatpush1.msra.mxu0 0.0
    %5412 = vmatprep.subr.mxu0 0.0
    %5413 = vmatpush1.msra.mxu0 0.0
    %5414 = vmatprep.subr.mxu0 0.0
    %5415 = vmatpush1.msra.mxu0 0.0
    %5416 = vmatprep.subr.mxu0 0.0
    %5417 = vmatpush1.msra.mxu0 0.0
    %5418 = vmatprep.subr.mxu0 0.0
    %5419 = vmatpush1.msra.mxu0 0.0
    %5420 = vmatprep.subr.mxu0 0.0
    %5421 = vmatpush1.msra.mxu0 0.0
    %5422 = vmatprep.subr.mxu0 0.0
    %5423 = vmatpush1.msra.mxu0 0.0
    %5424 = vmatprep.subr.mxu0 0.0
    %5425 = vmatpush1.msra.mxu0 0.0
    %5426 = vmatprep.subr.mxu0 0.0
    %5427 = vmatpush1.msra.mxu0 0.0
    %5428 = vmatprep.subr.mxu0 0.0
    %5429 = vmatpush1.msra.mxu0 0.0
    %5430 = vmatprep.subr.mxu0 0.0
    %5431 = vmatpush1.msra.mxu0 0.0
    %5432 = vmatprep.subr.mxu0 0.0
    %5433 = vmatpush1.msra.mxu0 0.0
    %5434 = vmatprep.subr.mxu0 0.0
    %5435 = vmatpush1.msra.mxu0 0.0
    %5436 = vmatprep.subr.mxu0 0.0
    %5437 = vmatpush1.msra.mxu0 0.0
    %5438 = vmatprep.subr.mxu0 0.0
    %5439 = vmatpush1.msra.mxu0 0.0
    %5440 = vmatprep.subr.mxu0 0.0
    %5441 = vmatpush1.msra.mxu0 0.0
    %5442 = vmatprep.subr.mxu0 0.0
    %5443 = vmatpush1.msra.mxu0 0.0
    %5444 = vmatprep.subr.mxu0 0.0
    %5445 = vmatpush1.msra.mxu0 0.0
    %5446 = vmatprep.subr.mxu0 0.0
    %5447 = vmatpush1.msra.mxu0 0.0
    %5448 = vmatprep.subr.mxu0 0.0
    %5449 = vmatpush1.msra.mxu0 0.0
    %5450 = vmatprep.subr.mxu0 0.0
    %5451 = vmatpush1.msra.mxu0 0.0
    %5452 = vmatprep.subr.mxu0 0.0
    %5453 = vmatpush1.msra.mxu0 0.0
    %5454 = vmatprep.subr.mxu0 0.0
    %5455 = vmatpush1.msra.mxu0 0.0
    %5456 = vmatprep.subr.mxu0 0.0
    %5457 = vmatpush1.msra.mxu0 0.0
    %5458 = vmatprep.subr.mxu0 0.0
    %5459 = vmatpush1.msra.mxu0 0.0
    %5460 = vmatprep.subr.mxu0 0.0
    %5461 = vmatpush1.msra.mxu0 0.0
    %5462 = vmatprep.subr.mxu0 0.0
    %5463 = vmatpush1.msra.mxu0 0.0
    %5464 = vmatprep.mubr.f32.mxu0 0.0
    %5465 = vmatmul.mubr.f32.gmra.mrb[0].mxu0 %v5391
    %v5466 = vpop.f32.mrb[0].mxu0
    %v5467 = vadd.f32 %v5387, %v5466
    %v5468 = vpop.f32.mrb[0].mxu0
    %5469 = vmatprep.mubr.f32.mxu0 0.0
    %5470 = vmatmul.mubr.f32.gmra.mrb[0].mxu0 %v5394
    %v5471 = vpop.f32.mrb[0].mxu0
    %v5472 = vadd.f32 %v5387, %v5471
    %v5473 = vpop.f32.mrb[0].mxu0
    %5474 = vdwg.mxu0
    %v5477 = vcombine.high %v5467, %v5467
    %v5479 = vunpack.c.l.s4 1983009808
    %v5480 = vunpack.c.0.s8 %v5479
    %v5481 = vlaneseq
    %v5482 = vshrl.u32 %v5481, 7
    %v5483 = vsub.s32 %v5480, %v5482
    %v5484 = vrot.slane %v5467, %v5483
    %v5486 = vunpack.c.l.s4 1983009808
    %v5487 = vunpack.c.0.s8 %v5486
    %v5488 = vlaneseq
    %v5489 = vshrl.u32 %v5488, 7
    %v5490 = vsub.s32 %v5487, %v5489
    %v5491 = vrot.slane %v5477, %v5490
    %v5492 = vcombine.high %v5484, %v5484
    %v5493 = vcombine.high %v5491, %v5491
    %v5494 = vcombine.high %v5472, %v5472
    %v5496 = vunpack.c.l.s4 1983009808
    %v5497 = vunpack.c.0.s8 %v5496
    %v5498 = vlaneseq
    %v5499 = vshrl.u32 %v5498, 7
    %v5500 = vsub.s32 %v5497, %v5499
    %v5501 = vrot.slane %v5472, %v5500
    %v5503 = vunpack.c.l.s4 1983009808
    %v5504 = vunpack.c.0.s8 %v5503
    %v5505 = vlaneseq
    %v5506 = vshrl.u32 %v5505, 7
    %v5507 = vsub.s32 %v5504, %v5506
    %v5508 = vrot.slane %v5494, %v5507
    %v5509 = vcombine.high %v5501, %v5501
    %v5510 = vcombine.high %v5508, %v5508
    %vm5519 = vcmask 58368
    %5520 = vst.msk [vmem:[#allocation4] sm:$0x3] %vm5519, %v5484
    %5521 = vst.msk [vmem:[#allocation4 + $0x2] sm:$0x3] %vm5519, %v5492
    %5522 = vst.msk [vmem:[#allocation4 + $0x4] sm:$0x3] %vm5519, %v5491
    %5523 = vst.msk [vmem:[#allocation4 + $0x6] sm:$0x3] %vm5519, %v5493
    %5524 = vst.msk [vmem:[#allocation4 + $0x8] sm:$0x3] %vm5519, %v5501
    %5525 = vst.msk [vmem:[#allocation4 + $0xa] sm:$0x3] %vm5519, %v5509
    %5526 = vst.msk [vmem:[#allocation4 + $0xc] sm:$0x3] %vm5519, %v5508
    %5527 = vst.msk [vmem:[#allocation4 + $0xe] sm:$0x3] %vm5519, %v5510
    %v5528 = vld [vmem:[#allocation3] sm:$0xff]
    %v5529 = vld [vmem:[#allocation3 + $0x8] sm:$0xff]
    %v5532 = vcombine.high %v5528, %v5528
    %v5534 = vunpack.c.l.s4 1983009808
    %v5535 = vunpack.c.0.s8 %v5534
    %v5536 = vlaneseq
    %v5537 = vshrl.u32 %v5536, 7
    %v5538 = vsub.s32 %v5535, %v5537
    %v5539 = vrot.slane %v5528, %v5538
    %v5541 = vunpack.c.l.s4 1983009808
    %v5542 = vunpack.c.0.s8 %v5541
    %v5543 = vlaneseq
    %v5544 = vshrl.u32 %v5543, 7
    %v5545 = vsub.s32 %v5542, %v5544
    %v5546 = vrot.slane %v5532, %v5545
    %v5547 = vcombine.high %v5539, %v5539
    %v5548 = vcombine.high %v5546, %v5546
    %v5549 = vcombine.high %v5529, %v5529
    %v5551 = vunpack.c.l.s4 1983009808
    %v5552 = vunpack.c.0.s8 %v5551
    %v5553 = vlaneseq
    %v5554 = vshrl.u32 %v5553, 7
    %v5555 = vsub.s32 %v5552, %v5554
    %v5556 = vrot.slane %v5529, %v5555
    %v5558 = vunpack.c.l.s4 1983009808
    %v5559 = vunpack.c.0.s8 %v5558
    %v5560 = vlaneseq
    %v5561 = vshrl.u32 %v5560, 7
    %v5562 = vsub.s32 %v5559, %v5561
    %v5563 = vrot.slane %v5549, %v5562
    %v5564 = vcombine.high %v5556, %v5556
    %v5565 = vcombine.high %v5563, %v5563
    %5574 = vst.msk [vmem:[%s17] sm:$0x3] %vm1081, %v5539
    %5575 = vst.msk [vmem:[%s17 + $0x2] sm:$0x3] %vm1081, %v5547
    %5576 = vst.msk [vmem:[%s17 + $0x4] sm:$0x3] %vm1081, %v5546
    %5577 = vst.msk [vmem:[%s17 + $0x6] sm:$0x3] %vm1081, %v5548
    %5578 = vst.msk [vmem:[%s17 + $0x8] sm:$0x3] %vm1081, %v5556
    %5579 = vst.msk [vmem:[%s17 + $0xa] sm:$0x3] %vm1081, %v5564
    %5580 = vst.msk [vmem:[%s17 + $0xc] sm:$0x3] %vm1081, %v5563
    %5581 = vst.msk [vmem:[%s17 + $0xe] sm:$0x3] %vm1081, %v5565
    // Predicated region
    $region66: #{tpu_custom_call.1} parent=1 // pred_check
      _
    $region67: #{tpu_custom_call.1} parent=1 // pred_check_branch
      %5583 = sbr.rel (0) target = $region69
    $region68: #{tpu_custom_call.1} parent=1 // pred_region
      %s5585 = ssub.s32 256, 256
      %5586 = vsyncadd [#allocation5], %s5585
      %s5587 = sshll.u32 [#allocation4], 4
      %s5588 = int_to_ptr.vmem [resolvable:$true] %s5587
      %5593 = dma.vmem_to_hbm [thread:$0]  %s5588, 256, %s16, [#allocation5], 32, 32, 2
    $region69: #{tpu_custom_call.1} parent=1 // pred_fallthru
      _
    // Predicated region
    $region70: #{tpu_custom_call.1} parent=1 // pred_check
      _
    $region71: #{tpu_custom_call.1} parent=1 // pred_check_branch
      %5595 = sbr.rel (0) target = $region73
    $region72: #{tpu_custom_call.1} parent=1 // pred_region
      _
    $region73: #{tpu_custom_call.1} parent=1 // pred_fallthru
      _
    // Predicated region
    $region74: #{tpu_custom_call.1} parent=1 // pred_check
      _
    $region75: #{tpu_custom_call.1} parent=1 // pred_check_branch
      %5597 = sbr.rel (0) target = $region77
    $region76: #{tpu_custom_call.1} parent=1 // pred_region
      %5598 = dma.done [#allocation5], 256
    $region77: #{tpu_custom_call.1} parent=1 // pred_fallthru
      _
    // Predicated region
    $region78: #{tpu_custom_call.1} parent=1 // pred_check
      _
    $region79: #{tpu_custom_call.1} parent=1 // pred_check_branch
      %5600 = sbr.rel (0) target = $region81
    $region80: #{tpu_custom_call.1} parent=1 // pred_region
      _
    $region81: #{tpu_custom_call.1} parent=1 // pred_fallthru
      _
    %5601 = vsyncpa [#allocation5], 1

</llo_original>
